<compile_context>
chip_gen: v5e
topology: v5e:2x2
jax: 0.10.0
libtpu: 0.0.40
codegen_flags: <defaults>
</compile_context>

<pallas_src>
import jax
import jax.numpy as jnp
from jax import lax
from jax.experimental import pallas as pl
from jax.experimental.pallas import tpu as pltpu

EPS = 1e-5


# --------------------------------------------------------------------- kernel helpers
def _gelu(x):
    # tanh-approximate GELU == nn.GELU(approximate='tanh')
    return jax.nn.gelu(x, approximate=True)


def _inst_norm(x, g, b):
    # x: (T, C, F) f32.  InstanceNorm2d: per-channel statistics over (T, F),
    # single traversal (sum + sum-of-squares, v = E[x^2] - m^2), biased variance.
    # g, b: (C, 1) affine params (broadcast over T and F).
    inv_n = 1.0 / (x.shape[0] * x.shape[2])
    s1 = jnp.sum(jnp.sum(x, axis=2, keepdims=True), axis=0, keepdims=True)
    s2 = jnp.sum(jnp.sum(x * x, axis=2, keepdims=True), axis=0, keepdims=True)
    m = s1 * inv_n
    v = jnp.maximum(s2 * inv_n - m * m, 0.0)
    return (x - m) * lax.rsqrt(v + EPS) * g + b


def _im2col(col_ref, ab, base):
    # ab: (T, Ci, F) bf16.  Writes the 9 SAME-padded shifted copies of `ab` into
    # col_ref[:, base + k*Ci : base + (k+1)*Ci, :], k = dy*3 + dx.
    # T-shifts are offsets on the outer dim (free); F-shifts are masked lane-offset
    # stores.  Only the 1-px border strips are redundantly zeroed (O(1/T + 1/F) of
    # the main write volume).
    # TODO(synk): lane-align the dx != 1 taps with pltpu.roll + iota edge masks once
    # F is a multiple of 128 (production F=2048); irrelevant at this self-test F.
    T, Ci, F = ab.shape
    zrow = jnp.zeros((1, Ci, F), ab.dtype)
    zlane = jnp.zeros((T, Ci, 1), ab.dtype)
    for dy in range(3):
        t0, t1 = max(0, 1 - dy), min(T, T + 1 - dy)          # dest t range
        st = t0 + dy - 1                                     # src t start
        for dx in range(3):
            f0, f1 = max(0, 1 - dx), min(F, F + 1 - dx)      # dest f range
            sf = f0 + dx - 1                                 # src f start
            r0 = base + (dy * 3 + dx) * Ci
            col_ref[t0:t1, r0:r0 + Ci, f0:f1] = (
                ab[st:st + (t1 - t0), :, sf:sf + (f1 - f0)])
            if dy == 0:
                col_ref[0:1, r0:r0 + Ci, :] = zrow
            elif dy == 2:
                col_ref[T - 1:T, r0:r0 + Ci, :] = zrow
            if dx == 0:
                col_ref[:, r0:r0 + Ci, 0:1] = zlane
            elif dx == 2:
                col_ref[:, r0:r0 + Ci, F - 1:F] = zlane


# ----------------------------------------------------------------- fused block kernel
def tfc_tdf_block_kernel(x_ref, n1g_ref, n1b_ref, w1_ref,
                         n2g_ref, n2b_ref, l1_ref,
                         n3g_ref, n3b_ref, l2_ref,
                         n4g_ref, n4b_ref, w2sc_ref,
                         o_ref, col_ref, y_ref):
    x = x_ref[...]                                           # (T, Cin, F) f32
    T, Cin, F = x.shape
    Cc = y_ref.shape[1]
    Fb = l1_ref.shape[1]
    K1 = 9 * Cin
    K2 = 9 * Cc + Cin

    # --- tfc1: InstanceNorm -> GELU -> 3x3 conv (im2col + per-row MXU matmul) ------
    a = _gelu(_inst_norm(x, n1g_ref[...], n1b_ref[...]))
    _im2col(col_ref, a.astype(jnp.bfloat16), 0)
    w1 = w1_ref[...]                                         # (Cc, 9*Cin) bf16

    def conv1_row(t, carry):
        y_ref[t] = jnp.dot(w1, col_ref[t, 0:K1, :],
                           preferred_element_type=jnp.float32)
        return carry
    lax.fori_loop(0, T, conv1_row, 0)

    # --- TDF branch + residual (bf16 MXU operands, f32 accumulation) ----------------
    y = y_ref[...]                                           # (T, Cc, F) f32
    t1 = _gelu(_inst_norm(y, n2g_ref[...], n2b_ref[...]))
    h = jnp.dot(t1.reshape(T * Cc, F).astype(jnp.bfloat16), l1_ref[...],
                preferred_element_type=jnp.float32).reshape(T, Cc, Fb)
    h = _gelu(_inst_norm(h, n3g_ref[...], n3b_ref[...]))
    t2 = jnp.dot(h.reshape(T * Cc, Fb).astype(jnp.bfloat16), l2_ref[...],
                 preferred_element_type=jnp.float32).reshape(T, Cc, F)
    y = y + t2

    # --- tfc2: InstanceNorm -> GELU -> 3x3 conv, with the 1x1 shortcut folded into
    #     the same contraction: weights = [W2 | W_shortcut], K = 9*Cc + Cin ----------
    z = _gelu(_inst_norm(y, n4g_ref[...], n4b_ref[...]))
    _im2col(col_ref, z.astype(jnp.bfloat16), 0)
    col_ref[:, 9 * Cc:K2, :] = x.astype(jnp.bfloat16)        # shortcut input rows
    w2 = w2sc_ref[...]                                       # (Cc, 9*Cc + Cin) bf16

    def conv2_row(t, carry):
        o_ref[t] = jnp.dot(w2, col_ref[t, 0:K2, :],
                           preferred_element_type=jnp.float32).astype(o_ref.dtype)
        return carry
    lax.fori_loop(0, T, conv2_row, 0)


# ------------------------------------------------------------------------ wrappers
def _vmem_limit_bytes():
    # ~3/4 of physical VMEM: ~48 MiB on v7x (64 MiB/TC), ~96 MiB on v5e/v6e (128 MiB).
    try:
        return int(pltpu.get_tpu_info().vmem_capacity_bytes) * 3 // 4
    except Exception:
        return 48 * 1024 * 1024


def tfc_tdf_block(x_btcf, p):
    # x_btcf: (B, T, C_in, F) -- kernel-internal layout (F on the lane axis).
    B, T, Cin, F = x_btcf.shape
    Cc = p["w1c"].shape[0]
    Fb = p["lin1T"].shape[1]
    Kmax = max(9 * Cin, 9 * Cc + Cin)

    vec = lambda n: pl.BlockSpec((n, 1), lambda i: (0, 0))
    mat = lambda r, c: pl.BlockSpec((r, c), lambda i: (0, 0))

    return pl.pallas_call(
        tfc_tdf_block_kernel,
        out_shape=jax.ShapeDtypeStruct((B, T, Cc, F), x_btcf.dtype),
        grid=(B,),
        in_specs=[
            pl.BlockSpec((None, T, Cin, F), lambda i: (i, 0, 0, 0)),
            vec(Cin), vec(Cin), mat(Cc, 9 * Cin),
            vec(Cc), vec(Cc), mat(F, Fb),
            vec(Cc), vec(Cc), mat(Fb, F),
            vec(Cc), vec(Cc), mat(Cc, 9 * Cc + Cin),
        ],
        out_specs=pl.BlockSpec((None, T, Cc, F), lambda i: (i, 0, 0, 0)),
        scratch_shapes=[
            pltpu.VMEM((T, Kmax, F), jnp.bfloat16),   # im2col buffer (bf16 MXU operand)
            pltpu.VMEM((T, Cc, F), jnp.float32),      # tfc1 output / TDF branch input
        ],
        compiler_params=pltpu.CompilerParams(
            dimension_semantics=("parallel",),
            vmem_limit_bytes=_vmem_limit_bytes()),
    )(x_btcf, p["n1_g"], p["n1_b"], p["w1c"],
      p["n2_g"], p["n2_b"], p["lin1T"],
      p["n3_g"], p["n3_b"], p["lin2T"],
      p["n4_g"], p["n4_b"], p["w2sc"])


def tfc_tdf_forward(x, prepped):
    # x: NCHW (B, C, T, F), matching PyTorch.  One transpose into the kernel-internal
    # (B, T, C, F) layout for the whole network, one back at the end.
    y = jnp.transpose(x, (0, 2, 1, 3))
    for p in prepped:
        y = tfc_tdf_block(y, p)
    return jnp.transpose(y, (0, 2, 1, 3))


def prep_params(params):
    """One-time weight re-layout + bf16 cast of all MXU operands (hoisted)."""
    prepped = []
    for p in params:
        co, ci = p["conv1"].shape[:2]
        # OIHW -> (Cout, 9*Cin) with flat index (dy*3+dx)*Cin + ci, matching _im2col.
        w1c = jnp.transpose(p["conv1"], (0, 2, 3, 1)).reshape(co, 9 * ci)
        w2c = jnp.transpose(p["conv2"], (0, 2, 3, 1)).reshape(co, 9 * co)
        wsc = p["shortcut"][:, :, 0, 0]                       # (Cout, Cin)
        prepped.append({
            "n1_g": p["n1_g"].reshape(ci, 1), "n1_b": p["n1_b"].reshape(ci, 1),
            "w1c": w1c.astype(jnp.bfloat16),
            "n2_g": p["n2_g"].reshape(co, 1), "n2_b": p["n2_b"].reshape(co, 1),
            "lin1T": p["lin1"].T.astype(jnp.bfloat16),        # (F, F//bn)
            "n3_g": p["n3_g"].reshape(co, 1), "n3_b": p["n3_b"].reshape(co, 1),
            "lin2T": p["lin2"].T.astype(jnp.bfloat16),        # (F//bn, F)
            "n4_g": p["n4_g"].reshape(co, 1), "n4_b": p["n4_b"].reshape(co, 1),
            "w2sc": jnp.concatenate([w2c, wsc], axis=1).astype(jnp.bfloat16),
        })
    return prepped


# ------------------------------------------------------------------------- reference
def ref_forward(x, params):
    # Full-f32, Precision.HIGHEST reference of the PyTorch module.
    def instnorm(x, g, b):
        m = x.mean(axis=(2, 3), keepdims=True)
        v = ((x - m) ** 2).mean(axis=(2, 3), keepdims=True)
        return (x - m) * lax.rsqrt(v + EPS) * g.reshape(1, -1, 1, 1) + b.reshape(1, -1, 1, 1)

    def conv(x, w, pad):
        return lax.conv_general_dilated(
            x, w, (1, 1), [(pad, pad), (pad, pad)],
            dimension_numbers=("NCHW", "OIHW", "NCHW"),
            precision=lax.Precision.HIGHEST)

    for p in params:
        s = conv(x, p["shortcut"], 0)
        x = conv(_gelu(instnorm(x, p["n1_g"], p["n1_b"])), p["conv1"], 1)
        t = _gelu(instnorm(x, p["n2_g"], p["n2_b"]))
        t = jnp.einsum("bchf,gf->bchg", t, p["lin1"], precision=lax.Precision.HIGHEST)
        t = _gelu(instnorm(t, p["n3_g"], p["n3_b"]))
        t = jnp.einsum("bchf,gf->bchg", t, p["lin2"], precision=lax.Precision.HIGHEST)
        x = x + t
        x = conv(_gelu(instnorm(x, p["n4_g"], p["n4_b"])), p["conv2"], 1)
        x = x + s
    return x


# ---------------------------------------------------------------------------- params
def init_params(key, in_c, c, l, f, bn):
    params = []
    ci = in_c
    for _ in range(l):
        key, *ks = jax.random.split(key, 14)
        nrm = lambda k, shape, s: s * jax.random.normal(k, shape, jnp.float32)
        p = {
            "n1_g": 1.0 + nrm(ks[0], (ci,), 0.1), "n1_b": nrm(ks[1], (ci,), 0.1),
            "conv1": nrm(ks[2], (c, ci, 3, 3), 0.25),
            "n2_g": 1.0 + nrm(ks[3], (c,), 0.1), "n2_b": nrm(ks[4], (c,), 0.1),
            "lin1": nrm(ks[5], (f // bn, f), 0.25),
            "n3_g": 1.0 + nrm(ks[6], (c,), 0.1), "n3_b": nrm(ks[7], (c,), 0.1),
            "lin2": nrm(ks[8], (f, f // bn), 0.25),
            "n4_g": 1.0 + nrm(ks[9], (c,), 0.1), "n4_b": nrm(ks[10], (c,), 0.1),
            "conv2": nrm(ks[11], (c, c, 3, 3), 0.25),
            "shortcut": nrm(ks[12], (c, ci, 1, 1), 0.25),
        }
        params.append(p)
        ci = c
    return params


# ------------------------------------------------------------------------------ main
if __name__ == "__main__":
    B, in_c, c, l, f, bn = 2, 4, 8, 2, 16, 4
    T = 16
    key = jax.random.PRNGKey(0)
    kx, kp = jax.random.split(key)
    x = jax.random.normal(kx, (B, in_c, T, f), jnp.float32)    # NCHW, last dim = f
    params = init_params(kp, in_c, c, l, f, bn)

    prepped = prep_params(params)                              # one-time weight prep
    out = jax.block_until_ready(jax.jit(tfc_tdf_forward)(x, prepped))

    ref = jax.block_until_ready(ref_forward(x, params))
    assert out.shape == (B, c, T, f), (out.shape, (B, c, T, f))

    # Kernel uses bf16 MXU operands with f32 accumulation; the reference is full-f32
    # Precision.HIGHEST, so allow bf16-scale deviations (expected ~0.5% relative).
    max_err = float(jnp.max(jnp.abs(out - ref)))
    rel_fro = float(jnp.linalg.norm(out - ref) / jnp.linalg.norm(ref))
    if not (rel_fro < 3e-2 and max_err < 1e-1):
        raise AssertionError(
            f"Pallas result mismatch vs reference: max_abs_err={max_err:.5f}, "
            f"rel_frobenius={rel_fro:.5f}")
    print("KERNEL_OK")
</pallas_src>

<mosaic_0001>
module attributes {stable_mosaic.version = 11 : i64} {
  func.func @tfc_tdf_block_kernel(%arg0: i32, %arg1: memref<1x16x8x16xf32, #tpu.memory_space<vmem>>, %arg2: memref<8x1xf32, #tpu.memory_space<vmem>>, %arg3: memref<8x1xf32, #tpu.memory_space<vmem>>, %arg4: memref<8x72xbf16, #tpu.memory_space<vmem>>, %arg5: memref<8x1xf32, #tpu.memory_space<vmem>>, %arg6: memref<8x1xf32, #tpu.memory_space<vmem>>, %arg7: memref<16x4xbf16, #tpu.memory_space<vmem>>, %arg8: memref<8x1xf32, #tpu.memory_space<vmem>>, %arg9: memref<8x1xf32, #tpu.memory_space<vmem>>, %arg10: memref<4x16xbf16, #tpu.memory_space<vmem>>, %arg11: memref<8x1xf32, #tpu.memory_space<vmem>>, %arg12: memref<8x1xf32, #tpu.memory_space<vmem>>, %arg13: memref<8x80xbf16, #tpu.memory_space<vmem>>, %arg14: memref<1x16x8x16xf32, #tpu.memory_space<vmem>>, %arg15: memref<16x80x16xbf16, #tpu.memory_space<vmem>>, %arg16: memref<16x8x16xf32, #tpu.memory_space<vmem>>) attributes {dimension_semantics = [#tpu.dimension_semantics<parallel>], iteration_bounds = array<i64: 2>, scalar_prefetch = 0 : i64, scratch_operands = 2 : i64, tpu.core_type = #tpu.core_type<tc>, window_params = [{transform_indices = @transform_0, window_bounds = array<i64: 1, 16, 8, 16>}, {pipeline_mode = #tpu.pipeline_mode<synchronous>, transform_indices = @transform_1, window_bounds = array<i64: 8, 1>}, {pipeline_mode = #tpu.pipeline_mode<synchronous>, transform_indices = @transform_2, window_bounds = array<i64: 8, 1>}, {pipeline_mode = #tpu.pipeline_mode<synchronous>, transform_indices = @transform_3, window_bounds = array<i64: 8, 72>}, {pipeline_mode = #tpu.pipeline_mode<synchronous>, transform_indices = @transform_4, window_bounds = array<i64: 8, 1>}, {pipeline_mode = #tpu.pipeline_mode<synchronous>, transform_indices = @transform_5, window_bounds = array<i64: 8, 1>}, {pipeline_mode = #tpu.pipeline_mode<synchronous>, transform_indices = @transform_6, window_bounds = array<i64: 16, 4>}, {pipeline_mode = #tpu.pipeline_mode<synchronous>, transform_indices = @transform_7, window_bounds = array<i64: 8, 1>}, {pipeline_mode = #tpu.pipeline_mode<synchronous>, transform_indices = @transform_8, window_bounds = array<i64: 8, 1>}, {pipeline_mode = #tpu.pipeline_mode<synchronous>, transform_indices = @transform_9, window_bounds = array<i64: 4, 16>}, {pipeline_mode = #tpu.pipeline_mode<synchronous>, transform_indices = @transform_10, window_bounds = array<i64: 8, 1>}, {pipeline_mode = #tpu.pipeline_mode<synchronous>, transform_indices = @transform_11, window_bounds = array<i64: 8, 1>}, {pipeline_mode = #tpu.pipeline_mode<synchronous>, transform_indices = @transform_12, window_bounds = array<i64: 8, 80>}, {transform_indices = @transform_13, window_bounds = array<i64: 1, 16, 8, 16>}]} {
    %c0 = arith.constant 0 : index
    %c0_0 = arith.constant 0 : index
    %c0_1 = arith.constant 0 : index
    %c0_2 = arith.constant 0 : index
    %0 = vector.load %arg1[%c0, %c0_0, %c0_1, %c0_2] : memref<1x16x8x16xf32, #tpu.memory_space<vmem>>, vector<1x16x8x16xf32>
    %1 = vector.shape_cast %0 : vector<1x16x8x16xf32> to vector<16x8x16xf32>
    %c0_3 = arith.constant 0 : index
    %c0_4 = arith.constant 0 : index
    %2 = vector.load %arg2[%c0_3, %c0_4] : memref<8x1xf32, #tpu.memory_space<vmem>>, vector<8x1xf32>
    %c0_5 = arith.constant 0 : index
    %c0_6 = arith.constant 0 : index
    %3 = vector.load %arg3[%c0_5, %c0_6] : memref<8x1xf32, #tpu.memory_space<vmem>>, vector<8x1xf32>
    %cst = arith.constant dense<0.000000e+00> : vector<16x8xf32>
    %4 = vector.multi_reduction <add>, %1, %cst [2] : vector<16x8x16xf32> to vector<16x8xf32>
    %5 = vector.shape_cast %4 : vector<16x8xf32> to vector<16x8x1xf32>
    %cst_7 = arith.constant dense<0.000000e+00> : vector<8x1xf32>
    %6 = vector.multi_reduction <add>, %5, %cst_7 [0] : vector<16x8x1xf32> to vector<8x1xf32>
    %7 = vector.shape_cast %6 : vector<8x1xf32> to vector<1x8x1xf32>
    %8 = arith.mulf %1, %1 : vector<16x8x16xf32>
    %cst_8 = arith.constant dense<0.000000e+00> : vector<16x8xf32>
    %9 = vector.multi_reduction <add>, %8, %cst_8 [2] : vector<16x8x16xf32> to vector<16x8xf32>
    %10 = vector.shape_cast %9 : vector<16x8xf32> to vector<16x8x1xf32>
    %cst_9 = arith.constant dense<0.000000e+00> : vector<8x1xf32>
    %11 = vector.multi_reduction <add>, %10, %cst_9 [0] : vector<16x8x1xf32> to vector<8x1xf32>
    %12 = vector.shape_cast %11 : vector<8x1xf32> to vector<1x8x1xf32>
    %cst_10 = arith.constant 3.906250e-03 : f32
    %13 = vector.broadcast %cst_10 : f32 to vector<1x8x1xf32>
    %14 = arith.mulf %7, %13 : vector<1x8x1xf32>
    %cst_11 = arith.constant 3.906250e-03 : f32
    %15 = vector.broadcast %cst_11 : f32 to vector<1x8x1xf32>
    %16 = arith.mulf %12, %15 : vector<1x8x1xf32>
    %17 = arith.mulf %14, %14 : vector<1x8x1xf32>
    %18 = arith.subf %16, %17 : vector<1x8x1xf32>
    %cst_12 = arith.constant 0.000000e+00 : f32
    %19 = vector.broadcast %cst_12 : f32 to vector<1x8x1xf32>
    %20 = arith.maximumf %18, %19 : vector<1x8x1xf32>
    %21 = vector.broadcast %14 : vector<1x8x1xf32> to vector<16x8x16xf32>
    %22 = arith.subf %1, %21 : vector<16x8x16xf32>
    %cst_13 = arith.constant 9.99999974E-6 : f32
    %23 = vector.broadcast %cst_13 : f32 to vector<1x8x1xf32>
    %24 = arith.addf %20, %23 : vector<1x8x1xf32>
    %25 = math.rsqrt %24 : vector<1x8x1xf32>
    %26 = vector.broadcast %25 : vector<1x8x1xf32> to vector<16x8x16xf32>
    %27 = arith.mulf %22, %26 : vector<16x8x16xf32>
    %28 = vector.shape_cast %2 : vector<8x1xf32> to vector<1x8x1xf32>
    %29 = vector.broadcast %28 : vector<1x8x1xf32> to vector<16x8x16xf32>
    %30 = arith.mulf %27, %29 : vector<16x8x16xf32>
    %31 = vector.shape_cast %3 : vector<8x1xf32> to vector<1x8x1xf32>
    %32 = vector.broadcast %31 : vector<1x8x1xf32> to vector<16x8x16xf32>
    %33 = arith.addf %30, %32 : vector<16x8x16xf32>
    %34 = arith.mulf %33, %33 : vector<16x8x16xf32>
    %35 = arith.mulf %33, %34 : vector<16x8x16xf32>
    %cst_14 = arith.constant 4.471500e-02 : f32
    %36 = vector.broadcast %cst_14 : f32 to vector<16x8x16xf32>
    %37 = arith.mulf %36, %35 : vector<16x8x16xf32>
    %38 = arith.addf %33, %37 : vector<16x8x16xf32>
    %cst_15 = arith.constant 0.797884583 : f32
    %39 = vector.broadcast %cst_15 : f32 to vector<16x8x16xf32>
    %40 = arith.mulf %39, %38 : vector<16x8x16xf32>
    %41 = math.tanh %40 : vector<16x8x16xf32>
    %cst_16 = arith.constant 1.000000e+00 : f32
    %42 = vector.broadcast %cst_16 : f32 to vector<16x8x16xf32>
    %43 = arith.addf %42, %41 : vector<16x8x16xf32>
    %cst_17 = arith.constant 5.000000e-01 : f32
    %44 = vector.broadcast %cst_17 : f32 to vector<16x8x16xf32>
    %45 = arith.mulf %44, %43 : vector<16x8x16xf32>
    %46 = arith.mulf %33, %45 : vector<16x8x16xf32>
    %47 = arith.truncf %46 : vector<16x8x16xf32> to vector<16x8x16xbf16>
    %cst_18 = arith.constant 0.000000e+00 : bf16
    %48 = vector.broadcast %cst_18 : bf16 to vector<1x8x16xbf16>
    %cst_19 = arith.constant 0.000000e+00 : bf16
    %49 = vector.broadcast %cst_19 : bf16 to vector<16x8x1xbf16>
    %50 = vector.extract_strided_slice %47 {offsets = [0, 0, 0], sizes = [15, 8, 15], strides = [1, 1, 1]} : vector<16x8x16xbf16> to vector<15x8x15xbf16>
    %c1 = arith.constant 1 : index
    %c0_20 = arith.constant 0 : index
    %c1_21 = arith.constant 1 : index
    %51 = vector.load %arg15[%c1, %c0_20, %c1_21] : memref<16x80x16xbf16, #tpu.memory_space<vmem>>, vector<15x8x15xbf16>
    tpu.vector_store %arg15[%c1, %c0_20, %c1_21], %50 {strides = array<i32>} : memref<16x80x16xbf16, #tpu.memory_space<vmem>>, vector<15x8x15xbf16>,
    %c0_22 = arith.constant 0 : index
    %c0_23 = arith.constant 0 : index
    %c0_24 = arith.constant 0 : index
    %52 = vector.load %arg15[%c0_22, %c0_23, %c0_24] : memref<16x80x16xbf16, #tpu.memory_space<vmem>>, vector<1x8x16xbf16>
    tpu.vector_store %arg15[%c0_22, %c0_23, %c0_24], %48 {strides = array<i32>} : memref<16x80x16xbf16, #tpu.memory_space<vmem>>, vector<1x8x16xbf16>,
    %c0_25 = arith.constant 0 : index
    %c0_26 = arith.constant 0 : index
    %c0_27 = arith.constant 0 : index
    %53 = vector.load %arg15[%c0_25, %c0_26, %c0_27] : memref<16x80x16xbf16, #tpu.memory_space<vmem>>, vector<16x8x1xbf16>
    tpu.vector_store %arg15[%c0_25, %c0_26, %c0_27], %49 {strides = array<i32>} : memref<16x80x16xbf16, #tpu.memory_space<vmem>>, vector<16x8x1xbf16>,
    %54 = vector.extract_strided_slice %47 {offsets = [0, 0, 0], sizes = [15, 8, 16], strides = [1, 1, 1]} : vector<16x8x16xbf16> to vector<15x8x16xbf16>
    %c1_28 = arith.constant 1 : index
    %c8 = arith.constant 8 : index
    %c0_29 = arith.constant 0 : index
    %55 = vector.load %arg15[%c1_28, %c8, %c0_29] : memref<16x80x16xbf16, #tpu.memory_space<vmem>>, vector<15x8x16xbf16>
    tpu.vector_store %arg15[%c1_28, %c8, %c0_29], %54 {strides = array<i32>} : memref<16x80x16xbf16, #tpu.memory_space<vmem>>, vector<15x8x16xbf16>,
    %c0_30 = arith.constant 0 : index
    %c8_31 = arith.constant 8 : index
    %c0_32 = arith.constant 0 : index
    %56 = vector.load %arg15[%c0_30, %c8_31, %c0_32] : memref<16x80x16xbf16, #tpu.memory_space<vmem>>, vector<1x8x16xbf16>
    tpu.vector_store %arg15[%c0_30, %c8_31, %c0_32], %48 {strides = array<i32>} : memref<16x80x16xbf16, #tpu.memory_space<vmem>>, vector<1x8x16xbf16>,
    %57 = vector.extract_strided_slice %47 {offsets = [0, 0, 1], sizes = [15, 8, 15], strides = [1, 1, 1]} : vector<16x8x16xbf16> to vector<15x8x15xbf16>
    %c1_33 = arith.constant 1 : index
    %c16 = arith.constant 16 : index
    %c0_34 = arith.constant 0 : index
    %58 = vector.load %arg15[%c1_33, %c16, %c0_34] : memref<16x80x16xbf16, #tpu.memory_space<vmem>>, vector<15x8x15xbf16>
    tpu.vector_store %arg15[%c1_33, %c16, %c0_34], %57 {strides = array<i32>} : memref<16x80x16xbf16, #tpu.memory_space<vmem>>, vector<15x8x15xbf16>,
    %c0_35 = arith.constant 0 : index
    %c16_36 = arith.constant 16 : index
    %c0_37 = arith.constant 0 : index
    %59 = vector.load %arg15[%c0_35, %c16_36, %c0_37] : memref<16x80x16xbf16, #tpu.memory_space<vmem>>, vector<1x8x16xbf16>
    tpu.vector_store %arg15[%c0_35, %c16_36, %c0_37], %48 {strides = array<i32>} : memref<16x80x16xbf16, #tpu.memory_space<vmem>>, vector<1x8x16xbf16>,
    %c0_38 = arith.constant 0 : index
    %c16_39 = arith.constant 16 : index
    %c15 = arith.constant 15 : index
    %60 = vector.load %arg15[%c0_38, %c16_39, %c15] : memref<16x80x16xbf16, #tpu.memory_space<vmem>>, vector<16x8x1xbf16>
    tpu.vector_store %arg15[%c0_38, %c16_39, %c15], %49 {strides = array<i32>} : memref<16x80x16xbf16, #tpu.memory_space<vmem>>, vector<16x8x1xbf16>,
    %61 = vector.extract_strided_slice %47 {offsets = [0, 0, 0], sizes = [16, 8, 15], strides = [1, 1, 1]} : vector<16x8x16xbf16> to vector<16x8x15xbf16>
    %c0_40 = arith.constant 0 : index
    %c24 = arith.constant 24 : index
    %c1_41 = arith.constant 1 : index
    %62 = vector.load %arg15[%c0_40, %c24, %c1_41] : memref<16x80x16xbf16, #tpu.memory_space<vmem>>, vector<16x8x15xbf16>
    tpu.vector_store %arg15[%c0_40, %c24, %c1_41], %61 {strides = array<i32>} : memref<16x80x16xbf16, #tpu.memory_space<vmem>>, vector<16x8x15xbf16>,
    %c0_42 = arith.constant 0 : index
    %c24_43 = arith.constant 24 : index
    %c0_44 = arith.constant 0 : index
    %63 = vector.load %arg15[%c0_42, %c24_43, %c0_44] : memref<16x80x16xbf16, #tpu.memory_space<vmem>>, vector<16x8x1xbf16>
    tpu.vector_store %arg15[%c0_42, %c24_43, %c0_44], %49 {strides = array<i32>} : memref<16x80x16xbf16, #tpu.memory_space<vmem>>, vector<16x8x1xbf16>,
    %c0_45 = arith.constant 0 : index
    %c32 = arith.constant 32 : index
    %c0_46 = arith.constant 0 : index
    %64 = vector.load %arg15[%c0_45, %c32, %c0_46] : memref<16x80x16xbf16, #tpu.memory_space<vmem>>, vector<16x8x16xbf16>
    tpu.vector_store %arg15[%c0_45, %c32, %c0_46], %47 {strides = array<i32>} : memref<16x80x16xbf16, #tpu.memory_space<vmem>>, vector<16x8x16xbf16>,
    %65 = vector.extract_strided_slice %47 {offsets = [0, 0, 1], sizes = [16, 8, 15], strides = [1, 1, 1]} : vector<16x8x16xbf16> to vector<16x8x15xbf16>
    %c0_47 = arith.constant 0 : index
    %c40 = arith.constant 40 : index
    %c0_48 = arith.constant 0 : index
    %66 = vector.load %arg15[%c0_47, %c40, %c0_48] : memref<16x80x16xbf16, #tpu.memory_space<vmem>>, vector<16x8x15xbf16>
    tpu.vector_store %arg15[%c0_47, %c40, %c0_48], %65 {strides = array<i32>} : memref<16x80x16xbf16, #tpu.memory_space<vmem>>, vector<16x8x15xbf16>,
    %c0_49 = arith.constant 0 : index
    %c40_50 = arith.constant 40 : index
    %c15_51 = arith.constant 15 : index
    %67 = vector.load %arg15[%c0_49, %c40_50, %c15_51] : memref<16x80x16xbf16, #tpu.memory_space<vmem>>, vector<16x8x1xbf16>
    tpu.vector_store %arg15[%c0_49, %c40_50, %c15_51], %49 {strides = array<i32>} : memref<16x80x16xbf16, #tpu.memory_space<vmem>>, vector<16x8x1xbf16>,
    %68 = vector.extract_strided_slice %47 {offsets = [1, 0, 0], sizes = [15, 8, 15], strides = [1, 1, 1]} : vector<16x8x16xbf16> to vector<15x8x15xbf16>
    %c0_52 = arith.constant 0 : index
    %c48 = arith.constant 48 : index
    %c1_53 = arith.constant 1 : index
    %69 = vector.load %arg15[%c0_52, %c48, %c1_53] : memref<16x80x16xbf16, #tpu.memory_space<vmem>>, vector<15x8x15xbf16>
    tpu.vector_store %arg15[%c0_52, %c48, %c1_53], %68 {strides = array<i32>} : memref<16x80x16xbf16, #tpu.memory_space<vmem>>, vector<15x8x15xbf16>,
    %c15_54 = arith.constant 15 : index
    %c48_55 = arith.constant 48 : index
    %c0_56 = arith.constant 0 : index
    %70 = vector.load %arg15[%c15_54, %c48_55, %c0_56] : memref<16x80x16xbf16, #tpu.memory_space<vmem>>, vector<1x8x16xbf16>
    tpu.vector_store %arg15[%c15_54, %c48_55, %c0_56], %48 {strides = array<i32>} : memref<16x80x16xbf16, #tpu.memory_space<vmem>>, vector<1x8x16xbf16>,
    %c0_57 = arith.constant 0 : index
    %c48_58 = arith.constant 48 : index
    %c0_59 = arith.constant 0 : index
    %71 = vector.load %arg15[%c0_57, %c48_58, %c0_59] : memref<16x80x16xbf16, #tpu.memory_space<vmem>>, vector<16x8x1xbf16>
    tpu.vector_store %arg15[%c0_57, %c48_58, %c0_59], %49 {strides = array<i32>} : memref<16x80x16xbf16, #tpu.memory_space<vmem>>, vector<16x8x1xbf16>,
    %72 = vector.extract_strided_slice %47 {offsets = [1, 0, 0], sizes = [15, 8, 16], strides = [1, 1, 1]} : vector<16x8x16xbf16> to vector<15x8x16xbf16>
    %c0_60 = arith.constant 0 : index
    %c56 = arith.constant 56 : index
    %c0_61 = arith.constant 0 : index
    %73 = vector.load %arg15[%c0_60, %c56, %c0_61] : memref<16x80x16xbf16, #tpu.memory_space<vmem>>, vector<15x8x16xbf16>
    tpu.vector_store %arg15[%c0_60, %c56, %c0_61], %72 {strides = array<i32>} : memref<16x80x16xbf16, #tpu.memory_space<vmem>>, vector<15x8x16xbf16>,
    %c15_62 = arith.constant 15 : index
    %c56_63 = arith.constant 56 : index
    %c0_64 = arith.constant 0 : index
    %74 = vector.load %arg15[%c15_62, %c56_63, %c0_64] : memref<16x80x16xbf16, #tpu.memory_space<vmem>>, vector<1x8x16xbf16>
    tpu.vector_store %arg15[%c15_62, %c56_63, %c0_64], %48 {strides = array<i32>} : memref<16x80x16xbf16, #tpu.memory_space<vmem>>, vector<1x8x16xbf16>,
    %75 = vector.extract_strided_slice %47 {offsets = [1, 0, 1], sizes = [15, 8, 15], strides = [1, 1, 1]} : vector<16x8x16xbf16> to vector<15x8x15xbf16>
    %c0_65 = arith.constant 0 : index
    %c64 = arith.constant 64 : index
    %c0_66 = arith.constant 0 : index
    %76 = vector.load %arg15[%c0_65, %c64, %c0_66] : memref<16x80x16xbf16, #tpu.memory_space<vmem>>, vector<15x8x15xbf16>
    tpu.vector_store %arg15[%c0_65, %c64, %c0_66], %75 {strides = array<i32>} : memref<16x80x16xbf16, #tpu.memory_space<vmem>>, vector<15x8x15xbf16>,
    %c15_67 = arith.constant 15 : index
    %c64_68 = arith.constant 64 : index
    %c0_69 = arith.constant 0 : index
    %77 = vector.load %arg15[%c15_67, %c64_68, %c0_69] : memref<16x80x16xbf16, #tpu.memory_space<vmem>>, vector<1x8x16xbf16>
    tpu.vector_store %arg15[%c15_67, %c64_68, %c0_69], %48 {strides = array<i32>} : memref<16x80x16xbf16, #tpu.memory_space<vmem>>, vector<1x8x16xbf16>,
    %c0_70 = arith.constant 0 : index
    %c64_71 = arith.constant 64 : index
    %c15_72 = arith.constant 15 : index
    %78 = vector.load %arg15[%c0_70, %c64_71, %c15_72] : memref<16x80x16xbf16, #tpu.memory_space<vmem>>, vector<16x8x1xbf16>
    tpu.vector_store %arg15[%c0_70, %c64_71, %c15_72], %49 {strides = array<i32>} : memref<16x80x16xbf16, #tpu.memory_space<vmem>>, vector<16x8x1xbf16>,
    %c0_73 = arith.constant 0 : index
    %c0_74 = arith.constant 0 : index
    %79 = vector.load %arg4[%c0_73, %c0_74] : memref<8x72xbf16, #tpu.memory_space<vmem>>, vector<8x72xbf16>
    %c0_i32 = arith.constant 0 : i32
    %c16_i32 = arith.constant 16 : i32
    %80 = arith.addi %c0_i32, %c16_i32 : i32
    %c1_i32 = arith.constant 1 : i32
    scf.for %arg17 = %c0_i32 to %80 step %c1_i32  : i32 {
      %264 = arith.index_cast %arg17 : i32 to index
      %c0_206 = arith.constant 0 : index
      %c0_207 = arith.constant 0 : index
      %265 = vector.load %arg15[%264, %c0_206, %c0_207] : memref<16x80x16xbf16, #tpu.memory_space<vmem>>, vector<1x72x16xbf16>
      %266 = vector.shape_cast %265 : vector<1x72x16xbf16> to vector<72x16xbf16>
      %cst_208 = arith.constant dense<0.000000e+00> : vector<8x16xf32>
      %267 = tpu.matmul %79, %266, %cst_208 {dimension_numbers = #tpu.dot_dimension_numbers<[1], [0], [0], [1], [0, 0, 1, 1], [], []>} : vector<8x72xbf16>, vector<72x16xbf16>, vector<8x16xf32> -> vector<8x16xf32>
      %268 = arith.index_cast %arg17 : i32 to index
      %c0_209 = arith.constant 0 : index
      %c0_210 = arith.constant 0 : index
      %269 = vector.load %arg16[%268, %c0_209, %c0_210] : memref<16x8x16xf32, #tpu.memory_space<vmem>>, vector<1x8x16xf32>
      %270 = vector.shape_cast %269 : vector<1x8x16xf32> to vector<8x16xf32>
      %271 = vector.shape_cast %267 : vector<8x16xf32> to vector<1x8x16xf32>
      tpu.vector_store %arg16[%268, %c0_209, %c0_210], %271 {strides = array<i32>} : memref<16x8x16xf32, #tpu.memory_space<vmem>>, vector<1x8x16xf32>,
    }
    %c16_i32_75 = arith.constant 16 : i32
    %c0_76 = arith.constant 0 : index
    %c0_77 = arith.constant 0 : index
    %c0_78 = arith.constant 0 : index
    %81 = vector.load %arg16[%c0_76, %c0_77, %c0_78] : memref<16x8x16xf32, #tpu.memory_space<vmem>>, vector<16x8x16xf32>
    %c0_79 = arith.constant 0 : index
    %c0_80 = arith.constant 0 : index
    %82 = vector.load %arg5[%c0_79, %c0_80] : memref<8x1xf32, #tpu.memory_space<vmem>>, vector<8x1xf32>
    %c0_81 = arith.constant 0 : index
    %c0_82 = arith.constant 0 : index
    %83 = vector.load %arg6[%c0_81, %c0_82] : memref<8x1xf32, #tpu.memory_space<vmem>>, vector<8x1xf32>
    %cst_83 = arith.constant dense<0.000000e+00> : vector<16x8xf32>
    %84 = vector.multi_reduction <add>, %81, %cst_83 [2] : vector<16x8x16xf32> to vector<16x8xf32>
    %85 = vector.shape_cast %84 : vector<16x8xf32> to vector<16x8x1xf32>
    %cst_84 = arith.constant dense<0.000000e+00> : vector<8x1xf32>
    %86 = vector.multi_reduction <add>, %85, %cst_84 [0] : vector<16x8x1xf32> to vector<8x1xf32>
    %87 = vector.shape_cast %86 : vector<8x1xf32> to vector<1x8x1xf32>
    %88 = arith.mulf %81, %81 : vector<16x8x16xf32>
    %cst_85 = arith.constant dense<0.000000e+00> : vector<16x8xf32>
    %89 = vector.multi_reduction <add>, %88, %cst_85 [2] : vector<16x8x16xf32> to vector<16x8xf32>
    %90 = vector.shape_cast %89 : vector<16x8xf32> to vector<16x8x1xf32>
    %cst_86 = arith.constant dense<0.000000e+00> : vector<8x1xf32>
    %91 = vector.multi_reduction <add>, %90, %cst_86 [0] : vector<16x8x1xf32> to vector<8x1xf32>
    %92 = vector.shape_cast %91 : vector<8x1xf32> to vector<1x8x1xf32>
    %cst_87 = arith.constant 3.906250e-03 : f32
    %93 = vector.broadcast %cst_87 : f32 to vector<1x8x1xf32>
    %94 = arith.mulf %87, %93 : vector<1x8x1xf32>
    %cst_88 = arith.constant 3.906250e-03 : f32
    %95 = vector.broadcast %cst_88 : f32 to vector<1x8x1xf32>
    %96 = arith.mulf %92, %95 : vector<1x8x1xf32>
    %97 = arith.mulf %94, %94 : vector<1x8x1xf32>
    %98 = arith.subf %96, %97 : vector<1x8x1xf32>
    %cst_89 = arith.constant 0.000000e+00 : f32
    %99 = vector.broadcast %cst_89 : f32 to vector<1x8x1xf32>
    %100 = arith.maximumf %98, %99 : vector<1x8x1xf32>
    %101 = vector.broadcast %94 : vector<1x8x1xf32> to vector<16x8x16xf32>
    %102 = arith.subf %81, %101 : vector<16x8x16xf32>
    %cst_90 = arith.constant 9.99999974E-6 : f32
    %103 = vector.broadcast %cst_90 : f32 to vector<1x8x1xf32>
    %104 = arith.addf %100, %103 : vector<1x8x1xf32>
    %105 = math.rsqrt %104 : vector<1x8x1xf32>
    %106 = vector.broadcast %105 : vector<1x8x1xf32> to vector<16x8x16xf32>
    %107 = arith.mulf %102, %106 : vector<16x8x16xf32>
    %108 = vector.shape_cast %82 : vector<8x1xf32> to vector<1x8x1xf32>
    %109 = vector.broadcast %108 : vector<1x8x1xf32> to vector<16x8x16xf32>
    %110 = arith.mulf %107, %109 : vector<16x8x16xf32>
    %111 = vector.shape_cast %83 : vector<8x1xf32> to vector<1x8x1xf32>
    %112 = vector.broadcast %111 : vector<1x8x1xf32> to vector<16x8x16xf32>
    %113 = arith.addf %110, %112 : vector<16x8x16xf32>
    %114 = arith.mulf %113, %113 : vector<16x8x16xf32>
    %115 = arith.mulf %113, %114 : vector<16x8x16xf32>
    %cst_91 = arith.constant 4.471500e-02 : f32
    %116 = vector.broadcast %cst_91 : f32 to vector<16x8x16xf32>
    %117 = arith.mulf %116, %115 : vector<16x8x16xf32>
    %118 = arith.addf %113, %117 : vector<16x8x16xf32>
    %cst_92 = arith.constant 0.797884583 : f32
    %119 = vector.broadcast %cst_92 : f32 to vector<16x8x16xf32>
    %120 = arith.mulf %119, %118 : vector<16x8x16xf32>
    %121 = math.tanh %120 : vector<16x8x16xf32>
    %cst_93 = arith.constant 1.000000e+00 : f32
    %122 = vector.broadcast %cst_93 : f32 to vector<16x8x16xf32>
    %123 = arith.addf %122, %121 : vector<16x8x16xf32>
    %cst_94 = arith.constant 5.000000e-01 : f32
    %124 = vector.broadcast %cst_94 : f32 to vector<16x8x16xf32>
    %125 = arith.mulf %124, %123 : vector<16x8x16xf32>
    %126 = arith.mulf %113, %125 : vector<16x8x16xf32>
    %127 = vector.shape_cast %126 : vector<16x8x16xf32> to vector<128x16xf32>
    %128 = arith.truncf %127 : vector<128x16xf32> to vector<128x16xbf16>
    %c0_95 = arith.constant 0 : index
    %c0_96 = arith.constant 0 : index
    %129 = vector.load %arg7[%c0_95, %c0_96] : memref<16x4xbf16, #tpu.memory_space<vmem>>, vector<16x4xbf16>
    %cst_97 = arith.constant dense<0.000000e+00> : vector<128x4xf32>
    %130 = tpu.matmul %128, %129, %cst_97 {dimension_numbers = #tpu.dot_dimension_numbers<[1], [0], [0], [1], [0, 0, 1, 1], [], []>} : vector<128x16xbf16>, vector<16x4xbf16>, vector<128x4xf32> -> vector<128x4xf32>
    %131 = vector.shape_cast %130 : vector<128x4xf32> to vector<16x8x4xf32>
    %c0_98 = arith.constant 0 : index
    %c0_99 = arith.constant 0 : index
    %132 = vector.load %arg8[%c0_98, %c0_99] : memref<8x1xf32, #tpu.memory_space<vmem>>, vector<8x1xf32>
    %c0_100 = arith.constant 0 : index
    %c0_101 = arith.constant 0 : index
    %133 = vector.load %arg9[%c0_100, %c0_101] : memref<8x1xf32, #tpu.memory_space<vmem>>, vector<8x1xf32>
    %cst_102 = arith.constant dense<0.000000e+00> : vector<16x8xf32>
    %134 = vector.multi_reduction <add>, %131, %cst_102 [2] : vector<16x8x4xf32> to vector<16x8xf32>
    %135 = vector.shape_cast %134 : vector<16x8xf32> to vector<16x8x1xf32>
    %cst_103 = arith.constant dense<0.000000e+00> : vector<8x1xf32>
    %136 = vector.multi_reduction <add>, %135, %cst_103 [0] : vector<16x8x1xf32> to vector<8x1xf32>
    %137 = vector.shape_cast %136 : vector<8x1xf32> to vector<1x8x1xf32>
    %138 = arith.mulf %131, %131 : vector<16x8x4xf32>
    %cst_104 = arith.constant dense<0.000000e+00> : vector<16x8xf32>
    %139 = vector.multi_reduction <add>, %138, %cst_104 [2] : vector<16x8x4xf32> to vector<16x8xf32>
    %140 = vector.shape_cast %139 : vector<16x8xf32> to vector<16x8x1xf32>
    %cst_105 = arith.constant dense<0.000000e+00> : vector<8x1xf32>
    %141 = vector.multi_reduction <add>, %140, %cst_105 [0] : vector<16x8x1xf32> to vector<8x1xf32>
    %142 = vector.shape_cast %141 : vector<8x1xf32> to vector<1x8x1xf32>
    %cst_106 = arith.constant 1.562500e-02 : f32
    %143 = vector.broadcast %cst_106 : f32 to vector<1x8x1xf32>
    %144 = arith.mulf %137, %143 : vector<1x8x1xf32>
    %cst_107 = arith.constant 1.562500e-02 : f32
    %145 = vector.broadcast %cst_107 : f32 to vector<1x8x1xf32>
    %146 = arith.mulf %142, %145 : vector<1x8x1xf32>
    %147 = arith.mulf %144, %144 : vector<1x8x1xf32>
    %148 = arith.subf %146, %147 : vector<1x8x1xf32>
    %cst_108 = arith.constant 0.000000e+00 : f32
    %149 = vector.broadcast %cst_108 : f32 to vector<1x8x1xf32>
    %150 = arith.maximumf %148, %149 : vector<1x8x1xf32>
    %151 = vector.broadcast %144 : vector<1x8x1xf32> to vector<16x8x4xf32>
    %152 = arith.subf %131, %151 : vector<16x8x4xf32>
    %cst_109 = arith.constant 9.99999974E-6 : f32
    %153 = vector.broadcast %cst_109 : f32 to vector<1x8x1xf32>
    %154 = arith.addf %150, %153 : vector<1x8x1xf32>
    %155 = math.rsqrt %154 : vector<1x8x1xf32>
    %156 = vector.broadcast %155 : vector<1x8x1xf32> to vector<16x8x4xf32>
    %157 = arith.mulf %152, %156 : vector<16x8x4xf32>
    %158 = vector.shape_cast %132 : vector<8x1xf32> to vector<1x8x1xf32>
    %159 = vector.broadcast %158 : vector<1x8x1xf32> to vector<16x8x4xf32>
    %160 = arith.mulf %157, %159 : vector<16x8x4xf32>
    %161 = vector.shape_cast %133 : vector<8x1xf32> to vector<1x8x1xf32>
    %162 = vector.broadcast %161 : vector<1x8x1xf32> to vector<16x8x4xf32>
    %163 = arith.addf %160, %162 : vector<16x8x4xf32>
    %164 = arith.mulf %163, %163 : vector<16x8x4xf32>
    %165 = arith.mulf %163, %164 : vector<16x8x4xf32>
    %cst_110 = arith.constant 4.471500e-02 : f32
    %166 = vector.broadcast %cst_110 : f32 to vector<16x8x4xf32>
    %167 = arith.mulf %166, %165 : vector<16x8x4xf32>
    %168 = arith.addf %163, %167 : vector<16x8x4xf32>
    %cst_111 = arith.constant 0.797884583 : f32
    %169 = vector.broadcast %cst_111 : f32 to vector<16x8x4xf32>
    %170 = arith.mulf %169, %168 : vector<16x8x4xf32>
    %171 = math.tanh %170 : vector<16x8x4xf32>
    %cst_112 = arith.constant 1.000000e+00 : f32
    %172 = vector.broadcast %cst_112 : f32 to vector<16x8x4xf32>
    %173 = arith.addf %172, %171 : vector<16x8x4xf32>
    %cst_113 = arith.constant 5.000000e-01 : f32
    %174 = vector.broadcast %cst_113 : f32 to vector<16x8x4xf32>
    %175 = arith.mulf %174, %173 : vector<16x8x4xf32>
    %176 = arith.mulf %163, %175 : vector<16x8x4xf32>
    %177 = vector.shape_cast %176 : vector<16x8x4xf32> to vector<128x4xf32>
    %178 = arith.truncf %177 : vector<128x4xf32> to vector<128x4xbf16>
    %c0_114 = arith.constant 0 : index
    %c0_115 = arith.constant 0 : index
    %179 = vector.load %arg10[%c0_114, %c0_115] : memref<4x16xbf16, #tpu.memory_space<vmem>>, vector<4x16xbf16>
    %cst_116 = arith.constant dense<0.000000e+00> : vector<128x16xf32>
    %180 = tpu.matmul %178, %179, %cst_116 {dimension_numbers = #tpu.dot_dimension_numbers<[1], [0], [0], [1], [0, 0, 1, 1], [], []>} : vector<128x4xbf16>, vector<4x16xbf16>, vector<128x16xf32> -> vector<128x16xf32>
    %181 = vector.shape_cast %180 : vector<128x16xf32> to vector<16x8x16xf32>
    %182 = arith.addf %81, %181 : vector<16x8x16xf32>
    %c0_117 = arith.constant 0 : index
    %c0_118 = arith.constant 0 : index
    %183 = vector.load %arg11[%c0_117, %c0_118] : memref<8x1xf32, #tpu.memory_space<vmem>>, vector<8x1xf32>
    %c0_119 = arith.constant 0 : index
    %c0_120 = arith.constant 0 : index
    %184 = vector.load %arg12[%c0_119, %c0_120] : memref<8x1xf32, #tpu.memory_space<vmem>>, vector<8x1xf32>
    %cst_121 = arith.constant dense<0.000000e+00> : vector<16x8xf32>
    %185 = vector.multi_reduction <add>, %182, %cst_121 [2] : vector<16x8x16xf32> to vector<16x8xf32>
    %186 = vector.shape_cast %185 : vector<16x8xf32> to vector<16x8x1xf32>
    %cst_122 = arith.constant dense<0.000000e+00> : vector<8x1xf32>
    %187 = vector.multi_reduction <add>, %186, %cst_122 [0] : vector<16x8x1xf32> to vector<8x1xf32>
    %188 = vector.shape_cast %187 : vector<8x1xf32> to vector<1x8x1xf32>
    %189 = arith.mulf %182, %182 : vector<16x8x16xf32>
    %cst_123 = arith.constant dense<0.000000e+00> : vector<16x8xf32>
    %190 = vector.multi_reduction <add>, %189, %cst_123 [2] : vector<16x8x16xf32> to vector<16x8xf32>
    %191 = vector.shape_cast %190 : vector<16x8xf32> to vector<16x8x1xf32>
    %cst_124 = arith.constant dense<0.000000e+00> : vector<8x1xf32>
    %192 = vector.multi_reduction <add>, %191, %cst_124 [0] : vector<16x8x1xf32> to vector<8x1xf32>
    %193 = vector.shape_cast %192 : vector<8x1xf32> to vector<1x8x1xf32>
    %cst_125 = arith.constant 3.906250e-03 : f32
    %194 = vector.broadcast %cst_125 : f32 to vector<1x8x1xf32>
    %195 = arith.mulf %188, %194 : vector<1x8x1xf32>
    %cst_126 = arith.constant 3.906250e-03 : f32
    %196 = vector.broadcast %cst_126 : f32 to vector<1x8x1xf32>
    %197 = arith.mulf %193, %196 : vector<1x8x1xf32>
    %198 = arith.mulf %195, %195 : vector<1x8x1xf32>
    %199 = arith.subf %197, %198 : vector<1x8x1xf32>
    %cst_127 = arith.constant 0.000000e+00 : f32
    %200 = vector.broadcast %cst_127 : f32 to vector<1x8x1xf32>
    %201 = arith.maximumf %199, %200 : vector<1x8x1xf32>
    %202 = vector.broadcast %195 : vector<1x8x1xf32> to vector<16x8x16xf32>
    %203 = arith.subf %182, %202 : vector<16x8x16xf32>
    %cst_128 = arith.constant 9.99999974E-6 : f32
    %204 = vector.broadcast %cst_128 : f32 to vector<1x8x1xf32>
    %205 = arith.addf %201, %204 : vector<1x8x1xf32>
    %206 = math.rsqrt %205 : vector<1x8x1xf32>
    %207 = vector.broadcast %206 : vector<1x8x1xf32> to vector<16x8x16xf32>
    %208 = arith.mulf %203, %207 : vector<16x8x16xf32>
    %209 = vector.shape_cast %183 : vector<8x1xf32> to vector<1x8x1xf32>
    %210 = vector.broadcast %209 : vector<1x8x1xf32> to vector<16x8x16xf32>
    %211 = arith.mulf %208, %210 : vector<16x8x16xf32>
    %212 = vector.shape_cast %184 : vector<8x1xf32> to vector<1x8x1xf32>
    %213 = vector.broadcast %212 : vector<1x8x1xf32> to vector<16x8x16xf32>
    %214 = arith.addf %211, %213 : vector<16x8x16xf32>
    %215 = arith.mulf %214, %214 : vector<16x8x16xf32>
    %216 = arith.mulf %214, %215 : vector<16x8x16xf32>
    %cst_129 = arith.constant 4.471500e-02 : f32
    %217 = vector.broadcast %cst_129 : f32 to vector<16x8x16xf32>
    %218 = arith.mulf %217, %216 : vector<16x8x16xf32>
    %219 = arith.addf %214, %218 : vector<16x8x16xf32>
    %cst_130 = arith.constant 0.797884583 : f32
    %220 = vector.broadcast %cst_130 : f32 to vector<16x8x16xf32>
    %221 = arith.mulf %220, %219 : vector<16x8x16xf32>
    %222 = math.tanh %221 : vector<16x8x16xf32>
    %cst_131 = arith.constant 1.000000e+00 : f32
    %223 = vector.broadcast %cst_131 : f32 to vector<16x8x16xf32>
    %224 = arith.addf %223, %222 : vector<16x8x16xf32>
    %cst_132 = arith.constant 5.000000e-01 : f32
    %225 = vector.broadcast %cst_132 : f32 to vector<16x8x16xf32>
    %226 = arith.mulf %225, %224 : vector<16x8x16xf32>
    %227 = arith.mulf %214, %226 : vector<16x8x16xf32>
    %228 = arith.truncf %227 : vector<16x8x16xf32> to vector<16x8x16xbf16>
    %cst_133 = arith.constant 0.000000e+00 : bf16
    %229 = vector.broadcast %cst_133 : bf16 to vector<1x8x16xbf16>
    %cst_134 = arith.constant 0.000000e+00 : bf16
    %230 = vector.broadcast %cst_134 : bf16 to vector<16x8x1xbf16>
    %231 = vector.extract_strided_slice %228 {offsets = [0, 0, 0], sizes = [15, 8, 15], strides = [1, 1, 1]} : vector<16x8x16xbf16> to vector<15x8x15xbf16>
    %c1_135 = arith.constant 1 : index
    %c0_136 = arith.constant 0 : index
    %c1_137 = arith.constant 1 : index
    %232 = vector.load %arg15[%c1_135, %c0_136, %c1_137] : memref<16x80x16xbf16, #tpu.memory_space<vmem>>, vector<15x8x15xbf16>
    tpu.vector_store %arg15[%c1_135, %c0_136, %c1_137], %231 {strides = array<i32>} : memref<16x80x16xbf16, #tpu.memory_space<vmem>>, vector<15x8x15xbf16>,
    %c0_138 = arith.constant 0 : index
    %c0_139 = arith.constant 0 : index
    %c0_140 = arith.constant 0 : index
    %233 = vector.load %arg15[%c0_138, %c0_139, %c0_140] : memref<16x80x16xbf16, #tpu.memory_space<vmem>>, vector<1x8x16xbf16>
    tpu.vector_store %arg15[%c0_138, %c0_139, %c0_140], %229 {strides = array<i32>} : memref<16x80x16xbf16, #tpu.memory_space<vmem>>, vector<1x8x16xbf16>,
    %c0_141 = arith.constant 0 : index
    %c0_142 = arith.constant 0 : index
    %c0_143 = arith.constant 0 : index
    %234 = vector.load %arg15[%c0_141, %c0_142, %c0_143] : memref<16x80x16xbf16, #tpu.memory_space<vmem>>, vector<16x8x1xbf16>
    tpu.vector_store %arg15[%c0_141, %c0_142, %c0_143], %230 {strides = array<i32>} : memref<16x80x16xbf16, #tpu.memory_space<vmem>>, vector<16x8x1xbf16>,
    %235 = vector.extract_strided_slice %228 {offsets = [0, 0, 0], sizes = [15, 8, 16], strides = [1, 1, 1]} : vector<16x8x16xbf16> to vector<15x8x16xbf16>
    %c1_144 = arith.constant 1 : index
    %c8_145 = arith.constant 8 : index
    %c0_146 = arith.constant 0 : index
    %236 = vector.load %arg15[%c1_144, %c8_145, %c0_146] : memref<16x80x16xbf16, #tpu.memory_space<vmem>>, vector<15x8x16xbf16>
    tpu.vector_store %arg15[%c1_144, %c8_145, %c0_146], %235 {strides = array<i32>} : memref<16x80x16xbf16, #tpu.memory_space<vmem>>, vector<15x8x16xbf16>,
    %c0_147 = arith.constant 0 : index
    %c8_148 = arith.constant 8 : index
    %c0_149 = arith.constant 0 : index
    %237 = vector.load %arg15[%c0_147, %c8_148, %c0_149] : memref<16x80x16xbf16, #tpu.memory_space<vmem>>, vector<1x8x16xbf16>
    tpu.vector_store %arg15[%c0_147, %c8_148, %c0_149], %229 {strides = array<i32>} : memref<16x80x16xbf16, #tpu.memory_space<vmem>>, vector<1x8x16xbf16>,
    %238 = vector.extract_strided_slice %228 {offsets = [0, 0, 1], sizes = [15, 8, 15], strides = [1, 1, 1]} : vector<16x8x16xbf16> to vector<15x8x15xbf16>
    %c1_150 = arith.constant 1 : index
    %c16_151 = arith.constant 16 : index
    %c0_152 = arith.constant 0 : index
    %239 = vector.load %arg15[%c1_150, %c16_151, %c0_152] : memref<16x80x16xbf16, #tpu.memory_space<vmem>>, vector<15x8x15xbf16>
    tpu.vector_store %arg15[%c1_150, %c16_151, %c0_152], %238 {strides = array<i32>} : memref<16x80x16xbf16, #tpu.memory_space<vmem>>, vector<15x8x15xbf16>,
    %c0_153 = arith.constant 0 : index
    %c16_154 = arith.constant 16 : index
    %c0_155 = arith.constant 0 : index
    %240 = vector.load %arg15[%c0_153, %c16_154, %c0_155] : memref<16x80x16xbf16, #tpu.memory_space<vmem>>, vector<1x8x16xbf16>
    tpu.vector_store %arg15[%c0_153, %c16_154, %c0_155], %229 {strides = array<i32>} : memref<16x80x16xbf16, #tpu.memory_space<vmem>>, vector<1x8x16xbf16>,
    %c0_156 = arith.constant 0 : index
    %c16_157 = arith.constant 16 : index
    %c15_158 = arith.constant 15 : index
    %241 = vector.load %arg15[%c0_156, %c16_157, %c15_158] : memref<16x80x16xbf16, #tpu.memory_space<vmem>>, vector<16x8x1xbf16>
    tpu.vector_store %arg15[%c0_156, %c16_157, %c15_158], %230 {strides = array<i32>} : memref<16x80x16xbf16, #tpu.memory_space<vmem>>, vector<16x8x1xbf16>,
    %242 = vector.extract_strided_slice %228 {offsets = [0, 0, 0], sizes = [16, 8, 15], strides = [1, 1, 1]} : vector<16x8x16xbf16> to vector<16x8x15xbf16>
    %c0_159 = arith.constant 0 : index
    %c24_160 = arith.constant 24 : index
    %c1_161 = arith.constant 1 : index
    %243 = vector.load %arg15[%c0_159, %c24_160, %c1_161] : memref<16x80x16xbf16, #tpu.memory_space<vmem>>, vector<16x8x15xbf16>
    tpu.vector_store %arg15[%c0_159, %c24_160, %c1_161], %242 {strides = array<i32>} : memref<16x80x16xbf16, #tpu.memory_space<vmem>>, vector<16x8x15xbf16>,
    %c0_162 = arith.constant 0 : index
    %c24_163 = arith.constant 24 : index
    %c0_164 = arith.constant 0 : index
    %244 = vector.load %arg15[%c0_162, %c24_163, %c0_164] : memref<16x80x16xbf16, #tpu.memory_space<vmem>>, vector<16x8x1xbf16>
    tpu.vector_store %arg15[%c0_162, %c24_163, %c0_164], %230 {strides = array<i32>} : memref<16x80x16xbf16, #tpu.memory_space<vmem>>, vector<16x8x1xbf16>,
    %c0_165 = arith.constant 0 : index
    %c32_166 = arith.constant 32 : index
    %c0_167 = arith.constant 0 : index
    %245 = vector.load %arg15[%c0_165, %c32_166, %c0_167] : memref<16x80x16xbf16, #tpu.memory_space<vmem>>, vector<16x8x16xbf16>
    tpu.vector_store %arg15[%c0_165, %c32_166, %c0_167], %228 {strides = array<i32>} : memref<16x80x16xbf16, #tpu.memory_space<vmem>>, vector<16x8x16xbf16>,
    %246 = vector.extract_strided_slice %228 {offsets = [0, 0, 1], sizes = [16, 8, 15], strides = [1, 1, 1]} : vector<16x8x16xbf16> to vector<16x8x15xbf16>
    %c0_168 = arith.constant 0 : index
    %c40_169 = arith.constant 40 : index
    %c0_170 = arith.constant 0 : index
    %247 = vector.load %arg15[%c0_168, %c40_169, %c0_170] : memref<16x80x16xbf16, #tpu.memory_space<vmem>>, vector<16x8x15xbf16>
    tpu.vector_store %arg15[%c0_168, %c40_169, %c0_170], %246 {strides = array<i32>} : memref<16x80x16xbf16, #tpu.memory_space<vmem>>, vector<16x8x15xbf16>,
    %c0_171 = arith.constant 0 : index
    %c40_172 = arith.constant 40 : index
    %c15_173 = arith.constant 15 : index
    %248 = vector.load %arg15[%c0_171, %c40_172, %c15_173] : memref<16x80x16xbf16, #tpu.memory_space<vmem>>, vector<16x8x1xbf16>
    tpu.vector_store %arg15[%c0_171, %c40_172, %c15_173], %230 {strides = array<i32>} : memref<16x80x16xbf16, #tpu.memory_space<vmem>>, vector<16x8x1xbf16>,
    %249 = vector.extract_strided_slice %228 {offsets = [1, 0, 0], sizes = [15, 8, 15], strides = [1, 1, 1]} : vector<16x8x16xbf16> to vector<15x8x15xbf16>
    %c0_174 = arith.constant 0 : index
    %c48_175 = arith.constant 48 : index
    %c1_176 = arith.constant 1 : index
    %250 = vector.load %arg15[%c0_174, %c48_175, %c1_176] : memref<16x80x16xbf16, #tpu.memory_space<vmem>>, vector<15x8x15xbf16>
    tpu.vector_store %arg15[%c0_174, %c48_175, %c1_176], %249 {strides = array<i32>} : memref<16x80x16xbf16, #tpu.memory_space<vmem>>, vector<15x8x15xbf16>,
    %c15_177 = arith.constant 15 : index
    %c48_178 = arith.constant 48 : index
    %c0_179 = arith.constant 0 : index
    %251 = vector.load %arg15[%c15_177, %c48_178, %c0_179] : memref<16x80x16xbf16, #tpu.memory_space<vmem>>, vector<1x8x16xbf16>
    tpu.vector_store %arg15[%c15_177, %c48_178, %c0_179], %229 {strides = array<i32>} : memref<16x80x16xbf16, #tpu.memory_space<vmem>>, vector<1x8x16xbf16>,
    %c0_180 = arith.constant 0 : index
    %c48_181 = arith.constant 48 : index
    %c0_182 = arith.constant 0 : index
    %252 = vector.load %arg15[%c0_180, %c48_181, %c0_182] : memref<16x80x16xbf16, #tpu.memory_space<vmem>>, vector<16x8x1xbf16>
    tpu.vector_store %arg15[%c0_180, %c48_181, %c0_182], %230 {strides = array<i32>} : memref<16x80x16xbf16, #tpu.memory_space<vmem>>, vector<16x8x1xbf16>,
    %253 = vector.extract_strided_slice %228 {offsets = [1, 0, 0], sizes = [15, 8, 16], strides = [1, 1, 1]} : vector<16x8x16xbf16> to vector<15x8x16xbf16>
    %c0_183 = arith.constant 0 : index
    %c56_184 = arith.constant 56 : index
    %c0_185 = arith.constant 0 : index
    %254 = vector.load %arg15[%c0_183, %c56_184, %c0_185] : memref<16x80x16xbf16, #tpu.memory_space<vmem>>, vector<15x8x16xbf16>
    tpu.vector_store %arg15[%c0_183, %c56_184, %c0_185], %253 {strides = array<i32>} : memref<16x80x16xbf16, #tpu.memory_space<vmem>>, vector<15x8x16xbf16>,
    %c15_186 = arith.constant 15 : index
    %c56_187 = arith.constant 56 : index
    %c0_188 = arith.constant 0 : index
    %255 = vector.load %arg15[%c15_186, %c56_187, %c0_188] : memref<16x80x16xbf16, #tpu.memory_space<vmem>>, vector<1x8x16xbf16>
    tpu.vector_store %arg15[%c15_186, %c56_187, %c0_188], %229 {strides = array<i32>} : memref<16x80x16xbf16, #tpu.memory_space<vmem>>, vector<1x8x16xbf16>,
    %256 = vector.extract_strided_slice %228 {offsets = [1, 0, 1], sizes = [15, 8, 15], strides = [1, 1, 1]} : vector<16x8x16xbf16> to vector<15x8x15xbf16>
    %c0_189 = arith.constant 0 : index
    %c64_190 = arith.constant 64 : index
    %c0_191 = arith.constant 0 : index
    %257 = vector.load %arg15[%c0_189, %c64_190, %c0_191] : memref<16x80x16xbf16, #tpu.memory_space<vmem>>, vector<15x8x15xbf16>
    tpu.vector_store %arg15[%c0_189, %c64_190, %c0_191], %256 {strides = array<i32>} : memref<16x80x16xbf16, #tpu.memory_space<vmem>>, vector<15x8x15xbf16>,
    %c15_192 = arith.constant 15 : index
    %c64_193 = arith.constant 64 : index
    %c0_194 = arith.constant 0 : index
    %258 = vector.load %arg15[%c15_192, %c64_193, %c0_194] : memref<16x80x16xbf16, #tpu.memory_space<vmem>>, vector<1x8x16xbf16>
    tpu.vector_store %arg15[%c15_192, %c64_193, %c0_194], %229 {strides = array<i32>} : memref<16x80x16xbf16, #tpu.memory_space<vmem>>, vector<1x8x16xbf16>,
    %c0_195 = arith.constant 0 : index
    %c64_196 = arith.constant 64 : index
    %c15_197 = arith.constant 15 : index
    %259 = vector.load %arg15[%c0_195, %c64_196, %c15_197] : memref<16x80x16xbf16, #tpu.memory_space<vmem>>, vector<16x8x1xbf16>
    tpu.vector_store %arg15[%c0_195, %c64_196, %c15_197], %230 {strides = array<i32>} : memref<16x80x16xbf16, #tpu.memory_space<vmem>>, vector<16x8x1xbf16>,
    %260 = arith.truncf %1 : vector<16x8x16xf32> to vector<16x8x16xbf16>
    %c0_198 = arith.constant 0 : index
    %c72 = arith.constant 72 : index
    %c0_199 = arith.constant 0 : index
    %261 = vector.load %arg15[%c0_198, %c72, %c0_199] : memref<16x80x16xbf16, #tpu.memory_space<vmem>>, vector<16x8x16xbf16>
    tpu.vector_store %arg15[%c0_198, %c72, %c0_199], %260 {strides = array<i32>} : memref<16x80x16xbf16, #tpu.memory_space<vmem>>, vector<16x8x16xbf16>,
    %c0_200 = arith.constant 0 : index
    %c0_201 = arith.constant 0 : index
    %262 = vector.load %arg13[%c0_200, %c0_201] : memref<8x80xbf16, #tpu.memory_space<vmem>>, vector<8x80xbf16>
    %c0_i32_202 = arith.constant 0 : i32
    %c16_i32_203 = arith.constant 16 : i32
    %263 = arith.addi %c0_i32_202, %c16_i32_203 : i32
    %c1_i32_204 = arith.constant 1 : i32
    scf.for %arg17 = %c0_i32_202 to %263 step %c1_i32_204  : i32 {
      %264 = arith.index_cast %arg17 : i32 to index
      %c0_206 = arith.constant 0 : index
      %c0_207 = arith.constant 0 : index
      %265 = vector.load %arg15[%264, %c0_206, %c0_207] : memref<16x80x16xbf16, #tpu.memory_space<vmem>>, vector<1x80x16xbf16>
      %266 = vector.shape_cast %265 : vector<1x80x16xbf16> to vector<80x16xbf16>
      %cst_208 = arith.constant dense<0.000000e+00> : vector<8x16xf32>
      %267 = tpu.matmul %262, %266, %cst_208 {dimension_numbers = #tpu.dot_dimension_numbers<[1], [0], [0], [1], [0, 0, 1, 1], [], []>} : vector<8x80xbf16>, vector<80x16xbf16>, vector<8x16xf32> -> vector<8x16xf32>
      %c0_209 = arith.constant 0 : index
      %268 = arith.index_cast %arg17 : i32 to index
      %c0_210 = arith.constant 0 : index
      %c0_211 = arith.constant 0 : index
      %269 = vector.load %arg14[%c0_209, %268, %c0_210, %c0_211] : memref<1x16x8x16xf32, #tpu.memory_space<vmem>>, vector<1x1x8x16xf32>
      %270 = vector.shape_cast %269 : vector<1x1x8x16xf32> to vector<8x16xf32>
      %271 = vector.shape_cast %267 : vector<8x16xf32> to vector<1x1x8x16xf32>
      tpu.vector_store %arg14[%c0_209, %268, %c0_210, %c0_211], %271 {strides = array<i32>} : memref<1x16x8x16xf32, #tpu.memory_space<vmem>>, vector<1x1x8x16xf32>,
    }
    %c16_i32_205 = arith.constant 16 : i32
    return
  }
  func.func @transform_0(%arg0: i32) -> (i32, i32, i32, i32) {
    %c0_i32 = arith.constant 0 : i32
    %c0_i32_0 = arith.constant 0 : i32
    %c0_i32_1 = arith.constant 0 : i32
    %c0_i32_2 = arith.constant 0 : i32
    return %arg0, %c0_i32, %c0_i32_0, %c0_i32_1 : i32, i32, i32, i32
  }
  func.func @transform_1(%arg0: i32) -> (i32, i32) {
    %c0_i32 = arith.constant 0 : i32
    %c0_i32_0 = arith.constant 0 : i32
    %c0_i32_1 = arith.constant 0 : i32
    return %c0_i32, %c0_i32_0 : i32, i32
  }
  func.func @transform_2(%arg0: i32) -> (i32, i32) {
    %c0_i32 = arith.constant 0 : i32
    %c0_i32_0 = arith.constant 0 : i32
    %c0_i32_1 = arith.constant 0 : i32
    return %c0_i32, %c0_i32_0 : i32, i32
  }
  func.func @transform_3(%arg0: i32) -> (i32, i32) {
    %c0_i32 = arith.constant 0 : i32
    %c0_i32_0 = arith.constant 0 : i32
    %c0_i32_1 = arith.constant 0 : i32
    return %c0_i32, %c0_i32_0 : i32, i32
  }
  func.func @transform_4(%arg0: i32) -> (i32, i32) {
    %c0_i32 = arith.constant 0 : i32
    %c0_i32_0 = arith.constant 0 : i32
    %c0_i32_1 = arith.constant 0 : i32
    return %c0_i32, %c0_i32_0 : i32, i32
  }
  func.func @transform_5(%arg0: i32) -> (i32, i32) {
    %c0_i32 = arith.constant 0 : i32
    %c0_i32_0 = arith.constant 0 : i32
    %c0_i32_1 = arith.constant 0 : i32
    return %c0_i32, %c0_i32_0 : i32, i32
  }
  func.func @transform_6(%arg0: i32) -> (i32, i32) {
    %c0_i32 = arith.constant 0 : i32
    %c0_i32_0 = arith.constant 0 : i32
    %c0_i32_1 = arith.constant 0 : i32
    return %c0_i32, %c0_i32_0 : i32, i32
  }
  func.func @transform_7(%arg0: i32) -> (i32, i32) {
    %c0_i32 = arith.constant 0 : i32
    %c0_i32_0 = arith.constant 0 : i32
    %c0_i32_1 = arith.constant 0 : i32
    return %c0_i32, %c0_i32_0 : i32, i32
  }
  func.func @transform_8(%arg0: i32) -> (i32, i32) {
    %c0_i32 = arith.constant 0 : i32
    %c0_i32_0 = arith.constant 0 : i32
    %c0_i32_1 = arith.constant 0 : i32
    return %c0_i32, %c0_i32_0 : i32, i32
  }
  func.func @transform_9(%arg0: i32) -> (i32, i32) {
    %c0_i32 = arith.constant 0 : i32
    %c0_i32_0 = arith.constant 0 : i32
    %c0_i32_1 = arith.constant 0 : i32
    return %c0_i32, %c0_i32_0 : i32, i32
  }
  func.func @transform_10(%arg0: i32) -> (i32, i32) {
    %c0_i32 = arith.constant 0 : i32
    %c0_i32_0 = arith.constant 0 : i32
    %c0_i32_1 = arith.constant 0 : i32
    return %c0_i32, %c0_i32_0 : i32, i32
  }
  func.func @transform_11(%arg0: i32) -> (i32, i32) {
    %c0_i32 = arith.constant 0 : i32
    %c0_i32_0 = arith.constant 0 : i32
    %c0_i32_1 = arith.constant 0 : i32
    return %c0_i32, %c0_i32_0 : i32, i32
  }
  func.func @transform_12(%arg0: i32) -> (i32, i32) {
    %c0_i32 = arith.constant 0 : i32
    %c0_i32_0 = arith.constant 0 : i32
    %c0_i32_1 = arith.constant 0 : i32
    return %c0_i32, %c0_i32_0 : i32, i32
  }
  func.func @transform_13(%arg0: i32) -> (i32, i32, i32, i32) {
    %c0_i32 = arith.constant 0 : i32
    %c0_i32_0 = arith.constant 0 : i32
    %c0_i32_1 = arith.constant 0 : i32
    %c0_i32_2 = arith.constant 0 : i32
    return %arg0, %c0_i32, %c0_i32_0, %c0_i32_1 : i32, i32, i32, i32
  }
}

module attributes {stable_mosaic.version = 11 : i64} {
  func.func @tfc_tdf_block_kernel(%arg0: i32, %arg1: memref<1x16x4x16xf32, #tpu.memory_space<vmem>>, %arg2: memref<4x1xf32, #tpu.memory_space<vmem>>, %arg3: memref<4x1xf32, #tpu.memory_space<vmem>>, %arg4: memref<8x36xbf16, #tpu.memory_space<vmem>>, %arg5: memref<8x1xf32, #tpu.memory_space<vmem>>, %arg6: memref<8x1xf32, #tpu.memory_space<vmem>>, %arg7: memref<16x4xbf16, #tpu.memory_space<vmem>>, %arg8: memref<8x1xf32, #tpu.memory_space<vmem>>, %arg9: memref<8x1xf32, #tpu.memory_space<vmem>>, %arg10: memref<4x16xbf16, #tpu.memory_space<vmem>>, %arg11: memref<8x1xf32, #tpu.memory_space<vmem>>, %arg12: memref<8x1xf32, #tpu.memory_space<vmem>>, %arg13: memref<8x76xbf16, #tpu.memory_space<vmem>>, %arg14: memref<1x16x8x16xf32, #tpu.memory_space<vmem>>, %arg15: memref<16x76x16xbf16, #tpu.memory_space<vmem>>, %arg16: memref<16x8x16xf32, #tpu.memory_space<vmem>>) attributes {dimension_semantics = [#tpu.dimension_semantics<parallel>], iteration_bounds = array<i64: 2>, scalar_prefetch = 0 : i64, scratch_operands = 2 : i64, tpu.core_type = #tpu.core_type<tc>, window_params = [{transform_indices = @transform_0, window_bounds = array<i64: 1, 16, 4, 16>}, {pipeline_mode = #tpu.pipeline_mode<synchronous>, transform_indices = @transform_1, window_bounds = array<i64: 4, 1>}, {pipeline_mode = #tpu.pipeline_mode<synchronous>, transform_indices = @transform_2, window_bounds = array<i64: 4, 1>}, {pipeline_mode = #tpu.pipeline_mode<synchronous>, transform_indices = @transform_3, window_bounds = array<i64: 8, 36>}, {pipeline_mode = #tpu.pipeline_mode<synchronous>, transform_indices = @transform_4, window_bounds = array<i64: 8, 1>}, {pipeline_mode = #tpu.pipeline_mode<synchronous>, transform_indices = @transform_5, window_bounds = array<i64: 8, 1>}, {pipeline_mode = #tpu.pipeline_mode<synchronous>, transform_indices = @transform_6, window_bounds = array<i64: 16, 4>}, {pipeline_mode = #tpu.pipeline_mode<synchronous>, transform_indices = @transform_7, window_bounds = array<i64: 8, 1>}, {pipeline_mode = #tpu.pipeline_mode<synchronous>, transform_indices = @transform_8, window_bounds = array<i64: 8, 1>}, {pipeline_mode = #tpu.pipeline_mode<synchronous>, transform_indices = @transform_9, window_bounds = array<i64: 4, 16>}, {pipeline_mode = #tpu.pipeline_mode<synchronous>, transform_indices = @transform_10, window_bounds = array<i64: 8, 1>}, {pipeline_mode = #tpu.pipeline_mode<synchronous>, transform_indices = @transform_11, window_bounds = array<i64: 8, 1>}, {pipeline_mode = #tpu.pipeline_mode<synchronous>, transform_indices = @transform_12, window_bounds = array<i64: 8, 76>}, {transform_indices = @transform_13, window_bounds = array<i64: 1, 16, 8, 16>}]} {
    %c0 = arith.constant 0 : index
    %c0_0 = arith.constant 0 : index
    %c0_1 = arith.constant 0 : index
    %c0_2 = arith.constant 0 : index
    %0 = vector.load %arg1[%c0, %c0_0, %c0_1, %c0_2] : memref<1x16x4x16xf32, #tpu.memory_space<vmem>>, vector<1x16x4x16xf32>
    %1 = vector.shape_cast %0 : vector<1x16x4x16xf32> to vector<16x4x16xf32>
    %c0_3 = arith.constant 0 : index
    %c0_4 = arith.constant 0 : index
    %2 = vector.load %arg2[%c0_3, %c0_4] : memref<4x1xf32, #tpu.memory_space<vmem>>, vector<4x1xf32>
    %c0_5 = arith.constant 0 : index
    %c0_6 = arith.constant 0 : index
    %3 = vector.load %arg3[%c0_5, %c0_6] : memref<4x1xf32, #tpu.memory_space<vmem>>, vector<4x1xf32>
    %cst = arith.constant dense<0.000000e+00> : vector<16x4xf32>
    %4 = vector.multi_reduction <add>, %1, %cst [2] : vector<16x4x16xf32> to vector<16x4xf32>
    %5 = vector.shape_cast %4 : vector<16x4xf32> to vector<16x4x1xf32>
    %cst_7 = arith.constant dense<0.000000e+00> : vector<4x1xf32>
    %6 = vector.multi_reduction <add>, %5, %cst_7 [0] : vector<16x4x1xf32> to vector<4x1xf32>
    %7 = vector.shape_cast %6 : vector<4x1xf32> to vector<1x4x1xf32>
    %8 = arith.mulf %1, %1 : vector<16x4x16xf32>
    %cst_8 = arith.constant dense<0.000000e+00> : vector<16x4xf32>
    %9 = vector.multi_reduction <add>, %8, %cst_8 [2] : vector<16x4x16xf32> to vector<16x4xf32>
    %10 = vector.shape_cast %9 : vector<16x4xf32> to vector<16x4x1xf32>
    %cst_9 = arith.constant dense<0.000000e+00> : vector<4x1xf32>
    %11 = vector.multi_reduction <add>, %10, %cst_9 [0] : vector<16x4x1xf32> to vector<4x1xf32>
    %12 = vector.shape_cast %11 : vector<4x1xf32> to vector<1x4x1xf32>
    %cst_10 = arith.constant 3.906250e-03 : f32
    %13 = vector.broadcast %cst_10 : f32 to vector<1x4x1xf32>
    %14 = arith.mulf %7, %13 : vector<1x4x1xf32>
    %cst_11 = arith.constant 3.906250e-03 : f32
    %15 = vector.broadcast %cst_11 : f32 to vector<1x4x1xf32>
    %16 = arith.mulf %12, %15 : vector<1x4x1xf32>
    %17 = arith.mulf %14, %14 : vector<1x4x1xf32>
    %18 = arith.subf %16, %17 : vector<1x4x1xf32>
    %cst_12 = arith.constant 0.000000e+00 : f32
    %19 = vector.broadcast %cst_12 : f32 to vector<1x4x1xf32>
    %20 = arith.maximumf %18, %19 : vector<1x4x1xf32>
    %21 = vector.broadcast %14 : vector<1x4x1xf32> to vector<16x4x16xf32>
    %22 = arith.subf %1, %21 : vector<16x4x16xf32>
    %cst_13 = arith.constant 9.99999974E-6 : f32
    %23 = vector.broadcast %cst_13 : f32 to vector<1x4x1xf32>
    %24 = arith.addf %20, %23 : vector<1x4x1xf32>
    %25 = math.rsqrt %24 : vector<1x4x1xf32>
    %26 = vector.broadcast %25 : vector<1x4x1xf32> to vector<16x4x16xf32>
    %27 = arith.mulf %22, %26 : vector<16x4x16xf32>
    %28 = vector.shape_cast %2 : vector<4x1xf32> to vector<1x4x1xf32>
    %29 = vector.broadcast %28 : vector<1x4x1xf32> to vector<16x4x16xf32>
    %30 = arith.mulf %27, %29 : vector<16x4x16xf32>
    %31 = vector.shape_cast %3 : vector<4x1xf32> to vector<1x4x1xf32>
    %32 = vector.broadcast %31 : vector<1x4x1xf32> to vector<16x4x16xf32>
    %33 = arith.addf %30, %32 : vector<16x4x16xf32>
    %34 = arith.mulf %33, %33 : vector<16x4x16xf32>
    %35 = arith.mulf %33, %34 : vector<16x4x16xf32>
    %cst_14 = arith.constant 4.471500e-02 : f32
    %36 = vector.broadcast %cst_14 : f32 to vector<16x4x16xf32>
    %37 = arith.mulf %36, %35 : vector<16x4x16xf32>
    %38 = arith.addf %33, %37 : vector<16x4x16xf32>
    %cst_15 = arith.constant 0.797884583 : f32
    %39 = vector.broadcast %cst_15 : f32 to vector<16x4x16xf32>
    %40 = arith.mulf %39, %38 : vector<16x4x16xf32>
    %41 = math.tanh %40 : vector<16x4x16xf32>
    %cst_16 = arith.constant 1.000000e+00 : f32
    %42 = vector.broadcast %cst_16 : f32 to vector<16x4x16xf32>
    %43 = arith.addf %42, %41 : vector<16x4x16xf32>
    %cst_17 = arith.constant 5.000000e-01 : f32
    %44 = vector.broadcast %cst_17 : f32 to vector<16x4x16xf32>
    %45 = arith.mulf %44, %43 : vector<16x4x16xf32>
    %46 = arith.mulf %33, %45 : vector<16x4x16xf32>
    %47 = arith.truncf %46 : vector<16x4x16xf32> to vector<16x4x16xbf16>
    %cst_18 = arith.constant 0.000000e+00 : bf16
    %48 = vector.broadcast %cst_18 : bf16 to vector<1x4x16xbf16>
    %cst_19 = arith.constant 0.000000e+00 : bf16
    %49 = vector.broadcast %cst_19 : bf16 to vector<16x4x1xbf16>
    %50 = vector.extract_strided_slice %47 {offsets = [0, 0, 0], sizes = [15, 4, 15], strides = [1, 1, 1]} : vector<16x4x16xbf16> to vector<15x4x15xbf16>
    %c1 = arith.constant 1 : index
    %c0_20 = arith.constant 0 : index
    %c1_21 = arith.constant 1 : index
    %51 = vector.load %arg15[%c1, %c0_20, %c1_21] : memref<16x76x16xbf16, #tpu.memory_space<vmem>>, vector<15x4x15xbf16>
    tpu.vector_store %arg15[%c1, %c0_20, %c1_21], %50 {strides = array<i32>} : memref<16x76x16xbf16, #tpu.memory_space<vmem>>, vector<15x4x15xbf16>,
    %c0_22 = arith.constant 0 : index
    %c0_23 = arith.constant 0 : index
    %c0_24 = arith.constant 0 : index
    %52 = vector.load %arg15[%c0_22, %c0_23, %c0_24] : memref<16x76x16xbf16, #tpu.memory_space<vmem>>, vector<1x4x16xbf16>
    tpu.vector_store %arg15[%c0_22, %c0_23, %c0_24], %48 {strides = array<i32>} : memref<16x76x16xbf16, #tpu.memory_space<vmem>>, vector<1x4x16xbf16>,
    %c0_25 = arith.constant 0 : index
    %c0_26 = arith.constant 0 : index
    %c0_27 = arith.constant 0 : index
    %53 = vector.load %arg15[%c0_25, %c0_26, %c0_27] : memref<16x76x16xbf16, #tpu.memory_space<vmem>>, vector<16x4x1xbf16>
    tpu.vector_store %arg15[%c0_25, %c0_26, %c0_27], %49 {strides = array<i32>} : memref<16x76x16xbf16, #tpu.memory_space<vmem>>, vector<16x4x1xbf16>,
    %54 = vector.extract_strided_slice %47 {offsets = [0, 0, 0], sizes = [15, 4, 16], strides = [1, 1, 1]} : vector<16x4x16xbf16> to vector<15x4x16xbf16>
    %c1_28 = arith.constant 1 : index
    %c4 = arith.constant 4 : index
    %c0_29 = arith.constant 0 : index
    %55 = vector.load %arg15[%c1_28, %c4, %c0_29] : memref<16x76x16xbf16, #tpu.memory_space<vmem>>, vector<15x4x16xbf16>
    tpu.vector_store %arg15[%c1_28, %c4, %c0_29], %54 {strides = array<i32>} : memref<16x76x16xbf16, #tpu.memory_space<vmem>>, vector<15x4x16xbf16>,
    %c0_30 = arith.constant 0 : index
    %c4_31 = arith.constant 4 : index
    %c0_32 = arith.constant 0 : index
    %56 = vector.load %arg15[%c0_30, %c4_31, %c0_32] : memref<16x76x16xbf16, #tpu.memory_space<vmem>>, vector<1x4x16xbf16>
    tpu.vector_store %arg15[%c0_30, %c4_31, %c0_32], %48 {strides = array<i32>} : memref<16x76x16xbf16, #tpu.memory_space<vmem>>, vector<1x4x16xbf16>,
    %57 = vector.extract_strided_slice %47 {offsets = [0, 0, 1], sizes = [15, 4, 15], strides = [1, 1, 1]} : vector<16x4x16xbf16> to vector<15x4x15xbf16>
    %c1_33 = arith.constant 1 : index
    %c8 = arith.constant 8 : index
    %c0_34 = arith.constant 0 : index
    %58 = vector.load %arg15[%c1_33, %c8, %c0_34] : memref<16x76x16xbf16, #tpu.memory_space<vmem>>, vector<15x4x15xbf16>
    tpu.vector_store %arg15[%c1_33, %c8, %c0_34], %57 {strides = array<i32>} : memref<16x76x16xbf16, #tpu.memory_space<vmem>>, vector<15x4x15xbf16>,
    %c0_35 = arith.constant 0 : index
    %c8_36 = arith.constant 8 : index
    %c0_37 = arith.constant 0 : index
    %59 = vector.load %arg15[%c0_35, %c8_36, %c0_37] : memref<16x76x16xbf16, #tpu.memory_space<vmem>>, vector<1x4x16xbf16>
    tpu.vector_store %arg15[%c0_35, %c8_36, %c0_37], %48 {strides = array<i32>} : memref<16x76x16xbf16, #tpu.memory_space<vmem>>, vector<1x4x16xbf16>,
    %c0_38 = arith.constant 0 : index
    %c8_39 = arith.constant 8 : index
    %c15 = arith.constant 15 : index
    %60 = vector.load %arg15[%c0_38, %c8_39, %c15] : memref<16x76x16xbf16, #tpu.memory_space<vmem>>, vector<16x4x1xbf16>
    tpu.vector_store %arg15[%c0_38, %c8_39, %c15], %49 {strides = array<i32>} : memref<16x76x16xbf16, #tpu.memory_space<vmem>>, vector<16x4x1xbf16>,
    %61 = vector.extract_strided_slice %47 {offsets = [0, 0, 0], sizes = [16, 4, 15], strides = [1, 1, 1]} : vector<16x4x16xbf16> to vector<16x4x15xbf16>
    %c0_40 = arith.constant 0 : index
    %c12 = arith.constant 12 : index
    %c1_41 = arith.constant 1 : index
    %62 = vector.load %arg15[%c0_40, %c12, %c1_41] : memref<16x76x16xbf16, #tpu.memory_space<vmem>>, vector<16x4x15xbf16>
    tpu.vector_store %arg15[%c0_40, %c12, %c1_41], %61 {strides = array<i32>} : memref<16x76x16xbf16, #tpu.memory_space<vmem>>, vector<16x4x15xbf16>,
    %c0_42 = arith.constant 0 : index
    %c12_43 = arith.constant 12 : index
    %c0_44 = arith.constant 0 : index
    %63 = vector.load %arg15[%c0_42, %c12_43, %c0_44] : memref<16x76x16xbf16, #tpu.memory_space<vmem>>, vector<16x4x1xbf16>
    tpu.vector_store %arg15[%c0_42, %c12_43, %c0_44], %49 {strides = array<i32>} : memref<16x76x16xbf16, #tpu.memory_space<vmem>>, vector<16x4x1xbf16>,
    %c0_45 = arith.constant 0 : index
    %c16 = arith.constant 16 : index
    %c0_46 = arith.constant 0 : index
    %64 = vector.load %arg15[%c0_45, %c16, %c0_46] : memref<16x76x16xbf16, #tpu.memory_space<vmem>>, vector<16x4x16xbf16>
    tpu.vector_store %arg15[%c0_45, %c16, %c0_46], %47 {strides = array<i32>} : memref<16x76x16xbf16, #tpu.memory_space<vmem>>, vector<16x4x16xbf16>,
    %65 = vector.extract_strided_slice %47 {offsets = [0, 0, 1], sizes = [16, 4, 15], strides = [1, 1, 1]} : vector<16x4x16xbf16> to vector<16x4x15xbf16>
    %c0_47 = arith.constant 0 : index
    %c20 = arith.constant 20 : index
    %c0_48 = arith.constant 0 : index
    %66 = vector.load %arg15[%c0_47, %c20, %c0_48] : memref<16x76x16xbf16, #tpu.memory_space<vmem>>, vector<16x4x15xbf16>
    tpu.vector_store %arg15[%c0_47, %c20, %c0_48], %65 {strides = array<i32>} : memref<16x76x16xbf16, #tpu.memory_space<vmem>>, vector<16x4x15xbf16>,
    %c0_49 = arith.constant 0 : index
    %c20_50 = arith.constant 20 : index
    %c15_51 = arith.constant 15 : index
    %67 = vector.load %arg15[%c0_49, %c20_50, %c15_51] : memref<16x76x16xbf16, #tpu.memory_space<vmem>>, vector<16x4x1xbf16>
    tpu.vector_store %arg15[%c0_49, %c20_50, %c15_51], %49 {strides = array<i32>} : memref<16x76x16xbf16, #tpu.memory_space<vmem>>, vector<16x4x1xbf16>,
    %68 = vector.extract_strided_slice %47 {offsets = [1, 0, 0], sizes = [15, 4, 15], strides = [1, 1, 1]} : vector<16x4x16xbf16> to vector<15x4x15xbf16>
    %c0_52 = arith.constant 0 : index
    %c24 = arith.constant 24 : index
    %c1_53 = arith.constant 1 : index
    %69 = vector.load %arg15[%c0_52, %c24, %c1_53] : memref<16x76x16xbf16, #tpu.memory_space<vmem>>, vector<15x4x15xbf16>
    tpu.vector_store %arg15[%c0_52, %c24, %c1_53], %68 {strides = array<i32>} : memref<16x76x16xbf16, #tpu.memory_space<vmem>>, vector<15x4x15xbf16>,
    %c15_54 = arith.constant 15 : index
    %c24_55 = arith.constant 24 : index
    %c0_56 = arith.constant 0 : index
    %70 = vector.load %arg15[%c15_54, %c24_55, %c0_56] : memref<16x76x16xbf16, #tpu.memory_space<vmem>>, vector<1x4x16xbf16>
    tpu.vector_store %arg15[%c15_54, %c24_55, %c0_56], %48 {strides = array<i32>} : memref<16x76x16xbf16, #tpu.memory_space<vmem>>, vector<1x4x16xbf16>,
    %c0_57 = arith.constant 0 : index
    %c24_58 = arith.constant 24 : index
    %c0_59 = arith.constant 0 : index
    %71 = vector.load %arg15[%c0_57, %c24_58, %c0_59] : memref<16x76x16xbf16, #tpu.memory_space<vmem>>, vector<16x4x1xbf16>
    tpu.vector_store %arg15[%c0_57, %c24_58, %c0_59], %49 {strides = array<i32>} : memref<16x76x16xbf16, #tpu.memory_space<vmem>>, vector<16x4x1xbf16>,
    %72 = vector.extract_strided_slice %47 {offsets = [1, 0, 0], sizes = [15, 4, 16], strides = [1, 1, 1]} : vector<16x4x16xbf16> to vector<15x4x16xbf16>
    %c0_60 = arith.constant 0 : index
    %c28 = arith.constant 28 : index
    %c0_61 = arith.constant 0 : index
    %73 = vector.load %arg15[%c0_60, %c28, %c0_61] : memref<16x76x16xbf16, #tpu.memory_space<vmem>>, vector<15x4x16xbf16>
    tpu.vector_store %arg15[%c0_60, %c28, %c0_61], %72 {strides = array<i32>} : memref<16x76x16xbf16, #tpu.memory_space<vmem>>, vector<15x4x16xbf16>,
    %c15_62 = arith.constant 15 : index
    %c28_63 = arith.constant 28 : index
    %c0_64 = arith.constant 0 : index
    %74 = vector.load %arg15[%c15_62, %c28_63, %c0_64] : memref<16x76x16xbf16, #tpu.memory_space<vmem>>, vector<1x4x16xbf16>
    tpu.vector_store %arg15[%c15_62, %c28_63, %c0_64], %48 {strides = array<i32>} : memref<16x76x16xbf16, #tpu.memory_space<vmem>>, vector<1x4x16xbf16>,
    %75 = vector.extract_strided_slice %47 {offsets = [1, 0, 1], sizes = [15, 4, 15], strides = [1, 1, 1]} : vector<16x4x16xbf16> to vector<15x4x15xbf16>
    %c0_65 = arith.constant 0 : index
    %c32 = arith.constant 32 : index
    %c0_66 = arith.constant 0 : index
    %76 = vector.load %arg15[%c0_65, %c32, %c0_66] : memref<16x76x16xbf16, #tpu.memory_space<vmem>>, vector<15x4x15xbf16>
    tpu.vector_store %arg15[%c0_65, %c32, %c0_66], %75 {strides = array<i32>} : memref<16x76x16xbf16, #tpu.memory_space<vmem>>, vector<15x4x15xbf16>,
    %c15_67 = arith.constant 15 : index
    %c32_68 = arith.constant 32 : index
    %c0_69 = arith.constant 0 : index
    %77 = vector.load %arg15[%c15_67, %c32_68, %c0_69] : memref<16x76x16xbf16, #tpu.memory_space<vmem>>, vector<1x4x16xbf16>
    tpu.vector_store %arg15[%c15_67, %c32_68, %c0_69], %48 {strides = array<i32>} : memref<16x76x16xbf16, #tpu.memory_space<vmem>>, vector<1x4x16xbf16>,
    %c0_70 = arith.constant 0 : index
    %c32_71 = arith.constant 32 : index
    %c15_72 = arith.constant 15 : index
    %78 = vector.load %arg15[%c0_70, %c32_71, %c15_72] : memref<16x76x16xbf16, #tpu.memory_space<vmem>>, vector<16x4x1xbf16>
    tpu.vector_store %arg15[%c0_70, %c32_71, %c15_72], %49 {strides = array<i32>} : memref<16x76x16xbf16, #tpu.memory_space<vmem>>, vector<16x4x1xbf16>,
    %c0_73 = arith.constant 0 : index
    %c0_74 = arith.constant 0 : index
    %79 = vector.load %arg4[%c0_73, %c0_74] : memref<8x36xbf16, #tpu.memory_space<vmem>>, vector<8x36xbf16>
    %c0_i32 = arith.constant 0 : i32
    %c16_i32 = arith.constant 16 : i32
    %80 = arith.addi %c0_i32, %c16_i32 : i32
    %c1_i32 = arith.constant 1 : i32
    scf.for %arg17 = %c0_i32 to %80 step %c1_i32  : i32 {
      %264 = arith.index_cast %arg17 : i32 to index
      %c0_202 = arith.constant 0 : index
      %c0_203 = arith.constant 0 : index
      %265 = vector.load %arg15[%264, %c0_202, %c0_203] : memref<16x76x16xbf16, #tpu.memory_space<vmem>>, vector<1x36x16xbf16>
      %266 = vector.shape_cast %265 : vector<1x36x16xbf16> to vector<36x16xbf16>
      %cst_204 = arith.constant dense<0.000000e+00> : vector<8x16xf32>
      %267 = tpu.matmul %79, %266, %cst_204 {dimension_numbers = #tpu.dot_dimension_numbers<[1], [0], [0], [1], [0, 0, 1, 1], [], []>} : vector<8x36xbf16>, vector<36x16xbf16>, vector<8x16xf32> -> vector<8x16xf32>
      %268 = arith.index_cast %arg17 : i32 to index
      %c0_205 = arith.constant 0 : index
      %c0_206 = arith.constant 0 : index
      %269 = vector.load %arg16[%268, %c0_205, %c0_206] : memref<16x8x16xf32, #tpu.memory_space<vmem>>, vector<1x8x16xf32>
      %270 = vector.shape_cast %269 : vector<1x8x16xf32> to vector<8x16xf32>
      %271 = vector.shape_cast %267 : vector<8x16xf32> to vector<1x8x16xf32>
      tpu.vector_store %arg16[%268, %c0_205, %c0_206], %271 {strides = array<i32>} : memref<16x8x16xf32, #tpu.memory_space<vmem>>, vector<1x8x16xf32>,
    }
    %c16_i32_75 = arith.constant 16 : i32
    %c0_76 = arith.constant 0 : index
    %c0_77 = arith.constant 0 : index
    %c0_78 = arith.constant 0 : index
    %81 = vector.load %arg16[%c0_76, %c0_77, %c0_78] : memref<16x8x16xf32, #tpu.memory_space<vmem>>, vector<16x8x16xf32>
    %c0_79 = arith.constant 0 : index
    %c0_80 = arith.constant 0 : index
    %82 = vector.load %arg5[%c0_79, %c0_80] : memref<8x1xf32, #tpu.memory_space<vmem>>, vector<8x1xf32>
    %c0_81 = arith.constant 0 : index
    %c0_82 = arith.constant 0 : index
    %83 = vector.load %arg6[%c0_81, %c0_82] : memref<8x1xf32, #tpu.memory_space<vmem>>, vector<8x1xf32>
    %cst_83 = arith.constant dense<0.000000e+00> : vector<16x8xf32>
    %84 = vector.multi_reduction <add>, %81, %cst_83 [2] : vector<16x8x16xf32> to vector<16x8xf32>
    %85 = vector.shape_cast %84 : vector<16x8xf32> to vector<16x8x1xf32>
    %cst_84 = arith.constant dense<0.000000e+00> : vector<8x1xf32>
    %86 = vector.multi_reduction <add>, %85, %cst_84 [0] : vector<16x8x1xf32> to vector<8x1xf32>
    %87 = vector.shape_cast %86 : vector<8x1xf32> to vector<1x8x1xf32>
    %88 = arith.mulf %81, %81 : vector<16x8x16xf32>
    %cst_85 = arith.constant dense<0.000000e+00> : vector<16x8xf32>
    %89 = vector.multi_reduction <add>, %88, %cst_85 [2] : vector<16x8x16xf32> to vector<16x8xf32>
    %90 = vector.shape_cast %89 : vector<16x8xf32> to vector<16x8x1xf32>
    %cst_86 = arith.constant dense<0.000000e+00> : vector<8x1xf32>
    %91 = vector.multi_reduction <add>, %90, %cst_86 [0] : vector<16x8x1xf32> to vector<8x1xf32>
    %92 = vector.shape_cast %91 : vector<8x1xf32> to vector<1x8x1xf32>
    %cst_87 = arith.constant 3.906250e-03 : f32
    %93 = vector.broadcast %cst_87 : f32 to vector<1x8x1xf32>
    %94 = arith.mulf %87, %93 : vector<1x8x1xf32>
    %cst_88 = arith.constant 3.906250e-03 : f32
    %95 = vector.broadcast %cst_88 : f32 to vector<1x8x1xf32>
    %96 = arith.mulf %92, %95 : vector<1x8x1xf32>
    %97 = arith.mulf %94, %94 : vector<1x8x1xf32>
    %98 = arith.subf %96, %97 : vector<1x8x1xf32>
    %cst_89 = arith.constant 0.000000e+00 : f32
    %99 = vector.broadcast %cst_89 : f32 to vector<1x8x1xf32>
    %100 = arith.maximumf %98, %99 : vector<1x8x1xf32>
    %101 = vector.broadcast %94 : vector<1x8x1xf32> to vector<16x8x16xf32>
    %102 = arith.subf %81, %101 : vector<16x8x16xf32>
    %cst_90 = arith.constant 9.99999974E-6 : f32
    %103 = vector.broadcast %cst_90 : f32 to vector<1x8x1xf32>
    %104 = arith.addf %100, %103 : vector<1x8x1xf32>
    %105 = math.rsqrt %104 : vector<1x8x1xf32>
    %106 = vector.broadcast %105 : vector<1x8x1xf32> to vector<16x8x16xf32>
    %107 = arith.mulf %102, %106 : vector<16x8x16xf32>
    %108 = vector.shape_cast %82 : vector<8x1xf32> to vector<1x8x1xf32>
    %109 = vector.broadcast %108 : vector<1x8x1xf32> to vector<16x8x16xf32>
    %110 = arith.mulf %107, %109 : vector<16x8x16xf32>
    %111 = vector.shape_cast %83 : vector<8x1xf32> to vector<1x8x1xf32>
    %112 = vector.broadcast %111 : vector<1x8x1xf32> to vector<16x8x16xf32>
    %113 = arith.addf %110, %112 : vector<16x8x16xf32>
    %114 = arith.mulf %113, %113 : vector<16x8x16xf32>
    %115 = arith.mulf %113, %114 : vector<16x8x16xf32>
    %cst_91 = arith.constant 4.471500e-02 : f32
    %116 = vector.broadcast %cst_91 : f32 to vector<16x8x16xf32>
    %117 = arith.mulf %116, %115 : vector<16x8x16xf32>
    %118 = arith.addf %113, %117 : vector<16x8x16xf32>
    %cst_92 = arith.constant 0.797884583 : f32
    %119 = vector.broadcast %cst_92 : f32 to vector<16x8x16xf32>
    %120 = arith.mulf %119, %118 : vector<16x8x16xf32>
    %121 = math.tanh %120 : vector<16x8x16xf32>
    %cst_93 = arith.constant 1.000000e+00 : f32
    %122 = vector.broadcast %cst_93 : f32 to vector<16x8x16xf32>
    %123 = arith.addf %122, %121 : vector<16x8x16xf32>
    %cst_94 = arith.constant 5.000000e-01 : f32
    %124 = vector.broadcast %cst_94 : f32 to vector<16x8x16xf32>
    %125 = arith.mulf %124, %123 : vector<16x8x16xf32>
    %126 = arith.mulf %113, %125 : vector<16x8x16xf32>
    %127 = vector.shape_cast %126 : vector<16x8x16xf32> to vector<128x16xf32>
    %128 = arith.truncf %127 : vector<128x16xf32> to vector<128x16xbf16>
    %c0_95 = arith.constant 0 : index
    %c0_96 = arith.constant 0 : index
    %129 = vector.load %arg7[%c0_95, %c0_96] : memref<16x4xbf16, #tpu.memory_space<vmem>>, vector<16x4xbf16>
    %cst_97 = arith.constant dense<0.000000e+00> : vector<128x4xf32>
    %130 = tpu.matmul %128, %129, %cst_97 {dimension_numbers = #tpu.dot_dimension_numbers<[1], [0], [0], [1], [0, 0, 1, 1], [], []>} : vector<128x16xbf16>, vector<16x4xbf16>, vector<128x4xf32> -> vector<128x4xf32>
    %131 = vector.shape_cast %130 : vector<128x4xf32> to vector<16x8x4xf32>
    %c0_98 = arith.constant 0 : index
    %c0_99 = arith.constant 0 : index
    %132 = vector.load %arg8[%c0_98, %c0_99] : memref<8x1xf32, #tpu.memory_space<vmem>>, vector<8x1xf32>
    %c0_100 = arith.constant 0 : index
    %c0_101 = arith.constant 0 : index
    %133 = vector.load %arg9[%c0_100, %c0_101] : memref<8x1xf32, #tpu.memory_space<vmem>>, vector<8x1xf32>
    %cst_102 = arith.constant dense<0.000000e+00> : vector<16x8xf32>
    %134 = vector.multi_reduction <add>, %131, %cst_102 [2] : vector<16x8x4xf32> to vector<16x8xf32>
    %135 = vector.shape_cast %134 : vector<16x8xf32> to vector<16x8x1xf32>
    %cst_103 = arith.constant dense<0.000000e+00> : vector<8x1xf32>
    %136 = vector.multi_reduction <add>, %135, %cst_103 [0] : vector<16x8x1xf32> to vector<8x1xf32>
    %137 = vector.shape_cast %136 : vector<8x1xf32> to vector<1x8x1xf32>
    %138 = arith.mulf %131, %131 : vector<16x8x4xf32>
    %cst_104 = arith.constant dense<0.000000e+00> : vector<16x8xf32>
    %139 = vector.multi_reduction <add>, %138, %cst_104 [2] : vector<16x8x4xf32> to vector<16x8xf32>
    %140 = vector.shape_cast %139 : vector<16x8xf32> to vector<16x8x1xf32>
    %cst_105 = arith.constant dense<0.000000e+00> : vector<8x1xf32>
    %141 = vector.multi_reduction <add>, %140, %cst_105 [0] : vector<16x8x1xf32> to vector<8x1xf32>
    %142 = vector.shape_cast %141 : vector<8x1xf32> to vector<1x8x1xf32>
    %cst_106 = arith.constant 1.562500e-02 : f32
    %143 = vector.broadcast %cst_106 : f32 to vector<1x8x1xf32>
    %144 = arith.mulf %137, %143 : vector<1x8x1xf32>
    %cst_107 = arith.constant 1.562500e-02 : f32
    %145 = vector.broadcast %cst_107 : f32 to vector<1x8x1xf32>
    %146 = arith.mulf %142, %145 : vector<1x8x1xf32>
    %147 = arith.mulf %144, %144 : vector<1x8x1xf32>
    %148 = arith.subf %146, %147 : vector<1x8x1xf32>
    %cst_108 = arith.constant 0.000000e+00 : f32
    %149 = vector.broadcast %cst_108 : f32 to vector<1x8x1xf32>
    %150 = arith.maximumf %148, %149 : vector<1x8x1xf32>
    %151 = vector.broadcast %144 : vector<1x8x1xf32> to vector<16x8x4xf32>
    %152 = arith.subf %131, %151 : vector<16x8x4xf32>
    %cst_109 = arith.constant 9.99999974E-6 : f32
    %153 = vector.broadcast %cst_109 : f32 to vector<1x8x1xf32>
    %154 = arith.addf %150, %153 : vector<1x8x1xf32>
    %155 = math.rsqrt %154 : vector<1x8x1xf32>
    %156 = vector.broadcast %155 : vector<1x8x1xf32> to vector<16x8x4xf32>
    %157 = arith.mulf %152, %156 : vector<16x8x4xf32>
    %158 = vector.shape_cast %132 : vector<8x1xf32> to vector<1x8x1xf32>
    %159 = vector.broadcast %158 : vector<1x8x1xf32> to vector<16x8x4xf32>
    %160 = arith.mulf %157, %159 : vector<16x8x4xf32>
    %161 = vector.shape_cast %133 : vector<8x1xf32> to vector<1x8x1xf32>
    %162 = vector.broadcast %161 : vector<1x8x1xf32> to vector<16x8x4xf32>
    %163 = arith.addf %160, %162 : vector<16x8x4xf32>
    %164 = arith.mulf %163, %163 : vector<16x8x4xf32>
    %165 = arith.mulf %163, %164 : vector<16x8x4xf32>
    %cst_110 = arith.constant 4.471500e-02 : f32
    %166 = vector.broadcast %cst_110 : f32 to vector<16x8x4xf32>
    %167 = arith.mulf %166, %165 : vector<16x8x4xf32>
    %168 = arith.addf %163, %167 : vector<16x8x4xf32>
    %cst_111 = arith.constant 0.797884583 : f32
    %169 = vector.broadcast %cst_111 : f32 to vector<16x8x4xf32>
    %170 = arith.mulf %169, %168 : vector<16x8x4xf32>
    %171 = math.tanh %170 : vector<16x8x4xf32>
    %cst_112 = arith.constant 1.000000e+00 : f32
    %172 = vector.broadcast %cst_112 : f32 to vector<16x8x4xf32>
    %173 = arith.addf %172, %171 : vector<16x8x4xf32>
    %cst_113 = arith.constant 5.000000e-01 : f32
    %174 = vector.broadcast %cst_113 : f32 to vector<16x8x4xf32>
    %175 = arith.mulf %174, %173 : vector<16x8x4xf32>
    %176 = arith.mulf %163, %175 : vector<16x8x4xf32>
    %177 = vector.shape_cast %176 : vector<16x8x4xf32> to vector<128x4xf32>
    %178 = arith.truncf %177 : vector<128x4xf32> to vector<128x4xbf16>
    %c0_114 = arith.constant 0 : index
    %c0_115 = arith.constant 0 : index
    %179 = vector.load %arg10[%c0_114, %c0_115] : memref<4x16xbf16, #tpu.memory_space<vmem>>, vector<4x16xbf16>
    %cst_116 = arith.constant dense<0.000000e+00> : vector<128x16xf32>
    %180 = tpu.matmul %178, %179, %cst_116 {dimension_numbers = #tpu.dot_dimension_numbers<[1], [0], [0], [1], [0, 0, 1, 1], [], []>} : vector<128x4xbf16>, vector<4x16xbf16>, vector<128x16xf32> -> vector<128x16xf32>
    %181 = vector.shape_cast %180 : vector<128x16xf32> to vector<16x8x16xf32>
    %182 = arith.addf %81, %181 : vector<16x8x16xf32>
    %c0_117 = arith.constant 0 : index
    %c0_118 = arith.constant 0 : index
    %183 = vector.load %arg11[%c0_117, %c0_118] : memref<8x1xf32, #tpu.memory_space<vmem>>, vector<8x1xf32>
    %c0_119 = arith.constant 0 : index
    %c0_120 = arith.constant 0 : index
    %184 = vector.load %arg12[%c0_119, %c0_120] : memref<8x1xf32, #tpu.memory_space<vmem>>, vector<8x1xf32>
    %cst_121 = arith.constant dense<0.000000e+00> : vector<16x8xf32>
    %185 = vector.multi_reduction <add>, %182, %cst_121 [2] : vector<16x8x16xf32> to vector<16x8xf32>
    %186 = vector.shape_cast %185 : vector<16x8xf32> to vector<16x8x1xf32>
    %cst_122 = arith.constant dense<0.000000e+00> : vector<8x1xf32>
    %187 = vector.multi_reduction <add>, %186, %cst_122 [0] : vector<16x8x1xf32> to vector<8x1xf32>
    %188 = vector.shape_cast %187 : vector<8x1xf32> to vector<1x8x1xf32>
    %189 = arith.mulf %182, %182 : vector<16x8x16xf32>
    %cst_123 = arith.constant dense<0.000000e+00> : vector<16x8xf32>
    %190 = vector.multi_reduction <add>, %189, %cst_123 [2] : vector<16x8x16xf32> to vector<16x8xf32>
    %191 = vector.shape_cast %190 : vector<16x8xf32> to vector<16x8x1xf32>
    %cst_124 = arith.constant dense<0.000000e+00> : vector<8x1xf32>
    %192 = vector.multi_reduction <add>, %191, %cst_124 [0] : vector<16x8x1xf32> to vector<8x1xf32>
    %193 = vector.shape_cast %192 : vector<8x1xf32> to vector<1x8x1xf32>
    %cst_125 = arith.constant 3.906250e-03 : f32
    %194 = vector.broadcast %cst_125 : f32 to vector<1x8x1xf32>
    %195 = arith.mulf %188, %194 : vector<1x8x1xf32>
    %cst_126 = arith.constant 3.906250e-03 : f32
    %196 = vector.broadcast %cst_126 : f32 to vector<1x8x1xf32>
    %197 = arith.mulf %193, %196 : vector<1x8x1xf32>
    %198 = arith.mulf %195, %195 : vector<1x8x1xf32>
    %199 = arith.subf %197, %198 : vector<1x8x1xf32>
    %cst_127 = arith.constant 0.000000e+00 : f32
    %200 = vector.broadcast %cst_127 : f32 to vector<1x8x1xf32>
    %201 = arith.maximumf %199, %200 : vector<1x8x1xf32>
    %202 = vector.broadcast %195 : vector<1x8x1xf32> to vector<16x8x16xf32>
    %203 = arith.subf %182, %202 : vector<16x8x16xf32>
    %cst_128 = arith.constant 9.99999974E-6 : f32
    %204 = vector.broadcast %cst_128 : f32 to vector<1x8x1xf32>
    %205 = arith.addf %201, %204 : vector<1x8x1xf32>
    %206 = math.rsqrt %205 : vector<1x8x1xf32>
    %207 = vector.broadcast %206 : vector<1x8x1xf32> to vector<16x8x16xf32>
    %208 = arith.mulf %203, %207 : vector<16x8x16xf32>
    %209 = vector.shape_cast %183 : vector<8x1xf32> to vector<1x8x1xf32>
    %210 = vector.broadcast %209 : vector<1x8x1xf32> to vector<16x8x16xf32>
    %211 = arith.mulf %208, %210 : vector<16x8x16xf32>
    %212 = vector.shape_cast %184 : vector<8x1xf32> to vector<1x8x1xf32>
    %213 = vector.broadcast %212 : vector<1x8x1xf32> to vector<16x8x16xf32>
    %214 = arith.addf %211, %213 : vector<16x8x16xf32>
    %215 = arith.mulf %214, %214 : vector<16x8x16xf32>
    %216 = arith.mulf %214, %215 : vector<16x8x16xf32>
    %cst_129 = arith.constant 4.471500e-02 : f32
    %217 = vector.broadcast %cst_129 : f32 to vector<16x8x16xf32>
    %218 = arith.mulf %217, %216 : vector<16x8x16xf32>
    %219 = arith.addf %214, %218 : vector<16x8x16xf32>
    %cst_130 = arith.constant 0.797884583 : f32
    %220 = vector.broadcast %cst_130 : f32 to vector<16x8x16xf32>
    %221 = arith.mulf %220, %219 : vector<16x8x16xf32>
    %222 = math.tanh %221 : vector<16x8x16xf32>
    %cst_131 = arith.constant 1.000000e+00 : f32
    %223 = vector.broadcast %cst_131 : f32 to vector<16x8x16xf32>
    %224 = arith.addf %223, %222 : vector<16x8x16xf32>
    %cst_132 = arith.constant 5.000000e-01 : f32
    %225 = vector.broadcast %cst_132 : f32 to vector<16x8x16xf32>
    %226 = arith.mulf %225, %224 : vector<16x8x16xf32>
    %227 = arith.mulf %214, %226 : vector<16x8x16xf32>
    %228 = arith.truncf %227 : vector<16x8x16xf32> to vector<16x8x16xbf16>
    %cst_133 = arith.constant 0.000000e+00 : bf16
    %229 = vector.broadcast %cst_133 : bf16 to vector<1x8x16xbf16>
    %cst_134 = arith.constant 0.000000e+00 : bf16
    %230 = vector.broadcast %cst_134 : bf16 to vector<16x8x1xbf16>
    %231 = vector.extract_strided_slice %228 {offsets = [0, 0, 0], sizes = [15, 8, 15], strides = [1, 1, 1]} : vector<16x8x16xbf16> to vector<15x8x15xbf16>
    %c1_135 = arith.constant 1 : index
    %c0_136 = arith.constant 0 : index
    %c1_137 = arith.constant 1 : index
    %232 = vector.load %arg15[%c1_135, %c0_136, %c1_137] : memref<16x76x16xbf16, #tpu.memory_space<vmem>>, vector<15x8x15xbf16>
    tpu.vector_store %arg15[%c1_135, %c0_136, %c1_137], %231 {strides = array<i32>} : memref<16x76x16xbf16, #tpu.memory_space<vmem>>, vector<15x8x15xbf16>,
    %c0_138 = arith.constant 0 : index
    %c0_139 = arith.constant 0 : index
    %c0_140 = arith.constant 0 : index
    %233 = vector.load %arg15[%c0_138, %c0_139, %c0_140] : memref<16x76x16xbf16, #tpu.memory_space<vmem>>, vector<1x8x16xbf16>
    tpu.vector_store %arg15[%c0_138, %c0_139, %c0_140], %229 {strides = array<i32>} : memref<16x76x16xbf16, #tpu.memory_space<vmem>>, vector<1x8x16xbf16>,
    %c0_141 = arith.constant 0 : index
    %c0_142 = arith.constant 0 : index
    %c0_143 = arith.constant 0 : index
    %234 = vector.load %arg15[%c0_141, %c0_142, %c0_143] : memref<16x76x16xbf16, #tpu.memory_space<vmem>>, vector<16x8x1xbf16>
    tpu.vector_store %arg15[%c0_141, %c0_142, %c0_143], %230 {strides = array<i32>} : memref<16x76x16xbf16, #tpu.memory_space<vmem>>, vector<16x8x1xbf16>,
    %235 = vector.extract_strided_slice %228 {offsets = [0, 0, 0], sizes = [15, 8, 16], strides = [1, 1, 1]} : vector<16x8x16xbf16> to vector<15x8x16xbf16>
    %c1_144 = arith.constant 1 : index
    %c8_145 = arith.constant 8 : index
    %c0_146 = arith.constant 0 : index
    %236 = vector.load %arg15[%c1_144, %c8_145, %c0_146] : memref<16x76x16xbf16, #tpu.memory_space<vmem>>, vector<15x8x16xbf16>
    tpu.vector_store %arg15[%c1_144, %c8_145, %c0_146], %235 {strides = array<i32>} : memref<16x76x16xbf16, #tpu.memory_space<vmem>>, vector<15x8x16xbf16>,
    %c0_147 = arith.constant 0 : index
    %c8_148 = arith.constant 8 : index
    %c0_149 = arith.constant 0 : index
    %237 = vector.load %arg15[%c0_147, %c8_148, %c0_149] : memref<16x76x16xbf16, #tpu.memory_space<vmem>>, vector<1x8x16xbf16>
    tpu.vector_store %arg15[%c0_147, %c8_148, %c0_149], %229 {strides = array<i32>} : memref<16x76x16xbf16, #tpu.memory_space<vmem>>, vector<1x8x16xbf16>,
    %238 = vector.extract_strided_slice %228 {offsets = [0, 0, 1], sizes = [15, 8, 15], strides = [1, 1, 1]} : vector<16x8x16xbf16> to vector<15x8x15xbf16>
    %c1_150 = arith.constant 1 : index
    %c16_151 = arith.constant 16 : index
    %c0_152 = arith.constant 0 : index
    %239 = vector.load %arg15[%c1_150, %c16_151, %c0_152] : memref<16x76x16xbf16, #tpu.memory_space<vmem>>, vector<15x8x15xbf16>
    tpu.vector_store %arg15[%c1_150, %c16_151, %c0_152], %238 {strides = array<i32>} : memref<16x76x16xbf16, #tpu.memory_space<vmem>>, vector<15x8x15xbf16>,
    %c0_153 = arith.constant 0 : index
    %c16_154 = arith.constant 16 : index
    %c0_155 = arith.constant 0 : index
    %240 = vector.load %arg15[%c0_153, %c16_154, %c0_155] : memref<16x76x16xbf16, #tpu.memory_space<vmem>>, vector<1x8x16xbf16>
    tpu.vector_store %arg15[%c0_153, %c16_154, %c0_155], %229 {strides = array<i32>} : memref<16x76x16xbf16, #tpu.memory_space<vmem>>, vector<1x8x16xbf16>,
    %c0_156 = arith.constant 0 : index
    %c16_157 = arith.constant 16 : index
    %c15_158 = arith.constant 15 : index
    %241 = vector.load %arg15[%c0_156, %c16_157, %c15_158] : memref<16x76x16xbf16, #tpu.memory_space<vmem>>, vector<16x8x1xbf16>
    tpu.vector_store %arg15[%c0_156, %c16_157, %c15_158], %230 {strides = array<i32>} : memref<16x76x16xbf16, #tpu.memory_space<vmem>>, vector<16x8x1xbf16>,
    %242 = vector.extract_strided_slice %228 {offsets = [0, 0, 0], sizes = [16, 8, 15], strides = [1, 1, 1]} : vector<16x8x16xbf16> to vector<16x8x15xbf16>
    %c0_159 = arith.constant 0 : index
    %c24_160 = arith.constant 24 : index
    %c1_161 = arith.constant 1 : index
    %243 = vector.load %arg15[%c0_159, %c24_160, %c1_161] : memref<16x76x16xbf16, #tpu.memory_space<vmem>>, vector<16x8x15xbf16>
    tpu.vector_store %arg15[%c0_159, %c24_160, %c1_161], %242 {strides = array<i32>} : memref<16x76x16xbf16, #tpu.memory_space<vmem>>, vector<16x8x15xbf16>,
    %c0_162 = arith.constant 0 : index
    %c24_163 = arith.constant 24 : index
    %c0_164 = arith.constant 0 : index
    %244 = vector.load %arg15[%c0_162, %c24_163, %c0_164] : memref<16x76x16xbf16, #tpu.memory_space<vmem>>, vector<16x8x1xbf16>
    tpu.vector_store %arg15[%c0_162, %c24_163, %c0_164], %230 {strides = array<i32>} : memref<16x76x16xbf16, #tpu.memory_space<vmem>>, vector<16x8x1xbf16>,
    %c0_165 = arith.constant 0 : index
    %c32_166 = arith.constant 32 : index
    %c0_167 = arith.constant 0 : index
    %245 = vector.load %arg15[%c0_165, %c32_166, %c0_167] : memref<16x76x16xbf16, #tpu.memory_space<vmem>>, vector<16x8x16xbf16>
    tpu.vector_store %arg15[%c0_165, %c32_166, %c0_167], %228 {strides = array<i32>} : memref<16x76x16xbf16, #tpu.memory_space<vmem>>, vector<16x8x16xbf16>,
    %246 = vector.extract_strided_slice %228 {offsets = [0, 0, 1], sizes = [16, 8, 15], strides = [1, 1, 1]} : vector<16x8x16xbf16> to vector<16x8x15xbf16>
    %c0_168 = arith.constant 0 : index
    %c40 = arith.constant 40 : index
    %c0_169 = arith.constant 0 : index
    %247 = vector.load %arg15[%c0_168, %c40, %c0_169] : memref<16x76x16xbf16, #tpu.memory_space<vmem>>, vector<16x8x15xbf16>
    tpu.vector_store %arg15[%c0_168, %c40, %c0_169], %246 {strides = array<i32>} : memref<16x76x16xbf16, #tpu.memory_space<vmem>>, vector<16x8x15xbf16>,
    %c0_170 = arith.constant 0 : index
    %c40_171 = arith.constant 40 : index
    %c15_172 = arith.constant 15 : index
    %248 = vector.load %arg15[%c0_170, %c40_171, %c15_172] : memref<16x76x16xbf16, #tpu.memory_space<vmem>>, vector<16x8x1xbf16>
    tpu.vector_store %arg15[%c0_170, %c40_171, %c15_172], %230 {strides = array<i32>} : memref<16x76x16xbf16, #tpu.memory_space<vmem>>, vector<16x8x1xbf16>,
    %249 = vector.extract_strided_slice %228 {offsets = [1, 0, 0], sizes = [15, 8, 15], strides = [1, 1, 1]} : vector<16x8x16xbf16> to vector<15x8x15xbf16>
    %c0_173 = arith.constant 0 : index
    %c48 = arith.constant 48 : index
    %c1_174 = arith.constant 1 : index
    %250 = vector.load %arg15[%c0_173, %c48, %c1_174] : memref<16x76x16xbf16, #tpu.memory_space<vmem>>, vector<15x8x15xbf16>
    tpu.vector_store %arg15[%c0_173, %c48, %c1_174], %249 {strides = array<i32>} : memref<16x76x16xbf16, #tpu.memory_space<vmem>>, vector<15x8x15xbf16>,
    %c15_175 = arith.constant 15 : index
    %c48_176 = arith.constant 48 : index
    %c0_177 = arith.constant 0 : index
    %251 = vector.load %arg15[%c15_175, %c48_176, %c0_177] : memref<16x76x16xbf16, #tpu.memory_space<vmem>>, vector<1x8x16xbf16>
    tpu.vector_store %arg15[%c15_175, %c48_176, %c0_177], %229 {strides = array<i32>} : memref<16x76x16xbf16, #tpu.memory_space<vmem>>, vector<1x8x16xbf16>,
    %c0_178 = arith.constant 0 : index
    %c48_179 = arith.constant 48 : index
    %c0_180 = arith.constant 0 : index
    %252 = vector.load %arg15[%c0_178, %c48_179, %c0_180] : memref<16x76x16xbf16, #tpu.memory_space<vmem>>, vector<16x8x1xbf16>
    tpu.vector_store %arg15[%c0_178, %c48_179, %c0_180], %230 {strides = array<i32>} : memref<16x76x16xbf16, #tpu.memory_space<vmem>>, vector<16x8x1xbf16>,
    %253 = vector.extract_strided_slice %228 {offsets = [1, 0, 0], sizes = [15, 8, 16], strides = [1, 1, 1]} : vector<16x8x16xbf16> to vector<15x8x16xbf16>
    %c0_181 = arith.constant 0 : index
    %c56 = arith.constant 56 : index
    %c0_182 = arith.constant 0 : index
    %254 = vector.load %arg15[%c0_181, %c56, %c0_182] : memref<16x76x16xbf16, #tpu.memory_space<vmem>>, vector<15x8x16xbf16>
    tpu.vector_store %arg15[%c0_181, %c56, %c0_182], %253 {strides = array<i32>} : memref<16x76x16xbf16, #tpu.memory_space<vmem>>, vector<15x8x16xbf16>,
    %c15_183 = arith.constant 15 : index
    %c56_184 = arith.constant 56 : index
    %c0_185 = arith.constant 0 : index
    %255 = vector.load %arg15[%c15_183, %c56_184, %c0_185] : memref<16x76x16xbf16, #tpu.memory_space<vmem>>, vector<1x8x16xbf16>
    tpu.vector_store %arg15[%c15_183, %c56_184, %c0_185], %229 {strides = array<i32>} : memref<16x76x16xbf16, #tpu.memory_space<vmem>>, vector<1x8x16xbf16>,
    %256 = vector.extract_strided_slice %228 {offsets = [1, 0, 1], sizes = [15, 8, 15], strides = [1, 1, 1]} : vector<16x8x16xbf16> to vector<15x8x15xbf16>
    %c0_186 = arith.constant 0 : index
    %c64 = arith.constant 64 : index
    %c0_187 = arith.constant 0 : index
    %257 = vector.load %arg15[%c0_186, %c64, %c0_187] : memref<16x76x16xbf16, #tpu.memory_space<vmem>>, vector<15x8x15xbf16>
    tpu.vector_store %arg15[%c0_186, %c64, %c0_187], %256 {strides = array<i32>} : memref<16x76x16xbf16, #tpu.memory_space<vmem>>, vector<15x8x15xbf16>,
    %c15_188 = arith.constant 15 : index
    %c64_189 = arith.constant 64 : index
    %c0_190 = arith.constant 0 : index
    %258 = vector.load %arg15[%c15_188, %c64_189, %c0_190] : memref<16x76x16xbf16, #tpu.memory_space<vmem>>, vector<1x8x16xbf16>
    tpu.vector_store %arg15[%c15_188, %c64_189, %c0_190], %229 {strides = array<i32>} : memref<16x76x16xbf16, #tpu.memory_space<vmem>>, vector<1x8x16xbf16>,
    %c0_191 = arith.constant 0 : index
    %c64_192 = arith.constant 64 : index
    %c15_193 = arith.constant 15 : index
    %259 = vector.load %arg15[%c0_191, %c64_192, %c15_193] : memref<16x76x16xbf16, #tpu.memory_space<vmem>>, vector<16x8x1xbf16>
    tpu.vector_store %arg15[%c0_191, %c64_192, %c15_193], %230 {strides = array<i32>} : memref<16x76x16xbf16, #tpu.memory_space<vmem>>, vector<16x8x1xbf16>,
    %260 = arith.truncf %1 : vector<16x4x16xf32> to vector<16x4x16xbf16>
    %c0_194 = arith.constant 0 : index
    %c72 = arith.constant 72 : index
    %c0_195 = arith.constant 0 : index
    %261 = vector.load %arg15[%c0_194, %c72, %c0_195] : memref<16x76x16xbf16, #tpu.memory_space<vmem>>, vector<16x4x16xbf16>
    tpu.vector_store %arg15[%c0_194, %c72, %c0_195], %260 {strides = array<i32>} : memref<16x76x16xbf16, #tpu.memory_space<vmem>>, vector<16x4x16xbf16>,
    %c0_196 = arith.constant 0 : index
    %c0_197 = arith.constant 0 : index
    %262 = vector.load %arg13[%c0_196, %c0_197] : memref<8x76xbf16, #tpu.memory_space<vmem>>, vector<8x76xbf16>
    %c0_i32_198 = arith.constant 0 : i32
    %c16_i32_199 = arith.constant 16 : i32
    %263 = arith.addi %c0_i32_198, %c16_i32_199 : i32
    %c1_i32_200 = arith.constant 1 : i32
    scf.for %arg17 = %c0_i32_198 to %263 step %c1_i32_200  : i32 {
      %264 = arith.index_cast %arg17 : i32 to index
      %c0_202 = arith.constant 0 : index
      %c0_203 = arith.constant 0 : index
      %265 = vector.load %arg15[%264, %c0_202, %c0_203] : memref<16x76x16xbf16, #tpu.memory_space<vmem>>, vector<1x76x16xbf16>
      %266 = vector.shape_cast %265 : vector<1x76x16xbf16> to vector<76x16xbf16>
      %cst_204 = arith.constant dense<0.000000e+00> : vector<8x16xf32>
      %267 = tpu.matmul %262, %266, %cst_204 {dimension_numbers = #tpu.dot_dimension_numbers<[1], [0], [0], [1], [0, 0, 1, 1], [], []>} : vector<8x76xbf16>, vector<76x16xbf16>, vector<8x16xf32> -> vector<8x16xf32>
      %c0_205 = arith.constant 0 : index
      %268 = arith.index_cast %arg17 : i32 to index
      %c0_206 = arith.constant 0 : index
      %c0_207 = arith.constant 0 : index
      %269 = vector.load %arg14[%c0_205, %268, %c0_206, %c0_207] : memref<1x16x8x16xf32, #tpu.memory_space<vmem>>, vector<1x1x8x16xf32>
      %270 = vector.shape_cast %269 : vector<1x1x8x16xf32> to vector<8x16xf32>
      %271 = vector.shape_cast %267 : vector<8x16xf32> to vector<1x1x8x16xf32>
      tpu.vector_store %arg14[%c0_205, %268, %c0_206, %c0_207], %271 {strides = array<i32>} : memref<1x16x8x16xf32, #tpu.memory_space<vmem>>, vector<1x1x8x16xf32>,
    }
    %c16_i32_201 = arith.constant 16 : i32
    return
  }
  func.func @transform_0(%arg0: i32) -> (i32, i32, i32, i32) {
    %c0_i32 = arith.constant 0 : i32
    %c0_i32_0 = arith.constant 0 : i32
    %c0_i32_1 = arith.constant 0 : i32
    %c0_i32_2 = arith.constant 0 : i32
    return %arg0, %c0_i32, %c0_i32_0, %c0_i32_1 : i32, i32, i32, i32
  }
  func.func @transform_1(%arg0: i32) -> (i32, i32) {
    %c0_i32 = arith.constant 0 : i32
    %c0_i32_0 = arith.constant 0 : i32
    %c0_i32_1 = arith.constant 0 : i32
    return %c0_i32, %c0_i32_0 : i32, i32
  }
  func.func @transform_2(%arg0: i32) -> (i32, i32) {
    %c0_i32 = arith.constant 0 : i32
    %c0_i32_0 = arith.constant 0 : i32
    %c0_i32_1 = arith.constant 0 : i32
    return %c0_i32, %c0_i32_0 : i32, i32
  }
  func.func @transform_3(%arg0: i32) -> (i32, i32) {
    %c0_i32 = arith.constant 0 : i32
    %c0_i32_0 = arith.constant 0 : i32
    %c0_i32_1 = arith.constant 0 : i32
    return %c0_i32, %c0_i32_0 : i32, i32
  }
  func.func @transform_4(%arg0: i32) -> (i32, i32) {
    %c0_i32 = arith.constant 0 : i32
    %c0_i32_0 = arith.constant 0 : i32
    %c0_i32_1 = arith.constant 0 : i32
    return %c0_i32, %c0_i32_0 : i32, i32
  }
  func.func @transform_5(%arg0: i32) -> (i32, i32) {
    %c0_i32 = arith.constant 0 : i32
    %c0_i32_0 = arith.constant 0 : i32
    %c0_i32_1 = arith.constant 0 : i32
    return %c0_i32, %c0_i32_0 : i32, i32
  }
  func.func @transform_6(%arg0: i32) -> (i32, i32) {
    %c0_i32 = arith.constant 0 : i32
    %c0_i32_0 = arith.constant 0 : i32
    %c0_i32_1 = arith.constant 0 : i32
    return %c0_i32, %c0_i32_0 : i32, i32
  }
  func.func @transform_7(%arg0: i32) -> (i32, i32) {
    %c0_i32 = arith.constant 0 : i32
    %c0_i32_0 = arith.constant 0 : i32
    %c0_i32_1 = arith.constant 0 : i32
    return %c0_i32, %c0_i32_0 : i32, i32
  }
  func.func @transform_8(%arg0: i32) -> (i32, i32) {
    %c0_i32 = arith.constant 0 : i32
    %c0_i32_0 = arith.constant 0 : i32
    %c0_i32_1 = arith.constant 0 : i32
    return %c0_i32, %c0_i32_0 : i32, i32
  }
  func.func @transform_9(%arg0: i32) -> (i32, i32) {
    %c0_i32 = arith.constant 0 : i32
    %c0_i32_0 = arith.constant 0 : i32
    %c0_i32_1 = arith.constant 0 : i32
    return %c0_i32, %c0_i32_0 : i32, i32
  }
  func.func @transform_10(%arg0: i32) -> (i32, i32) {
    %c0_i32 = arith.constant 0 : i32
    %c0_i32_0 = arith.constant 0 : i32
    %c0_i32_1 = arith.constant 0 : i32
    return %c0_i32, %c0_i32_0 : i32, i32
  }
  func.func @transform_11(%arg0: i32) -> (i32, i32) {
    %c0_i32 = arith.constant 0 : i32
    %c0_i32_0 = arith.constant 0 : i32
    %c0_i32_1 = arith.constant 0 : i32
    return %c0_i32, %c0_i32_0 : i32, i32
  }
  func.func @transform_12(%arg0: i32) -> (i32, i32) {
    %c0_i32 = arith.constant 0 : i32
    %c0_i32_0 = arith.constant 0 : i32
    %c0_i32_1 = arith.constant 0 : i32
    return %c0_i32, %c0_i32_0 : i32, i32
  }
  func.func @transform_13(%arg0: i32) -> (i32, i32, i32, i32) {
    %c0_i32 = arith.constant 0 : i32
    %c0_i32_0 = arith.constant 0 : i32
    %c0_i32_1 = arith.constant 0 : i32
    %c0_i32_2 = arith.constant 0 : i32
    return %arg0, %c0_i32, %c0_i32_0, %c0_i32_1 : i32, i32, i32, i32
  }
}

</mosaic_0001>

<llo_original>
// kernel: tfc_tdf_forward.3
$region0: #{tfc_tdf_forward.3}
  #allocation0 [shape = 'u32[]', space=smem, size = 0x4, offset = 0x4, fixed_abs, tag = 'smem constant byte address 0x4 - core index']
  #allocation1 [shape = 'u32[72,128]{1,0:T(1,128)}', space=vmem, size = 0x9000, scoped, tag = 'internal scratch']
  #allocation2 [shape = 'bf16[16,80,16]{2,1,0:T(8,128)(2,1)}', space=vmem, size = 0x50000, scoped, tag = 'scratch operand']
  #allocation3 [shape = 'f32[16,8,16]{2,1,0:T(8,128)}', space=vmem, size = 0x10000, scoped, tag = 'scratch operand']
  %s0 = inlined_call_operand.vmem [shape: f32[2,16,8,16], index: 0, kind: input, shape index: {}]
  %s1 = inlined_call_operand.vmem [shape: f32[8,1], index: 1, kind: input, shape index: {}]
  %s2 = inlined_call_operand.vmem [shape: f32[8,1], index: 2, kind: input, shape index: {}]
  %s3 = inlined_call_operand.vmem [shape: bf16[8,72], index: 3, kind: input, shape index: {}]
  %s4 = inlined_call_operand.vmem [shape: f32[8,1], index: 4, kind: input, shape index: {}]
  %s5 = inlined_call_operand.vmem [shape: f32[8,1], index: 5, kind: input, shape index: {}]
  %s6 = inlined_call_operand.vmem [shape: bf16[16,4], index: 6, kind: input, shape index: {}]
  %s7 = inlined_call_operand.vmem [shape: f32[8,1], index: 7, kind: input, shape index: {}]
  %s8 = inlined_call_operand.vmem [shape: f32[8,1], index: 8, kind: input, shape index: {}]
  %s9 = inlined_call_operand.vmem [shape: bf16[4,16], index: 9, kind: input, shape index: {}]
  %s10 = inlined_call_operand.vmem [shape: f32[8,1], index: 10, kind: input, shape index: {}]
  %s11 = inlined_call_operand.vmem [shape: f32[8,1], index: 11, kind: input, shape index: {}]
  %s12 = inlined_call_operand.vmem [shape: bf16[8,80], index: 12, kind: input, shape index: {}]
  %s13 = inlined_call_operand.vmem [shape: f32[2,16,8,16], index: 13, kind: output, shape index: {}]
  %s14 = sld [smem:[#allocation0]]
  $region99: #{tfc_tdf_forward.3} parent=0
    _
  %s16 = ssub.s32 1, %s14
  %s17 = scalar_select 0, %s16, %s14
  loop: start=0, step=1, limit=4
  $region2: #{tfc_tdf_forward.3} parent=0 // loop_pre_header
    _
  $region3: #{tfc_tdf_forward.3} parent=0 // loop_header
    %s19 = sphi 0, %s23
    %p20 = scmp.ge.s32.totalorder %s19, 4
    %s29 = sphi 0, %s31
    %s32 = sphi 0, %s29
    %s33 = sphi 0, %s32
    %s49 = sphi 0, %s33
    %s53 = sphi 0, %s53
    %s55 = sphi 0, %s53
    %s56 = sphi 0, %s55
    %s70 = sphi 0, %s56
    %s74 = sphi 0, %s74
    %s76 = sphi 0, %s74
    %s77 = sphi 0, %s76
    %s91 = sphi 0, %s77
    %s95 = sphi 0, %s95
    %s97 = sphi 0, %s95
    %s98 = sphi 0, %s97
    %s112 = sphi 0, %s98
    %s116 = sphi 0, %s116
    %s118 = sphi 0, %s116
    %s119 = sphi 0, %s118
    %s133 = sphi 0, %s119
    %s137 = sphi 0, %s137
    %s139 = sphi 0, %s137
    %s140 = sphi 0, %s139
    %s154 = sphi 0, %s140
    %s158 = sphi 0, %s158
    %s160 = sphi 0, %s158
    %s161 = sphi 0, %s160
    %s175 = sphi 0, %s161
    %s179 = sphi 0, %s179
    %s181 = sphi 0, %s179
    %s182 = sphi 0, %s181
    %s196 = sphi 0, %s182
    %s200 = sphi 0, %s200
    %s202 = sphi 0, %s200
    %s203 = sphi 0, %s202
    %s217 = sphi 0, %s203
    %s221 = sphi 0, %s221
    %s223 = sphi 0, %s221
    %s224 = sphi 0, %s223
    %s238 = sphi 0, %s224
    %s242 = sphi 0, %s242
    %s244 = sphi 0, %s242
    %s245 = sphi 0, %s244
    %s259 = sphi 0, %s245
    %s263 = sphi 0, %s263
    %s265 = sphi 0, %s263
    %s266 = sphi 0, %s265
    %s280 = sphi 0, %s266
    %s284 = sphi 0, %s284
    %s286 = sphi 0, %s284
    %s287 = sphi 0, %s286
    %s301 = sphi 0, %s287
    %s307 = sphi 0, %s309
    %s310 = sphi 0, %s307
    %s311 = sphi 0, %s310
    %s327 = sphi 0, %s311
  $region4: #{tfc_tdf_forward.3} parent=0 // loop_header_branch
    %22 = sbr.rel (%p20) target = $region8
  $region5: #{tfc_tdf_forward.3} parent=0 // loop_body
    %s24 = ssub.s32 %s19, 1
    %s25 = ssub.s32 %s19, 2
    %s26 = sadd.s32 %s19, 1
    %s27 = ssub.s32 %s19, %s26
    %p28 = scmp.eq.s32.totalorder %s27, 0
    %s30 = sadd.s32 %s29, 1
    %s31 = scalar_select %p28, %s29, %s30
    %p34 = pneg %p28
    %p35 = scmp.eq.s32.totalorder %s19, 1
    %p36 = por %p34, %p35
    %p37 = scmp.ne.s32.totalorder %s29, %s32
    %p38 = scmp.eq.s32.totalorder %s19, 0
    %p39 = por %p37, %p38
    %p40 = scmp.ne.s32.totalorder %s29, %s32
    %p41 = scmp.eq.s32.totalorder %s24, 1
    %p42 = por %p40, %p41
    %p43 = scmp.ne.s32.totalorder %s32, %s33
    %p44 = scmp.eq.s32.totalorder %s24, 0
    %p45 = por %p43, %p44
    %p46 = scmp.ne.s32.totalorder %s32, %s33
    %p47 = scmp.eq.s32.totalorder %s25, 1
    %p48 = por %p46, %p47
    %p50 = scmp.ne.s32.totalorder %s33, %s49
    %p51 = scmp.eq.s32.totalorder %s25, 0
    %p52 = por %p50, %p51
    %s54 = sadd.s32 %s53, 1
    %p57 = scmp.eq.s32.totalorder %s19, 1
    %p58 = scmp.ne.s32.totalorder %s53, %s55
    %p59 = scmp.eq.s32.totalorder %s19, 0
    %p60 = por %p58, %p59
    %p61 = scmp.ne.s32.totalorder %s53, %s55
    %p62 = scmp.eq.s32.totalorder %s24, 1
    %p63 = por %p61, %p62
    %p64 = scmp.ne.s32.totalorder %s55, %s56
    %p65 = scmp.eq.s32.totalorder %s24, 0
    %p66 = por %p64, %p65
    %p67 = scmp.ne.s32.totalorder %s55, %s56
    %p68 = scmp.eq.s32.totalorder %s25, 1
    %p69 = por %p67, %p68
    %p71 = scmp.ne.s32.totalorder %s56, %s70
    %p72 = scmp.eq.s32.totalorder %s25, 0
    %p73 = por %p71, %p72
    %s75 = sadd.s32 %s74, 1
    %p78 = scmp.eq.s32.totalorder %s19, 1
    %p79 = scmp.ne.s32.totalorder %s74, %s76
    %p80 = scmp.eq.s32.totalorder %s19, 0
    %p81 = por %p79, %p80
    %p82 = scmp.ne.s32.totalorder %s74, %s76
    %p83 = scmp.eq.s32.totalorder %s24, 1
    %p84 = por %p82, %p83
    %p85 = scmp.ne.s32.totalorder %s76, %s77
    %p86 = scmp.eq.s32.totalorder %s24, 0
    %p87 = por %p85, %p86
    %p88 = scmp.ne.s32.totalorder %s76, %s77
    %p89 = scmp.eq.s32.totalorder %s25, 1
    %p90 = por %p88, %p89
    %p92 = scmp.ne.s32.totalorder %s77, %s91
    %p93 = scmp.eq.s32.totalorder %s25, 0
    %p94 = por %p92, %p93
    %s96 = sadd.s32 %s95, 1
    %p99 = scmp.eq.s32.totalorder %s19, 1
    %p100 = scmp.ne.s32.totalorder %s95, %s97
    %p101 = scmp.eq.s32.totalorder %s19, 0
    %p102 = por %p100, %p101
    %p103 = scmp.ne.s32.totalorder %s95, %s97
    %p104 = scmp.eq.s32.totalorder %s24, 1
    %p105 = por %p103, %p104
    %p106 = scmp.ne.s32.totalorder %s97, %s98
    %p107 = scmp.eq.s32.totalorder %s24, 0
    %p108 = por %p106, %p107
    %p109 = scmp.ne.s32.totalorder %s97, %s98
    %p110 = scmp.eq.s32.totalorder %s25, 1
    %p111 = por %p109, %p110
    %p113 = scmp.ne.s32.totalorder %s98, %s112
    %p114 = scmp.eq.s32.totalorder %s25, 0
    %p115 = por %p113, %p114
    %s117 = sadd.s32 %s116, 1
    %p120 = scmp.eq.s32.totalorder %s19, 1
    %p121 = scmp.ne.s32.totalorder %s116, %s118
    %p122 = scmp.eq.s32.totalorder %s19, 0
    %p123 = por %p121, %p122
    %p124 = scmp.ne.s32.totalorder %s116, %s118
    %p125 = scmp.eq.s32.totalorder %s24, 1
    %p126 = por %p124, %p125
    %p127 = scmp.ne.s32.totalorder %s118, %s119
    %p128 = scmp.eq.s32.totalorder %s24, 0
    %p129 = por %p127, %p128
    %p130 = scmp.ne.s32.totalorder %s118, %s119
    %p131 = scmp.eq.s32.totalorder %s25, 1
    %p132 = por %p130, %p131
    %p134 = scmp.ne.s32.totalorder %s119, %s133
    %p135 = scmp.eq.s32.totalorder %s25, 0
    %p136 = por %p134, %p135
    %s138 = sadd.s32 %s137, 1
    %p141 = scmp.eq.s32.totalorder %s19, 1
    %p142 = scmp.ne.s32.totalorder %s137, %s139
    %p143 = scmp.eq.s32.totalorder %s19, 0
    %p144 = por %p142, %p143
    %p145 = scmp.ne.s32.totalorder %s137, %s139
    %p146 = scmp.eq.s32.totalorder %s24, 1
    %p147 = por %p145, %p146
    %p148 = scmp.ne.s32.totalorder %s139, %s140
    %p149 = scmp.eq.s32.totalorder %s24, 0
    %p150 = por %p148, %p149
    %p151 = scmp.ne.s32.totalorder %s139, %s140
    %p152 = scmp.eq.s32.totalorder %s25, 1
    %p153 = por %p151, %p152
    %p155 = scmp.ne.s32.totalorder %s140, %s154
    %p156 = scmp.eq.s32.totalorder %s25, 0
    %p157 = por %p155, %p156
    %s159 = sadd.s32 %s158, 1
    %p162 = scmp.eq.s32.totalorder %s19, 1
    %p163 = scmp.ne.s32.totalorder %s158, %s160
    %p164 = scmp.eq.s32.totalorder %s19, 0
    %p165 = por %p163, %p164
    %p166 = scmp.ne.s32.totalorder %s158, %s160
    %p167 = scmp.eq.s32.totalorder %s24, 1
    %p168 = por %p166, %p167
    %p169 = scmp.ne.s32.totalorder %s160, %s161
    %p170 = scmp.eq.s32.totalorder %s24, 0
    %p171 = por %p169, %p170
    %p172 = scmp.ne.s32.totalorder %s160, %s161
    %p173 = scmp.eq.s32.totalorder %s25, 1
    %p174 = por %p172, %p173
    %p176 = scmp.ne.s32.totalorder %s161, %s175
    %p177 = scmp.eq.s32.totalorder %s25, 0
    %p178 = por %p176, %p177
    %s180 = sadd.s32 %s179, 1
    %p183 = scmp.eq.s32.totalorder %s19, 1
    %p184 = scmp.ne.s32.totalorder %s179, %s181
    %p185 = scmp.eq.s32.totalorder %s19, 0
    %p186 = por %p184, %p185
    %p187 = scmp.ne.s32.totalorder %s179, %s181
    %p188 = scmp.eq.s32.totalorder %s24, 1
    %p189 = por %p187, %p188
    %p190 = scmp.ne.s32.totalorder %s181, %s182
    %p191 = scmp.eq.s32.totalorder %s24, 0
    %p192 = por %p190, %p191
    %p193 = scmp.ne.s32.totalorder %s181, %s182
    %p194 = scmp.eq.s32.totalorder %s25, 1
    %p195 = por %p193, %p194
    %p197 = scmp.ne.s32.totalorder %s182, %s196
    %p198 = scmp.eq.s32.totalorder %s25, 0
    %p199 = por %p197, %p198
    %s201 = sadd.s32 %s200, 1
    %p204 = scmp.eq.s32.totalorder %s19, 1
    %p205 = scmp.ne.s32.totalorder %s200, %s202
    %p206 = scmp.eq.s32.totalorder %s19, 0
    %p207 = por %p205, %p206
    %p208 = scmp.ne.s32.totalorder %s200, %s202
    %p209 = scmp.eq.s32.totalorder %s24, 1
    %p210 = por %p208, %p209
    %p211 = scmp.ne.s32.totalorder %s202, %s203
    %p212 = scmp.eq.s32.totalorder %s24, 0
    %p213 = por %p211, %p212
    %p214 = scmp.ne.s32.totalorder %s202, %s203
    %p215 = scmp.eq.s32.totalorder %s25, 1
    %p216 = por %p214, %p215
    %p218 = scmp.ne.s32.totalorder %s203, %s217
    %p219 = scmp.eq.s32.totalorder %s25, 0
    %p220 = por %p218, %p219
    %s222 = sadd.s32 %s221, 1
    %p225 = scmp.eq.s32.totalorder %s19, 1
    %p226 = scmp.ne.s32.totalorder %s221, %s223
    %p227 = scmp.eq.s32.totalorder %s19, 0
    %p228 = por %p226, %p227
    %p229 = scmp.ne.s32.totalorder %s221, %s223
    %p230 = scmp.eq.s32.totalorder %s24, 1
    %p231 = por %p229, %p230
    %p232 = scmp.ne.s32.totalorder %s223, %s224
    %p233 = scmp.eq.s32.totalorder %s24, 0
    %p234 = por %p232, %p233
    %p235 = scmp.ne.s32.totalorder %s223, %s224
    %p236 = scmp.eq.s32.totalorder %s25, 1
    %p237 = por %p235, %p236
    %p239 = scmp.ne.s32.totalorder %s224, %s238
    %p240 = scmp.eq.s32.totalorder %s25, 0
    %p241 = por %p239, %p240
    %s243 = sadd.s32 %s242, 1
    %p246 = scmp.eq.s32.totalorder %s19, 1
    %p247 = scmp.ne.s32.totalorder %s242, %s244
    %p248 = scmp.eq.s32.totalorder %s19, 0
    %p249 = por %p247, %p248
    %p250 = scmp.ne.s32.totalorder %s242, %s244
    %p251 = scmp.eq.s32.totalorder %s24, 1
    %p252 = por %p250, %p251
    %p253 = scmp.ne.s32.totalorder %s244, %s245
    %p254 = scmp.eq.s32.totalorder %s24, 0
    %p255 = por %p253, %p254
    %p256 = scmp.ne.s32.totalorder %s244, %s245
    %p257 = scmp.eq.s32.totalorder %s25, 1
    %p258 = por %p256, %p257
    %p260 = scmp.ne.s32.totalorder %s245, %s259
    %p261 = scmp.eq.s32.totalorder %s25, 0
    %p262 = por %p260, %p261
    %s264 = sadd.s32 %s263, 1
    %p267 = scmp.eq.s32.totalorder %s19, 1
    %p268 = scmp.ne.s32.totalorder %s263, %s265
    %p269 = scmp.eq.s32.totalorder %s19, 0
    %p270 = por %p268, %p269
    %p271 = scmp.ne.s32.totalorder %s263, %s265
    %p272 = scmp.eq.s32.totalorder %s24, 1
    %p273 = por %p271, %p272
    %p274 = scmp.ne.s32.totalorder %s265, %s266
    %p275 = scmp.eq.s32.totalorder %s24, 0
    %p276 = por %p274, %p275
    %p277 = scmp.ne.s32.totalorder %s265, %s266
    %p278 = scmp.eq.s32.totalorder %s25, 1
    %p279 = por %p277, %p278
    %p281 = scmp.ne.s32.totalorder %s266, %s280
    %p282 = scmp.eq.s32.totalorder %s25, 0
    %p283 = por %p281, %p282
    %s285 = sadd.s32 %s284, 1
    %p288 = scmp.eq.s32.totalorder %s19, 1
    %p289 = scmp.ne.s32.totalorder %s284, %s286
    %p290 = scmp.eq.s32.totalorder %s19, 0
    %p291 = por %p289, %p290
    %p292 = scmp.ne.s32.totalorder %s284, %s286
    %p293 = scmp.eq.s32.totalorder %s24, 1
    %p294 = por %p292, %p293
    %p295 = scmp.ne.s32.totalorder %s286, %s287
    %p296 = scmp.eq.s32.totalorder %s24, 0
    %p297 = por %p295, %p296
    %p298 = scmp.ne.s32.totalorder %s286, %s287
    %p299 = scmp.eq.s32.totalorder %s25, 1
    %p300 = por %p298, %p299
    %p302 = scmp.ne.s32.totalorder %s287, %s301
    %p303 = scmp.eq.s32.totalorder %s25, 0
    %p304 = por %p302, %p303
    %s305 = ssub.s32 %s19, %s26
    %p306 = scmp.eq.s32.totalorder %s305, 0
    %s308 = sadd.s32 %s307, 1
    %s309 = scalar_select %p306, %s307, %s308
    %p312 = pneg %p306
    %p313 = scmp.eq.s32.totalorder %s19, 1
    %p314 = por %p312, %p313
    %p315 = scmp.ne.s32.totalorder %s307, %s310
    %p316 = scmp.eq.s32.totalorder %s19, 0
    %p317 = por %p315, %p316
    %p318 = scmp.ne.s32.totalorder %s307, %s310
    %p319 = scmp.eq.s32.totalorder %s24, 1
    %p320 = por %p318, %p319
    %p321 = scmp.ne.s32.totalorder %s310, %s311
    %p322 = scmp.eq.s32.totalorder %s24, 0
    %p323 = por %p321, %p322
    %p324 = scmp.ne.s32.totalorder %s310, %s311
    %p325 = scmp.eq.s32.totalorder %s25, 1
    %p326 = por %p324, %p325
    %p328 = scmp.ne.s32.totalorder %s311, %s327
    %p329 = scmp.eq.s32.totalorder %s25, 0
    %p330 = por %p328, %p329
    %p331 = scmp.le.s32.totalorder 1, %s19
    %p332 = scmp.lt.s32.totalorder %s19, 3
    %p333 = pnand %p331, %p332
    %p334 = pneg %p333
    // Predicated region
    $region9: #{tfc_tdf_forward.3} parent=5 // pred_check
      _
    $region10: #{tfc_tdf_forward.3} parent=5 // pred_check_branch
      %336 = sbr.rel (%p333) target = $region12
    $region11: #{tfc_tdf_forward.3} parent=5 // pred_region
      %s337 = ssub.s32 %s19, 1
      // Predicated region
      $region13: #{tfc_tdf_forward.3} parent=11 // pred_check
        %p338 = pneg %p66
      $region14: #{tfc_tdf_forward.3} parent=11 // pred_check_branch
        %340 = sbr.rel (%p338) target = $region16
      $region15: #{tfc_tdf_forward.3} parent=11 // pred_region
        _
      $region16: #{tfc_tdf_forward.3} parent=11 // pred_fallthru
        _
      // Predicated region
      $region17: #{tfc_tdf_forward.3} parent=11 // pred_check
        %p341 = pneg %p87
      $region18: #{tfc_tdf_forward.3} parent=11 // pred_check_branch
        %343 = sbr.rel (%p341) target = $region20
      $region19: #{tfc_tdf_forward.3} parent=11 // pred_region
        _
      $region20: #{tfc_tdf_forward.3} parent=11 // pred_fallthru
        _
      // Predicated region
      $region21: #{tfc_tdf_forward.3} parent=11 // pred_check
        %p344 = pneg %p108
      $region22: #{tfc_tdf_forward.3} parent=11 // pred_check_branch
        %346 = sbr.rel (%p344) target = $region24
      $region23: #{tfc_tdf_forward.3} parent=11 // pred_region
        _
      $region24: #{tfc_tdf_forward.3} parent=11 // pred_fallthru
        _
      // Predicated region
      $region25: #{tfc_tdf_forward.3} parent=11 // pred_check
        %p347 = pneg %p129
      $region26: #{tfc_tdf_forward.3} parent=11 // pred_check_branch
        %349 = sbr.rel (%p347) target = $region28
      $region27: #{tfc_tdf_forward.3} parent=11 // pred_region
        _
      $region28: #{tfc_tdf_forward.3} parent=11 // pred_fallthru
        _
      // Predicated region
      $region29: #{tfc_tdf_forward.3} parent=11 // pred_check
        %p350 = pneg %p150
      $region30: #{tfc_tdf_forward.3} parent=11 // pred_check_branch
        %352 = sbr.rel (%p350) target = $region32
      $region31: #{tfc_tdf_forward.3} parent=11 // pred_region
        _
      $region32: #{tfc_tdf_forward.3} parent=11 // pred_fallthru
        _
      // Predicated region
      $region33: #{tfc_tdf_forward.3} parent=11 // pred_check
        %p353 = pneg %p171
      $region34: #{tfc_tdf_forward.3} parent=11 // pred_check_branch
        %355 = sbr.rel (%p353) target = $region36
      $region35: #{tfc_tdf_forward.3} parent=11 // pred_region
        _
      $region36: #{tfc_tdf_forward.3} parent=11 // pred_fallthru
        _
      // Predicated region
      $region37: #{tfc_tdf_forward.3} parent=11 // pred_check
        %p356 = pneg %p192
      $region38: #{tfc_tdf_forward.3} parent=11 // pred_check_branch
        %358 = sbr.rel (%p356) target = $region40
      $region39: #{tfc_tdf_forward.3} parent=11 // pred_region
        _
      $region40: #{tfc_tdf_forward.3} parent=11 // pred_fallthru
        _
      // Predicated region
      $region41: #{tfc_tdf_forward.3} parent=11 // pred_check
        %p359 = pneg %p213
      $region42: #{tfc_tdf_forward.3} parent=11 // pred_check_branch
        %361 = sbr.rel (%p359) target = $region44
      $region43: #{tfc_tdf_forward.3} parent=11 // pred_region
        _
      $region44: #{tfc_tdf_forward.3} parent=11 // pred_fallthru
        _
      // Predicated region
      $region45: #{tfc_tdf_forward.3} parent=11 // pred_check
        %p362 = pneg %p234
      $region46: #{tfc_tdf_forward.3} parent=11 // pred_check_branch
        %364 = sbr.rel (%p362) target = $region48
      $region47: #{tfc_tdf_forward.3} parent=11 // pred_region
        _
      $region48: #{tfc_tdf_forward.3} parent=11 // pred_fallthru
        _
      // Predicated region
      $region49: #{tfc_tdf_forward.3} parent=11 // pred_check
        %p365 = pneg %p255
      $region50: #{tfc_tdf_forward.3} parent=11 // pred_check_branch
        %367 = sbr.rel (%p365) target = $region52
      $region51: #{tfc_tdf_forward.3} parent=11 // pred_region
        _
      $region52: #{tfc_tdf_forward.3} parent=11 // pred_fallthru
        _
      // Predicated region
      $region53: #{tfc_tdf_forward.3} parent=11 // pred_check
        %p368 = pneg %p276
      $region54: #{tfc_tdf_forward.3} parent=11 // pred_check_branch
        %370 = sbr.rel (%p368) target = $region56
      $region55: #{tfc_tdf_forward.3} parent=11 // pred_region
        _
      $region56: #{tfc_tdf_forward.3} parent=11 // pred_fallthru
        _
      // Predicated region
      $region57: #{tfc_tdf_forward.3} parent=11 // pred_check
        %p371 = pneg %p297
      $region58: #{tfc_tdf_forward.3} parent=11 // pred_check_branch
        %373 = sbr.rel (%p371) target = $region60
      $region59: #{tfc_tdf_forward.3} parent=11 // pred_region
        _
      $region60: #{tfc_tdf_forward.3} parent=11 // pred_fallthru
        _
    $region12: #{tfc_tdf_forward.3} parent=5 // pred_fallthru
      _
    %p374 = scmp.lt.s32.totalorder %s19, 2
    // Predicated region
    $region61: #{tfc_tdf_forward.3} parent=5 // pred_check
      %p375 = pneg %p374
    $region62: #{tfc_tdf_forward.3} parent=5 // pred_check_branch
      %377 = sbr.rel (%p375) target = $region64
    $region63: #{tfc_tdf_forward.3} parent=5 // pred_region
      // Predicated region
      $region65: #{tfc_tdf_forward.3} parent=63 // pred_check
        %p378 = pneg %p39
      $region66: #{tfc_tdf_forward.3} parent=63 // pred_check_branch
        %380 = sbr.rel (%p378) target = $region68
      $region67: #{tfc_tdf_forward.3} parent=63 // pred_region
        %p381 = scmp.lt.s32.totalorder %s19, 1
        %s382 = scalar_select %p381, %s19, 1
        %s383 = smul.addr %s382, 16
        %s384 = smul.addr %s383, 8
        %s385 = scalar_lea.vmem %s0, %s384
      $region68: #{tfc_tdf_forward.3} parent=63 // pred_fallthru
        _
    $region64: #{tfc_tdf_forward.3} parent=5 // pred_fallthru
      _
    %p386 = scmp.le.s32.totalorder 1, %s19
    %p387 = scmp.lt.s32.totalorder %s19, 3
    %p388 = pnand %p386, %p387
    %p389 = pneg %p388
    // Predicated region
    $region69: #{tfc_tdf_forward.3} parent=5 // pred_check
      _
    $region70: #{tfc_tdf_forward.3} parent=5 // pred_check_branch
      %391 = sbr.rel (%p388) target = $region72
    $region71: #{tfc_tdf_forward.3} parent=5 // pred_region
      %s392 = ssub.s32 %s19, 1
      %p393 = scmp.lt.s32.totalorder %s24, 1
      %s394 = scalar_select %p393, %s24, 1
      %s395 = smul.addr %s394, 16
      %s396 = smul.addr %s395, 8
      %s397 = scalar_lea.vmem %s0, %s396
      %p398 = pneg %p45
      %p399 = pneg %p42
      %p400 = pneg %p66
      %p401 = pneg %p63
      %p402 = pneg %p87
      %p403 = pneg %p84
      %p404 = pneg %p108
      %p405 = pneg %p105
      %p406 = pneg %p129
      %p407 = pneg %p126
      %p408 = pneg %p150
      %p409 = pneg %p147
      %p410 = pneg %p171
      %p411 = pneg %p168
      %p412 = pneg %p192
      %p413 = pneg %p189
      %p414 = pneg %p213
      %p415 = pneg %p210
      %p416 = pneg %p234
      %p417 = pneg %p231
      %p418 = pneg %p255
      %p419 = pneg %p252
      %p420 = pneg %p276
      %p421 = pneg %p273
      %p422 = pneg %p297
      %p423 = pneg %p294
      %p424 = pneg %p323
      %p425 = pneg %p320
      %p426 = scmp.lt.s32.totalorder %s24, 1
      %s427 = scalar_select %p426, %s24, 1
      %s428 = smul.addr %s427, 16
      %s429 = smul.addr %s428, 8
      %s430 = scalar_lea.vmem %s13, %s429
      %p431 = scmp.lt.s32.totalorder %s24, 1
      %s432 = scalar_select %p431, %s24, 1
      %s433 = smul.addr %s432, 16
      %s434 = smul.addr %s433, 8
      %s435 = scalar_lea.vmem %s0, %s434
      %p436 = scmp.lt.s32.totalorder %s24, 1
      %s437 = scalar_select %p436, %s24, 1
      %s438 = smul.addr %s437, 16
      %s439 = smul.addr %s438, 8
      %s440 = scalar_lea.vmem %s13, %s439
      %v442 = vld [vmem:[%s435] sm:$0xff]
      %v443 = vld [vmem:[%s435 + $0x8] sm:$0xff]
      %v444 = vld [vmem:[%s435 + $0x10] sm:$0xff]
      %v445 = vld [vmem:[%s435 + $0x18] sm:$0xff]
      %v446 = vld [vmem:[%s435 + $0x20] sm:$0xff]
      %v447 = vld [vmem:[%s435 + $0x28] sm:$0xff]
      %v448 = vld [vmem:[%s435 + $0x30] sm:$0xff]
      %v449 = vld [vmem:[%s435 + $0x38] sm:$0xff]
      %v450 = vld [vmem:[%s435 + $0x40] sm:$0xff]
      %v451 = vld [vmem:[%s435 + $0x48] sm:$0xff]
      %v452 = vld [vmem:[%s435 + $0x50] sm:$0xff]
      %v453 = vld [vmem:[%s435 + $0x58] sm:$0xff]
      %v454 = vld [vmem:[%s435 + $0x60] sm:$0xff]
      %v455 = vld [vmem:[%s435 + $0x68] sm:$0xff]
      %v456 = vld [vmem:[%s435 + $0x70] sm:$0xff]
      %v457 = vld [vmem:[%s435 + $0x78] sm:$0xff]
      %v458 = vld [vmem:[%s1] sm:$0xff]
      %v459 = vld [vmem:[%s2] sm:$0xff]
      %vm460 = vcmask 130048
      %v461 = vsel %vm460, %v442, 0.0
      %462 = vadd.xlane.f32.xlu0 %v461
      %v463 = vpop.xlane.xlu0 %462
      %v464 = vsel %vm460, %v443, 0.0
      %465 = vadd.xlane.f32.xlu0 %v464
      %v466 = vpop.xlane.xlu0 %465
      %v467 = vsel %vm460, %v444, 0.0
      %468 = vadd.xlane.f32.xlu0 %v467
      %v469 = vpop.xlane.xlu0 %468
      %v470 = vsel %vm460, %v445, 0.0
      %471 = vadd.xlane.f32.xlu0 %v470
      %v472 = vpop.xlane.xlu0 %471
      %v473 = vsel %vm460, %v446, 0.0
      %474 = vadd.xlane.f32.xlu0 %v473
      %v475 = vpop.xlane.xlu0 %474
      %v476 = vsel %vm460, %v447, 0.0
      %477 = vadd.xlane.f32.xlu0 %v476
      %v478 = vpop.xlane.xlu0 %477
      %v479 = vsel %vm460, %v448, 0.0
      %480 = vadd.xlane.f32.xlu0 %v479
      %v481 = vpop.xlane.xlu0 %480
      %v482 = vsel %vm460, %v449, 0.0
      %483 = vadd.xlane.f32.xlu0 %v482
      %v484 = vpop.xlane.xlu0 %483
      %v485 = vsel %vm460, %v450, 0.0
      %486 = vadd.xlane.f32.xlu0 %v485
      %v487 = vpop.xlane.xlu0 %486
      %v488 = vsel %vm460, %v451, 0.0
      %489 = vadd.xlane.f32.xlu0 %v488
      %v490 = vpop.xlane.xlu0 %489
      %v491 = vsel %vm460, %v452, 0.0
      %492 = vadd.xlane.f32.xlu0 %v491
      %v493 = vpop.xlane.xlu0 %492
      %v494 = vsel %vm460, %v453, 0.0
      %495 = vadd.xlane.f32.xlu0 %v494
      %v496 = vpop.xlane.xlu0 %495
      %v497 = vsel %vm460, %v454, 0.0
      %498 = vadd.xlane.f32.xlu0 %v497
      %v499 = vpop.xlane.xlu0 %498
      %v500 = vsel %vm460, %v455, 0.0
      %501 = vadd.xlane.f32.xlu0 %v500
      %v502 = vpop.xlane.xlu0 %501
      %v503 = vsel %vm460, %v456, 0.0
      %504 = vadd.xlane.f32.xlu0 %v503
      %v505 = vpop.xlane.xlu0 %504
      %v506 = vsel %vm460, %v457, 0.0
      %507 = vadd.xlane.f32.xlu0 %v506
      %v508 = vpop.xlane.xlu0 %507
      %v509 = vadd.f32 %v463, %v466
      %v510 = vadd.f32 %v509, %v469
      %v511 = vadd.f32 %v510, %v472
      %v512 = vadd.f32 %v511, %v475
      %v513 = vadd.f32 %v512, %v478
      %v514 = vadd.f32 %v513, %v481
      %v515 = vadd.f32 %v514, %v484
      %v516 = vadd.f32 %v515, %v487
      %v517 = vadd.f32 %v516, %v490
      %v518 = vadd.f32 %v517, %v493
      %v519 = vadd.f32 %v518, %v496
      %v520 = vadd.f32 %v519, %v499
      %v521 = vadd.f32 %v520, %v502
      %v522 = vadd.f32 %v521, %v505
      %v523 = vadd.f32 %v522, %v508
      %v524 = vmul.f32 %v442, %v442
      %v525 = vmul.f32 %v443, %v443
      %v526 = vmul.f32 %v444, %v444
      %v527 = vmul.f32 %v445, %v445
      %v528 = vmul.f32 %v446, %v446
      %v529 = vmul.f32 %v447, %v447
      %v530 = vmul.f32 %v448, %v448
      %v531 = vmul.f32 %v449, %v449
      %v532 = vmul.f32 %v450, %v450
      %v533 = vmul.f32 %v451, %v451
      %v534 = vmul.f32 %v452, %v452
      %v535 = vmul.f32 %v453, %v453
      %v536 = vmul.f32 %v454, %v454
      %v537 = vmul.f32 %v455, %v455
      %v538 = vmul.f32 %v456, %v456
      %v539 = vmul.f32 %v457, %v457
      %v540 = vsel %vm460, %v524, 0.0
      %541 = vadd.xlane.f32.xlu0 %v540
      %v542 = vpop.xlane.xlu0 %541
      %v543 = vsel %vm460, %v525, 0.0
      %544 = vadd.xlane.f32.xlu0 %v543
      %v545 = vpop.xlane.xlu0 %544
      %v546 = vsel %vm460, %v526, 0.0
      %547 = vadd.xlane.f32.xlu0 %v546
      %v548 = vpop.xlane.xlu0 %547
      %v549 = vsel %vm460, %v527, 0.0
      %550 = vadd.xlane.f32.xlu0 %v549
      %v551 = vpop.xlane.xlu0 %550
      %v552 = vsel %vm460, %v528, 0.0
      %553 = vadd.xlane.f32.xlu0 %v552
      %v554 = vpop.xlane.xlu0 %553
      %v555 = vsel %vm460, %v529, 0.0
      %556 = vadd.xlane.f32.xlu0 %v555
      %v557 = vpop.xlane.xlu0 %556
      %v558 = vsel %vm460, %v530, 0.0
      %559 = vadd.xlane.f32.xlu0 %v558
      %v560 = vpop.xlane.xlu0 %559
      %v561 = vsel %vm460, %v531, 0.0
      %562 = vadd.xlane.f32.xlu0 %v561
      %v563 = vpop.xlane.xlu0 %562
      %v564 = vsel %vm460, %v532, 0.0
      %565 = vadd.xlane.f32.xlu0 %v564
      %v566 = vpop.xlane.xlu0 %565
      %v567 = vsel %vm460, %v533, 0.0
      %568 = vadd.xlane.f32.xlu0 %v567
      %v569 = vpop.xlane.xlu0 %568
      %v570 = vsel %vm460, %v534, 0.0
      %571 = vadd.xlane.f32.xlu0 %v570
      %v572 = vpop.xlane.xlu0 %571
      %v573 = vsel %vm460, %v535, 0.0
      %574 = vadd.xlane.f32.xlu0 %v573
      %v575 = vpop.xlane.xlu0 %574
      %v576 = vsel %vm460, %v536, 0.0
      %577 = vadd.xlane.f32.xlu0 %v576
      %v578 = vpop.xlane.xlu0 %577
      %v579 = vsel %vm460, %v537, 0.0
      %580 = vadd.xlane.f32.xlu0 %v579
      %v581 = vpop.xlane.xlu0 %580
      %v582 = vsel %vm460, %v538, 0.0
      %583 = vadd.xlane.f32.xlu0 %v582
      %v584 = vpop.xlane.xlu0 %583
      %v585 = vsel %vm460, %v539, 0.0
      %586 = vadd.xlane.f32.xlu0 %v585
      %v587 = vpop.xlane.xlu0 %586
      %v588 = vadd.f32 %v542, %v545
      %v589 = vadd.f32 %v588, %v548
      %v590 = vadd.f32 %v589, %v551
      %v591 = vadd.f32 %v590, %v554
      %v592 = vadd.f32 %v591, %v557
      %v593 = vadd.f32 %v592, %v560
      %v594 = vadd.f32 %v593, %v563
      %v595 = vadd.f32 %v594, %v566
      %v596 = vadd.f32 %v595, %v569
      %v597 = vadd.f32 %v596, %v572
      %v598 = vadd.f32 %v597, %v575
      %v599 = vadd.f32 %v598, %v578
      %v600 = vadd.f32 %v599, %v581
      %v601 = vadd.f32 %v600, %v584
      %v602 = vadd.f32 %v601, %v587
      %v603 = vmul.f32 %v523, 0.00390625
      %v604 = vmul.f32 %v602, 0.00390625
      %v605 = vmul.f32 %v603, %v603
      %v606 = vsub.f32 %v604, %v605
      %v607 = vmax.f32 %v606, 0.0
      %v608 = vsub.f32 %v442, %v603
      %v609 = vsub.f32 %v443, %v603
      %v610 = vsub.f32 %v444, %v603
      %v611 = vsub.f32 %v445, %v603
      %v612 = vsub.f32 %v446, %v603
      %v613 = vsub.f32 %v447, %v603
      %v614 = vsub.f32 %v448, %v603
      %v615 = vsub.f32 %v449, %v603
      %v616 = vsub.f32 %v450, %v603
      %v617 = vsub.f32 %v451, %v603
      %v618 = vsub.f32 %v452, %v603
      %v619 = vsub.f32 %v453, %v603
      %v620 = vsub.f32 %v454, %v603
      %v621 = vsub.f32 %v455, %v603
      %v622 = vsub.f32 %v456, %v603
      %v623 = vsub.f32 %v457, %v603
      %v624 = vadd.f32 %v607, 1e-05
      %v625 = vrsqrt.pop %v624
      %v626 = vmul.f32 %v625, %v624
      %v627 = vmul.f32 %v626, %v625
      %v628 = vmul.f32 0.5, %v627
      %v629 = vsub.f32 1.5, %v628
      %v630 = vmul.f32 %v625, %v629
      %vm631 = vweird.f32 %v624
      %vm632 = vweird.f32 %v625
      %vm633 = vmor %vm631, %vm632
      %v634 = vsel %vm633, %v625, %v630
      %v635 = vmul.f32 %v608, %v634
      %v636 = vmul.f32 %v609, %v634
      %v637 = vmul.f32 %v610, %v634
      %v638 = vmul.f32 %v611, %v634
      %v639 = vmul.f32 %v612, %v634
      %v640 = vmul.f32 %v613, %v634
      %v641 = vmul.f32 %v614, %v634
      %v642 = vmul.f32 %v615, %v634
      %v643 = vmul.f32 %v616, %v634
      %v644 = vmul.f32 %v617, %v634
      %v645 = vmul.f32 %v618, %v634
      %v646 = vmul.f32 %v619, %v634
      %v647 = vmul.f32 %v620, %v634
      %v648 = vmul.f32 %v621, %v634
      %v649 = vmul.f32 %v622, %v634
      %v650 = vmul.f32 %v623, %v634
      %652 = vset.pattern.permute.xlu0 0
      %653 = vperm.xlu0 %652, %v458
      %v654 = vpop.permute.xlu0 %653
      %v656 = vmul.f32 %v635, %v654
      %v657 = vmul.f32 %v636, %v654
      %v658 = vmul.f32 %v637, %v654
      %v659 = vmul.f32 %v638, %v654
      %v660 = vmul.f32 %v639, %v654
      %v661 = vmul.f32 %v640, %v654
      %v662 = vmul.f32 %v641, %v654
      %v663 = vmul.f32 %v642, %v654
      %v664 = vmul.f32 %v643, %v654
      %v665 = vmul.f32 %v644, %v654
      %v666 = vmul.f32 %v645, %v654
      %v667 = vmul.f32 %v646, %v654
      %v668 = vmul.f32 %v647, %v654
      %v669 = vmul.f32 %v648, %v654
      %v670 = vmul.f32 %v649, %v654
      %v671 = vmul.f32 %v650, %v654
      %673 = vset.pattern.permute.xlu0 0
      %674 = vperm.xlu0 %673, %v459
      %v675 = vpop.permute.xlu0 %674
      %v677 = vadd.f32 %v656, %v675
      %v678 = vadd.f32 %v657, %v675
      %v679 = vadd.f32 %v658, %v675
      %v680 = vadd.f32 %v659, %v675
      %v681 = vadd.f32 %v660, %v675
      %v682 = vadd.f32 %v661, %v675
      %v683 = vadd.f32 %v662, %v675
      %v684 = vadd.f32 %v663, %v675
      %v685 = vadd.f32 %v664, %v675
      %v686 = vadd.f32 %v665, %v675
      %v687 = vadd.f32 %v666, %v675
      %v688 = vadd.f32 %v667, %v675
      %v689 = vadd.f32 %v668, %v675
      %v690 = vadd.f32 %v669, %v675
      %v691 = vadd.f32 %v670, %v675
      %v692 = vadd.f32 %v671, %v675
      %v693 = vmul.f32 %v677, %v677
      %v694 = vmul.f32 %v678, %v678
      %v695 = vmul.f32 %v679, %v679
      %v696 = vmul.f32 %v680, %v680
      %v697 = vmul.f32 %v681, %v681
      %v698 = vmul.f32 %v682, %v682
      %v699 = vmul.f32 %v683, %v683
      %v700 = vmul.f32 %v684, %v684
      %v701 = vmul.f32 %v685, %v685
      %v702 = vmul.f32 %v686, %v686
      %v703 = vmul.f32 %v687, %v687
      %v704 = vmul.f32 %v688, %v688
      %v705 = vmul.f32 %v689, %v689
      %v706 = vmul.f32 %v690, %v690
      %v707 = vmul.f32 %v691, %v691
      %v708 = vmul.f32 %v692, %v692
      %v709 = vmul.f32 %v677, %v693
      %v710 = vmul.f32 %v678, %v694
      %v711 = vmul.f32 %v679, %v695
      %v712 = vmul.f32 %v680, %v696
      %v713 = vmul.f32 %v681, %v697
      %v714 = vmul.f32 %v682, %v698
      %v715 = vmul.f32 %v683, %v699
      %v716 = vmul.f32 %v684, %v700
      %v717 = vmul.f32 %v685, %v701
      %v718 = vmul.f32 %v686, %v702
      %v719 = vmul.f32 %v687, %v703
      %v720 = vmul.f32 %v688, %v704
      %v721 = vmul.f32 %v689, %v705
      %v722 = vmul.f32 %v690, %v706
      %v723 = vmul.f32 %v691, %v707
      %v724 = vmul.f32 %v692, %v708
      %v725 = vmul.f32 %v709, 0.044715
      %v726 = vmul.f32 %v710, 0.044715
      %v727 = vmul.f32 %v711, 0.044715
      %v728 = vmul.f32 %v712, 0.044715
      %v729 = vmul.f32 %v713, 0.044715
      %v730 = vmul.f32 %v714, 0.044715
      %v731 = vmul.f32 %v715, 0.044715
      %v732 = vmul.f32 %v716, 0.044715
      %v733 = vmul.f32 %v717, 0.044715
      %v734 = vmul.f32 %v718, 0.044715
      %v735 = vmul.f32 %v719, 0.044715
      %v736 = vmul.f32 %v720, 0.044715
      %v737 = vmul.f32 %v721, 0.044715
      %v738 = vmul.f32 %v722, 0.044715
      %v739 = vmul.f32 %v723, 0.044715
      %v740 = vmul.f32 %v724, 0.044715
      %v741 = vadd.f32 %v677, %v725
      %v742 = vadd.f32 %v678, %v726
      %v743 = vadd.f32 %v679, %v727
      %v744 = vadd.f32 %v680, %v728
      %v745 = vadd.f32 %v681, %v729
      %v746 = vadd.f32 %v682, %v730
      %v747 = vadd.f32 %v683, %v731
      %v748 = vadd.f32 %v684, %v732
      %v749 = vadd.f32 %v685, %v733
      %v750 = vadd.f32 %v686, %v734
      %v751 = vadd.f32 %v687, %v735
      %v752 = vadd.f32 %v688, %v736
      %v753 = vadd.f32 %v689, %v737
      %v754 = vadd.f32 %v690, %v738
      %v755 = vadd.f32 %v691, %v739
      %v756 = vadd.f32 %v692, %v740
      %v757 = vmul.f32 %v741, 0.7978846
      %v758 = vmul.f32 %v742, 0.7978846
      %v759 = vmul.f32 %v743, 0.7978846
      %v760 = vmul.f32 %v744, 0.7978846
      %v761 = vmul.f32 %v745, 0.7978846
      %v762 = vmul.f32 %v746, 0.7978846
      %v763 = vmul.f32 %v747, 0.7978846
      %v764 = vmul.f32 %v748, 0.7978846
      %v765 = vmul.f32 %v749, 0.7978846
      %v766 = vmul.f32 %v750, 0.7978846
      %v767 = vmul.f32 %v751, 0.7978846
      %v768 = vmul.f32 %v752, 0.7978846
      %v769 = vmul.f32 %v753, 0.7978846
      %v770 = vmul.f32 %v754, 0.7978846
      %v771 = vmul.f32 %v755, 0.7978846
      %v772 = vmul.f32 %v756, 0.7978846
      %v773 = vtanh.pop %v757
      %v774 = vtanh.pop %v758
      %v775 = vtanh.pop %v759
      %v776 = vtanh.pop %v760
      %v777 = vtanh.pop %v761
      %v778 = vtanh.pop %v762
      %v779 = vtanh.pop %v763
      %v780 = vtanh.pop %v764
      %v781 = vtanh.pop %v765
      %v782 = vtanh.pop %v766
      %v783 = vtanh.pop %v767
      %v784 = vtanh.pop %v768
      %v785 = vtanh.pop %v769
      %v786 = vtanh.pop %v770
      %v787 = vtanh.pop %v771
      %v788 = vtanh.pop %v772
      %v789 = vadd.f32 %v773, 1.0
      %v790 = vadd.f32 %v774, 1.0
      %v791 = vadd.f32 %v775, 1.0
      %v792 = vadd.f32 %v776, 1.0
      %v793 = vadd.f32 %v777, 1.0
      %v794 = vadd.f32 %v778, 1.0
      %v795 = vadd.f32 %v779, 1.0
      %v796 = vadd.f32 %v780, 1.0
      %v797 = vadd.f32 %v781, 1.0
      %v798 = vadd.f32 %v782, 1.0
      %v799 = vadd.f32 %v783, 1.0
      %v800 = vadd.f32 %v784, 1.0
      %v801 = vadd.f32 %v785, 1.0
      %v802 = vadd.f32 %v786, 1.0
      %v803 = vadd.f32 %v787, 1.0
      %v804 = vadd.f32 %v788, 1.0
      %v805 = vmul.f32 %v789, 0.5
      %v806 = vmul.f32 %v790, 0.5
      %v807 = vmul.f32 %v791, 0.5
      %v808 = vmul.f32 %v792, 0.5
      %v809 = vmul.f32 %v793, 0.5
      %v810 = vmul.f32 %v794, 0.5
      %v811 = vmul.f32 %v795, 0.5
      %v812 = vmul.f32 %v796, 0.5
      %v813 = vmul.f32 %v797, 0.5
      %v814 = vmul.f32 %v798, 0.5
      %v815 = vmul.f32 %v799, 0.5
      %v816 = vmul.f32 %v800, 0.5
      %v817 = vmul.f32 %v801, 0.5
      %v818 = vmul.f32 %v802, 0.5
      %v819 = vmul.f32 %v803, 0.5
      %v820 = vmul.f32 %v804, 0.5
      %v821 = vmul.f32 %v677, %v805
      %v822 = vmul.f32 %v678, %v806
      %v823 = vmul.f32 %v679, %v807
      %v824 = vmul.f32 %v680, %v808
      %v825 = vmul.f32 %v681, %v809
      %v826 = vmul.f32 %v682, %v810
      %v827 = vmul.f32 %v683, %v811
      %v828 = vmul.f32 %v684, %v812
      %v829 = vmul.f32 %v685, %v813
      %v830 = vmul.f32 %v686, %v814
      %v831 = vmul.f32 %v687, %v815
      %v832 = vmul.f32 %v688, %v816
      %v833 = vmul.f32 %v689, %v817
      %v834 = vmul.f32 %v690, %v818
      %v835 = vmul.f32 %v691, %v819
      %v836 = vmul.f32 %v692, %v820
      %v837 = vpack.c.bf16 %v821, %v821
      %v838 = vpack.c.bf16 %v822, %v822
      %v839 = vpack.c.bf16 %v823, %v823
      %v840 = vpack.c.bf16 %v824, %v824
      %v841 = vpack.c.bf16 %v825, %v825
      %v842 = vpack.c.bf16 %v826, %v826
      %v843 = vpack.c.bf16 %v827, %v827
      %v844 = vpack.c.bf16 %v828, %v828
      %v845 = vpack.c.bf16 %v829, %v829
      %v846 = vpack.c.bf16 %v830, %v830
      %v847 = vpack.c.bf16 %v831, %v831
      %v848 = vpack.c.bf16 %v832, %v832
      %v849 = vpack.c.bf16 %v833, %v833
      %v850 = vpack.c.bf16 %v834, %v834
      %v851 = vpack.c.bf16 %v835, %v835
      %v852 = vpack.c.bf16 %v836, %v836
      %868 = vrot.lane.b32.xlu0 %v837, 1
      %v869 = vpop.permute.xlu0 %868
      %870 = vrot.lane.b32.xlu0 %v838, 1
      %v871 = vpop.permute.xlu0 %870
      %872 = vrot.lane.b32.xlu0 %v839, 1
      %v873 = vpop.permute.xlu0 %872
      %874 = vrot.lane.b32.xlu0 %v840, 1
      %v875 = vpop.permute.xlu0 %874
      %876 = vrot.lane.b32.xlu0 %v841, 1
      %v877 = vpop.permute.xlu0 %876
      %878 = vrot.lane.b32.xlu0 %v842, 1
      %v879 = vpop.permute.xlu0 %878
      %880 = vrot.lane.b32.xlu0 %v843, 1
      %v881 = vpop.permute.xlu0 %880
      %882 = vrot.lane.b32.xlu0 %v844, 1
      %v883 = vpop.permute.xlu0 %882
      %884 = vrot.lane.b32.xlu0 %v845, 1
      %v885 = vpop.permute.xlu0 %884
      %886 = vrot.lane.b32.xlu0 %v846, 1
      %v887 = vpop.permute.xlu0 %886
      %888 = vrot.lane.b32.xlu0 %v847, 1
      %v889 = vpop.permute.xlu0 %888
      %890 = vrot.lane.b32.xlu0 %v848, 1
      %v891 = vpop.permute.xlu0 %890
      %892 = vrot.lane.b32.xlu0 %v849, 1
      %v893 = vpop.permute.xlu0 %892
      %894 = vrot.lane.b32.xlu0 %v850, 1
      %v895 = vpop.permute.xlu0 %894
      %896 = vrot.lane.b32.xlu0 %v851, 1
      %v897 = vpop.permute.xlu0 %896
      %s913 = scalar_lea.vmem [#allocation2], 40
      %vm914 = vcmask 125960
      %915 = vst.msk [vmem:[%s913] sm:$0xf] %vm914, %v869
      %916 = vst.msk [vmem:[%s913 + $0x28] sm:$0xf] %vm914, %v871
      %917 = vst.msk [vmem:[%s913 + $0x50] sm:$0xf] %vm914, %v873
      %918 = vst.msk [vmem:[%s913 + $0x78] sm:$0xf] %vm914, %v875
      %919 = vst.msk [vmem:[%s913 + $0xa0] sm:$0xf] %vm914, %v877
      %920 = vst.msk [vmem:[%s913 + $0xc8] sm:$0xf] %vm914, %v879
      %921 = vst.msk [vmem:[%s913 + $0xf0] sm:$0xf] %vm914, %v881
      %922 = vst.msk [vmem:[%s913 + $0x118] sm:$0xf] %vm914, %v883
      %923 = vst.msk [vmem:[%s913 + $0x140] sm:$0xf] %vm914, %v885
      %924 = vst.msk [vmem:[%s913 + $0x168] sm:$0xf] %vm914, %v887
      %925 = vst.msk [vmem:[%s913 + $0x190] sm:$0xf] %vm914, %v889
      %926 = vst.msk [vmem:[%s913 + $0x1b8] sm:$0xf] %vm914, %v891
      %927 = vst.msk [vmem:[%s913 + $0x1e0] sm:$0xf] %vm914, %v893
      %928 = vst.msk [vmem:[%s913 + $0x208] sm:$0xf] %vm914, %v895
      %929 = vst.msk [vmem:[%s913 + $0x230] sm:$0xf] %vm914, %v897
      %vm930 = vcmask 125952
      %931 = vst.msk [vmem:[#allocation2] sm:$0xf] %vm930, 0
      %vm932 = vcmask 3072
      %933 = vst.msk [vmem:[#allocation2] sm:$0xf] %vm932, 0
      %934 = vst.msk [vmem:[#allocation2 + $0x28] sm:$0xf] %vm932, 0
      %935 = vst.msk [vmem:[#allocation2 + $0x50] sm:$0xf] %vm932, 0
      %936 = vst.msk [vmem:[#allocation2 + $0x78] sm:$0xf] %vm932, 0
      %937 = vst.msk [vmem:[#allocation2 + $0xa0] sm:$0xf] %vm932, 0
      %938 = vst.msk [vmem:[#allocation2 + $0xc8] sm:$0xf] %vm932, 0
      %939 = vst.msk [vmem:[#allocation2 + $0xf0] sm:$0xf] %vm932, 0
      %940 = vst.msk [vmem:[#allocation2 + $0x118] sm:$0xf] %vm932, 0
      %941 = vst.msk [vmem:[#allocation2 + $0x140] sm:$0xf] %vm932, 0
      %942 = vst.msk [vmem:[#allocation2 + $0x168] sm:$0xf] %vm932, 0
      %943 = vst.msk [vmem:[#allocation2 + $0x190] sm:$0xf] %vm932, 0
      %944 = vst.msk [vmem:[#allocation2 + $0x1b8] sm:$0xf] %vm932, 0
      %945 = vst.msk [vmem:[#allocation2 + $0x1e0] sm:$0xf] %vm932, 0
      %946 = vst.msk [vmem:[#allocation2 + $0x208] sm:$0xf] %vm932, 0
      %947 = vst.msk [vmem:[#allocation2 + $0x230] sm:$0xf] %vm932, 0
      %948 = vst.msk [vmem:[#allocation2 + $0x258] sm:$0xf] %vm932, 0
      %949 = vst.msk [vmem:[%s913 + $0x4] sm:$0xf] %vm930, %v837
      %950 = vst.msk [vmem:[%s913 + $0x2c] sm:$0xf] %vm930, %v838
      %951 = vst.msk [vmem:[%s913 + $0x54] sm:$0xf] %vm930, %v839
      %952 = vst.msk [vmem:[%s913 + $0x7c] sm:$0xf] %vm930, %v840
      %953 = vst.msk [vmem:[%s913 + $0xa4] sm:$0xf] %vm930, %v841
      %954 = vst.msk [vmem:[%s913 + $0xcc] sm:$0xf] %vm930, %v842
      %955 = vst.msk [vmem:[%s913 + $0xf4] sm:$0xf] %vm930, %v843
      %956 = vst.msk [vmem:[%s913 + $0x11c] sm:$0xf] %vm930, %v844
      %957 = vst.msk [vmem:[%s913 + $0x144] sm:$0xf] %vm930, %v845
      %958 = vst.msk [vmem:[%s913 + $0x16c] sm:$0xf] %vm930, %v846
      %959 = vst.msk [vmem:[%s913 + $0x194] sm:$0xf] %vm930, %v847
      %960 = vst.msk [vmem:[%s913 + $0x1bc] sm:$0xf] %vm930, %v848
      %961 = vst.msk [vmem:[%s913 + $0x1e4] sm:$0xf] %vm930, %v849
      %962 = vst.msk [vmem:[%s913 + $0x20c] sm:$0xf] %vm930, %v850
      %963 = vst.msk [vmem:[%s913 + $0x234] sm:$0xf] %vm930, %v851
      %964 = vst.msk [vmem:[#allocation2 + $0x4] sm:$0xf] %vm930, 0
      %965 = vrot.lane.b32.xlu0 %v837, 127
      %v966 = vpop.permute.xlu0 %965
      %967 = vrot.lane.b32.xlu0 %v838, 127
      %v968 = vpop.permute.xlu0 %967
      %969 = vrot.lane.b32.xlu0 %v839, 127
      %v970 = vpop.permute.xlu0 %969
      %971 = vrot.lane.b32.xlu0 %v840, 127
      %v972 = vpop.permute.xlu0 %971
      %973 = vrot.lane.b32.xlu0 %v841, 127
      %v974 = vpop.permute.xlu0 %973
      %975 = vrot.lane.b32.xlu0 %v842, 127
      %v976 = vpop.permute.xlu0 %975
      %977 = vrot.lane.b32.xlu0 %v843, 127
      %v978 = vpop.permute.xlu0 %977
      %979 = vrot.lane.b32.xlu0 %v844, 127
      %v980 = vpop.permute.xlu0 %979
      %981 = vrot.lane.b32.xlu0 %v845, 127
      %v982 = vpop.permute.xlu0 %981
      %983 = vrot.lane.b32.xlu0 %v846, 127
      %v984 = vpop.permute.xlu0 %983
      %985 = vrot.lane.b32.xlu0 %v847, 127
      %v986 = vpop.permute.xlu0 %985
      %987 = vrot.lane.b32.xlu0 %v848, 127
      %v988 = vpop.permute.xlu0 %987
      %989 = vrot.lane.b32.xlu0 %v849, 127
      %v990 = vpop.permute.xlu0 %989
      %991 = vrot.lane.b32.xlu0 %v850, 127
      %v992 = vpop.permute.xlu0 %991
      %993 = vrot.lane.b32.xlu0 %v851, 127
      %v994 = vpop.permute.xlu0 %993
      %vm1010 = vcmask 117760
      %1011 = vst.msk [vmem:[%s913 + $0x8] sm:$0xf] %vm1010, %v966
      %1012 = vst.msk [vmem:[%s913 + $0x30] sm:$0xf] %vm1010, %v968
      %1013 = vst.msk [vmem:[%s913 + $0x58] sm:$0xf] %vm1010, %v970
      %1014 = vst.msk [vmem:[%s913 + $0x80] sm:$0xf] %vm1010, %v972
      %1015 = vst.msk [vmem:[%s913 + $0xa8] sm:$0xf] %vm1010, %v974
      %1016 = vst.msk [vmem:[%s913 + $0xd0] sm:$0xf] %vm1010, %v976
      %1017 = vst.msk [vmem:[%s913 + $0xf8] sm:$0xf] %vm1010, %v978
      %1018 = vst.msk [vmem:[%s913 + $0x120] sm:$0xf] %vm1010, %v980
      %1019 = vst.msk [vmem:[%s913 + $0x148] sm:$0xf] %vm1010, %v982
      %1020 = vst.msk [vmem:[%s913 + $0x170] sm:$0xf] %vm1010, %v984
      %1021 = vst.msk [vmem:[%s913 + $0x198] sm:$0xf] %vm1010, %v986
      %1022 = vst.msk [vmem:[%s913 + $0x1c0] sm:$0xf] %vm1010, %v988
      %1023 = vst.msk [vmem:[%s913 + $0x1e8] sm:$0xf] %vm1010, %v990
      %1024 = vst.msk [vmem:[%s913 + $0x210] sm:$0xf] %vm1010, %v992
      %1025 = vst.msk [vmem:[%s913 + $0x238] sm:$0xf] %vm1010, %v994
      %1026 = vst.msk [vmem:[#allocation2 + $0x8] sm:$0xf] %vm930, 0
      %vm1027 = vcmask 126072
      %1028 = vst.msk [vmem:[#allocation2 + $0x8] sm:$0xf] %vm1027, 0
      %1029 = vst.msk [vmem:[#allocation2 + $0x30] sm:$0xf] %vm1027, 0
      %1030 = vst.msk [vmem:[#allocation2 + $0x58] sm:$0xf] %vm1027, 0
      %1031 = vst.msk [vmem:[#allocation2 + $0x80] sm:$0xf] %vm1027, 0
      %1032 = vst.msk [vmem:[#allocation2 + $0xa8] sm:$0xf] %vm1027, 0
      %1033 = vst.msk [vmem:[#allocation2 + $0xd0] sm:$0xf] %vm1027, 0
      %1034 = vst.msk [vmem:[#allocation2 + $0xf8] sm:$0xf] %vm1027, 0
      %1035 = vst.msk [vmem:[#allocation2 + $0x120] sm:$0xf] %vm1027, 0
      %1036 = vst.msk [vmem:[#allocation2 + $0x148] sm:$0xf] %vm1027, 0
      %1037 = vst.msk [vmem:[#allocation2 + $0x170] sm:$0xf] %vm1027, 0
      %1038 = vst.msk [vmem:[#allocation2 + $0x198] sm:$0xf] %vm1027, 0
      %1039 = vst.msk [vmem:[#allocation2 + $0x1c0] sm:$0xf] %vm1027, 0
      %1040 = vst.msk [vmem:[#allocation2 + $0x1e8] sm:$0xf] %vm1027, 0
      %1041 = vst.msk [vmem:[#allocation2 + $0x210] sm:$0xf] %vm1027, 0
      %1042 = vst.msk [vmem:[#allocation2 + $0x238] sm:$0xf] %vm1027, 0
      %1043 = vst.msk [vmem:[#allocation2 + $0x260] sm:$0xf] %vm1027, 0
      %1045 = vrot.lane.b32.xlu0 %v852, 1
      %v1046 = vpop.permute.xlu0 %1045
      %1048 = vst.msk [vmem:[#allocation2 + $0xc] sm:$0xf] %vm914, %v869
      %1049 = vst.msk [vmem:[#allocation2 + $0x34] sm:$0xf] %vm914, %v871
      %1050 = vst.msk [vmem:[#allocation2 + $0x5c] sm:$0xf] %vm914, %v873
      %1051 = vst.msk [vmem:[#allocation2 + $0x84] sm:$0xf] %vm914, %v875
      %1052 = vst.msk [vmem:[#allocation2 + $0xac] sm:$0xf] %vm914, %v877
      %1053 = vst.msk [vmem:[#allocation2 + $0xd4] sm:$0xf] %vm914, %v879
      %1054 = vst.msk [vmem:[#allocation2 + $0xfc] sm:$0xf] %vm914, %v881
      %1055 = vst.msk [vmem:[#allocation2 + $0x124] sm:$0xf] %vm914, %v883
      %1056 = vst.msk [vmem:[#allocation2 + $0x14c] sm:$0xf] %vm914, %v885
      %1057 = vst.msk [vmem:[#allocation2 + $0x174] sm:$0xf] %vm914, %v887
      %1058 = vst.msk [vmem:[#allocation2 + $0x19c] sm:$0xf] %vm914, %v889
      %1059 = vst.msk [vmem:[#allocation2 + $0x1c4] sm:$0xf] %vm914, %v891
      %1060 = vst.msk [vmem:[#allocation2 + $0x1ec] sm:$0xf] %vm914, %v893
      %1061 = vst.msk [vmem:[#allocation2 + $0x214] sm:$0xf] %vm914, %v895
      %1062 = vst.msk [vmem:[#allocation2 + $0x23c] sm:$0xf] %vm914, %v897
      %1063 = vst.msk [vmem:[#allocation2 + $0x264] sm:$0xf] %vm914, %v1046
      %1064 = vst.msk [vmem:[#allocation2 + $0xc] sm:$0xf] %vm932, 0
      %1065 = vst.msk [vmem:[#allocation2 + $0x34] sm:$0xf] %vm932, 0
      %1066 = vst.msk [vmem:[#allocation2 + $0x5c] sm:$0xf] %vm932, 0
      %1067 = vst.msk [vmem:[#allocation2 + $0x84] sm:$0xf] %vm932, 0
      %1068 = vst.msk [vmem:[#allocation2 + $0xac] sm:$0xf] %vm932, 0
      %1069 = vst.msk [vmem:[#allocation2 + $0xd4] sm:$0xf] %vm932, 0
      %1070 = vst.msk [vmem:[#allocation2 + $0xfc] sm:$0xf] %vm932, 0
      %1071 = vst.msk [vmem:[#allocation2 + $0x124] sm:$0xf] %vm932, 0
      %1072 = vst.msk [vmem:[#allocation2 + $0x14c] sm:$0xf] %vm932, 0
      %1073 = vst.msk [vmem:[#allocation2 + $0x174] sm:$0xf] %vm932, 0
      %1074 = vst.msk [vmem:[#allocation2 + $0x19c] sm:$0xf] %vm932, 0
      %1075 = vst.msk [vmem:[#allocation2 + $0x1c4] sm:$0xf] %vm932, 0
      %1076 = vst.msk [vmem:[#allocation2 + $0x1ec] sm:$0xf] %vm932, 0
      %1077 = vst.msk [vmem:[#allocation2 + $0x214] sm:$0xf] %vm932, 0
      %1078 = vst.msk [vmem:[#allocation2 + $0x23c] sm:$0xf] %vm932, 0
      %1079 = vst.msk [vmem:[#allocation2 + $0x264] sm:$0xf] %vm932, 0
      %1080 = vst.msk [vmem:[#allocation2 + $0x10] sm:$0xf] %vm930, %v837
      %1081 = vst.msk [vmem:[#allocation2 + $0x38] sm:$0xf] %vm930, %v838
      %1082 = vst.msk [vmem:[#allocation2 + $0x60] sm:$0xf] %vm930, %v839
      %1083 = vst.msk [vmem:[#allocation2 + $0x88] sm:$0xf] %vm930, %v840
      %1084 = vst.msk [vmem:[#allocation2 + $0xb0] sm:$0xf] %vm930, %v841
      %1085 = vst.msk [vmem:[#allocation2 + $0xd8] sm:$0xf] %vm930, %v842
      %1086 = vst.msk [vmem:[#allocation2 + $0x100] sm:$0xf] %vm930, %v843
      %1087 = vst.msk [vmem:[#allocation2 + $0x128] sm:$0xf] %vm930, %v844
      %1088 = vst.msk [vmem:[#allocation2 + $0x150] sm:$0xf] %vm930, %v845
      %1089 = vst.msk [vmem:[#allocation2 + $0x178] sm:$0xf] %vm930, %v846
      %1090 = vst.msk [vmem:[#allocation2 + $0x1a0] sm:$0xf] %vm930, %v847
      %1091 = vst.msk [vmem:[#allocation2 + $0x1c8] sm:$0xf] %vm930, %v848
      %1092 = vst.msk [vmem:[#allocation2 + $0x1f0] sm:$0xf] %vm930, %v849
      %1093 = vst.msk [vmem:[#allocation2 + $0x218] sm:$0xf] %vm930, %v850
      %1094 = vst.msk [vmem:[#allocation2 + $0x240] sm:$0xf] %vm930, %v851
      %1095 = vst.msk [vmem:[#allocation2 + $0x268] sm:$0xf] %vm930, %v852
      %1096 = vrot.lane.b32.xlu0 %v852, 127
      %v1097 = vpop.permute.xlu0 %1096
      %1099 = vst.msk [vmem:[#allocation2 + $0x14] sm:$0xf] %vm1010, %v966
      %1100 = vst.msk [vmem:[#allocation2 + $0x3c] sm:$0xf] %vm1010, %v968
      %1101 = vst.msk [vmem:[#allocation2 + $0x64] sm:$0xf] %vm1010, %v970
      %1102 = vst.msk [vmem:[#allocation2 + $0x8c] sm:$0xf] %vm1010, %v972
      %1103 = vst.msk [vmem:[#allocation2 + $0xb4] sm:$0xf] %vm1010, %v974
      %1104 = vst.msk [vmem:[#allocation2 + $0xdc] sm:$0xf] %vm1010, %v976
      %1105 = vst.msk [vmem:[#allocation2 + $0x104] sm:$0xf] %vm1010, %v978
      %1106 = vst.msk [vmem:[#allocation2 + $0x12c] sm:$0xf] %vm1010, %v980
      %1107 = vst.msk [vmem:[#allocation2 + $0x154] sm:$0xf] %vm1010, %v982
      %1108 = vst.msk [vmem:[#allocation2 + $0x17c] sm:$0xf] %vm1010, %v984
      %1109 = vst.msk [vmem:[#allocation2 + $0x1a4] sm:$0xf] %vm1010, %v986
      %1110 = vst.msk [vmem:[#allocation2 + $0x1cc] sm:$0xf] %vm1010, %v988
      %1111 = vst.msk [vmem:[#allocation2 + $0x1f4] sm:$0xf] %vm1010, %v990
      %1112 = vst.msk [vmem:[#allocation2 + $0x21c] sm:$0xf] %vm1010, %v992
      %1113 = vst.msk [vmem:[#allocation2 + $0x244] sm:$0xf] %vm1010, %v994
      %1114 = vst.msk [vmem:[#allocation2 + $0x26c] sm:$0xf] %vm1010, %v1097
      %1115 = vst.msk [vmem:[#allocation2 + $0x14] sm:$0xf] %vm1027, 0
      %1116 = vst.msk [vmem:[#allocation2 + $0x3c] sm:$0xf] %vm1027, 0
      %1117 = vst.msk [vmem:[#allocation2 + $0x64] sm:$0xf] %vm1027, 0
      %1118 = vst.msk [vmem:[#allocation2 + $0x8c] sm:$0xf] %vm1027, 0
      %1119 = vst.msk [vmem:[#allocation2 + $0xb4] sm:$0xf] %vm1027, 0
      %1120 = vst.msk [vmem:[#allocation2 + $0xdc] sm:$0xf] %vm1027, 0
      %1121 = vst.msk [vmem:[#allocation2 + $0x104] sm:$0xf] %vm1027, 0
      %1122 = vst.msk [vmem:[#allocation2 + $0x12c] sm:$0xf] %vm1027, 0
      %1123 = vst.msk [vmem:[#allocation2 + $0x154] sm:$0xf] %vm1027, 0
      %1124 = vst.msk [vmem:[#allocation2 + $0x17c] sm:$0xf] %vm1027, 0
      %1125 = vst.msk [vmem:[#allocation2 + $0x1a4] sm:$0xf] %vm1027, 0
      %1126 = vst.msk [vmem:[#allocation2 + $0x1cc] sm:$0xf] %vm1027, 0
      %1127 = vst.msk [vmem:[#allocation2 + $0x1f4] sm:$0xf] %vm1027, 0
      %1128 = vst.msk [vmem:[#allocation2 + $0x21c] sm:$0xf] %vm1027, 0
      %1129 = vst.msk [vmem:[#allocation2 + $0x244] sm:$0xf] %vm1027, 0
      %1130 = vst.msk [vmem:[#allocation2 + $0x26c] sm:$0xf] %vm1027, 0
      %1131 = vst.msk [vmem:[#allocation2 + $0x18] sm:$0xf] %vm914, %v871
      %1132 = vst.msk [vmem:[#allocation2 + $0x40] sm:$0xf] %vm914, %v873
      %1133 = vst.msk [vmem:[#allocation2 + $0x68] sm:$0xf] %vm914, %v875
      %1134 = vst.msk [vmem:[#allocation2 + $0x90] sm:$0xf] %vm914, %v877
      %1135 = vst.msk [vmem:[#allocation2 + $0xb8] sm:$0xf] %vm914, %v879
      %1136 = vst.msk [vmem:[#allocation2 + $0xe0] sm:$0xf] %vm914, %v881
      %1137 = vst.msk [vmem:[#allocation2 + $0x108] sm:$0xf] %vm914, %v883
      %1138 = vst.msk [vmem:[#allocation2 + $0x130] sm:$0xf] %vm914, %v885
      %1139 = vst.msk [vmem:[#allocation2 + $0x158] sm:$0xf] %vm914, %v887
      %1140 = vst.msk [vmem:[#allocation2 + $0x180] sm:$0xf] %vm914, %v889
      %1141 = vst.msk [vmem:[#allocation2 + $0x1a8] sm:$0xf] %vm914, %v891
      %1142 = vst.msk [vmem:[#allocation2 + $0x1d0] sm:$0xf] %vm914, %v893
      %1143 = vst.msk [vmem:[#allocation2 + $0x1f8] sm:$0xf] %vm914, %v895
      %1144 = vst.msk [vmem:[#allocation2 + $0x220] sm:$0xf] %vm914, %v897
      %1145 = vst.msk [vmem:[#allocation2 + $0x248] sm:$0xf] %vm914, %v1046
      %s1146 = scalar_lea.vmem [#allocation2], 600
      %1147 = vst.msk [vmem:[%s1146 + $0x18] sm:$0xf] %vm930, 0
      %1148 = vst.msk [vmem:[#allocation2 + $0x18] sm:$0xf] %vm932, 0
      %1149 = vst.msk [vmem:[#allocation2 + $0x40] sm:$0xf] %vm932, 0
      %1150 = vst.msk [vmem:[#allocation2 + $0x68] sm:$0xf] %vm932, 0
      %1151 = vst.msk [vmem:[#allocation2 + $0x90] sm:$0xf] %vm932, 0
      %1152 = vst.msk [vmem:[#allocation2 + $0xb8] sm:$0xf] %vm932, 0
      %1153 = vst.msk [vmem:[#allocation2 + $0xe0] sm:$0xf] %vm932, 0
      %1154 = vst.msk [vmem:[#allocation2 + $0x108] sm:$0xf] %vm932, 0
      %1155 = vst.msk [vmem:[#allocation2 + $0x130] sm:$0xf] %vm932, 0
      %1156 = vst.msk [vmem:[#allocation2 + $0x158] sm:$0xf] %vm932, 0
      %1157 = vst.msk [vmem:[#allocation2 + $0x180] sm:$0xf] %vm932, 0
      %1158 = vst.msk [vmem:[#allocation2 + $0x1a8] sm:$0xf] %vm932, 0
      %1159 = vst.msk [vmem:[#allocation2 + $0x1d0] sm:$0xf] %vm932, 0
      %1160 = vst.msk [vmem:[#allocation2 + $0x1f8] sm:$0xf] %vm932, 0
      %1161 = vst.msk [vmem:[#allocation2 + $0x220] sm:$0xf] %vm932, 0
      %1162 = vst.msk [vmem:[#allocation2 + $0x248] sm:$0xf] %vm932, 0
      %1163 = vst.msk [vmem:[#allocation2 + $0x270] sm:$0xf] %vm932, 0
      %1164 = vst.msk [vmem:[#allocation2 + $0x1c] sm:$0xf] %vm930, %v838
      %1165 = vst.msk [vmem:[#allocation2 + $0x44] sm:$0xf] %vm930, %v839
      %1166 = vst.msk [vmem:[#allocation2 + $0x6c] sm:$0xf] %vm930, %v840
      %1167 = vst.msk [vmem:[#allocation2 + $0x94] sm:$0xf] %vm930, %v841
      %1168 = vst.msk [vmem:[#allocation2 + $0xbc] sm:$0xf] %vm930, %v842
      %1169 = vst.msk [vmem:[#allocation2 + $0xe4] sm:$0xf] %vm930, %v843
      %1170 = vst.msk [vmem:[#allocation2 + $0x10c] sm:$0xf] %vm930, %v844
      %1171 = vst.msk [vmem:[#allocation2 + $0x134] sm:$0xf] %vm930, %v845
      %1172 = vst.msk [vmem:[#allocation2 + $0x15c] sm:$0xf] %vm930, %v846
      %1173 = vst.msk [vmem:[#allocation2 + $0x184] sm:$0xf] %vm930, %v847
      %1174 = vst.msk [vmem:[#allocation2 + $0x1ac] sm:$0xf] %vm930, %v848
      %1175 = vst.msk [vmem:[#allocation2 + $0x1d4] sm:$0xf] %vm930, %v849
      %1176 = vst.msk [vmem:[#allocation2 + $0x1fc] sm:$0xf] %vm930, %v850
      %1177 = vst.msk [vmem:[#allocation2 + $0x224] sm:$0xf] %vm930, %v851
      %1178 = vst.msk [vmem:[#allocation2 + $0x24c] sm:$0xf] %vm930, %v852
      %1179 = vst.msk [vmem:[%s1146 + $0x1c] sm:$0xf] %vm930, 0
      %1180 = vst.msk [vmem:[#allocation2 + $0x20] sm:$0xf] %vm1010, %v968
      %1181 = vst.msk [vmem:[#allocation2 + $0x48] sm:$0xf] %vm1010, %v970
      %1182 = vst.msk [vmem:[#allocation2 + $0x70] sm:$0xf] %vm1010, %v972
      %1183 = vst.msk [vmem:[#allocation2 + $0x98] sm:$0xf] %vm1010, %v974
      %1184 = vst.msk [vmem:[#allocation2 + $0xc0] sm:$0xf] %vm1010, %v976
      %1185 = vst.msk [vmem:[#allocation2 + $0xe8] sm:$0xf] %vm1010, %v978
      %1186 = vst.msk [vmem:[#allocation2 + $0x110] sm:$0xf] %vm1010, %v980
      %1187 = vst.msk [vmem:[#allocation2 + $0x138] sm:$0xf] %vm1010, %v982
      %1188 = vst.msk [vmem:[#allocation2 + $0x160] sm:$0xf] %vm1010, %v984
      %1189 = vst.msk [vmem:[#allocation2 + $0x188] sm:$0xf] %vm1010, %v986
      %1190 = vst.msk [vmem:[#allocation2 + $0x1b0] sm:$0xf] %vm1010, %v988
      %1191 = vst.msk [vmem:[#allocation2 + $0x1d8] sm:$0xf] %vm1010, %v990
      %1192 = vst.msk [vmem:[#allocation2 + $0x200] sm:$0xf] %vm1010, %v992
      %1193 = vst.msk [vmem:[#allocation2 + $0x228] sm:$0xf] %vm1010, %v994
      %1194 = vst.msk [vmem:[#allocation2 + $0x250] sm:$0xf] %vm1010, %v1097
      %1195 = vst.msk [vmem:[%s1146 + $0x20] sm:$0xf] %vm930, 0
      %1196 = vst.msk [vmem:[#allocation2 + $0x20] sm:$0xf] %vm1027, 0
      %1197 = vst.msk [vmem:[#allocation2 + $0x48] sm:$0xf] %vm1027, 0
      %1198 = vst.msk [vmem:[#allocation2 + $0x70] sm:$0xf] %vm1027, 0
      %1199 = vst.msk [vmem:[#allocation2 + $0x98] sm:$0xf] %vm1027, 0
      %1200 = vst.msk [vmem:[#allocation2 + $0xc0] sm:$0xf] %vm1027, 0
      %1201 = vst.msk [vmem:[#allocation2 + $0xe8] sm:$0xf] %vm1027, 0
      %1202 = vst.msk [vmem:[#allocation2 + $0x110] sm:$0xf] %vm1027, 0
      %1203 = vst.msk [vmem:[#allocation2 + $0x138] sm:$0xf] %vm1027, 0
      %1204 = vst.msk [vmem:[#allocation2 + $0x160] sm:$0xf] %vm1027, 0
      %1205 = vst.msk [vmem:[#allocation2 + $0x188] sm:$0xf] %vm1027, 0
      %1206 = vst.msk [vmem:[#allocation2 + $0x1b0] sm:$0xf] %vm1027, 0
      %1207 = vst.msk [vmem:[#allocation2 + $0x1d8] sm:$0xf] %vm1027, 0
      %1208 = vst.msk [vmem:[#allocation2 + $0x200] sm:$0xf] %vm1027, 0
      %1209 = vst.msk [vmem:[#allocation2 + $0x228] sm:$0xf] %vm1027, 0
      %1210 = vst.msk [vmem:[#allocation2 + $0x250] sm:$0xf] %vm1027, 0
      %1211 = vst.msk [vmem:[#allocation2 + $0x278] sm:$0xf] %vm1027, 0
      %v1212 = vld [vmem:[%s3] sm:$0xf]
      loop: start=0, step=1, limit=16
      $region73: #{tfc_tdf_forward.3} parent=71 // loop_pre_header
        _
      $region74: #{tfc_tdf_forward.3} parent=71 // loop_header
        %s1214 = sphi 0, %s1218
        %p1215 = scmp.ge.s32.totalorder %s1214, 16
      $region75: #{tfc_tdf_forward.3} parent=71 // loop_header_branch
        %1217 = sbr.rel (%p1215) target = $region79
      $region76: #{tfc_tdf_forward.3} parent=71 // loop_body
        %s1219 = smul.u32 %s1214, 10
        %s1220 = smul.addr %s1219, 4
        %s1221 = scalar_lea.vmem [#allocation2], %s1220
        %v1222 = vld [vmem:[%s1221] sm:$0xf]
        %v1223 = vld [vmem:[%s1221 + $0x4] sm:$0xf]
        %v1224 = vld [vmem:[%s1221 + $0x8] sm:$0xf]
        %v1225 = vld [vmem:[%s1221 + $0xc] sm:$0xf]
        %v1226 = vld [vmem:[%s1221 + $0x10] sm:$0xf]
        %v1227 = vld [vmem:[%s1221 + $0x14] sm:$0xf]
        %v1228 = vld [vmem:[%s1221 + $0x18] sm:$0xf]
        %v1229 = vld [vmem:[%s1221 + $0x1c] sm:$0xf]
        %v1230 = vld [vmem:[%s1221 + $0x20] sm:$0xf]
        %v1240 = vunpack.c.l.b16 %v1222
        %v1241 = vunpack.c.l.b16 %v1223
        %v1242 = vunpack.c.l.b16 %v1224
        %v1243 = vunpack.c.l.b16 %v1225
        %v1244 = vunpack.c.l.b16 %v1226
        %v1245 = vunpack.c.l.b16 %v1227
        %v1246 = vunpack.c.l.b16 %v1228
        %v1247 = vunpack.c.l.b16 %v1229
        %v1248 = vunpack.c.l.b16 %v1230
        %v1249 = vpack.c.b16 %v1241, %v1240
        %v1250 = vpack.c.b16 %v1243, %v1242
        %v1251 = vpack.c.b16 %v1245, %v1244
        %v1252 = vpack.c.b16 %v1247, %v1246
        %v1253 = vpack.c.b16 %v1248, %v1248
        %vm1258 = vcmask 588800
        %v1260 = vsel %vm1258, %v1212, 0
        %vm1262 = vcmask 1043456
        %v1264 = vsel %vm1262, %v1253, 0
        %1266 = vmatpush.bf16.msra.mxu0 0
        %1267 = vmatpush.bf16.msra.mxu0 0
        %1268 = vmatpush.bf16.msra.mxu0 0
        %1269 = vmatpush.bf16.msra.mxu0 %v1264
        %1270 = vmatpush.bf16.msra.mxu0 %v1252
        %1271 = vmatpush.bf16.msra.mxu0 %v1251
        %1272 = vmatpush.bf16.msra.mxu0 %v1250
        %1273 = vmatpush.bf16.msra.mxu0 %v1249
        %1274 = vmatmul.bf16.gmra.mxu0 %v1260
        %v1275 = vpop.f32.mrf.mxu0
        %v1276 = vadd.f32 0.0, %v1275
        %v1277 = vpop.f32.mrf.mxu0
        %1278 = vdwg.mxu0
        %s1279 = smul.u32 %s1214, 8
        %s1280 = scalar_lea.vmem [#allocation3], %s1279
        %1281 = vst.msk [vmem:[%s1280] sm:$0xff] %vm460, %v1276
      $region77: #{tfc_tdf_forward.3} parent=71 // loop_footer
        %s1218 = sadd.s32 1, %s1214
      $region78: #{tfc_tdf_forward.3} parent=71 // loop_footer_branch
        %1213 = sbr.rel target = $region74
      $region79: #{tfc_tdf_forward.3} parent=71 // loop_exit
        _
      %v1282 = vld [vmem:[#allocation3] sm:$0xff]
      %v1283 = vld [vmem:[#allocation3 + $0x8] sm:$0xff]
      %v1284 = vld [vmem:[#allocation3 + $0x10] sm:$0xff]
      %v1285 = vld [vmem:[#allocation3 + $0x18] sm:$0xff]
      %v1286 = vld [vmem:[#allocation3 + $0x20] sm:$0xff]
      %v1287 = vld [vmem:[#allocation3 + $0x28] sm:$0xff]
      %v1288 = vld [vmem:[#allocation3 + $0x30] sm:$0xff]
      %v1289 = vld [vmem:[#allocation3 + $0x38] sm:$0xff]
      %v1290 = vld [vmem:[#allocation3 + $0x40] sm:$0xff]
      %v1291 = vld [vmem:[#allocation3 + $0x48] sm:$0xff]
      %v1292 = vld [vmem:[#allocation3 + $0x50] sm:$0xff]
      %v1293 = vld [vmem:[#allocation3 + $0x58] sm:$0xff]
      %v1294 = vld [vmem:[#allocation3 + $0x60] sm:$0xff]
      %v1295 = vld [vmem:[#allocation3 + $0x68] sm:$0xff]
      %v1296 = vld [vmem:[#allocation3 + $0x70] sm:$0xff]
      %v1297 = vld [vmem:[#allocation3 + $0x78] sm:$0xff]
      %v1298 = vld [vmem:[%s4] sm:$0xff]
      %v1299 = vld [vmem:[%s5] sm:$0xff]
      %v1300 = vsel %vm460, %v1282, 0.0
      %1301 = vadd.xlane.f32.xlu0 %v1300
      %v1302 = vpop.xlane.xlu0 %1301
      %v1303 = vsel %vm460, %v1283, 0.0
      %1304 = vadd.xlane.f32.xlu0 %v1303
      %v1305 = vpop.xlane.xlu0 %1304
      %v1306 = vsel %vm460, %v1284, 0.0
      %1307 = vadd.xlane.f32.xlu0 %v1306
      %v1308 = vpop.xlane.xlu0 %1307
      %v1309 = vsel %vm460, %v1285, 0.0
      %1310 = vadd.xlane.f32.xlu0 %v1309
      %v1311 = vpop.xlane.xlu0 %1310
      %v1312 = vsel %vm460, %v1286, 0.0
      %1313 = vadd.xlane.f32.xlu0 %v1312
      %v1314 = vpop.xlane.xlu0 %1313
      %v1315 = vsel %vm460, %v1287, 0.0
      %1316 = vadd.xlane.f32.xlu0 %v1315
      %v1317 = vpop.xlane.xlu0 %1316
      %v1318 = vsel %vm460, %v1288, 0.0
      %1319 = vadd.xlane.f32.xlu0 %v1318
      %v1320 = vpop.xlane.xlu0 %1319
      %v1321 = vsel %vm460, %v1289, 0.0
      %1322 = vadd.xlane.f32.xlu0 %v1321
      %v1323 = vpop.xlane.xlu0 %1322
      %v1324 = vsel %vm460, %v1290, 0.0
      %1325 = vadd.xlane.f32.xlu0 %v1324
      %v1326 = vpop.xlane.xlu0 %1325
      %v1327 = vsel %vm460, %v1291, 0.0
      %1328 = vadd.xlane.f32.xlu0 %v1327
      %v1329 = vpop.xlane.xlu0 %1328
      %v1330 = vsel %vm460, %v1292, 0.0
      %1331 = vadd.xlane.f32.xlu0 %v1330
      %v1332 = vpop.xlane.xlu0 %1331
      %v1333 = vsel %vm460, %v1293, 0.0
      %1334 = vadd.xlane.f32.xlu0 %v1333
      %v1335 = vpop.xlane.xlu0 %1334
      %v1336 = vsel %vm460, %v1294, 0.0
      %1337 = vadd.xlane.f32.xlu0 %v1336
      %v1338 = vpop.xlane.xlu0 %1337
      %v1339 = vsel %vm460, %v1295, 0.0
      %1340 = vadd.xlane.f32.xlu0 %v1339
      %v1341 = vpop.xlane.xlu0 %1340
      %v1342 = vsel %vm460, %v1296, 0.0
      %1343 = vadd.xlane.f32.xlu0 %v1342
      %v1344 = vpop.xlane.xlu0 %1343
      %v1345 = vsel %vm460, %v1297, 0.0
      %1346 = vadd.xlane.f32.xlu0 %v1345
      %v1347 = vpop.xlane.xlu0 %1346
      %v1348 = vadd.f32 %v1302, %v1305
      %v1349 = vadd.f32 %v1348, %v1308
      %v1350 = vadd.f32 %v1349, %v1311
      %v1351 = vadd.f32 %v1350, %v1314
      %v1352 = vadd.f32 %v1351, %v1317
      %v1353 = vadd.f32 %v1352, %v1320
      %v1354 = vadd.f32 %v1353, %v1323
      %v1355 = vadd.f32 %v1354, %v1326
      %v1356 = vadd.f32 %v1355, %v1329
      %v1357 = vadd.f32 %v1356, %v1332
      %v1358 = vadd.f32 %v1357, %v1335
      %v1359 = vadd.f32 %v1358, %v1338
      %v1360 = vadd.f32 %v1359, %v1341
      %v1361 = vadd.f32 %v1360, %v1344
      %v1362 = vadd.f32 %v1361, %v1347
      %v1363 = vmul.f32 %v1282, %v1282
      %v1364 = vmul.f32 %v1283, %v1283
      %v1365 = vmul.f32 %v1284, %v1284
      %v1366 = vmul.f32 %v1285, %v1285
      %v1367 = vmul.f32 %v1286, %v1286
      %v1368 = vmul.f32 %v1287, %v1287
      %v1369 = vmul.f32 %v1288, %v1288
      %v1370 = vmul.f32 %v1289, %v1289
      %v1371 = vmul.f32 %v1290, %v1290
      %v1372 = vmul.f32 %v1291, %v1291
      %v1373 = vmul.f32 %v1292, %v1292
      %v1374 = vmul.f32 %v1293, %v1293
      %v1375 = vmul.f32 %v1294, %v1294
      %v1376 = vmul.f32 %v1295, %v1295
      %v1377 = vmul.f32 %v1296, %v1296
      %v1378 = vmul.f32 %v1297, %v1297
      %v1379 = vsel %vm460, %v1363, 0.0
      %1380 = vadd.xlane.f32.xlu0 %v1379
      %v1381 = vpop.xlane.xlu0 %1380
      %v1382 = vsel %vm460, %v1364, 0.0
      %1383 = vadd.xlane.f32.xlu0 %v1382
      %v1384 = vpop.xlane.xlu0 %1383
      %v1385 = vsel %vm460, %v1365, 0.0
      %1386 = vadd.xlane.f32.xlu0 %v1385
      %v1387 = vpop.xlane.xlu0 %1386
      %v1388 = vsel %vm460, %v1366, 0.0
      %1389 = vadd.xlane.f32.xlu0 %v1388
      %v1390 = vpop.xlane.xlu0 %1389
      %v1391 = vsel %vm460, %v1367, 0.0
      %1392 = vadd.xlane.f32.xlu0 %v1391
      %v1393 = vpop.xlane.xlu0 %1392
      %v1394 = vsel %vm460, %v1368, 0.0
      %1395 = vadd.xlane.f32.xlu0 %v1394
      %v1396 = vpop.xlane.xlu0 %1395
      %v1397 = vsel %vm460, %v1369, 0.0
      %1398 = vadd.xlane.f32.xlu0 %v1397
      %v1399 = vpop.xlane.xlu0 %1398
      %v1400 = vsel %vm460, %v1370, 0.0
      %1401 = vadd.xlane.f32.xlu0 %v1400
      %v1402 = vpop.xlane.xlu0 %1401
      %v1403 = vsel %vm460, %v1371, 0.0
      %1404 = vadd.xlane.f32.xlu0 %v1403
      %v1405 = vpop.xlane.xlu0 %1404
      %v1406 = vsel %vm460, %v1372, 0.0
      %1407 = vadd.xlane.f32.xlu0 %v1406
      %v1408 = vpop.xlane.xlu0 %1407
      %v1409 = vsel %vm460, %v1373, 0.0
      %1410 = vadd.xlane.f32.xlu0 %v1409
      %v1411 = vpop.xlane.xlu0 %1410
      %v1412 = vsel %vm460, %v1374, 0.0
      %1413 = vadd.xlane.f32.xlu0 %v1412
      %v1414 = vpop.xlane.xlu0 %1413
      %v1415 = vsel %vm460, %v1375, 0.0
      %1416 = vadd.xlane.f32.xlu0 %v1415
      %v1417 = vpop.xlane.xlu0 %1416
      %v1418 = vsel %vm460, %v1376, 0.0
      %1419 = vadd.xlane.f32.xlu0 %v1418
      %v1420 = vpop.xlane.xlu0 %1419
      %v1421 = vsel %vm460, %v1377, 0.0
      %1422 = vadd.xlane.f32.xlu0 %v1421
      %v1423 = vpop.xlane.xlu0 %1422
      %v1424 = vsel %vm460, %v1378, 0.0
      %1425 = vadd.xlane.f32.xlu0 %v1424
      %v1426 = vpop.xlane.xlu0 %1425
      %v1427 = vadd.f32 %v1381, %v1384
      %v1428 = vadd.f32 %v1427, %v1387
      %v1429 = vadd.f32 %v1428, %v1390
      %v1430 = vadd.f32 %v1429, %v1393
      %v1431 = vadd.f32 %v1430, %v1396
      %v1432 = vadd.f32 %v1431, %v1399
      %v1433 = vadd.f32 %v1432, %v1402
      %v1434 = vadd.f32 %v1433, %v1405
      %v1435 = vadd.f32 %v1434, %v1408
      %v1436 = vadd.f32 %v1435, %v1411
      %v1437 = vadd.f32 %v1436, %v1414
      %v1438 = vadd.f32 %v1437, %v1417
      %v1439 = vadd.f32 %v1438, %v1420
      %v1440 = vadd.f32 %v1439, %v1423
      %v1441 = vadd.f32 %v1440, %v1426
      %v1442 = vmul.f32 %v1362, 0.00390625
      %v1443 = vmul.f32 %v1441, 0.00390625
      %v1444 = vmul.f32 %v1442, %v1442
      %v1445 = vsub.f32 %v1443, %v1444
      %v1446 = vmax.f32 %v1445, 0.0
      %v1447 = vsub.f32 %v1282, %v1442
      %v1448 = vsub.f32 %v1283, %v1442
      %v1449 = vsub.f32 %v1284, %v1442
      %v1450 = vsub.f32 %v1285, %v1442
      %v1451 = vsub.f32 %v1286, %v1442
      %v1452 = vsub.f32 %v1287, %v1442
      %v1453 = vsub.f32 %v1288, %v1442
      %v1454 = vsub.f32 %v1289, %v1442
      %v1455 = vsub.f32 %v1290, %v1442
      %v1456 = vsub.f32 %v1291, %v1442
      %v1457 = vsub.f32 %v1292, %v1442
      %v1458 = vsub.f32 %v1293, %v1442
      %v1459 = vsub.f32 %v1294, %v1442
      %v1460 = vsub.f32 %v1295, %v1442
      %v1461 = vsub.f32 %v1296, %v1442
      %v1462 = vsub.f32 %v1297, %v1442
      %v1463 = vadd.f32 %v1446, 1e-05
      %v1464 = vrsqrt.pop %v1463
      %v1465 = vmul.f32 %v1464, %v1463
      %v1466 = vmul.f32 %v1465, %v1464
      %v1467 = vmul.f32 0.5, %v1466
      %v1468 = vsub.f32 1.5, %v1467
      %v1469 = vmul.f32 %v1464, %v1468
      %vm1470 = vweird.f32 %v1463
      %vm1471 = vweird.f32 %v1464
      %vm1472 = vmor %vm1470, %vm1471
      %v1473 = vsel %vm1472, %v1464, %v1469
      %v1474 = vmul.f32 %v1447, %v1473
      %v1475 = vmul.f32 %v1448, %v1473
      %v1476 = vmul.f32 %v1449, %v1473
      %v1477 = vmul.f32 %v1450, %v1473
      %v1478 = vmul.f32 %v1451, %v1473
      %v1479 = vmul.f32 %v1452, %v1473
      %v1480 = vmul.f32 %v1453, %v1473
      %v1481 = vmul.f32 %v1454, %v1473
      %v1482 = vmul.f32 %v1455, %v1473
      %v1483 = vmul.f32 %v1456, %v1473
      %v1484 = vmul.f32 %v1457, %v1473
      %v1485 = vmul.f32 %v1458, %v1473
      %v1486 = vmul.f32 %v1459, %v1473
      %v1487 = vmul.f32 %v1460, %v1473
      %v1488 = vmul.f32 %v1461, %v1473
      %v1489 = vmul.f32 %v1462, %v1473
      %1491 = vset.pattern.permute.xlu0 0
      %1492 = vperm.xlu0 %1491, %v1298
      %v1493 = vpop.permute.xlu0 %1492
      %v1495 = vmul.f32 %v1474, %v1493
      %v1496 = vmul.f32 %v1475, %v1493
      %v1497 = vmul.f32 %v1476, %v1493
      %v1498 = vmul.f32 %v1477, %v1493
      %v1499 = vmul.f32 %v1478, %v1493
      %v1500 = vmul.f32 %v1479, %v1493
      %v1501 = vmul.f32 %v1480, %v1493
      %v1502 = vmul.f32 %v1481, %v1493
      %v1503 = vmul.f32 %v1482, %v1493
      %v1504 = vmul.f32 %v1483, %v1493
      %v1505 = vmul.f32 %v1484, %v1493
      %v1506 = vmul.f32 %v1485, %v1493
      %v1507 = vmul.f32 %v1486, %v1493
      %v1508 = vmul.f32 %v1487, %v1493
      %v1509 = vmul.f32 %v1488, %v1493
      %v1510 = vmul.f32 %v1489, %v1493
      %1512 = vset.pattern.permute.xlu0 0
      %1513 = vperm.xlu0 %1512, %v1299
      %v1514 = vpop.permute.xlu0 %1513
      %v1516 = vadd.f32 %v1495, %v1514
      %v1517 = vadd.f32 %v1496, %v1514
      %v1518 = vadd.f32 %v1497, %v1514
      %v1519 = vadd.f32 %v1498, %v1514
      %v1520 = vadd.f32 %v1499, %v1514
      %v1521 = vadd.f32 %v1500, %v1514
      %v1522 = vadd.f32 %v1501, %v1514
      %v1523 = vadd.f32 %v1502, %v1514
      %v1524 = vadd.f32 %v1503, %v1514
      %v1525 = vadd.f32 %v1504, %v1514
      %v1526 = vadd.f32 %v1505, %v1514
      %v1527 = vadd.f32 %v1506, %v1514
      %v1528 = vadd.f32 %v1507, %v1514
      %v1529 = vadd.f32 %v1508, %v1514
      %v1530 = vadd.f32 %v1509, %v1514
      %v1531 = vadd.f32 %v1510, %v1514
      %v1532 = vmul.f32 %v1516, %v1516
      %v1533 = vmul.f32 %v1517, %v1517
      %v1534 = vmul.f32 %v1518, %v1518
      %v1535 = vmul.f32 %v1519, %v1519
      %v1536 = vmul.f32 %v1520, %v1520
      %v1537 = vmul.f32 %v1521, %v1521
      %v1538 = vmul.f32 %v1522, %v1522
      %v1539 = vmul.f32 %v1523, %v1523
      %v1540 = vmul.f32 %v1524, %v1524
      %v1541 = vmul.f32 %v1525, %v1525
      %v1542 = vmul.f32 %v1526, %v1526
      %v1543 = vmul.f32 %v1527, %v1527
      %v1544 = vmul.f32 %v1528, %v1528
      %v1545 = vmul.f32 %v1529, %v1529
      %v1546 = vmul.f32 %v1530, %v1530
      %v1547 = vmul.f32 %v1531, %v1531
      %v1548 = vmul.f32 %v1516, %v1532
      %v1549 = vmul.f32 %v1517, %v1533
      %v1550 = vmul.f32 %v1518, %v1534
      %v1551 = vmul.f32 %v1519, %v1535
      %v1552 = vmul.f32 %v1520, %v1536
      %v1553 = vmul.f32 %v1521, %v1537
      %v1554 = vmul.f32 %v1522, %v1538
      %v1555 = vmul.f32 %v1523, %v1539
      %v1556 = vmul.f32 %v1524, %v1540
      %v1557 = vmul.f32 %v1525, %v1541
      %v1558 = vmul.f32 %v1526, %v1542
      %v1559 = vmul.f32 %v1527, %v1543
      %v1560 = vmul.f32 %v1528, %v1544
      %v1561 = vmul.f32 %v1529, %v1545
      %v1562 = vmul.f32 %v1530, %v1546
      %v1563 = vmul.f32 %v1531, %v1547
      %v1564 = vmul.f32 %v1548, 0.044715
      %v1565 = vmul.f32 %v1549, 0.044715
      %v1566 = vmul.f32 %v1550, 0.044715
      %v1567 = vmul.f32 %v1551, 0.044715
      %v1568 = vmul.f32 %v1552, 0.044715
      %v1569 = vmul.f32 %v1553, 0.044715
      %v1570 = vmul.f32 %v1554, 0.044715
      %v1571 = vmul.f32 %v1555, 0.044715
      %v1572 = vmul.f32 %v1556, 0.044715
      %v1573 = vmul.f32 %v1557, 0.044715
      %v1574 = vmul.f32 %v1558, 0.044715
      %v1575 = vmul.f32 %v1559, 0.044715
      %v1576 = vmul.f32 %v1560, 0.044715
      %v1577 = vmul.f32 %v1561, 0.044715
      %v1578 = vmul.f32 %v1562, 0.044715
      %v1579 = vmul.f32 %v1563, 0.044715
      %v1580 = vadd.f32 %v1516, %v1564
      %v1581 = vadd.f32 %v1517, %v1565
      %v1582 = vadd.f32 %v1518, %v1566
      %v1583 = vadd.f32 %v1519, %v1567
      %v1584 = vadd.f32 %v1520, %v1568
      %v1585 = vadd.f32 %v1521, %v1569
      %v1586 = vadd.f32 %v1522, %v1570
      %v1587 = vadd.f32 %v1523, %v1571
      %v1588 = vadd.f32 %v1524, %v1572
      %v1589 = vadd.f32 %v1525, %v1573
      %v1590 = vadd.f32 %v1526, %v1574
      %v1591 = vadd.f32 %v1527, %v1575
      %v1592 = vadd.f32 %v1528, %v1576
      %v1593 = vadd.f32 %v1529, %v1577
      %v1594 = vadd.f32 %v1530, %v1578
      %v1595 = vadd.f32 %v1531, %v1579
      %v1596 = vmul.f32 %v1580, 0.7978846
      %v1597 = vmul.f32 %v1581, 0.7978846
      %v1598 = vmul.f32 %v1582, 0.7978846
      %v1599 = vmul.f32 %v1583, 0.7978846
      %v1600 = vmul.f32 %v1584, 0.7978846
      %v1601 = vmul.f32 %v1585, 0.7978846
      %v1602 = vmul.f32 %v1586, 0.7978846
      %v1603 = vmul.f32 %v1587, 0.7978846
      %v1604 = vmul.f32 %v1588, 0.7978846
      %v1605 = vmul.f32 %v1589, 0.7978846
      %v1606 = vmul.f32 %v1590, 0.7978846
      %v1607 = vmul.f32 %v1591, 0.7978846
      %v1608 = vmul.f32 %v1592, 0.7978846
      %v1609 = vmul.f32 %v1593, 0.7978846
      %v1610 = vmul.f32 %v1594, 0.7978846
      %v1611 = vmul.f32 %v1595, 0.7978846
      %v1612 = vtanh.pop %v1596
      %v1613 = vtanh.pop %v1597
      %v1614 = vtanh.pop %v1598
      %v1615 = vtanh.pop %v1599
      %v1616 = vtanh.pop %v1600
      %v1617 = vtanh.pop %v1601
      %v1618 = vtanh.pop %v1602
      %v1619 = vtanh.pop %v1603
      %v1620 = vtanh.pop %v1604
      %v1621 = vtanh.pop %v1605
      %v1622 = vtanh.pop %v1606
      %v1623 = vtanh.pop %v1607
      %v1624 = vtanh.pop %v1608
      %v1625 = vtanh.pop %v1609
      %v1626 = vtanh.pop %v1610
      %v1627 = vtanh.pop %v1611
      %v1628 = vadd.f32 %v1612, 1.0
      %v1629 = vadd.f32 %v1613, 1.0
      %v1630 = vadd.f32 %v1614, 1.0
      %v1631 = vadd.f32 %v1615, 1.0
      %v1632 = vadd.f32 %v1616, 1.0
      %v1633 = vadd.f32 %v1617, 1.0
      %v1634 = vadd.f32 %v1618, 1.0
      %v1635 = vadd.f32 %v1619, 1.0
      %v1636 = vadd.f32 %v1620, 1.0
      %v1637 = vadd.f32 %v1621, 1.0
      %v1638 = vadd.f32 %v1622, 1.0
      %v1639 = vadd.f32 %v1623, 1.0
      %v1640 = vadd.f32 %v1624, 1.0
      %v1641 = vadd.f32 %v1625, 1.0
      %v1642 = vadd.f32 %v1626, 1.0
      %v1643 = vadd.f32 %v1627, 1.0
      %v1644 = vmul.f32 %v1628, 0.5
      %v1645 = vmul.f32 %v1629, 0.5
      %v1646 = vmul.f32 %v1630, 0.5
      %v1647 = vmul.f32 %v1631, 0.5
      %v1648 = vmul.f32 %v1632, 0.5
      %v1649 = vmul.f32 %v1633, 0.5
      %v1650 = vmul.f32 %v1634, 0.5
      %v1651 = vmul.f32 %v1635, 0.5
      %v1652 = vmul.f32 %v1636, 0.5
      %v1653 = vmul.f32 %v1637, 0.5
      %v1654 = vmul.f32 %v1638, 0.5
      %v1655 = vmul.f32 %v1639, 0.5
      %v1656 = vmul.f32 %v1640, 0.5
      %v1657 = vmul.f32 %v1641, 0.5
      %v1658 = vmul.f32 %v1642, 0.5
      %v1659 = vmul.f32 %v1643, 0.5
      %v1660 = vmul.f32 %v1516, %v1644
      %v1661 = vmul.f32 %v1517, %v1645
      %v1662 = vmul.f32 %v1518, %v1646
      %v1663 = vmul.f32 %v1519, %v1647
      %v1664 = vmul.f32 %v1520, %v1648
      %v1665 = vmul.f32 %v1521, %v1649
      %v1666 = vmul.f32 %v1522, %v1650
      %v1667 = vmul.f32 %v1523, %v1651
      %v1668 = vmul.f32 %v1524, %v1652
      %v1669 = vmul.f32 %v1525, %v1653
      %v1670 = vmul.f32 %v1526, %v1654
      %v1671 = vmul.f32 %v1527, %v1655
      %v1672 = vmul.f32 %v1528, %v1656
      %v1673 = vmul.f32 %v1529, %v1657
      %v1674 = vmul.f32 %v1530, %v1658
      %v1675 = vmul.f32 %v1531, %v1659
      %v1676 = vpack.c.bf16 %v1661, %v1660
      %v1677 = vpack.c.bf16 %v1663, %v1662
      %v1678 = vpack.c.bf16 %v1665, %v1664
      %v1679 = vpack.c.bf16 %v1667, %v1666
      %v1680 = vpack.c.bf16 %v1669, %v1668
      %v1681 = vpack.c.bf16 %v1671, %v1670
      %v1682 = vpack.c.bf16 %v1673, %v1672
      %v1683 = vpack.c.bf16 %v1675, %v1674
      %v1684 = vld [vmem:[%s6] sm:$0xf]
      %v1685 = vld [vmem:[%s6 + $0x4] sm:$0xf]
      %v1688 = vunpack.c.l.b16 %v1684
      %v1689 = vunpack.c.l.b16 %v1685
      %v1690 = vpack.c.b16 %v1689, %v1688
      %v1693 = vsel %vm460, %v1676, 0
      %v1696 = vsel %vm460, %v1677, 0
      %v1699 = vsel %vm460, %v1678, 0
      %v1702 = vsel %vm460, %v1679, 0
      %v1705 = vsel %vm460, %v1680, 0
      %v1708 = vsel %vm460, %v1681, 0
      %v1711 = vsel %vm460, %v1682, 0
      %v1714 = vsel %vm460, %v1683, 0
      %1716 = vmatpush.bf16.msra.mxu0 0
      %1717 = vmatpush.bf16.msra.mxu0 0
      %1718 = vmatpush.bf16.msra.mxu0 0
      %1719 = vmatpush.bf16.msra.mxu0 0
      %1720 = vmatpush.bf16.msra.mxu0 0
      %1721 = vmatpush.bf16.msra.mxu0 0
      %1722 = vmatpush.bf16.msra.mxu0 0
      %1723 = vmatpush.bf16.msra.mxu0 %v1690
      %1724 = vmatmul.bf16.gmra.mxu0 %v1693
      %v1725 = vpop.f32.mrf.mxu0
      %v1726 = vadd.f32 0.0, %v1725
      %v1727 = vpop.f32.mrf.mxu0
      %v1728 = vadd.f32 0.0, %v1727
      %1729 = vmatmul.bf16.gmra.mxu0 %v1696
      %v1730 = vpop.f32.mrf.mxu0
      %v1731 = vadd.f32 0.0, %v1730
      %v1732 = vpop.f32.mrf.mxu0
      %v1733 = vadd.f32 0.0, %v1732
      %1734 = vmatmul.bf16.gmra.mxu0 %v1699
      %v1735 = vpop.f32.mrf.mxu0
      %v1736 = vadd.f32 0.0, %v1735
      %v1737 = vpop.f32.mrf.mxu0
      %v1738 = vadd.f32 0.0, %v1737
      %1739 = vmatmul.bf16.gmra.mxu0 %v1702
      %v1740 = vpop.f32.mrf.mxu0
      %v1741 = vadd.f32 0.0, %v1740
      %v1742 = vpop.f32.mrf.mxu0
      %v1743 = vadd.f32 0.0, %v1742
      %1744 = vmatmul.bf16.gmra.mxu0 %v1705
      %v1745 = vpop.f32.mrf.mxu0
      %v1746 = vadd.f32 0.0, %v1745
      %v1747 = vpop.f32.mrf.mxu0
      %v1748 = vadd.f32 0.0, %v1747
      %1749 = vmatmul.bf16.gmra.mxu0 %v1708
      %v1750 = vpop.f32.mrf.mxu0
      %v1751 = vadd.f32 0.0, %v1750
      %v1752 = vpop.f32.mrf.mxu0
      %v1753 = vadd.f32 0.0, %v1752
      %1754 = vmatmul.bf16.gmra.mxu0 %v1711
      %v1755 = vpop.f32.mrf.mxu0
      %v1756 = vadd.f32 0.0, %v1755
      %v1757 = vpop.f32.mrf.mxu0
      %v1758 = vadd.f32 0.0, %v1757
      %1759 = vmatmul.bf16.gmra.mxu0 %v1714
      %v1760 = vpop.f32.mrf.mxu0
      %v1761 = vadd.f32 0.0, %v1760
      %v1762 = vpop.f32.mrf.mxu0
      %v1763 = vadd.f32 0.0, %v1762
      %1764 = vdwg.mxu0
      %v1765 = vld [vmem:[%s7] sm:$0xff]
      %v1766 = vld [vmem:[%s8] sm:$0xff]
      %vm1767 = vcmask 31744
      %v1768 = vsel %vm1767, %v1726, 0.0
      %1769 = vadd.xlane.f32.xlu0 %v1768
      %v1770 = vpop.xlane.xlu0 %1769
      %v1771 = vsel %vm1767, %v1728, 0.0
      %1772 = vadd.xlane.f32.xlu0 %v1771
      %v1773 = vpop.xlane.xlu0 %1772
      %v1774 = vsel %vm1767, %v1731, 0.0
      %1775 = vadd.xlane.f32.xlu0 %v1774
      %v1776 = vpop.xlane.xlu0 %1775
      %v1777 = vsel %vm1767, %v1733, 0.0
      %1778 = vadd.xlane.f32.xlu0 %v1777
      %v1779 = vpop.xlane.xlu0 %1778
      %v1780 = vsel %vm1767, %v1736, 0.0
      %1781 = vadd.xlane.f32.xlu0 %v1780
      %v1782 = vpop.xlane.xlu0 %1781
      %v1783 = vsel %vm1767, %v1738, 0.0
      %1784 = vadd.xlane.f32.xlu0 %v1783
      %v1785 = vpop.xlane.xlu0 %1784
      %v1786 = vsel %vm1767, %v1741, 0.0
      %1787 = vadd.xlane.f32.xlu0 %v1786
      %v1788 = vpop.xlane.xlu0 %1787
      %v1789 = vsel %vm1767, %v1743, 0.0
      %1790 = vadd.xlane.f32.xlu0 %v1789
      %v1791 = vpop.xlane.xlu0 %1790
      %v1792 = vsel %vm1767, %v1746, 0.0
      %1793 = vadd.xlane.f32.xlu0 %v1792
      %v1794 = vpop.xlane.xlu0 %1793
      %v1795 = vsel %vm1767, %v1748, 0.0
      %1796 = vadd.xlane.f32.xlu0 %v1795
      %v1797 = vpop.xlane.xlu0 %1796
      %v1798 = vsel %vm1767, %v1751, 0.0
      %1799 = vadd.xlane.f32.xlu0 %v1798
      %v1800 = vpop.xlane.xlu0 %1799
      %v1801 = vsel %vm1767, %v1753, 0.0
      %1802 = vadd.xlane.f32.xlu0 %v1801
      %v1803 = vpop.xlane.xlu0 %1802
      %v1804 = vsel %vm1767, %v1756, 0.0
      %1805 = vadd.xlane.f32.xlu0 %v1804
      %v1806 = vpop.xlane.xlu0 %1805
      %v1807 = vsel %vm1767, %v1758, 0.0
      %1808 = vadd.xlane.f32.xlu0 %v1807
      %v1809 = vpop.xlane.xlu0 %1808
      %v1810 = vsel %vm1767, %v1761, 0.0
      %1811 = vadd.xlane.f32.xlu0 %v1810
      %v1812 = vpop.xlane.xlu0 %1811
      %v1813 = vsel %vm1767, %v1763, 0.0
      %1814 = vadd.xlane.f32.xlu0 %v1813
      %v1815 = vpop.xlane.xlu0 %1814
      %v1816 = vadd.f32 %v1770, %v1773
      %v1817 = vadd.f32 %v1816, %v1776
      %v1818 = vadd.f32 %v1817, %v1779
      %v1819 = vadd.f32 %v1818, %v1782
      %v1820 = vadd.f32 %v1819, %v1785
      %v1821 = vadd.f32 %v1820, %v1788
      %v1822 = vadd.f32 %v1821, %v1791
      %v1823 = vadd.f32 %v1822, %v1794
      %v1824 = vadd.f32 %v1823, %v1797
      %v1825 = vadd.f32 %v1824, %v1800
      %v1826 = vadd.f32 %v1825, %v1803
      %v1827 = vadd.f32 %v1826, %v1806
      %v1828 = vadd.f32 %v1827, %v1809
      %v1829 = vadd.f32 %v1828, %v1812
      %v1830 = vadd.f32 %v1829, %v1815
      %v1831 = vmul.f32 %v1726, %v1726
      %v1832 = vmul.f32 %v1728, %v1728
      %v1833 = vmul.f32 %v1731, %v1731
      %v1834 = vmul.f32 %v1733, %v1733
      %v1835 = vmul.f32 %v1736, %v1736
      %v1836 = vmul.f32 %v1738, %v1738
      %v1837 = vmul.f32 %v1741, %v1741
      %v1838 = vmul.f32 %v1743, %v1743
      %v1839 = vmul.f32 %v1746, %v1746
      %v1840 = vmul.f32 %v1748, %v1748
      %v1841 = vmul.f32 %v1751, %v1751
      %v1842 = vmul.f32 %v1753, %v1753
      %v1843 = vmul.f32 %v1756, %v1756
      %v1844 = vmul.f32 %v1758, %v1758
      %v1845 = vmul.f32 %v1761, %v1761
      %v1846 = vmul.f32 %v1763, %v1763
      %v1847 = vsel %vm1767, %v1831, 0.0
      %1848 = vadd.xlane.f32.xlu0 %v1847
      %v1849 = vpop.xlane.xlu0 %1848
      %v1850 = vsel %vm1767, %v1832, 0.0
      %1851 = vadd.xlane.f32.xlu0 %v1850
      %v1852 = vpop.xlane.xlu0 %1851
      %v1853 = vsel %vm1767, %v1833, 0.0
      %1854 = vadd.xlane.f32.xlu0 %v1853
      %v1855 = vpop.xlane.xlu0 %1854
      %v1856 = vsel %vm1767, %v1834, 0.0
      %1857 = vadd.xlane.f32.xlu0 %v1856
      %v1858 = vpop.xlane.xlu0 %1857
      %v1859 = vsel %vm1767, %v1835, 0.0
      %1860 = vadd.xlane.f32.xlu0 %v1859
      %v1861 = vpop.xlane.xlu0 %1860
      %v1862 = vsel %vm1767, %v1836, 0.0
      %1863 = vadd.xlane.f32.xlu0 %v1862
      %v1864 = vpop.xlane.xlu0 %1863
      %v1865 = vsel %vm1767, %v1837, 0.0
      %1866 = vadd.xlane.f32.xlu0 %v1865
      %v1867 = vpop.xlane.xlu0 %1866
      %v1868 = vsel %vm1767, %v1838, 0.0
      %1869 = vadd.xlane.f32.xlu0 %v1868
      %v1870 = vpop.xlane.xlu0 %1869
      %v1871 = vsel %vm1767, %v1839, 0.0
      %1872 = vadd.xlane.f32.xlu0 %v1871
      %v1873 = vpop.xlane.xlu0 %1872
      %v1874 = vsel %vm1767, %v1840, 0.0
      %1875 = vadd.xlane.f32.xlu0 %v1874
      %v1876 = vpop.xlane.xlu0 %1875
      %v1877 = vsel %vm1767, %v1841, 0.0
      %1878 = vadd.xlane.f32.xlu0 %v1877
      %v1879 = vpop.xlane.xlu0 %1878
      %v1880 = vsel %vm1767, %v1842, 0.0
      %1881 = vadd.xlane.f32.xlu0 %v1880
      %v1882 = vpop.xlane.xlu0 %1881
      %v1883 = vsel %vm1767, %v1843, 0.0
      %1884 = vadd.xlane.f32.xlu0 %v1883
      %v1885 = vpop.xlane.xlu0 %1884
      %v1886 = vsel %vm1767, %v1844, 0.0
      %1887 = vadd.xlane.f32.xlu0 %v1886
      %v1888 = vpop.xlane.xlu0 %1887
      %v1889 = vsel %vm1767, %v1845, 0.0
      %1890 = vadd.xlane.f32.xlu0 %v1889
      %v1891 = vpop.xlane.xlu0 %1890
      %v1892 = vsel %vm1767, %v1846, 0.0
      %1893 = vadd.xlane.f32.xlu0 %v1892
      %v1894 = vpop.xlane.xlu0 %1893
      %v1895 = vadd.f32 %v1849, %v1852
      %v1896 = vadd.f32 %v1895, %v1855
      %v1897 = vadd.f32 %v1896, %v1858
      %v1898 = vadd.f32 %v1897, %v1861
      %v1899 = vadd.f32 %v1898, %v1864
      %v1900 = vadd.f32 %v1899, %v1867
      %v1901 = vadd.f32 %v1900, %v1870
      %v1902 = vadd.f32 %v1901, %v1873
      %v1903 = vadd.f32 %v1902, %v1876
      %v1904 = vadd.f32 %v1903, %v1879
      %v1905 = vadd.f32 %v1904, %v1882
      %v1906 = vadd.f32 %v1905, %v1885
      %v1907 = vadd.f32 %v1906, %v1888
      %v1908 = vadd.f32 %v1907, %v1891
      %v1909 = vadd.f32 %v1908, %v1894
      %v1910 = vmul.f32 %v1830, 0.015625
      %v1911 = vmul.f32 %v1909, 0.015625
      %v1912 = vmul.f32 %v1910, %v1910
      %v1913 = vsub.f32 %v1911, %v1912
      %v1914 = vmax.f32 %v1913, 0.0
      %v1915 = vsub.f32 %v1726, %v1910
      %v1916 = vsub.f32 %v1728, %v1910
      %v1917 = vsub.f32 %v1731, %v1910
      %v1918 = vsub.f32 %v1733, %v1910
      %v1919 = vsub.f32 %v1736, %v1910
      %v1920 = vsub.f32 %v1738, %v1910
      %v1921 = vsub.f32 %v1741, %v1910
      %v1922 = vsub.f32 %v1743, %v1910
      %v1923 = vsub.f32 %v1746, %v1910
      %v1924 = vsub.f32 %v1748, %v1910
      %v1925 = vsub.f32 %v1751, %v1910
      %v1926 = vsub.f32 %v1753, %v1910
      %v1927 = vsub.f32 %v1756, %v1910
      %v1928 = vsub.f32 %v1758, %v1910
      %v1929 = vsub.f32 %v1761, %v1910
      %v1930 = vsub.f32 %v1763, %v1910
      %v1931 = vadd.f32 %v1914, 1e-05
      %v1932 = vrsqrt.pop %v1931
      %v1933 = vmul.f32 %v1932, %v1931
      %v1934 = vmul.f32 %v1933, %v1932
      %v1935 = vmul.f32 0.5, %v1934
      %v1936 = vsub.f32 1.5, %v1935
      %v1937 = vmul.f32 %v1932, %v1936
      %vm1938 = vweird.f32 %v1931
      %vm1939 = vweird.f32 %v1932
      %vm1940 = vmor %vm1938, %vm1939
      %v1941 = vsel %vm1940, %v1932, %v1937
      %v1942 = vmul.f32 %v1915, %v1941
      %v1943 = vmul.f32 %v1916, %v1941
      %v1944 = vmul.f32 %v1917, %v1941
      %v1945 = vmul.f32 %v1918, %v1941
      %v1946 = vmul.f32 %v1919, %v1941
      %v1947 = vmul.f32 %v1920, %v1941
      %v1948 = vmul.f32 %v1921, %v1941
      %v1949 = vmul.f32 %v1922, %v1941
      %v1950 = vmul.f32 %v1923, %v1941
      %v1951 = vmul.f32 %v1924, %v1941
      %v1952 = vmul.f32 %v1925, %v1941
      %v1953 = vmul.f32 %v1926, %v1941
      %v1954 = vmul.f32 %v1927, %v1941
      %v1955 = vmul.f32 %v1928, %v1941
      %v1956 = vmul.f32 %v1929, %v1941
      %v1957 = vmul.f32 %v1930, %v1941
      %1959 = vset.pattern.permute.xlu0 0
      %1960 = vperm.xlu0 %1959, %v1765
      %v1961 = vpop.permute.xlu0 %1960
      %v1963 = vmul.f32 %v1942, %v1961
      %v1964 = vmul.f32 %v1943, %v1961
      %v1965 = vmul.f32 %v1944, %v1961
      %v1966 = vmul.f32 %v1945, %v1961
      %v1967 = vmul.f32 %v1946, %v1961
      %v1968 = vmul.f32 %v1947, %v1961
      %v1969 = vmul.f32 %v1948, %v1961
      %v1970 = vmul.f32 %v1949, %v1961
      %v1971 = vmul.f32 %v1950, %v1961
      %v1972 = vmul.f32 %v1951, %v1961
      %v1973 = vmul.f32 %v1952, %v1961
      %v1974 = vmul.f32 %v1953, %v1961
      %v1975 = vmul.f32 %v1954, %v1961
      %v1976 = vmul.f32 %v1955, %v1961
      %v1977 = vmul.f32 %v1956, %v1961
      %v1978 = vmul.f32 %v1957, %v1961
      %1980 = vset.pattern.permute.xlu0 0
      %1981 = vperm.xlu0 %1980, %v1766
      %v1982 = vpop.permute.xlu0 %1981
      %v1984 = vadd.f32 %v1963, %v1982
      %v1985 = vadd.f32 %v1964, %v1982
      %v1986 = vadd.f32 %v1965, %v1982
      %v1987 = vadd.f32 %v1966, %v1982
      %v1988 = vadd.f32 %v1967, %v1982
      %v1989 = vadd.f32 %v1968, %v1982
      %v1990 = vadd.f32 %v1969, %v1982
      %v1991 = vadd.f32 %v1970, %v1982
      %v1992 = vadd.f32 %v1971, %v1982
      %v1993 = vadd.f32 %v1972, %v1982
      %v1994 = vadd.f32 %v1973, %v1982
      %v1995 = vadd.f32 %v1974, %v1982
      %v1996 = vadd.f32 %v1975, %v1982
      %v1997 = vadd.f32 %v1976, %v1982
      %v1998 = vadd.f32 %v1977, %v1982
      %v1999 = vadd.f32 %v1978, %v1982
      %v2000 = vmul.f32 %v1984, %v1984
      %v2001 = vmul.f32 %v1985, %v1985
      %v2002 = vmul.f32 %v1986, %v1986
      %v2003 = vmul.f32 %v1987, %v1987
      %v2004 = vmul.f32 %v1988, %v1988
      %v2005 = vmul.f32 %v1989, %v1989
      %v2006 = vmul.f32 %v1990, %v1990
      %v2007 = vmul.f32 %v1991, %v1991
      %v2008 = vmul.f32 %v1992, %v1992
      %v2009 = vmul.f32 %v1993, %v1993
      %v2010 = vmul.f32 %v1994, %v1994
      %v2011 = vmul.f32 %v1995, %v1995
      %v2012 = vmul.f32 %v1996, %v1996
      %v2013 = vmul.f32 %v1997, %v1997
      %v2014 = vmul.f32 %v1998, %v1998
      %v2015 = vmul.f32 %v1999, %v1999
      %v2016 = vmul.f32 %v1984, %v2000
      %v2017 = vmul.f32 %v1985, %v2001
      %v2018 = vmul.f32 %v1986, %v2002
      %v2019 = vmul.f32 %v1987, %v2003
      %v2020 = vmul.f32 %v1988, %v2004
      %v2021 = vmul.f32 %v1989, %v2005
      %v2022 = vmul.f32 %v1990, %v2006
      %v2023 = vmul.f32 %v1991, %v2007
      %v2024 = vmul.f32 %v1992, %v2008
      %v2025 = vmul.f32 %v1993, %v2009
      %v2026 = vmul.f32 %v1994, %v2010
      %v2027 = vmul.f32 %v1995, %v2011
      %v2028 = vmul.f32 %v1996, %v2012
      %v2029 = vmul.f32 %v1997, %v2013
      %v2030 = vmul.f32 %v1998, %v2014
      %v2031 = vmul.f32 %v1999, %v2015
      %v2032 = vmul.f32 %v2016, 0.044715
      %v2033 = vmul.f32 %v2017, 0.044715
      %v2034 = vmul.f32 %v2018, 0.044715
      %v2035 = vmul.f32 %v2019, 0.044715
      %v2036 = vmul.f32 %v2020, 0.044715
      %v2037 = vmul.f32 %v2021, 0.044715
      %v2038 = vmul.f32 %v2022, 0.044715
      %v2039 = vmul.f32 %v2023, 0.044715
      %v2040 = vmul.f32 %v2024, 0.044715
      %v2041 = vmul.f32 %v2025, 0.044715
      %v2042 = vmul.f32 %v2026, 0.044715
      %v2043 = vmul.f32 %v2027, 0.044715
      %v2044 = vmul.f32 %v2028, 0.044715
      %v2045 = vmul.f32 %v2029, 0.044715
      %v2046 = vmul.f32 %v2030, 0.044715
      %v2047 = vmul.f32 %v2031, 0.044715
      %v2048 = vadd.f32 %v1984, %v2032
      %v2049 = vadd.f32 %v1985, %v2033
      %v2050 = vadd.f32 %v1986, %v2034
      %v2051 = vadd.f32 %v1987, %v2035
      %v2052 = vadd.f32 %v1988, %v2036
      %v2053 = vadd.f32 %v1989, %v2037
      %v2054 = vadd.f32 %v1990, %v2038
      %v2055 = vadd.f32 %v1991, %v2039
      %v2056 = vadd.f32 %v1992, %v2040
      %v2057 = vadd.f32 %v1993, %v2041
      %v2058 = vadd.f32 %v1994, %v2042
      %v2059 = vadd.f32 %v1995, %v2043
      %v2060 = vadd.f32 %v1996, %v2044
      %v2061 = vadd.f32 %v1997, %v2045
      %v2062 = vadd.f32 %v1998, %v2046
      %v2063 = vadd.f32 %v1999, %v2047
      %v2064 = vmul.f32 %v2048, 0.7978846
      %v2065 = vmul.f32 %v2049, 0.7978846
      %v2066 = vmul.f32 %v2050, 0.7978846
      %v2067 = vmul.f32 %v2051, 0.7978846
      %v2068 = vmul.f32 %v2052, 0.7978846
      %v2069 = vmul.f32 %v2053, 0.7978846
      %v2070 = vmul.f32 %v2054, 0.7978846
      %v2071 = vmul.f32 %v2055, 0.7978846
      %v2072 = vmul.f32 %v2056, 0.7978846
      %v2073 = vmul.f32 %v2057, 0.7978846
      %v2074 = vmul.f32 %v2058, 0.7978846
      %v2075 = vmul.f32 %v2059, 0.7978846
      %v2076 = vmul.f32 %v2060, 0.7978846
      %v2077 = vmul.f32 %v2061, 0.7978846
      %v2078 = vmul.f32 %v2062, 0.7978846
      %v2079 = vmul.f32 %v2063, 0.7978846
      %v2080 = vtanh.pop %v2064
      %v2081 = vtanh.pop %v2065
      %v2082 = vtanh.pop %v2066
      %v2083 = vtanh.pop %v2067
      %v2084 = vtanh.pop %v2068
      %v2085 = vtanh.pop %v2069
      %v2086 = vtanh.pop %v2070
      %v2087 = vtanh.pop %v2071
      %v2088 = vtanh.pop %v2072
      %v2089 = vtanh.pop %v2073
      %v2090 = vtanh.pop %v2074
      %v2091 = vtanh.pop %v2075
      %v2092 = vtanh.pop %v2076
      %v2093 = vtanh.pop %v2077
      %v2094 = vtanh.pop %v2078
      %v2095 = vtanh.pop %v2079
      %v2096 = vadd.f32 %v2080, 1.0
      %v2097 = vadd.f32 %v2081, 1.0
      %v2098 = vadd.f32 %v2082, 1.0
      %v2099 = vadd.f32 %v2083, 1.0
      %v2100 = vadd.f32 %v2084, 1.0
      %v2101 = vadd.f32 %v2085, 1.0
      %v2102 = vadd.f32 %v2086, 1.0
      %v2103 = vadd.f32 %v2087, 1.0
      %v2104 = vadd.f32 %v2088, 1.0
      %v2105 = vadd.f32 %v2089, 1.0
      %v2106 = vadd.f32 %v2090, 1.0
      %v2107 = vadd.f32 %v2091, 1.0
      %v2108 = vadd.f32 %v2092, 1.0
      %v2109 = vadd.f32 %v2093, 1.0
      %v2110 = vadd.f32 %v2094, 1.0
      %v2111 = vadd.f32 %v2095, 1.0
      %v2112 = vmul.f32 %v2096, 0.5
      %v2113 = vmul.f32 %v2097, 0.5
      %v2114 = vmul.f32 %v2098, 0.5
      %v2115 = vmul.f32 %v2099, 0.5
      %v2116 = vmul.f32 %v2100, 0.5
      %v2117 = vmul.f32 %v2101, 0.5
      %v2118 = vmul.f32 %v2102, 0.5
      %v2119 = vmul.f32 %v2103, 0.5
      %v2120 = vmul.f32 %v2104, 0.5
      %v2121 = vmul.f32 %v2105, 0.5
      %v2122 = vmul.f32 %v2106, 0.5
      %v2123 = vmul.f32 %v2107, 0.5
      %v2124 = vmul.f32 %v2108, 0.5
      %v2125 = vmul.f32 %v2109, 0.5
      %v2126 = vmul.f32 %v2110, 0.5
      %v2127 = vmul.f32 %v2111, 0.5
      %v2128 = vmul.f32 %v1984, %v2112
      %v2129 = vmul.f32 %v1985, %v2113
      %v2130 = vmul.f32 %v1986, %v2114
      %v2131 = vmul.f32 %v1987, %v2115
      %v2132 = vmul.f32 %v1988, %v2116
      %v2133 = vmul.f32 %v1989, %v2117
      %v2134 = vmul.f32 %v1990, %v2118
      %v2135 = vmul.f32 %v1991, %v2119
      %v2136 = vmul.f32 %v1992, %v2120
      %v2137 = vmul.f32 %v1993, %v2121
      %v2138 = vmul.f32 %v1994, %v2122
      %v2139 = vmul.f32 %v1995, %v2123
      %v2140 = vmul.f32 %v1996, %v2124
      %v2141 = vmul.f32 %v1997, %v2125
      %v2142 = vmul.f32 %v1998, %v2126
      %v2143 = vmul.f32 %v1999, %v2127
      %v2144 = vpack.c.bf16 %v2129, %v2128
      %v2145 = vpack.c.bf16 %v2131, %v2130
      %v2146 = vpack.c.bf16 %v2133, %v2132
      %v2147 = vpack.c.bf16 %v2135, %v2134
      %v2148 = vpack.c.bf16 %v2137, %v2136
      %v2149 = vpack.c.bf16 %v2139, %v2138
      %v2150 = vpack.c.bf16 %v2141, %v2140
      %v2151 = vpack.c.bf16 %v2143, %v2142
      %v2152 = vld [vmem:[%s9] sm:$0x3]
      %v2154 = vsel %vm1767, %v2144, 0
      %v2157 = vsel %vm1767, %v2145, 0
      %v2160 = vsel %vm1767, %v2146, 0
      %v2163 = vsel %vm1767, %v2147, 0
      %v2166 = vsel %vm1767, %v2148, 0
      %v2169 = vsel %vm1767, %v2149, 0
      %v2172 = vsel %vm1767, %v2150, 0
      %v2175 = vsel %vm1767, %v2151, 0
      %vm2177 = vcmask 1041408
      %v2179 = vsel %vm2177, %v2152, 0
      %2181 = vmatpush.bf16.msra.mxu0 0
      %2182 = vmatpush.bf16.msra.mxu0 0
      %2183 = vmatpush.bf16.msra.mxu0 0
      %2184 = vmatpush.bf16.msra.mxu0 0
      %2185 = vmatpush.bf16.msra.mxu0 0
      %2186 = vmatpush.bf16.msra.mxu0 0
      %2187 = vmatpush.bf16.msra.mxu0 0
      %2188 = vmatpush.bf16.msra.mxu0 %v2179
      %2189 = vmatmul.bf16.gmra.mxu0 %v2154
      %v2190 = vpop.f32.mrf.mxu0
      %v2191 = vadd.f32 0.0, %v2190
      %v2192 = vpop.f32.mrf.mxu0
      %v2193 = vadd.f32 0.0, %v2192
      %2194 = vmatmul.bf16.gmra.mxu0 %v2157
      %v2195 = vpop.f32.mrf.mxu0
      %v2196 = vadd.f32 0.0, %v2195
      %v2197 = vpop.f32.mrf.mxu0
      %v2198 = vadd.f32 0.0, %v2197
      %2199 = vmatmul.bf16.gmra.mxu0 %v2160
      %v2200 = vpop.f32.mrf.mxu0
      %v2201 = vadd.f32 0.0, %v2200
      %v2202 = vpop.f32.mrf.mxu0
      %v2203 = vadd.f32 0.0, %v2202
      %2204 = vmatmul.bf16.gmra.mxu0 %v2163
      %v2205 = vpop.f32.mrf.mxu0
      %v2206 = vadd.f32 0.0, %v2205
      %v2207 = vpop.f32.mrf.mxu0
      %v2208 = vadd.f32 0.0, %v2207
      %2209 = vmatmul.bf16.gmra.mxu0 %v2166
      %v2210 = vpop.f32.mrf.mxu0
      %v2211 = vadd.f32 0.0, %v2210
      %v2212 = vpop.f32.mrf.mxu0
      %v2213 = vadd.f32 0.0, %v2212
      %2214 = vmatmul.bf16.gmra.mxu0 %v2169
      %v2215 = vpop.f32.mrf.mxu0
      %v2216 = vadd.f32 0.0, %v2215
      %v2217 = vpop.f32.mrf.mxu0
      %v2218 = vadd.f32 0.0, %v2217
      %2219 = vmatmul.bf16.gmra.mxu0 %v2172
      %v2220 = vpop.f32.mrf.mxu0
      %v2221 = vadd.f32 0.0, %v2220
      %v2222 = vpop.f32.mrf.mxu0
      %v2223 = vadd.f32 0.0, %v2222
      %2224 = vmatmul.bf16.gmra.mxu0 %v2175
      %v2225 = vpop.f32.mrf.mxu0
      %v2226 = vadd.f32 0.0, %v2225
      %v2227 = vpop.f32.mrf.mxu0
      %v2228 = vadd.f32 0.0, %v2227
      %2229 = vdwg.mxu0
      %v2230 = vadd.f32 %v1282, %v2191
      %v2231 = vadd.f32 %v1283, %v2193
      %v2232 = vadd.f32 %v1284, %v2196
      %v2233 = vadd.f32 %v1285, %v2198
      %v2234 = vadd.f32 %v1286, %v2201
      %v2235 = vadd.f32 %v1287, %v2203
      %v2236 = vadd.f32 %v1288, %v2206
      %v2237 = vadd.f32 %v1289, %v2208
      %v2238 = vadd.f32 %v1290, %v2211
      %v2239 = vadd.f32 %v1291, %v2213
      %v2240 = vadd.f32 %v1292, %v2216
      %v2241 = vadd.f32 %v1293, %v2218
      %v2242 = vadd.f32 %v1294, %v2221
      %v2243 = vadd.f32 %v1295, %v2223
      %v2244 = vadd.f32 %v1296, %v2226
      %v2245 = vadd.f32 %v1297, %v2228
      %v2246 = vld [vmem:[%s10] sm:$0xff]
      %v2247 = vld [vmem:[%s11] sm:$0xff]
      %v2248 = vsel %vm460, %v2230, 0.0
      %2249 = vadd.xlane.f32.xlu0 %v2248
      %v2250 = vpop.xlane.xlu0 %2249
      %v2251 = vsel %vm460, %v2231, 0.0
      %2252 = vadd.xlane.f32.xlu0 %v2251
      %v2253 = vpop.xlane.xlu0 %2252
      %v2254 = vsel %vm460, %v2232, 0.0
      %2255 = vadd.xlane.f32.xlu0 %v2254
      %v2256 = vpop.xlane.xlu0 %2255
      %v2257 = vsel %vm460, %v2233, 0.0
      %2258 = vadd.xlane.f32.xlu0 %v2257
      %v2259 = vpop.xlane.xlu0 %2258
      %v2260 = vsel %vm460, %v2234, 0.0
      %2261 = vadd.xlane.f32.xlu0 %v2260
      %v2262 = vpop.xlane.xlu0 %2261
      %v2263 = vsel %vm460, %v2235, 0.0
      %2264 = vadd.xlane.f32.xlu0 %v2263
      %v2265 = vpop.xlane.xlu0 %2264
      %v2266 = vsel %vm460, %v2236, 0.0
      %2267 = vadd.xlane.f32.xlu0 %v2266
      %v2268 = vpop.xlane.xlu0 %2267
      %v2269 = vsel %vm460, %v2237, 0.0
      %2270 = vadd.xlane.f32.xlu0 %v2269
      %v2271 = vpop.xlane.xlu0 %2270
      %v2272 = vsel %vm460, %v2238, 0.0
      %2273 = vadd.xlane.f32.xlu0 %v2272
      %v2274 = vpop.xlane.xlu0 %2273
      %v2275 = vsel %vm460, %v2239, 0.0
      %2276 = vadd.xlane.f32.xlu0 %v2275
      %v2277 = vpop.xlane.xlu0 %2276
      %v2278 = vsel %vm460, %v2240, 0.0
      %2279 = vadd.xlane.f32.xlu0 %v2278
      %v2280 = vpop.xlane.xlu0 %2279
      %v2281 = vsel %vm460, %v2241, 0.0
      %2282 = vadd.xlane.f32.xlu0 %v2281
      %v2283 = vpop.xlane.xlu0 %2282
      %v2284 = vsel %vm460, %v2242, 0.0
      %2285 = vadd.xlane.f32.xlu0 %v2284
      %v2286 = vpop.xlane.xlu0 %2285
      %v2287 = vsel %vm460, %v2243, 0.0
      %2288 = vadd.xlane.f32.xlu0 %v2287
      %v2289 = vpop.xlane.xlu0 %2288
      %v2290 = vsel %vm460, %v2244, 0.0
      %2291 = vadd.xlane.f32.xlu0 %v2290
      %v2292 = vpop.xlane.xlu0 %2291
      %v2293 = vsel %vm460, %v2245, 0.0
      %2294 = vadd.xlane.f32.xlu0 %v2293
      %v2295 = vpop.xlane.xlu0 %2294
      %v2296 = vadd.f32 %v2250, %v2253
      %v2297 = vadd.f32 %v2296, %v2256
      %v2298 = vadd.f32 %v2297, %v2259
      %v2299 = vadd.f32 %v2298, %v2262
      %v2300 = vadd.f32 %v2299, %v2265
      %v2301 = vadd.f32 %v2300, %v2268
      %v2302 = vadd.f32 %v2301, %v2271
      %v2303 = vadd.f32 %v2302, %v2274
      %v2304 = vadd.f32 %v2303, %v2277
      %v2305 = vadd.f32 %v2304, %v2280
      %v2306 = vadd.f32 %v2305, %v2283
      %v2307 = vadd.f32 %v2306, %v2286
      %v2308 = vadd.f32 %v2307, %v2289
      %v2309 = vadd.f32 %v2308, %v2292
      %v2310 = vadd.f32 %v2309, %v2295
      %v2311 = vmul.f32 %v2230, %v2230
      %v2312 = vmul.f32 %v2231, %v2231
      %v2313 = vmul.f32 %v2232, %v2232
      %v2314 = vmul.f32 %v2233, %v2233
      %v2315 = vmul.f32 %v2234, %v2234
      %v2316 = vmul.f32 %v2235, %v2235
      %v2317 = vmul.f32 %v2236, %v2236
      %v2318 = vmul.f32 %v2237, %v2237
      %v2319 = vmul.f32 %v2238, %v2238
      %v2320 = vmul.f32 %v2239, %v2239
      %v2321 = vmul.f32 %v2240, %v2240
      %v2322 = vmul.f32 %v2241, %v2241
      %v2323 = vmul.f32 %v2242, %v2242
      %v2324 = vmul.f32 %v2243, %v2243
      %v2325 = vmul.f32 %v2244, %v2244
      %v2326 = vmul.f32 %v2245, %v2245
      %v2327 = vsel %vm460, %v2311, 0.0
      %2328 = vadd.xlane.f32.xlu0 %v2327
      %v2329 = vpop.xlane.xlu0 %2328
      %v2330 = vsel %vm460, %v2312, 0.0
      %2331 = vadd.xlane.f32.xlu0 %v2330
      %v2332 = vpop.xlane.xlu0 %2331
      %v2333 = vsel %vm460, %v2313, 0.0
      %2334 = vadd.xlane.f32.xlu0 %v2333
      %v2335 = vpop.xlane.xlu0 %2334
      %v2336 = vsel %vm460, %v2314, 0.0
      %2337 = vadd.xlane.f32.xlu0 %v2336
      %v2338 = vpop.xlane.xlu0 %2337
      %v2339 = vsel %vm460, %v2315, 0.0
      %2340 = vadd.xlane.f32.xlu0 %v2339
      %v2341 = vpop.xlane.xlu0 %2340
      %v2342 = vsel %vm460, %v2316, 0.0
      %2343 = vadd.xlane.f32.xlu0 %v2342
      %v2344 = vpop.xlane.xlu0 %2343
      %v2345 = vsel %vm460, %v2317, 0.0
      %2346 = vadd.xlane.f32.xlu0 %v2345
      %v2347 = vpop.xlane.xlu0 %2346
      %v2348 = vsel %vm460, %v2318, 0.0
      %2349 = vadd.xlane.f32.xlu0 %v2348
      %v2350 = vpop.xlane.xlu0 %2349
      %v2351 = vsel %vm460, %v2319, 0.0
      %2352 = vadd.xlane.f32.xlu0 %v2351
      %v2353 = vpop.xlane.xlu0 %2352
      %v2354 = vsel %vm460, %v2320, 0.0
      %2355 = vadd.xlane.f32.xlu0 %v2354
      %v2356 = vpop.xlane.xlu0 %2355
      %v2357 = vsel %vm460, %v2321, 0.0
      %2358 = vadd.xlane.f32.xlu0 %v2357
      %v2359 = vpop.xlane.xlu0 %2358
      %v2360 = vsel %vm460, %v2322, 0.0
      %2361 = vadd.xlane.f32.xlu0 %v2360
      %v2362 = vpop.xlane.xlu0 %2361
      %v2363 = vsel %vm460, %v2323, 0.0
      %2364 = vadd.xlane.f32.xlu0 %v2363
      %v2365 = vpop.xlane.xlu0 %2364
      %v2366 = vsel %vm460, %v2324, 0.0
      %2367 = vadd.xlane.f32.xlu0 %v2366
      %v2368 = vpop.xlane.xlu0 %2367
      %v2369 = vsel %vm460, %v2325, 0.0
      %2370 = vadd.xlane.f32.xlu0 %v2369
      %v2371 = vpop.xlane.xlu0 %2370
      %v2372 = vsel %vm460, %v2326, 0.0
      %2373 = vadd.xlane.f32.xlu0 %v2372
      %v2374 = vpop.xlane.xlu0 %2373
      %v2375 = vadd.f32 %v2329, %v2332
      %v2376 = vadd.f32 %v2375, %v2335
      %v2377 = vadd.f32 %v2376, %v2338
      %v2378 = vadd.f32 %v2377, %v2341
      %v2379 = vadd.f32 %v2378, %v2344
      %v2380 = vadd.f32 %v2379, %v2347
      %v2381 = vadd.f32 %v2380, %v2350
      %v2382 = vadd.f32 %v2381, %v2353
      %v2383 = vadd.f32 %v2382, %v2356
      %v2384 = vadd.f32 %v2383, %v2359
      %v2385 = vadd.f32 %v2384, %v2362
      %v2386 = vadd.f32 %v2385, %v2365
      %v2387 = vadd.f32 %v2386, %v2368
      %v2388 = vadd.f32 %v2387, %v2371
      %v2389 = vadd.f32 %v2388, %v2374
      %v2390 = vmul.f32 %v2310, 0.00390625
      %v2391 = vmul.f32 %v2389, 0.00390625
      %v2392 = vmul.f32 %v2390, %v2390
      %v2393 = vsub.f32 %v2391, %v2392
      %v2394 = vmax.f32 %v2393, 0.0
      %v2395 = vsub.f32 %v2230, %v2390
      %v2396 = vsub.f32 %v2231, %v2390
      %v2397 = vsub.f32 %v2232, %v2390
      %v2398 = vsub.f32 %v2233, %v2390
      %v2399 = vsub.f32 %v2234, %v2390
      %v2400 = vsub.f32 %v2235, %v2390
      %v2401 = vsub.f32 %v2236, %v2390
      %v2402 = vsub.f32 %v2237, %v2390
      %v2403 = vsub.f32 %v2238, %v2390
      %v2404 = vsub.f32 %v2239, %v2390
      %v2405 = vsub.f32 %v2240, %v2390
      %v2406 = vsub.f32 %v2241, %v2390
      %v2407 = vsub.f32 %v2242, %v2390
      %v2408 = vsub.f32 %v2243, %v2390
      %v2409 = vsub.f32 %v2244, %v2390
      %v2410 = vsub.f32 %v2245, %v2390
      %v2411 = vadd.f32 %v2394, 1e-05
      %v2412 = vrsqrt.pop %v2411
      %v2413 = vmul.f32 %v2412, %v2411
      %v2414 = vmul.f32 %v2413, %v2412
      %v2415 = vmul.f32 0.5, %v2414
      %v2416 = vsub.f32 1.5, %v2415
      %v2417 = vmul.f32 %v2412, %v2416
      %vm2418 = vweird.f32 %v2411
      %vm2419 = vweird.f32 %v2412
      %vm2420 = vmor %vm2418, %vm2419
      %v2421 = vsel %vm2420, %v2412, %v2417
      %v2422 = vmul.f32 %v2395, %v2421
      %v2423 = vmul.f32 %v2396, %v2421
      %v2424 = vmul.f32 %v2397, %v2421
      %v2425 = vmul.f32 %v2398, %v2421
      %v2426 = vmul.f32 %v2399, %v2421
      %v2427 = vmul.f32 %v2400, %v2421
      %v2428 = vmul.f32 %v2401, %v2421
      %v2429 = vmul.f32 %v2402, %v2421
      %v2430 = vmul.f32 %v2403, %v2421
      %v2431 = vmul.f32 %v2404, %v2421
      %v2432 = vmul.f32 %v2405, %v2421
      %v2433 = vmul.f32 %v2406, %v2421
      %v2434 = vmul.f32 %v2407, %v2421
      %v2435 = vmul.f32 %v2408, %v2421
      %v2436 = vmul.f32 %v2409, %v2421
      %v2437 = vmul.f32 %v2410, %v2421
      %2439 = vset.pattern.permute.xlu0 0
      %2440 = vperm.xlu0 %2439, %v2246
      %v2441 = vpop.permute.xlu0 %2440
      %v2443 = vmul.f32 %v2422, %v2441
      %v2444 = vmul.f32 %v2423, %v2441
      %v2445 = vmul.f32 %v2424, %v2441
      %v2446 = vmul.f32 %v2425, %v2441
      %v2447 = vmul.f32 %v2426, %v2441
      %v2448 = vmul.f32 %v2427, %v2441
      %v2449 = vmul.f32 %v2428, %v2441
      %v2450 = vmul.f32 %v2429, %v2441
      %v2451 = vmul.f32 %v2430, %v2441
      %v2452 = vmul.f32 %v2431, %v2441
      %v2453 = vmul.f32 %v2432, %v2441
      %v2454 = vmul.f32 %v2433, %v2441
      %v2455 = vmul.f32 %v2434, %v2441
      %v2456 = vmul.f32 %v2435, %v2441
      %v2457 = vmul.f32 %v2436, %v2441
      %v2458 = vmul.f32 %v2437, %v2441
      %2460 = vset.pattern.permute.xlu0 0
      %2461 = vperm.xlu0 %2460, %v2247
      %v2462 = vpop.permute.xlu0 %2461
      %v2464 = vadd.f32 %v2443, %v2462
      %v2465 = vadd.f32 %v2444, %v2462
      %v2466 = vadd.f32 %v2445, %v2462
      %v2467 = vadd.f32 %v2446, %v2462
      %v2468 = vadd.f32 %v2447, %v2462
      %v2469 = vadd.f32 %v2448, %v2462
      %v2470 = vadd.f32 %v2449, %v2462
      %v2471 = vadd.f32 %v2450, %v2462
      %v2472 = vadd.f32 %v2451, %v2462
      %v2473 = vadd.f32 %v2452, %v2462
      %v2474 = vadd.f32 %v2453, %v2462
      %v2475 = vadd.f32 %v2454, %v2462
      %v2476 = vadd.f32 %v2455, %v2462
      %v2477 = vadd.f32 %v2456, %v2462
      %v2478 = vadd.f32 %v2457, %v2462
      %v2479 = vadd.f32 %v2458, %v2462
      %v2480 = vmul.f32 %v2464, %v2464
      %v2481 = vmul.f32 %v2465, %v2465
      %v2482 = vmul.f32 %v2466, %v2466
      %v2483 = vmul.f32 %v2467, %v2467
      %v2484 = vmul.f32 %v2468, %v2468
      %v2485 = vmul.f32 %v2469, %v2469
      %v2486 = vmul.f32 %v2470, %v2470
      %v2487 = vmul.f32 %v2471, %v2471
      %v2488 = vmul.f32 %v2472, %v2472
      %v2489 = vmul.f32 %v2473, %v2473
      %v2490 = vmul.f32 %v2474, %v2474
      %v2491 = vmul.f32 %v2475, %v2475
      %v2492 = vmul.f32 %v2476, %v2476
      %v2493 = vmul.f32 %v2477, %v2477
      %v2494 = vmul.f32 %v2478, %v2478
      %v2495 = vmul.f32 %v2479, %v2479
      %v2496 = vmul.f32 %v2464, %v2480
      %v2497 = vmul.f32 %v2465, %v2481
      %v2498 = vmul.f32 %v2466, %v2482
      %v2499 = vmul.f32 %v2467, %v2483
      %v2500 = vmul.f32 %v2468, %v2484
      %v2501 = vmul.f32 %v2469, %v2485
      %v2502 = vmul.f32 %v2470, %v2486
      %v2503 = vmul.f32 %v2471, %v2487
      %v2504 = vmul.f32 %v2472, %v2488
      %v2505 = vmul.f32 %v2473, %v2489
      %v2506 = vmul.f32 %v2474, %v2490
      %v2507 = vmul.f32 %v2475, %v2491
      %v2508 = vmul.f32 %v2476, %v2492
      %v2509 = vmul.f32 %v2477, %v2493
      %v2510 = vmul.f32 %v2478, %v2494
      %v2511 = vmul.f32 %v2479, %v2495
      %v2512 = vmul.f32 %v2496, 0.044715
      %v2513 = vmul.f32 %v2497, 0.044715
      %v2514 = vmul.f32 %v2498, 0.044715
      %v2515 = vmul.f32 %v2499, 0.044715
      %v2516 = vmul.f32 %v2500, 0.044715
      %v2517 = vmul.f32 %v2501, 0.044715
      %v2518 = vmul.f32 %v2502, 0.044715
      %v2519 = vmul.f32 %v2503, 0.044715
      %v2520 = vmul.f32 %v2504, 0.044715
      %v2521 = vmul.f32 %v2505, 0.044715
      %v2522 = vmul.f32 %v2506, 0.044715
      %v2523 = vmul.f32 %v2507, 0.044715
      %v2524 = vmul.f32 %v2508, 0.044715
      %v2525 = vmul.f32 %v2509, 0.044715
      %v2526 = vmul.f32 %v2510, 0.044715
      %v2527 = vmul.f32 %v2511, 0.044715
      %v2528 = vadd.f32 %v2464, %v2512
      %v2529 = vadd.f32 %v2465, %v2513
      %v2530 = vadd.f32 %v2466, %v2514
      %v2531 = vadd.f32 %v2467, %v2515
      %v2532 = vadd.f32 %v2468, %v2516
      %v2533 = vadd.f32 %v2469, %v2517
      %v2534 = vadd.f32 %v2470, %v2518
      %v2535 = vadd.f32 %v2471, %v2519
      %v2536 = vadd.f32 %v2472, %v2520
      %v2537 = vadd.f32 %v2473, %v2521
      %v2538 = vadd.f32 %v2474, %v2522
      %v2539 = vadd.f32 %v2475, %v2523
      %v2540 = vadd.f32 %v2476, %v2524
      %v2541 = vadd.f32 %v2477, %v2525
      %v2542 = vadd.f32 %v2478, %v2526
      %v2543 = vadd.f32 %v2479, %v2527
      %v2544 = vmul.f32 %v2528, 0.7978846
      %v2545 = vmul.f32 %v2529, 0.7978846
      %v2546 = vmul.f32 %v2530, 0.7978846
      %v2547 = vmul.f32 %v2531, 0.7978846
      %v2548 = vmul.f32 %v2532, 0.7978846
      %v2549 = vmul.f32 %v2533, 0.7978846
      %v2550 = vmul.f32 %v2534, 0.7978846
      %v2551 = vmul.f32 %v2535, 0.7978846
      %v2552 = vmul.f32 %v2536, 0.7978846
      %v2553 = vmul.f32 %v2537, 0.7978846
      %v2554 = vmul.f32 %v2538, 0.7978846
      %v2555 = vmul.f32 %v2539, 0.7978846
      %v2556 = vmul.f32 %v2540, 0.7978846
      %v2557 = vmul.f32 %v2541, 0.7978846
      %v2558 = vmul.f32 %v2542, 0.7978846
      %v2559 = vmul.f32 %v2543, 0.7978846
      %v2560 = vtanh.pop %v2544
      %v2561 = vtanh.pop %v2545
      %v2562 = vtanh.pop %v2546
      %v2563 = vtanh.pop %v2547
      %v2564 = vtanh.pop %v2548
      %v2565 = vtanh.pop %v2549
      %v2566 = vtanh.pop %v2550
      %v2567 = vtanh.pop %v2551
      %v2568 = vtanh.pop %v2552
      %v2569 = vtanh.pop %v2553
      %v2570 = vtanh.pop %v2554
      %v2571 = vtanh.pop %v2555
      %v2572 = vtanh.pop %v2556
      %v2573 = vtanh.pop %v2557
      %v2574 = vtanh.pop %v2558
      %v2575 = vtanh.pop %v2559
      %v2576 = vadd.f32 %v2560, 1.0
      %v2577 = vadd.f32 %v2561, 1.0
      %v2578 = vadd.f32 %v2562, 1.0
      %v2579 = vadd.f32 %v2563, 1.0
      %v2580 = vadd.f32 %v2564, 1.0
      %v2581 = vadd.f32 %v2565, 1.0
      %v2582 = vadd.f32 %v2566, 1.0
      %v2583 = vadd.f32 %v2567, 1.0
      %v2584 = vadd.f32 %v2568, 1.0
      %v2585 = vadd.f32 %v2569, 1.0
      %v2586 = vadd.f32 %v2570, 1.0
      %v2587 = vadd.f32 %v2571, 1.0
      %v2588 = vadd.f32 %v2572, 1.0
      %v2589 = vadd.f32 %v2573, 1.0
      %v2590 = vadd.f32 %v2574, 1.0
      %v2591 = vadd.f32 %v2575, 1.0
      %v2592 = vmul.f32 %v2576, 0.5
      %v2593 = vmul.f32 %v2577, 0.5
      %v2594 = vmul.f32 %v2578, 0.5
      %v2595 = vmul.f32 %v2579, 0.5
      %v2596 = vmul.f32 %v2580, 0.5
      %v2597 = vmul.f32 %v2581, 0.5
      %v2598 = vmul.f32 %v2582, 0.5
      %v2599 = vmul.f32 %v2583, 0.5
      %v2600 = vmul.f32 %v2584, 0.5
      %v2601 = vmul.f32 %v2585, 0.5
      %v2602 = vmul.f32 %v2586, 0.5
      %v2603 = vmul.f32 %v2587, 0.5
      %v2604 = vmul.f32 %v2588, 0.5
      %v2605 = vmul.f32 %v2589, 0.5
      %v2606 = vmul.f32 %v2590, 0.5
      %v2607 = vmul.f32 %v2591, 0.5
      %v2608 = vmul.f32 %v2464, %v2592
      %v2609 = vmul.f32 %v2465, %v2593
      %v2610 = vmul.f32 %v2466, %v2594
      %v2611 = vmul.f32 %v2467, %v2595
      %v2612 = vmul.f32 %v2468, %v2596
      %v2613 = vmul.f32 %v2469, %v2597
      %v2614 = vmul.f32 %v2470, %v2598
      %v2615 = vmul.f32 %v2471, %v2599
      %v2616 = vmul.f32 %v2472, %v2600
      %v2617 = vmul.f32 %v2473, %v2601
      %v2618 = vmul.f32 %v2474, %v2602
      %v2619 = vmul.f32 %v2475, %v2603
      %v2620 = vmul.f32 %v2476, %v2604
      %v2621 = vmul.f32 %v2477, %v2605
      %v2622 = vmul.f32 %v2478, %v2606
      %v2623 = vmul.f32 %v2479, %v2607
      %v2624 = vpack.c.bf16 %v2608, %v2608
      %v2625 = vpack.c.bf16 %v2609, %v2609
      %v2626 = vpack.c.bf16 %v2610, %v2610
      %v2627 = vpack.c.bf16 %v2611, %v2611
      %v2628 = vpack.c.bf16 %v2612, %v2612
      %v2629 = vpack.c.bf16 %v2613, %v2613
      %v2630 = vpack.c.bf16 %v2614, %v2614
      %v2631 = vpack.c.bf16 %v2615, %v2615
      %v2632 = vpack.c.bf16 %v2616, %v2616
      %v2633 = vpack.c.bf16 %v2617, %v2617
      %v2634 = vpack.c.bf16 %v2618, %v2618
      %v2635 = vpack.c.bf16 %v2619, %v2619
      %v2636 = vpack.c.bf16 %v2620, %v2620
      %v2637 = vpack.c.bf16 %v2621, %v2621
      %v2638 = vpack.c.bf16 %v2622, %v2622
      %v2639 = vpack.c.bf16 %v2623, %v2623
      %2655 = vrot.lane.b32.xlu0 %v2624, 1
      %v2656 = vpop.permute.xlu0 %2655
      %2657 = vrot.lane.b32.xlu0 %v2625, 1
      %v2658 = vpop.permute.xlu0 %2657
      %2659 = vrot.lane.b32.xlu0 %v2626, 1
      %v2660 = vpop.permute.xlu0 %2659
      %2661 = vrot.lane.b32.xlu0 %v2627, 1
      %v2662 = vpop.permute.xlu0 %2661
      %2663 = vrot.lane.b32.xlu0 %v2628, 1
      %v2664 = vpop.permute.xlu0 %2663
      %2665 = vrot.lane.b32.xlu0 %v2629, 1
      %v2666 = vpop.permute.xlu0 %2665
      %2667 = vrot.lane.b32.xlu0 %v2630, 1
      %v2668 = vpop.permute.xlu0 %2667
      %2669 = vrot.lane.b32.xlu0 %v2631, 1
      %v2670 = vpop.permute.xlu0 %2669
      %2671 = vrot.lane.b32.xlu0 %v2632, 1
      %v2672 = vpop.permute.xlu0 %2671
      %2673 = vrot.lane.b32.xlu0 %v2633, 1
      %v2674 = vpop.permute.xlu0 %2673
      %2675 = vrot.lane.b32.xlu0 %v2634, 1
      %v2676 = vpop.permute.xlu0 %2675
      %2677 = vrot.lane.b32.xlu0 %v2635, 1
      %v2678 = vpop.permute.xlu0 %2677
      %2679 = vrot.lane.b32.xlu0 %v2636, 1
      %v2680 = vpop.permute.xlu0 %2679
      %2681 = vrot.lane.b32.xlu0 %v2637, 1
      %v2682 = vpop.permute.xlu0 %2681
      %2683 = vrot.lane.b32.xlu0 %v2638, 1
      %v2684 = vpop.permute.xlu0 %2683
      %2700 = vst.msk [vmem:[%s913] sm:$0xf] %vm914, %v2656
      %2701 = vst.msk [vmem:[%s913 + $0x28] sm:$0xf] %vm914, %v2658
      %2702 = vst.msk [vmem:[%s913 + $0x50] sm:$0xf] %vm914, %v2660
      %2703 = vst.msk [vmem:[%s913 + $0x78] sm:$0xf] %vm914, %v2662
      %2704 = vst.msk [vmem:[%s913 + $0xa0] sm:$0xf] %vm914, %v2664
      %2705 = vst.msk [vmem:[%s913 + $0xc8] sm:$0xf] %vm914, %v2666
      %2706 = vst.msk [vmem:[%s913 + $0xf0] sm:$0xf] %vm914, %v2668
      %2707 = vst.msk [vmem:[%s913 + $0x118] sm:$0xf] %vm914, %v2670
      %2708 = vst.msk [vmem:[%s913 + $0x140] sm:$0xf] %vm914, %v2672
      %2709 = vst.msk [vmem:[%s913 + $0x168] sm:$0xf] %vm914, %v2674
      %2710 = vst.msk [vmem:[%s913 + $0x190] sm:$0xf] %vm914, %v2676
      %2711 = vst.msk [vmem:[%s913 + $0x1b8] sm:$0xf] %vm914, %v2678
      %2712 = vst.msk [vmem:[%s913 + $0x1e0] sm:$0xf] %vm914, %v2680
      %2713 = vst.msk [vmem:[%s913 + $0x208] sm:$0xf] %vm914, %v2682
      %2714 = vst.msk [vmem:[%s913 + $0x230] sm:$0xf] %vm914, %v2684
      %2715 = vst.msk [vmem:[#allocation2] sm:$0xf] %vm930, 0
      %2716 = vst.msk [vmem:[#allocation2] sm:$0xf] %vm932, 0
      %2717 = vst.msk [vmem:[#allocation2 + $0x28] sm:$0xf] %vm932, 0
      %2718 = vst.msk [vmem:[#allocation2 + $0x50] sm:$0xf] %vm932, 0
      %2719 = vst.msk [vmem:[#allocation2 + $0x78] sm:$0xf] %vm932, 0
      %2720 = vst.msk [vmem:[#allocation2 + $0xa0] sm:$0xf] %vm932, 0
      %2721 = vst.msk [vmem:[#allocation2 + $0xc8] sm:$0xf] %vm932, 0
      %2722 = vst.msk [vmem:[#allocation2 + $0xf0] sm:$0xf] %vm932, 0
      %2723 = vst.msk [vmem:[#allocation2 + $0x118] sm:$0xf] %vm932, 0
      %2724 = vst.msk [vmem:[#allocation2 + $0x140] sm:$0xf] %vm932, 0
      %2725 = vst.msk [vmem:[#allocation2 + $0x168] sm:$0xf] %vm932, 0
      %2726 = vst.msk [vmem:[#allocation2 + $0x190] sm:$0xf] %vm932, 0
      %2727 = vst.msk [vmem:[#allocation2 + $0x1b8] sm:$0xf] %vm932, 0
      %2728 = vst.msk [vmem:[#allocation2 + $0x1e0] sm:$0xf] %vm932, 0
      %2729 = vst.msk [vmem:[#allocation2 + $0x208] sm:$0xf] %vm932, 0
      %2730 = vst.msk [vmem:[#allocation2 + $0x230] sm:$0xf] %vm932, 0
      %2731 = vst.msk [vmem:[#allocation2 + $0x258] sm:$0xf] %vm932, 0
      %2732 = vst.msk [vmem:[%s913 + $0x4] sm:$0xf] %vm930, %v2624
      %2733 = vst.msk [vmem:[%s913 + $0x2c] sm:$0xf] %vm930, %v2625
      %2734 = vst.msk [vmem:[%s913 + $0x54] sm:$0xf] %vm930, %v2626
      %2735 = vst.msk [vmem:[%s913 + $0x7c] sm:$0xf] %vm930, %v2627
      %2736 = vst.msk [vmem:[%s913 + $0xa4] sm:$0xf] %vm930, %v2628
      %2737 = vst.msk [vmem:[%s913 + $0xcc] sm:$0xf] %vm930, %v2629
      %2738 = vst.msk [vmem:[%s913 + $0xf4] sm:$0xf] %vm930, %v2630
      %2739 = vst.msk [vmem:[%s913 + $0x11c] sm:$0xf] %vm930, %v2631
      %2740 = vst.msk [vmem:[%s913 + $0x144] sm:$0xf] %vm930, %v2632
      %2741 = vst.msk [vmem:[%s913 + $0x16c] sm:$0xf] %vm930, %v2633
      %2742 = vst.msk [vmem:[%s913 + $0x194] sm:$0xf] %vm930, %v2634
      %2743 = vst.msk [vmem:[%s913 + $0x1bc] sm:$0xf] %vm930, %v2635
      %2744 = vst.msk [vmem:[%s913 + $0x1e4] sm:$0xf] %vm930, %v2636
      %2745 = vst.msk [vmem:[%s913 + $0x20c] sm:$0xf] %vm930, %v2637
      %2746 = vst.msk [vmem:[%s913 + $0x234] sm:$0xf] %vm930, %v2638
      %2747 = vst.msk [vmem:[#allocation2 + $0x4] sm:$0xf] %vm930, 0
      %2748 = vrot.lane.b32.xlu0 %v2624, 127
      %v2749 = vpop.permute.xlu0 %2748
      %2750 = vrot.lane.b32.xlu0 %v2625, 127
      %v2751 = vpop.permute.xlu0 %2750
      %2752 = vrot.lane.b32.xlu0 %v2626, 127
      %v2753 = vpop.permute.xlu0 %2752
      %2754 = vrot.lane.b32.xlu0 %v2627, 127
      %v2755 = vpop.permute.xlu0 %2754
      %2756 = vrot.lane.b32.xlu0 %v2628, 127
      %v2757 = vpop.permute.xlu0 %2756
      %2758 = vrot.lane.b32.xlu0 %v2629, 127
      %v2759 = vpop.permute.xlu0 %2758
      %2760 = vrot.lane.b32.xlu0 %v2630, 127
      %v2761 = vpop.permute.xlu0 %2760
      %2762 = vrot.lane.b32.xlu0 %v2631, 127
      %v2763 = vpop.permute.xlu0 %2762
      %2764 = vrot.lane.b32.xlu0 %v2632, 127
      %v2765 = vpop.permute.xlu0 %2764
      %2766 = vrot.lane.b32.xlu0 %v2633, 127
      %v2767 = vpop.permute.xlu0 %2766
      %2768 = vrot.lane.b32.xlu0 %v2634, 127
      %v2769 = vpop.permute.xlu0 %2768
      %2770 = vrot.lane.b32.xlu0 %v2635, 127
      %v2771 = vpop.permute.xlu0 %2770
      %2772 = vrot.lane.b32.xlu0 %v2636, 127
      %v2773 = vpop.permute.xlu0 %2772
      %2774 = vrot.lane.b32.xlu0 %v2637, 127
      %v2775 = vpop.permute.xlu0 %2774
      %2776 = vrot.lane.b32.xlu0 %v2638, 127
      %v2777 = vpop.permute.xlu0 %2776
      %2793 = vst.msk [vmem:[%s913 + $0x8] sm:$0xf] %vm1010, %v2749
      %2794 = vst.msk [vmem:[%s913 + $0x30] sm:$0xf] %vm1010, %v2751
      %2795 = vst.msk [vmem:[%s913 + $0x58] sm:$0xf] %vm1010, %v2753
      %2796 = vst.msk [vmem:[%s913 + $0x80] sm:$0xf] %vm1010, %v2755
      %2797 = vst.msk [vmem:[%s913 + $0xa8] sm:$0xf] %vm1010, %v2757
      %2798 = vst.msk [vmem:[%s913 + $0xd0] sm:$0xf] %vm1010, %v2759
      %2799 = vst.msk [vmem:[%s913 + $0xf8] sm:$0xf] %vm1010, %v2761
      %2800 = vst.msk [vmem:[%s913 + $0x120] sm:$0xf] %vm1010, %v2763
      %2801 = vst.msk [vmem:[%s913 + $0x148] sm:$0xf] %vm1010, %v2765
      %2802 = vst.msk [vmem:[%s913 + $0x170] sm:$0xf] %vm1010, %v2767
      %2803 = vst.msk [vmem:[%s913 + $0x198] sm:$0xf] %vm1010, %v2769
      %2804 = vst.msk [vmem:[%s913 + $0x1c0] sm:$0xf] %vm1010, %v2771
      %2805 = vst.msk [vmem:[%s913 + $0x1e8] sm:$0xf] %vm1010, %v2773
      %2806 = vst.msk [vmem:[%s913 + $0x210] sm:$0xf] %vm1010, %v2775
      %2807 = vst.msk [vmem:[%s913 + $0x238] sm:$0xf] %vm1010, %v2777
      %2808 = vst.msk [vmem:[#allocation2 + $0x8] sm:$0xf] %vm930, 0
      %2809 = vst.msk [vmem:[#allocation2 + $0x8] sm:$0xf] %vm1027, 0
      %2810 = vst.msk [vmem:[#allocation2 + $0x30] sm:$0xf] %vm1027, 0
      %2811 = vst.msk [vmem:[#allocation2 + $0x58] sm:$0xf] %vm1027, 0
      %2812 = vst.msk [vmem:[#allocation2 + $0x80] sm:$0xf] %vm1027, 0
      %2813 = vst.msk [vmem:[#allocation2 + $0xa8] sm:$0xf] %vm1027, 0
      %2814 = vst.msk [vmem:[#allocation2 + $0xd0] sm:$0xf] %vm1027, 0
      %2815 = vst.msk [vmem:[#allocation2 + $0xf8] sm:$0xf] %vm1027, 0
      %2816 = vst.msk [vmem:[#allocation2 + $0x120] sm:$0xf] %vm1027, 0
      %2817 = vst.msk [vmem:[#allocation2 + $0x148] sm:$0xf] %vm1027, 0
      %2818 = vst.msk [vmem:[#allocation2 + $0x170] sm:$0xf] %vm1027, 0
      %2819 = vst.msk [vmem:[#allocation2 + $0x198] sm:$0xf] %vm1027, 0
      %2820 = vst.msk [vmem:[#allocation2 + $0x1c0] sm:$0xf] %vm1027, 0
      %2821 = vst.msk [vmem:[#allocation2 + $0x1e8] sm:$0xf] %vm1027, 0
      %2822 = vst.msk [vmem:[#allocation2 + $0x210] sm:$0xf] %vm1027, 0
      %2823 = vst.msk [vmem:[#allocation2 + $0x238] sm:$0xf] %vm1027, 0
      %2824 = vst.msk [vmem:[#allocation2 + $0x260] sm:$0xf] %vm1027, 0
      %2826 = vrot.lane.b32.xlu0 %v2639, 1
      %v2827 = vpop.permute.xlu0 %2826
      %2829 = vst.msk [vmem:[#allocation2 + $0xc] sm:$0xf] %vm914, %v2656
      %2830 = vst.msk [vmem:[#allocation2 + $0x34] sm:$0xf] %vm914, %v2658
      %2831 = vst.msk [vmem:[#allocation2 + $0x5c] sm:$0xf] %vm914, %v2660
      %2832 = vst.msk [vmem:[#allocation2 + $0x84] sm:$0xf] %vm914, %v2662
      %2833 = vst.msk [vmem:[#allocation2 + $0xac] sm:$0xf] %vm914, %v2664
      %2834 = vst.msk [vmem:[#allocation2 + $0xd4] sm:$0xf] %vm914, %v2666
      %2835 = vst.msk [vmem:[#allocation2 + $0xfc] sm:$0xf] %vm914, %v2668
      %2836 = vst.msk [vmem:[#allocation2 + $0x124] sm:$0xf] %vm914, %v2670
      %2837 = vst.msk [vmem:[#allocation2 + $0x14c] sm:$0xf] %vm914, %v2672
      %2838 = vst.msk [vmem:[#allocation2 + $0x174] sm:$0xf] %vm914, %v2674
      %2839 = vst.msk [vmem:[#allocation2 + $0x19c] sm:$0xf] %vm914, %v2676
      %2840 = vst.msk [vmem:[#allocation2 + $0x1c4] sm:$0xf] %vm914, %v2678
      %2841 = vst.msk [vmem:[#allocation2 + $0x1ec] sm:$0xf] %vm914, %v2680
      %2842 = vst.msk [vmem:[#allocation2 + $0x214] sm:$0xf] %vm914, %v2682
      %2843 = vst.msk [vmem:[#allocation2 + $0x23c] sm:$0xf] %vm914, %v2684
      %2844 = vst.msk [vmem:[#allocation2 + $0x264] sm:$0xf] %vm914, %v2827
      %2845 = vst.msk [vmem:[#allocation2 + $0xc] sm:$0xf] %vm932, 0
      %2846 = vst.msk [vmem:[#allocation2 + $0x34] sm:$0xf] %vm932, 0
      %2847 = vst.msk [vmem:[#allocation2 + $0x5c] sm:$0xf] %vm932, 0
      %2848 = vst.msk [vmem:[#allocation2 + $0x84] sm:$0xf] %vm932, 0
      %2849 = vst.msk [vmem:[#allocation2 + $0xac] sm:$0xf] %vm932, 0
      %2850 = vst.msk [vmem:[#allocation2 + $0xd4] sm:$0xf] %vm932, 0
      %2851 = vst.msk [vmem:[#allocation2 + $0xfc] sm:$0xf] %vm932, 0
      %2852 = vst.msk [vmem:[#allocation2 + $0x124] sm:$0xf] %vm932, 0
      %2853 = vst.msk [vmem:[#allocation2 + $0x14c] sm:$0xf] %vm932, 0
      %2854 = vst.msk [vmem:[#allocation2 + $0x174] sm:$0xf] %vm932, 0
      %2855 = vst.msk [vmem:[#allocation2 + $0x19c] sm:$0xf] %vm932, 0
      %2856 = vst.msk [vmem:[#allocation2 + $0x1c4] sm:$0xf] %vm932, 0
      %2857 = vst.msk [vmem:[#allocation2 + $0x1ec] sm:$0xf] %vm932, 0
      %2858 = vst.msk [vmem:[#allocation2 + $0x214] sm:$0xf] %vm932, 0
      %2859 = vst.msk [vmem:[#allocation2 + $0x23c] sm:$0xf] %vm932, 0
      %2860 = vst.msk [vmem:[#allocation2 + $0x264] sm:$0xf] %vm932, 0
      %2861 = vst.msk [vmem:[#allocation2 + $0x10] sm:$0xf] %vm930, %v2624
      %2862 = vst.msk [vmem:[#allocation2 + $0x38] sm:$0xf] %vm930, %v2625
      %2863 = vst.msk [vmem:[#allocation2 + $0x60] sm:$0xf] %vm930, %v2626
      %2864 = vst.msk [vmem:[#allocation2 + $0x88] sm:$0xf] %vm930, %v2627
      %2865 = vst.msk [vmem:[#allocation2 + $0xb0] sm:$0xf] %vm930, %v2628
      %2866 = vst.msk [vmem:[#allocation2 + $0xd8] sm:$0xf] %vm930, %v2629
      %2867 = vst.msk [vmem:[#allocation2 + $0x100] sm:$0xf] %vm930, %v2630
      %2868 = vst.msk [vmem:[#allocation2 + $0x128] sm:$0xf] %vm930, %v2631
      %2869 = vst.msk [vmem:[#allocation2 + $0x150] sm:$0xf] %vm930, %v2632
      %2870 = vst.msk [vmem:[#allocation2 + $0x178] sm:$0xf] %vm930, %v2633
      %2871 = vst.msk [vmem:[#allocation2 + $0x1a0] sm:$0xf] %vm930, %v2634
      %2872 = vst.msk [vmem:[#allocation2 + $0x1c8] sm:$0xf] %vm930, %v2635
      %2873 = vst.msk [vmem:[#allocation2 + $0x1f0] sm:$0xf] %vm930, %v2636
      %2874 = vst.msk [vmem:[#allocation2 + $0x218] sm:$0xf] %vm930, %v2637
      %2875 = vst.msk [vmem:[#allocation2 + $0x240] sm:$0xf] %vm930, %v2638
      %2876 = vst.msk [vmem:[#allocation2 + $0x268] sm:$0xf] %vm930, %v2639
      %2877 = vrot.lane.b32.xlu0 %v2639, 127
      %v2878 = vpop.permute.xlu0 %2877
      %2880 = vst.msk [vmem:[#allocation2 + $0x14] sm:$0xf] %vm1010, %v2749
      %2881 = vst.msk [vmem:[#allocation2 + $0x3c] sm:$0xf] %vm1010, %v2751
      %2882 = vst.msk [vmem:[#allocation2 + $0x64] sm:$0xf] %vm1010, %v2753
      %2883 = vst.msk [vmem:[#allocation2 + $0x8c] sm:$0xf] %vm1010, %v2755
      %2884 = vst.msk [vmem:[#allocation2 + $0xb4] sm:$0xf] %vm1010, %v2757
      %2885 = vst.msk [vmem:[#allocation2 + $0xdc] sm:$0xf] %vm1010, %v2759
      %2886 = vst.msk [vmem:[#allocation2 + $0x104] sm:$0xf] %vm1010, %v2761
      %2887 = vst.msk [vmem:[#allocation2 + $0x12c] sm:$0xf] %vm1010, %v2763
      %2888 = vst.msk [vmem:[#allocation2 + $0x154] sm:$0xf] %vm1010, %v2765
      %2889 = vst.msk [vmem:[#allocation2 + $0x17c] sm:$0xf] %vm1010, %v2767
      %2890 = vst.msk [vmem:[#allocation2 + $0x1a4] sm:$0xf] %vm1010, %v2769
      %2891 = vst.msk [vmem:[#allocation2 + $0x1cc] sm:$0xf] %vm1010, %v2771
      %2892 = vst.msk [vmem:[#allocation2 + $0x1f4] sm:$0xf] %vm1010, %v2773
      %2893 = vst.msk [vmem:[#allocation2 + $0x21c] sm:$0xf] %vm1010, %v2775
      %2894 = vst.msk [vmem:[#allocation2 + $0x244] sm:$0xf] %vm1010, %v2777
      %2895 = vst.msk [vmem:[#allocation2 + $0x26c] sm:$0xf] %vm1010, %v2878
      %2896 = vst.msk [vmem:[#allocation2 + $0x14] sm:$0xf] %vm1027, 0
      %2897 = vst.msk [vmem:[#allocation2 + $0x3c] sm:$0xf] %vm1027, 0
      %2898 = vst.msk [vmem:[#allocation2 + $0x64] sm:$0xf] %vm1027, 0
      %2899 = vst.msk [vmem:[#allocation2 + $0x8c] sm:$0xf] %vm1027, 0
      %2900 = vst.msk [vmem:[#allocation2 + $0xb4] sm:$0xf] %vm1027, 0
      %2901 = vst.msk [vmem:[#allocation2 + $0xdc] sm:$0xf] %vm1027, 0
      %2902 = vst.msk [vmem:[#allocation2 + $0x104] sm:$0xf] %vm1027, 0
      %2903 = vst.msk [vmem:[#allocation2 + $0x12c] sm:$0xf] %vm1027, 0
      %2904 = vst.msk [vmem:[#allocation2 + $0x154] sm:$0xf] %vm1027, 0
      %2905 = vst.msk [vmem:[#allocation2 + $0x17c] sm:$0xf] %vm1027, 0
      %2906 = vst.msk [vmem:[#allocation2 + $0x1a4] sm:$0xf] %vm1027, 0
      %2907 = vst.msk [vmem:[#allocation2 + $0x1cc] sm:$0xf] %vm1027, 0
      %2908 = vst.msk [vmem:[#allocation2 + $0x1f4] sm:$0xf] %vm1027, 0
      %2909 = vst.msk [vmem:[#allocation2 + $0x21c] sm:$0xf] %vm1027, 0
      %2910 = vst.msk [vmem:[#allocation2 + $0x244] sm:$0xf] %vm1027, 0
      %2911 = vst.msk [vmem:[#allocation2 + $0x26c] sm:$0xf] %vm1027, 0
      %2912 = vst.msk [vmem:[#allocation2 + $0x18] sm:$0xf] %vm914, %v2658
      %2913 = vst.msk [vmem:[#allocation2 + $0x40] sm:$0xf] %vm914, %v2660
      %2914 = vst.msk [vmem:[#allocation2 + $0x68] sm:$0xf] %vm914, %v2662
      %2915 = vst.msk [vmem:[#allocation2 + $0x90] sm:$0xf] %vm914, %v2664
      %2916 = vst.msk [vmem:[#allocation2 + $0xb8] sm:$0xf] %vm914, %v2666
      %2917 = vst.msk [vmem:[#allocation2 + $0xe0] sm:$0xf] %vm914, %v2668
      %2918 = vst.msk [vmem:[#allocation2 + $0x108] sm:$0xf] %vm914, %v2670
      %2919 = vst.msk [vmem:[#allocation2 + $0x130] sm:$0xf] %vm914, %v2672
      %2920 = vst.msk [vmem:[#allocation2 + $0x158] sm:$0xf] %vm914, %v2674
      %2921 = vst.msk [vmem:[#allocation2 + $0x180] sm:$0xf] %vm914, %v2676
      %2922 = vst.msk [vmem:[#allocation2 + $0x1a8] sm:$0xf] %vm914, %v2678
      %2923 = vst.msk [vmem:[#allocation2 + $0x1d0] sm:$0xf] %vm914, %v2680
      %2924 = vst.msk [vmem:[#allocation2 + $0x1f8] sm:$0xf] %vm914, %v2682
      %2925 = vst.msk [vmem:[#allocation2 + $0x220] sm:$0xf] %vm914, %v2684
      %2926 = vst.msk [vmem:[#allocation2 + $0x248] sm:$0xf] %vm914, %v2827
      %2927 = vst.msk [vmem:[%s1146 + $0x18] sm:$0xf] %vm930, 0
      %2928 = vst.msk [vmem:[#allocation2 + $0x18] sm:$0xf] %vm932, 0
      %2929 = vst.msk [vmem:[#allocation2 + $0x40] sm:$0xf] %vm932, 0
      %2930 = vst.msk [vmem:[#allocation2 + $0x68] sm:$0xf] %vm932, 0
      %2931 = vst.msk [vmem:[#allocation2 + $0x90] sm:$0xf] %vm932, 0
      %2932 = vst.msk [vmem:[#allocation2 + $0xb8] sm:$0xf] %vm932, 0
      %2933 = vst.msk [vmem:[#allocation2 + $0xe0] sm:$0xf] %vm932, 0
      %2934 = vst.msk [vmem:[#allocation2 + $0x108] sm:$0xf] %vm932, 0
      %2935 = vst.msk [vmem:[#allocation2 + $0x130] sm:$0xf] %vm932, 0
      %2936 = vst.msk [vmem:[#allocation2 + $0x158] sm:$0xf] %vm932, 0
      %2937 = vst.msk [vmem:[#allocation2 + $0x180] sm:$0xf] %vm932, 0
      %2938 = vst.msk [vmem:[#allocation2 + $0x1a8] sm:$0xf] %vm932, 0
      %2939 = vst.msk [vmem:[#allocation2 + $0x1d0] sm:$0xf] %vm932, 0
      %2940 = vst.msk [vmem:[#allocation2 + $0x1f8] sm:$0xf] %vm932, 0
      %2941 = vst.msk [vmem:[#allocation2 + $0x220] sm:$0xf] %vm932, 0
      %2942 = vst.msk [vmem:[#allocation2 + $0x248] sm:$0xf] %vm932, 0
      %2943 = vst.msk [vmem:[#allocation2 + $0x270] sm:$0xf] %vm932, 0
      %2944 = vst.msk [vmem:[#allocation2 + $0x1c] sm:$0xf] %vm930, %v2625
      %2945 = vst.msk [vmem:[#allocation2 + $0x44] sm:$0xf] %vm930, %v2626
      %2946 = vst.msk [vmem:[#allocation2 + $0x6c] sm:$0xf] %vm930, %v2627
      %2947 = vst.msk [vmem:[#allocation2 + $0x94] sm:$0xf] %vm930, %v2628
      %2948 = vst.msk [vmem:[#allocation2 + $0xbc] sm:$0xf] %vm930, %v2629
      %2949 = vst.msk [vmem:[#allocation2 + $0xe4] sm:$0xf] %vm930, %v2630
      %2950 = vst.msk [vmem:[#allocation2 + $0x10c] sm:$0xf] %vm930, %v2631
      %2951 = vst.msk [vmem:[#allocation2 + $0x134] sm:$0xf] %vm930, %v2632
      %2952 = vst.msk [vmem:[#allocation2 + $0x15c] sm:$0xf] %vm930, %v2633
      %2953 = vst.msk [vmem:[#allocation2 + $0x184] sm:$0xf] %vm930, %v2634
      %2954 = vst.msk [vmem:[#allocation2 + $0x1ac] sm:$0xf] %vm930, %v2635
      %2955 = vst.msk [vmem:[#allocation2 + $0x1d4] sm:$0xf] %vm930, %v2636
      %2956 = vst.msk [vmem:[#allocation2 + $0x1fc] sm:$0xf] %vm930, %v2637
      %2957 = vst.msk [vmem:[#allocation2 + $0x224] sm:$0xf] %vm930, %v2638
      %2958 = vst.msk [vmem:[#allocation2 + $0x24c] sm:$0xf] %vm930, %v2639
      %2959 = vst.msk [vmem:[%s1146 + $0x1c] sm:$0xf] %vm930, 0
      %2960 = vst.msk [vmem:[#allocation2 + $0x20] sm:$0xf] %vm1010, %v2751
      %2961 = vst.msk [vmem:[#allocation2 + $0x48] sm:$0xf] %vm1010, %v2753
      %2962 = vst.msk [vmem:[#allocation2 + $0x70] sm:$0xf] %vm1010, %v2755
      %2963 = vst.msk [vmem:[#allocation2 + $0x98] sm:$0xf] %vm1010, %v2757
      %2964 = vst.msk [vmem:[#allocation2 + $0xc0] sm:$0xf] %vm1010, %v2759
      %2965 = vst.msk [vmem:[#allocation2 + $0xe8] sm:$0xf] %vm1010, %v2761
      %2966 = vst.msk [vmem:[#allocation2 + $0x110] sm:$0xf] %vm1010, %v2763
      %2967 = vst.msk [vmem:[#allocation2 + $0x138] sm:$0xf] %vm1010, %v2765
      %2968 = vst.msk [vmem:[#allocation2 + $0x160] sm:$0xf] %vm1010, %v2767
      %2969 = vst.msk [vmem:[#allocation2 + $0x188] sm:$0xf] %vm1010, %v2769
      %2970 = vst.msk [vmem:[#allocation2 + $0x1b0] sm:$0xf] %vm1010, %v2771
      %2971 = vst.msk [vmem:[#allocation2 + $0x1d8] sm:$0xf] %vm1010, %v2773
      %2972 = vst.msk [vmem:[#allocation2 + $0x200] sm:$0xf] %vm1010, %v2775
      %2973 = vst.msk [vmem:[#allocation2 + $0x228] sm:$0xf] %vm1010, %v2777
      %2974 = vst.msk [vmem:[#allocation2 + $0x250] sm:$0xf] %vm1010, %v2878
      %2975 = vst.msk [vmem:[%s1146 + $0x20] sm:$0xf] %vm930, 0
      %2976 = vst.msk [vmem:[#allocation2 + $0x20] sm:$0xf] %vm1027, 0
      %2977 = vst.msk [vmem:[#allocation2 + $0x48] sm:$0xf] %vm1027, 0
      %2978 = vst.msk [vmem:[#allocation2 + $0x70] sm:$0xf] %vm1027, 0
      %2979 = vst.msk [vmem:[#allocation2 + $0x98] sm:$0xf] %vm1027, 0
      %2980 = vst.msk [vmem:[#allocation2 + $0xc0] sm:$0xf] %vm1027, 0
      %2981 = vst.msk [vmem:[#allocation2 + $0xe8] sm:$0xf] %vm1027, 0
      %2982 = vst.msk [vmem:[#allocation2 + $0x110] sm:$0xf] %vm1027, 0
      %2983 = vst.msk [vmem:[#allocation2 + $0x138] sm:$0xf] %vm1027, 0
      %2984 = vst.msk [vmem:[#allocation2 + $0x160] sm:$0xf] %vm1027, 0
      %2985 = vst.msk [vmem:[#allocation2 + $0x188] sm:$0xf] %vm1027, 0
      %2986 = vst.msk [vmem:[#allocation2 + $0x1b0] sm:$0xf] %vm1027, 0
      %2987 = vst.msk [vmem:[#allocation2 + $0x1d8] sm:$0xf] %vm1027, 0
      %2988 = vst.msk [vmem:[#allocation2 + $0x200] sm:$0xf] %vm1027, 0
      %2989 = vst.msk [vmem:[#allocation2 + $0x228] sm:$0xf] %vm1027, 0
      %2990 = vst.msk [vmem:[#allocation2 + $0x250] sm:$0xf] %vm1027, 0
      %2991 = vst.msk [vmem:[#allocation2 + $0x278] sm:$0xf] %vm1027, 0
      %v2992 = vpack.c.bf16 %v442, %v442
      %v2993 = vpack.c.bf16 %v443, %v443
      %v2994 = vpack.c.bf16 %v444, %v444
      %v2995 = vpack.c.bf16 %v445, %v445
      %v2996 = vpack.c.bf16 %v446, %v446
      %v2997 = vpack.c.bf16 %v447, %v447
      %v2998 = vpack.c.bf16 %v448, %v448
      %v2999 = vpack.c.bf16 %v449, %v449
      %v3000 = vpack.c.bf16 %v450, %v450
      %v3001 = vpack.c.bf16 %v451, %v451
      %v3002 = vpack.c.bf16 %v452, %v452
      %v3003 = vpack.c.bf16 %v453, %v453
      %v3004 = vpack.c.bf16 %v454, %v454
      %v3005 = vpack.c.bf16 %v455, %v455
      %v3006 = vpack.c.bf16 %v456, %v456
      %v3007 = vpack.c.bf16 %v457, %v457
      %3008 = vst.msk [vmem:[#allocation2 + $0x24] sm:$0xf] %vm930, %v2992
      %3009 = vst.msk [vmem:[#allocation2 + $0x4c] sm:$0xf] %vm930, %v2993
      %3010 = vst.msk [vmem:[#allocation2 + $0x74] sm:$0xf] %vm930, %v2994
      %3011 = vst.msk [vmem:[#allocation2 + $0x9c] sm:$0xf] %vm930, %v2995
      %3012 = vst.msk [vmem:[#allocation2 + $0xc4] sm:$0xf] %vm930, %v2996
      %3013 = vst.msk [vmem:[#allocation2 + $0xec] sm:$0xf] %vm930, %v2997
      %3014 = vst.msk [vmem:[#allocation2 + $0x114] sm:$0xf] %vm930, %v2998
      %3015 = vst.msk [vmem:[#allocation2 + $0x13c] sm:$0xf] %vm930, %v2999
      %3016 = vst.msk [vmem:[#allocation2 + $0x164] sm:$0xf] %vm930, %v3000
      %3017 = vst.msk [vmem:[#allocation2 + $0x18c] sm:$0xf] %vm930, %v3001
      %3018 = vst.msk [vmem:[#allocation2 + $0x1b4] sm:$0xf] %vm930, %v3002
      %3019 = vst.msk [vmem:[#allocation2 + $0x1dc] sm:$0xf] %vm930, %v3003
      %3020 = vst.msk [vmem:[#allocation2 + $0x204] sm:$0xf] %vm930, %v3004
      %3021 = vst.msk [vmem:[#allocation2 + $0x22c] sm:$0xf] %vm930, %v3005
      %3022 = vst.msk [vmem:[#allocation2 + $0x254] sm:$0xf] %vm930, %v3006
      %3023 = vst.msk [vmem:[#allocation2 + $0x27c] sm:$0xf] %vm930, %v3007
      %v3024 = vld [vmem:[%s12] sm:$0xf]
      loop: start=0, step=1, limit=16
      $region80: #{tfc_tdf_forward.3} parent=71 // loop_pre_header
        _
      $region81: #{tfc_tdf_forward.3} parent=71 // loop_header
        %s3026 = sphi 0, %s3030
        %p3027 = scmp.ge.s32.totalorder %s3026, 16
      $region82: #{tfc_tdf_forward.3} parent=71 // loop_header_branch
        %3029 = sbr.rel (%p3027) target = $region86
      $region83: #{tfc_tdf_forward.3} parent=71 // loop_body
        %s3031 = smul.u32 %s3026, 10
        %s3032 = smul.addr %s3031, 4
        %s3033 = scalar_lea.vmem [#allocation2], %s3032
        %v3034 = vld [vmem:[%s3033] sm:$0xf]
        %v3035 = vld [vmem:[%s3033 + $0x4] sm:$0xf]
        %v3036 = vld [vmem:[%s3033 + $0x8] sm:$0xf]
        %v3037 = vld [vmem:[%s3033 + $0xc] sm:$0xf]
        %v3038 = vld [vmem:[%s3033 + $0x10] sm:$0xf]
        %v3039 = vld [vmem:[%s3033 + $0x14] sm:$0xf]
        %v3040 = vld [vmem:[%s3033 + $0x18] sm:$0xf]
        %v3041 = vld [vmem:[%s3033 + $0x1c] sm:$0xf]
        %v3042 = vld [vmem:[%s3033 + $0x20] sm:$0xf]
        %v3043 = vld [vmem:[%s3033 + $0x24] sm:$0xf]
        %v3054 = vunpack.c.l.b16 %v3034
        %v3055 = vunpack.c.l.b16 %v3035
        %v3056 = vunpack.c.l.b16 %v3036
        %v3057 = vunpack.c.l.b16 %v3037
        %v3058 = vunpack.c.l.b16 %v3038
        %v3059 = vunpack.c.l.b16 %v3039
        %v3060 = vunpack.c.l.b16 %v3040
        %v3061 = vunpack.c.l.b16 %v3041
        %v3062 = vunpack.c.l.b16 %v3042
        %v3063 = vunpack.c.l.b16 %v3043
        %v3064 = vpack.c.b16 %v3055, %v3054
        %v3065 = vpack.c.b16 %v3057, %v3056
        %v3066 = vpack.c.b16 %v3059, %v3058
        %v3067 = vpack.c.b16 %v3061, %v3060
        %v3068 = vpack.c.b16 %v3063, %v3062
        %vm3074 = vcmask 654336
        %v3076 = vsel %vm3074, %v3024, 0
        %3078 = vmatpush.bf16.msra.mxu0 0
        %3079 = vmatpush.bf16.msra.mxu0 0
        %3080 = vmatpush.bf16.msra.mxu0 0
        %3081 = vmatpush.bf16.msra.mxu0 %v3068
        %3082 = vmatpush.bf16.msra.mxu0 %v3067
        %3083 = vmatpush.bf16.msra.mxu0 %v3066
        %3084 = vmatpush.bf16.msra.mxu0 %v3065
        %3085 = vmatpush.bf16.msra.mxu0 %v3064
        %3086 = vmatmul.bf16.gmra.mxu0 %v3076
        %v3087 = vpop.f32.mrf.mxu0
        %v3088 = vadd.f32 0.0, %v3087
        %v3089 = vpop.f32.mrf.mxu0
        %3090 = vdwg.mxu0
        %s3091 = smul.u32 %s3026, 8
        %s3092 = scalar_lea.vmem %s440, %s3091
        %3093 = vst.msk [vmem:[%s3092] sm:$0xff] %vm460, %v3088
      $region84: #{tfc_tdf_forward.3} parent=71 // loop_footer
        %s3030 = sadd.s32 1, %s3026
      $region85: #{tfc_tdf_forward.3} parent=71 // loop_footer_branch
        %3025 = sbr.rel target = $region81
      $region86: #{tfc_tdf_forward.3} parent=71 // loop_exit
        _
      %p3094 = scmp.lt.s32.totalorder %s24, 1
      %s3095 = scalar_select %p3094, %s24, 1
      %s3096 = smul.addr %s3095, 16
      %s3097 = smul.addr %s3096, 8
      %s3098 = scalar_lea.vmem %s13, %s3097
      // Predicated region
      $region87: #{tfc_tdf_forward.3} parent=71 // pred_check
        %p3099 = pneg %p320
      $region88: #{tfc_tdf_forward.3} parent=71 // pred_check_branch
        %3101 = sbr.rel (%p3099) target = $region90
      $region89: #{tfc_tdf_forward.3} parent=71 // pred_region
        _
      $region90: #{tfc_tdf_forward.3} parent=71 // pred_fallthru
        _
    $region72: #{tfc_tdf_forward.3} parent=5 // pred_fallthru
      _
    %p3102 = scmp.le.s32.totalorder 2, %s19
    // Predicated region
    $region91: #{tfc_tdf_forward.3} parent=5 // pred_check
      %p3103 = pneg %p3102
    $region92: #{tfc_tdf_forward.3} parent=5 // pred_check_branch
      %3105 = sbr.rel (%p3103) target = $region94
    $region93: #{tfc_tdf_forward.3} parent=5 // pred_region
      %s3106 = ssub.s32 %s19, 2
      // Predicated region
      $region95: #{tfc_tdf_forward.3} parent=93 // pred_check
        %p3107 = pneg %p326
      $region96: #{tfc_tdf_forward.3} parent=93 // pred_check_branch
        %3109 = sbr.rel (%p3107) target = $region98
      $region97: #{tfc_tdf_forward.3} parent=93 // pred_region
        %p3110 = scmp.lt.s32.totalorder %s25, 1
        %s3111 = scalar_select %p3110, %s25, 1
        %s3112 = smul.addr %s3111, 16
        %s3113 = smul.addr %s3112, 8
        %s3114 = scalar_lea.vmem %s13, %s3113
      $region98: #{tfc_tdf_forward.3} parent=93 // pred_fallthru
        _
    $region94: #{tfc_tdf_forward.3} parent=5 // pred_fallthru
      _
  $region6: #{tfc_tdf_forward.3} parent=0 // loop_footer
    %s23 = sadd.s32 1, %s19
  $region7: #{tfc_tdf_forward.3} parent=0 // loop_footer_branch
    %18 = sbr.rel target = $region3
  $region8: #{tfc_tdf_forward.3} parent=0 // loop_exit
    _

// kernel: tfc_tdf_forward.2
$region0: #{tfc_tdf_forward.2}
  #allocation0 [shape = 'u32[]', space=smem, size = 0x4, offset = 0x4, fixed_abs, tag = 'smem constant byte address 0x4 - core index']
  #allocation1 [shape = 'u32[72,128]{1,0:T(1,128)}', space=vmem, size = 0x9000, scoped, tag = 'internal scratch']
  #allocation2 [shape = 'bf16[16,76,16]{2,1,0:T(8,128)(2,1)}', space=vmem, size = 0x50000, scoped, tag = 'scratch operand']
  #allocation3 [shape = 'f32[16,8,16]{2,1,0:T(8,128)}', space=vmem, size = 0x10000, scoped, tag = 'scratch operand']
  %s0 = inlined_call_operand.vmem [shape: f32[2,16,4,16], index: 0, kind: input, shape index: {}]
  %s1 = inlined_call_operand.vmem [shape: f32[4,1], index: 1, kind: input, shape index: {}]
  %s2 = inlined_call_operand.vmem [shape: f32[4,1], index: 2, kind: input, shape index: {}]
  %s3 = inlined_call_operand.vmem [shape: bf16[8,36], index: 3, kind: input, shape index: {}]
  %s4 = inlined_call_operand.vmem [shape: f32[8,1], index: 4, kind: input, shape index: {}]
  %s5 = inlined_call_operand.vmem [shape: f32[8,1], index: 5, kind: input, shape index: {}]
  %s6 = inlined_call_operand.vmem [shape: bf16[16,4], index: 6, kind: input, shape index: {}]
  %s7 = inlined_call_operand.vmem [shape: f32[8,1], index: 7, kind: input, shape index: {}]
  %s8 = inlined_call_operand.vmem [shape: f32[8,1], index: 8, kind: input, shape index: {}]
  %s9 = inlined_call_operand.vmem [shape: bf16[4,16], index: 9, kind: input, shape index: {}]
  %s10 = inlined_call_operand.vmem [shape: f32[8,1], index: 10, kind: input, shape index: {}]
  %s11 = inlined_call_operand.vmem [shape: f32[8,1], index: 11, kind: input, shape index: {}]
  %s12 = inlined_call_operand.vmem [shape: bf16[8,76], index: 12, kind: input, shape index: {}]
  %s13 = inlined_call_operand.vmem [shape: f32[2,16,8,16], index: 13, kind: output, shape index: {}]
  %s14 = sld [smem:[#allocation0]]
  $region99: #{tfc_tdf_forward.2} parent=0
    _
  %s16 = ssub.s32 1, %s14
  %s17 = scalar_select 0, %s16, %s14
  loop: start=0, step=1, limit=4
  $region2: #{tfc_tdf_forward.2} parent=0 // loop_pre_header
    _
  $region3: #{tfc_tdf_forward.2} parent=0 // loop_header
    %s19 = sphi 0, %s23
    %p20 = scmp.ge.s32.totalorder %s19, 4
    %s29 = sphi 0, %s31
    %s32 = sphi 0, %s29
    %s33 = sphi 0, %s32
    %s49 = sphi 0, %s33
    %s53 = sphi 0, %s53
    %s55 = sphi 0, %s53
    %s56 = sphi 0, %s55
    %s70 = sphi 0, %s56
    %s74 = sphi 0, %s74
    %s76 = sphi 0, %s74
    %s77 = sphi 0, %s76
    %s91 = sphi 0, %s77
    %s95 = sphi 0, %s95
    %s97 = sphi 0, %s95
    %s98 = sphi 0, %s97
    %s112 = sphi 0, %s98
    %s116 = sphi 0, %s116
    %s118 = sphi 0, %s116
    %s119 = sphi 0, %s118
    %s133 = sphi 0, %s119
    %s137 = sphi 0, %s137
    %s139 = sphi 0, %s137
    %s140 = sphi 0, %s139
    %s154 = sphi 0, %s140
    %s158 = sphi 0, %s158
    %s160 = sphi 0, %s158
    %s161 = sphi 0, %s160
    %s175 = sphi 0, %s161
    %s179 = sphi 0, %s179
    %s181 = sphi 0, %s179
    %s182 = sphi 0, %s181
    %s196 = sphi 0, %s182
    %s200 = sphi 0, %s200
    %s202 = sphi 0, %s200
    %s203 = sphi 0, %s202
    %s217 = sphi 0, %s203
    %s221 = sphi 0, %s221
    %s223 = sphi 0, %s221
    %s224 = sphi 0, %s223
    %s238 = sphi 0, %s224
    %s242 = sphi 0, %s242
    %s244 = sphi 0, %s242
    %s245 = sphi 0, %s244
    %s259 = sphi 0, %s245
    %s263 = sphi 0, %s263
    %s265 = sphi 0, %s263
    %s266 = sphi 0, %s265
    %s280 = sphi 0, %s266
    %s284 = sphi 0, %s284
    %s286 = sphi 0, %s284
    %s287 = sphi 0, %s286
    %s301 = sphi 0, %s287
    %s307 = sphi 0, %s309
    %s310 = sphi 0, %s307
    %s311 = sphi 0, %s310
    %s327 = sphi 0, %s311
  $region4: #{tfc_tdf_forward.2} parent=0 // loop_header_branch
    %22 = sbr.rel (%p20) target = $region8
  $region5: #{tfc_tdf_forward.2} parent=0 // loop_body
    %s24 = ssub.s32 %s19, 1
    %s25 = ssub.s32 %s19, 2
    %s26 = sadd.s32 %s19, 1
    %s27 = ssub.s32 %s19, %s26
    %p28 = scmp.eq.s32.totalorder %s27, 0
    %s30 = sadd.s32 %s29, 1
    %s31 = scalar_select %p28, %s29, %s30
    %p34 = pneg %p28
    %p35 = scmp.eq.s32.totalorder %s19, 1
    %p36 = por %p34, %p35
    %p37 = scmp.ne.s32.totalorder %s29, %s32
    %p38 = scmp.eq.s32.totalorder %s19, 0
    %p39 = por %p37, %p38
    %p40 = scmp.ne.s32.totalorder %s29, %s32
    %p41 = scmp.eq.s32.totalorder %s24, 1
    %p42 = por %p40, %p41
    %p43 = scmp.ne.s32.totalorder %s32, %s33
    %p44 = scmp.eq.s32.totalorder %s24, 0
    %p45 = por %p43, %p44
    %p46 = scmp.ne.s32.totalorder %s32, %s33
    %p47 = scmp.eq.s32.totalorder %s25, 1
    %p48 = por %p46, %p47
    %p50 = scmp.ne.s32.totalorder %s33, %s49
    %p51 = scmp.eq.s32.totalorder %s25, 0
    %p52 = por %p50, %p51
    %s54 = sadd.s32 %s53, 1
    %p57 = scmp.eq.s32.totalorder %s19, 1
    %p58 = scmp.ne.s32.totalorder %s53, %s55
    %p59 = scmp.eq.s32.totalorder %s19, 0
    %p60 = por %p58, %p59
    %p61 = scmp.ne.s32.totalorder %s53, %s55
    %p62 = scmp.eq.s32.totalorder %s24, 1
    %p63 = por %p61, %p62
    %p64 = scmp.ne.s32.totalorder %s55, %s56
    %p65 = scmp.eq.s32.totalorder %s24, 0
    %p66 = por %p64, %p65
    %p67 = scmp.ne.s32.totalorder %s55, %s56
    %p68 = scmp.eq.s32.totalorder %s25, 1
    %p69 = por %p67, %p68
    %p71 = scmp.ne.s32.totalorder %s56, %s70
    %p72 = scmp.eq.s32.totalorder %s25, 0
    %p73 = por %p71, %p72
    %s75 = sadd.s32 %s74, 1
    %p78 = scmp.eq.s32.totalorder %s19, 1
    %p79 = scmp.ne.s32.totalorder %s74, %s76
    %p80 = scmp.eq.s32.totalorder %s19, 0
    %p81 = por %p79, %p80
    %p82 = scmp.ne.s32.totalorder %s74, %s76
    %p83 = scmp.eq.s32.totalorder %s24, 1
    %p84 = por %p82, %p83
    %p85 = scmp.ne.s32.totalorder %s76, %s77
    %p86 = scmp.eq.s32.totalorder %s24, 0
    %p87 = por %p85, %p86
    %p88 = scmp.ne.s32.totalorder %s76, %s77
    %p89 = scmp.eq.s32.totalorder %s25, 1
    %p90 = por %p88, %p89
    %p92 = scmp.ne.s32.totalorder %s77, %s91
    %p93 = scmp.eq.s32.totalorder %s25, 0
    %p94 = por %p92, %p93
    %s96 = sadd.s32 %s95, 1
    %p99 = scmp.eq.s32.totalorder %s19, 1
    %p100 = scmp.ne.s32.totalorder %s95, %s97
    %p101 = scmp.eq.s32.totalorder %s19, 0
    %p102 = por %p100, %p101
    %p103 = scmp.ne.s32.totalorder %s95, %s97
    %p104 = scmp.eq.s32.totalorder %s24, 1
    %p105 = por %p103, %p104
    %p106 = scmp.ne.s32.totalorder %s97, %s98
    %p107 = scmp.eq.s32.totalorder %s24, 0
    %p108 = por %p106, %p107
    %p109 = scmp.ne.s32.totalorder %s97, %s98
    %p110 = scmp.eq.s32.totalorder %s25, 1
    %p111 = por %p109, %p110
    %p113 = scmp.ne.s32.totalorder %s98, %s112
    %p114 = scmp.eq.s32.totalorder %s25, 0
    %p115 = por %p113, %p114
    %s117 = sadd.s32 %s116, 1
    %p120 = scmp.eq.s32.totalorder %s19, 1
    %p121 = scmp.ne.s32.totalorder %s116, %s118
    %p122 = scmp.eq.s32.totalorder %s19, 0
    %p123 = por %p121, %p122
    %p124 = scmp.ne.s32.totalorder %s116, %s118
    %p125 = scmp.eq.s32.totalorder %s24, 1
    %p126 = por %p124, %p125
    %p127 = scmp.ne.s32.totalorder %s118, %s119
    %p128 = scmp.eq.s32.totalorder %s24, 0
    %p129 = por %p127, %p128
    %p130 = scmp.ne.s32.totalorder %s118, %s119
    %p131 = scmp.eq.s32.totalorder %s25, 1
    %p132 = por %p130, %p131
    %p134 = scmp.ne.s32.totalorder %s119, %s133
    %p135 = scmp.eq.s32.totalorder %s25, 0
    %p136 = por %p134, %p135
    %s138 = sadd.s32 %s137, 1
    %p141 = scmp.eq.s32.totalorder %s19, 1
    %p142 = scmp.ne.s32.totalorder %s137, %s139
    %p143 = scmp.eq.s32.totalorder %s19, 0
    %p144 = por %p142, %p143
    %p145 = scmp.ne.s32.totalorder %s137, %s139
    %p146 = scmp.eq.s32.totalorder %s24, 1
    %p147 = por %p145, %p146
    %p148 = scmp.ne.s32.totalorder %s139, %s140
    %p149 = scmp.eq.s32.totalorder %s24, 0
    %p150 = por %p148, %p149
    %p151 = scmp.ne.s32.totalorder %s139, %s140
    %p152 = scmp.eq.s32.totalorder %s25, 1
    %p153 = por %p151, %p152
    %p155 = scmp.ne.s32.totalorder %s140, %s154
    %p156 = scmp.eq.s32.totalorder %s25, 0
    %p157 = por %p155, %p156
    %s159 = sadd.s32 %s158, 1
    %p162 = scmp.eq.s32.totalorder %s19, 1
    %p163 = scmp.ne.s32.totalorder %s158, %s160
    %p164 = scmp.eq.s32.totalorder %s19, 0
    %p165 = por %p163, %p164
    %p166 = scmp.ne.s32.totalorder %s158, %s160
    %p167 = scmp.eq.s32.totalorder %s24, 1
    %p168 = por %p166, %p167
    %p169 = scmp.ne.s32.totalorder %s160, %s161
    %p170 = scmp.eq.s32.totalorder %s24, 0
    %p171 = por %p169, %p170
    %p172 = scmp.ne.s32.totalorder %s160, %s161
    %p173 = scmp.eq.s32.totalorder %s25, 1
    %p174 = por %p172, %p173
    %p176 = scmp.ne.s32.totalorder %s161, %s175
    %p177 = scmp.eq.s32.totalorder %s25, 0
    %p178 = por %p176, %p177
    %s180 = sadd.s32 %s179, 1
    %p183 = scmp.eq.s32.totalorder %s19, 1
    %p184 = scmp.ne.s32.totalorder %s179, %s181
    %p185 = scmp.eq.s32.totalorder %s19, 0
    %p186 = por %p184, %p185
    %p187 = scmp.ne.s32.totalorder %s179, %s181
    %p188 = scmp.eq.s32.totalorder %s24, 1
    %p189 = por %p187, %p188
    %p190 = scmp.ne.s32.totalorder %s181, %s182
    %p191 = scmp.eq.s32.totalorder %s24, 0
    %p192 = por %p190, %p191
    %p193 = scmp.ne.s32.totalorder %s181, %s182
    %p194 = scmp.eq.s32.totalorder %s25, 1
    %p195 = por %p193, %p194
    %p197 = scmp.ne.s32.totalorder %s182, %s196
    %p198 = scmp.eq.s32.totalorder %s25, 0
    %p199 = por %p197, %p198
    %s201 = sadd.s32 %s200, 1
    %p204 = scmp.eq.s32.totalorder %s19, 1
    %p205 = scmp.ne.s32.totalorder %s200, %s202
    %p206 = scmp.eq.s32.totalorder %s19, 0
    %p207 = por %p205, %p206
    %p208 = scmp.ne.s32.totalorder %s200, %s202
    %p209 = scmp.eq.s32.totalorder %s24, 1
    %p210 = por %p208, %p209
    %p211 = scmp.ne.s32.totalorder %s202, %s203
    %p212 = scmp.eq.s32.totalorder %s24, 0
    %p213 = por %p211, %p212
    %p214 = scmp.ne.s32.totalorder %s202, %s203
    %p215 = scmp.eq.s32.totalorder %s25, 1
    %p216 = por %p214, %p215
    %p218 = scmp.ne.s32.totalorder %s203, %s217
    %p219 = scmp.eq.s32.totalorder %s25, 0
    %p220 = por %p218, %p219
    %s222 = sadd.s32 %s221, 1
    %p225 = scmp.eq.s32.totalorder %s19, 1
    %p226 = scmp.ne.s32.totalorder %s221, %s223
    %p227 = scmp.eq.s32.totalorder %s19, 0
    %p228 = por %p226, %p227
    %p229 = scmp.ne.s32.totalorder %s221, %s223
    %p230 = scmp.eq.s32.totalorder %s24, 1
    %p231 = por %p229, %p230
    %p232 = scmp.ne.s32.totalorder %s223, %s224
    %p233 = scmp.eq.s32.totalorder %s24, 0
    %p234 = por %p232, %p233
    %p235 = scmp.ne.s32.totalorder %s223, %s224
    %p236 = scmp.eq.s32.totalorder %s25, 1
    %p237 = por %p235, %p236
    %p239 = scmp.ne.s32.totalorder %s224, %s238
    %p240 = scmp.eq.s32.totalorder %s25, 0
    %p241 = por %p239, %p240
    %s243 = sadd.s32 %s242, 1
    %p246 = scmp.eq.s32.totalorder %s19, 1
    %p247 = scmp.ne.s32.totalorder %s242, %s244
    %p248 = scmp.eq.s32.totalorder %s19, 0
    %p249 = por %p247, %p248
    %p250 = scmp.ne.s32.totalorder %s242, %s244
    %p251 = scmp.eq.s32.totalorder %s24, 1
    %p252 = por %p250, %p251
    %p253 = scmp.ne.s32.totalorder %s244, %s245
    %p254 = scmp.eq.s32.totalorder %s24, 0
    %p255 = por %p253, %p254
    %p256 = scmp.ne.s32.totalorder %s244, %s245
    %p257 = scmp.eq.s32.totalorder %s25, 1
    %p258 = por %p256, %p257
    %p260 = scmp.ne.s32.totalorder %s245, %s259
    %p261 = scmp.eq.s32.totalorder %s25, 0
    %p262 = por %p260, %p261
    %s264 = sadd.s32 %s263, 1
    %p267 = scmp.eq.s32.totalorder %s19, 1
    %p268 = scmp.ne.s32.totalorder %s263, %s265
    %p269 = scmp.eq.s32.totalorder %s19, 0
    %p270 = por %p268, %p269
    %p271 = scmp.ne.s32.totalorder %s263, %s265
    %p272 = scmp.eq.s32.totalorder %s24, 1
    %p273 = por %p271, %p272
    %p274 = scmp.ne.s32.totalorder %s265, %s266
    %p275 = scmp.eq.s32.totalorder %s24, 0
    %p276 = por %p274, %p275
    %p277 = scmp.ne.s32.totalorder %s265, %s266
    %p278 = scmp.eq.s32.totalorder %s25, 1
    %p279 = por %p277, %p278
    %p281 = scmp.ne.s32.totalorder %s266, %s280
    %p282 = scmp.eq.s32.totalorder %s25, 0
    %p283 = por %p281, %p282
    %s285 = sadd.s32 %s284, 1
    %p288 = scmp.eq.s32.totalorder %s19, 1
    %p289 = scmp.ne.s32.totalorder %s284, %s286
    %p290 = scmp.eq.s32.totalorder %s19, 0
    %p291 = por %p289, %p290
    %p292 = scmp.ne.s32.totalorder %s284, %s286
    %p293 = scmp.eq.s32.totalorder %s24, 1
    %p294 = por %p292, %p293
    %p295 = scmp.ne.s32.totalorder %s286, %s287
    %p296 = scmp.eq.s32.totalorder %s24, 0
    %p297 = por %p295, %p296
    %p298 = scmp.ne.s32.totalorder %s286, %s287
    %p299 = scmp.eq.s32.totalorder %s25, 1
    %p300 = por %p298, %p299
    %p302 = scmp.ne.s32.totalorder %s287, %s301
    %p303 = scmp.eq.s32.totalorder %s25, 0
    %p304 = por %p302, %p303
    %s305 = ssub.s32 %s19, %s26
    %p306 = scmp.eq.s32.totalorder %s305, 0
    %s308 = sadd.s32 %s307, 1
    %s309 = scalar_select %p306, %s307, %s308
    %p312 = pneg %p306
    %p313 = scmp.eq.s32.totalorder %s19, 1
    %p314 = por %p312, %p313
    %p315 = scmp.ne.s32.totalorder %s307, %s310
    %p316 = scmp.eq.s32.totalorder %s19, 0
    %p317 = por %p315, %p316
    %p318 = scmp.ne.s32.totalorder %s307, %s310
    %p319 = scmp.eq.s32.totalorder %s24, 1
    %p320 = por %p318, %p319
    %p321 = scmp.ne.s32.totalorder %s310, %s311
    %p322 = scmp.eq.s32.totalorder %s24, 0
    %p323 = por %p321, %p322
    %p324 = scmp.ne.s32.totalorder %s310, %s311
    %p325 = scmp.eq.s32.totalorder %s25, 1
    %p326 = por %p324, %p325
    %p328 = scmp.ne.s32.totalorder %s311, %s327
    %p329 = scmp.eq.s32.totalorder %s25, 0
    %p330 = por %p328, %p329
    %p331 = scmp.le.s32.totalorder 1, %s19
    %p332 = scmp.lt.s32.totalorder %s19, 3
    %p333 = pnand %p331, %p332
    %p334 = pneg %p333
    // Predicated region
    $region9: #{tfc_tdf_forward.2} parent=5 // pred_check
      _
    $region10: #{tfc_tdf_forward.2} parent=5 // pred_check_branch
      %336 = sbr.rel (%p333) target = $region12
    $region11: #{tfc_tdf_forward.2} parent=5 // pred_region
      %s337 = ssub.s32 %s19, 1
      // Predicated region
      $region13: #{tfc_tdf_forward.2} parent=11 // pred_check
        %p338 = pneg %p66
      $region14: #{tfc_tdf_forward.2} parent=11 // pred_check_branch
        %340 = sbr.rel (%p338) target = $region16
      $region15: #{tfc_tdf_forward.2} parent=11 // pred_region
        _
      $region16: #{tfc_tdf_forward.2} parent=11 // pred_fallthru
        _
      // Predicated region
      $region17: #{tfc_tdf_forward.2} parent=11 // pred_check
        %p341 = pneg %p87
      $region18: #{tfc_tdf_forward.2} parent=11 // pred_check_branch
        %343 = sbr.rel (%p341) target = $region20
      $region19: #{tfc_tdf_forward.2} parent=11 // pred_region
        _
      $region20: #{tfc_tdf_forward.2} parent=11 // pred_fallthru
        _
      // Predicated region
      $region21: #{tfc_tdf_forward.2} parent=11 // pred_check
        %p344 = pneg %p108
      $region22: #{tfc_tdf_forward.2} parent=11 // pred_check_branch
        %346 = sbr.rel (%p344) target = $region24
      $region23: #{tfc_tdf_forward.2} parent=11 // pred_region
        _
      $region24: #{tfc_tdf_forward.2} parent=11 // pred_fallthru
        _
      // Predicated region
      $region25: #{tfc_tdf_forward.2} parent=11 // pred_check
        %p347 = pneg %p129
      $region26: #{tfc_tdf_forward.2} parent=11 // pred_check_branch
        %349 = sbr.rel (%p347) target = $region28
      $region27: #{tfc_tdf_forward.2} parent=11 // pred_region
        _
      $region28: #{tfc_tdf_forward.2} parent=11 // pred_fallthru
        _
      // Predicated region
      $region29: #{tfc_tdf_forward.2} parent=11 // pred_check
        %p350 = pneg %p150
      $region30: #{tfc_tdf_forward.2} parent=11 // pred_check_branch
        %352 = sbr.rel (%p350) target = $region32
      $region31: #{tfc_tdf_forward.2} parent=11 // pred_region
        _
      $region32: #{tfc_tdf_forward.2} parent=11 // pred_fallthru
        _
      // Predicated region
      $region33: #{tfc_tdf_forward.2} parent=11 // pred_check
        %p353 = pneg %p171
      $region34: #{tfc_tdf_forward.2} parent=11 // pred_check_branch
        %355 = sbr.rel (%p353) target = $region36
      $region35: #{tfc_tdf_forward.2} parent=11 // pred_region
        _
      $region36: #{tfc_tdf_forward.2} parent=11 // pred_fallthru
        _
      // Predicated region
      $region37: #{tfc_tdf_forward.2} parent=11 // pred_check
        %p356 = pneg %p192
      $region38: #{tfc_tdf_forward.2} parent=11 // pred_check_branch
        %358 = sbr.rel (%p356) target = $region40
      $region39: #{tfc_tdf_forward.2} parent=11 // pred_region
        _
      $region40: #{tfc_tdf_forward.2} parent=11 // pred_fallthru
        _
      // Predicated region
      $region41: #{tfc_tdf_forward.2} parent=11 // pred_check
        %p359 = pneg %p213
      $region42: #{tfc_tdf_forward.2} parent=11 // pred_check_branch
        %361 = sbr.rel (%p359) target = $region44
      $region43: #{tfc_tdf_forward.2} parent=11 // pred_region
        _
      $region44: #{tfc_tdf_forward.2} parent=11 // pred_fallthru
        _
      // Predicated region
      $region45: #{tfc_tdf_forward.2} parent=11 // pred_check
        %p362 = pneg %p234
      $region46: #{tfc_tdf_forward.2} parent=11 // pred_check_branch
        %364 = sbr.rel (%p362) target = $region48
      $region47: #{tfc_tdf_forward.2} parent=11 // pred_region
        _
      $region48: #{tfc_tdf_forward.2} parent=11 // pred_fallthru
        _
      // Predicated region
      $region49: #{tfc_tdf_forward.2} parent=11 // pred_check
        %p365 = pneg %p255
      $region50: #{tfc_tdf_forward.2} parent=11 // pred_check_branch
        %367 = sbr.rel (%p365) target = $region52
      $region51: #{tfc_tdf_forward.2} parent=11 // pred_region
        _
      $region52: #{tfc_tdf_forward.2} parent=11 // pred_fallthru
        _
      // Predicated region
      $region53: #{tfc_tdf_forward.2} parent=11 // pred_check
        %p368 = pneg %p276
      $region54: #{tfc_tdf_forward.2} parent=11 // pred_check_branch
        %370 = sbr.rel (%p368) target = $region56
      $region55: #{tfc_tdf_forward.2} parent=11 // pred_region
        _
      $region56: #{tfc_tdf_forward.2} parent=11 // pred_fallthru
        _
      // Predicated region
      $region57: #{tfc_tdf_forward.2} parent=11 // pred_check
        %p371 = pneg %p297
      $region58: #{tfc_tdf_forward.2} parent=11 // pred_check_branch
        %373 = sbr.rel (%p371) target = $region60
      $region59: #{tfc_tdf_forward.2} parent=11 // pred_region
        _
      $region60: #{tfc_tdf_forward.2} parent=11 // pred_fallthru
        _
    $region12: #{tfc_tdf_forward.2} parent=5 // pred_fallthru
      _
    %p374 = scmp.lt.s32.totalorder %s19, 2
    // Predicated region
    $region61: #{tfc_tdf_forward.2} parent=5 // pred_check
      %p375 = pneg %p374
    $region62: #{tfc_tdf_forward.2} parent=5 // pred_check_branch
      %377 = sbr.rel (%p375) target = $region64
    $region63: #{tfc_tdf_forward.2} parent=5 // pred_region
      // Predicated region
      $region65: #{tfc_tdf_forward.2} parent=63 // pred_check
        %p378 = pneg %p39
      $region66: #{tfc_tdf_forward.2} parent=63 // pred_check_branch
        %380 = sbr.rel (%p378) target = $region68
      $region67: #{tfc_tdf_forward.2} parent=63 // pred_region
        %p381 = scmp.lt.s32.totalorder %s19, 1
        %s382 = scalar_select %p381, %s19, 1
        %s383 = smul.addr %s382, 16
        %s384 = smul.addr %s383, 4
        %s385 = scalar_lea.vmem %s0, %s384
      $region68: #{tfc_tdf_forward.2} parent=63 // pred_fallthru
        _
    $region64: #{tfc_tdf_forward.2} parent=5 // pred_fallthru
      _
    %p386 = scmp.le.s32.totalorder 1, %s19
    %p387 = scmp.lt.s32.totalorder %s19, 3
    %p388 = pnand %p386, %p387
    %p389 = pneg %p388
    // Predicated region
    $region69: #{tfc_tdf_forward.2} parent=5 // pred_check
      _
    $region70: #{tfc_tdf_forward.2} parent=5 // pred_check_branch
      %391 = sbr.rel (%p388) target = $region72
    $region71: #{tfc_tdf_forward.2} parent=5 // pred_region
      %s392 = ssub.s32 %s19, 1
      %p393 = scmp.lt.s32.totalorder %s24, 1
      %s394 = scalar_select %p393, %s24, 1
      %s395 = smul.addr %s394, 16
      %s396 = smul.addr %s395, 4
      %s397 = scalar_lea.vmem %s0, %s396
      %p398 = pneg %p45
      %p399 = pneg %p42
      %p400 = pneg %p66
      %p401 = pneg %p63
      %p402 = pneg %p87
      %p403 = pneg %p84
      %p404 = pneg %p108
      %p405 = pneg %p105
      %p406 = pneg %p129
      %p407 = pneg %p126
      %p408 = pneg %p150
      %p409 = pneg %p147
      %p410 = pneg %p171
      %p411 = pneg %p168
      %p412 = pneg %p192
      %p413 = pneg %p189
      %p414 = pneg %p213
      %p415 = pneg %p210
      %p416 = pneg %p234
      %p417 = pneg %p231
      %p418 = pneg %p255
      %p419 = pneg %p252
      %p420 = pneg %p276
      %p421 = pneg %p273
      %p422 = pneg %p297
      %p423 = pneg %p294
      %p424 = pneg %p323
      %p425 = pneg %p320
      %p426 = scmp.lt.s32.totalorder %s24, 1
      %s427 = scalar_select %p426, %s24, 1
      %s428 = smul.addr %s427, 16
      %s429 = smul.addr %s428, 8
      %s430 = scalar_lea.vmem %s13, %s429
      %p431 = scmp.lt.s32.totalorder %s24, 1
      %s432 = scalar_select %p431, %s24, 1
      %s433 = smul.addr %s432, 16
      %s434 = smul.addr %s433, 4
      %s435 = scalar_lea.vmem %s0, %s434
      %p436 = scmp.lt.s32.totalorder %s24, 1
      %s437 = scalar_select %p436, %s24, 1
      %s438 = smul.addr %s437, 16
      %s439 = smul.addr %s438, 8
      %s440 = scalar_lea.vmem %s13, %s439
      %v442 = vld [vmem:[%s435] sm:$0xf]
      %v443 = vld [vmem:[%s435 + $0x4] sm:$0xf]
      %v444 = vld [vmem:[%s435 + $0x8] sm:$0xf]
      %v445 = vld [vmem:[%s435 + $0xc] sm:$0xf]
      %v446 = vld [vmem:[%s435 + $0x10] sm:$0xf]
      %v447 = vld [vmem:[%s435 + $0x14] sm:$0xf]
      %v448 = vld [vmem:[%s435 + $0x18] sm:$0xf]
      %v449 = vld [vmem:[%s435 + $0x1c] sm:$0xf]
      %v450 = vld [vmem:[%s435 + $0x20] sm:$0xf]
      %v451 = vld [vmem:[%s435 + $0x24] sm:$0xf]
      %v452 = vld [vmem:[%s435 + $0x28] sm:$0xf]
      %v453 = vld [vmem:[%s435 + $0x2c] sm:$0xf]
      %v454 = vld [vmem:[%s435 + $0x30] sm:$0xf]
      %v455 = vld [vmem:[%s435 + $0x34] sm:$0xf]
      %v456 = vld [vmem:[%s435 + $0x38] sm:$0xf]
      %v457 = vld [vmem:[%s435 + $0x3c] sm:$0xf]
      %v458 = vld [vmem:[%s1] sm:$0xf]
      %v459 = vld [vmem:[%s2] sm:$0xf]
      %vm460 = vcmask 125952
      %v461 = vsel %vm460, %v442, 0.0
      %462 = vadd.xlane.f32.xlu0 %v461
      %v463 = vpop.xlane.xlu0 %462
      %v464 = vsel %vm460, %v443, 0.0
      %465 = vadd.xlane.f32.xlu0 %v464
      %v466 = vpop.xlane.xlu0 %465
      %v467 = vsel %vm460, %v444, 0.0
      %468 = vadd.xlane.f32.xlu0 %v467
      %v469 = vpop.xlane.xlu0 %468
      %v470 = vsel %vm460, %v445, 0.0
      %471 = vadd.xlane.f32.xlu0 %v470
      %v472 = vpop.xlane.xlu0 %471
      %v473 = vsel %vm460, %v446, 0.0
      %474 = vadd.xlane.f32.xlu0 %v473
      %v475 = vpop.xlane.xlu0 %474
      %v476 = vsel %vm460, %v447, 0.0
      %477 = vadd.xlane.f32.xlu0 %v476
      %v478 = vpop.xlane.xlu0 %477
      %v479 = vsel %vm460, %v448, 0.0
      %480 = vadd.xlane.f32.xlu0 %v479
      %v481 = vpop.xlane.xlu0 %480
      %v482 = vsel %vm460, %v449, 0.0
      %483 = vadd.xlane.f32.xlu0 %v482
      %v484 = vpop.xlane.xlu0 %483
      %v485 = vsel %vm460, %v450, 0.0
      %486 = vadd.xlane.f32.xlu0 %v485
      %v487 = vpop.xlane.xlu0 %486
      %v488 = vsel %vm460, %v451, 0.0
      %489 = vadd.xlane.f32.xlu0 %v488
      %v490 = vpop.xlane.xlu0 %489
      %v491 = vsel %vm460, %v452, 0.0
      %492 = vadd.xlane.f32.xlu0 %v491
      %v493 = vpop.xlane.xlu0 %492
      %v494 = vsel %vm460, %v453, 0.0
      %495 = vadd.xlane.f32.xlu0 %v494
      %v496 = vpop.xlane.xlu0 %495
      %v497 = vsel %vm460, %v454, 0.0
      %498 = vadd.xlane.f32.xlu0 %v497
      %v499 = vpop.xlane.xlu0 %498
      %v500 = vsel %vm460, %v455, 0.0
      %501 = vadd.xlane.f32.xlu0 %v500
      %v502 = vpop.xlane.xlu0 %501
      %v503 = vsel %vm460, %v456, 0.0
      %504 = vadd.xlane.f32.xlu0 %v503
      %v505 = vpop.xlane.xlu0 %504
      %v506 = vsel %vm460, %v457, 0.0
      %507 = vadd.xlane.f32.xlu0 %v506
      %v508 = vpop.xlane.xlu0 %507
      %vm509 = vcmask 1043456
      %v510 = vsel %vm509, %v463, 0.0
      %v511 = vsel %vm509, %v466, 0.0
      %v512 = vadd.f32 %v510, %v511
      %v513 = vsel %vm509, %v469, 0.0
      %v514 = vadd.f32 %v512, %v513
      %v515 = vsel %vm509, %v472, 0.0
      %v516 = vadd.f32 %v514, %v515
      %v517 = vsel %vm509, %v475, 0.0
      %v518 = vadd.f32 %v516, %v517
      %v519 = vsel %vm509, %v478, 0.0
      %v520 = vadd.f32 %v518, %v519
      %v521 = vsel %vm509, %v481, 0.0
      %v522 = vadd.f32 %v520, %v521
      %v523 = vsel %vm509, %v484, 0.0
      %v524 = vadd.f32 %v522, %v523
      %v525 = vsel %vm509, %v487, 0.0
      %v526 = vadd.f32 %v524, %v525
      %v527 = vsel %vm509, %v490, 0.0
      %v528 = vadd.f32 %v526, %v527
      %v529 = vsel %vm509, %v493, 0.0
      %v530 = vadd.f32 %v528, %v529
      %v531 = vsel %vm509, %v496, 0.0
      %v532 = vadd.f32 %v530, %v531
      %v533 = vsel %vm509, %v499, 0.0
      %v534 = vadd.f32 %v532, %v533
      %v535 = vsel %vm509, %v502, 0.0
      %v536 = vadd.f32 %v534, %v535
      %v537 = vsel %vm509, %v505, 0.0
      %v538 = vadd.f32 %v536, %v537
      %v539 = vsel %vm509, %v508, 0.0
      %v540 = vadd.f32 %v538, %v539
      %v541 = vmul.f32 %v442, %v442
      %v542 = vmul.f32 %v443, %v443
      %v543 = vmul.f32 %v444, %v444
      %v544 = vmul.f32 %v445, %v445
      %v545 = vmul.f32 %v446, %v446
      %v546 = vmul.f32 %v447, %v447
      %v547 = vmul.f32 %v448, %v448
      %v548 = vmul.f32 %v449, %v449
      %v549 = vmul.f32 %v450, %v450
      %v550 = vmul.f32 %v451, %v451
      %v551 = vmul.f32 %v452, %v452
      %v552 = vmul.f32 %v453, %v453
      %v553 = vmul.f32 %v454, %v454
      %v554 = vmul.f32 %v455, %v455
      %v555 = vmul.f32 %v456, %v456
      %v556 = vmul.f32 %v457, %v457
      %v557 = vsel %vm460, %v541, 0.0
      %558 = vadd.xlane.f32.xlu0 %v557
      %v559 = vpop.xlane.xlu0 %558
      %v560 = vsel %vm460, %v542, 0.0
      %561 = vadd.xlane.f32.xlu0 %v560
      %v562 = vpop.xlane.xlu0 %561
      %v563 = vsel %vm460, %v543, 0.0
      %564 = vadd.xlane.f32.xlu0 %v563
      %v565 = vpop.xlane.xlu0 %564
      %v566 = vsel %vm460, %v544, 0.0
      %567 = vadd.xlane.f32.xlu0 %v566
      %v568 = vpop.xlane.xlu0 %567
      %v569 = vsel %vm460, %v545, 0.0
      %570 = vadd.xlane.f32.xlu0 %v569
      %v571 = vpop.xlane.xlu0 %570
      %v572 = vsel %vm460, %v546, 0.0
      %573 = vadd.xlane.f32.xlu0 %v572
      %v574 = vpop.xlane.xlu0 %573
      %v575 = vsel %vm460, %v547, 0.0
      %576 = vadd.xlane.f32.xlu0 %v575
      %v577 = vpop.xlane.xlu0 %576
      %v578 = vsel %vm460, %v548, 0.0
      %579 = vadd.xlane.f32.xlu0 %v578
      %v580 = vpop.xlane.xlu0 %579
      %v581 = vsel %vm460, %v549, 0.0
      %582 = vadd.xlane.f32.xlu0 %v581
      %v583 = vpop.xlane.xlu0 %582
      %v584 = vsel %vm460, %v550, 0.0
      %585 = vadd.xlane.f32.xlu0 %v584
      %v586 = vpop.xlane.xlu0 %585
      %v587 = vsel %vm460, %v551, 0.0
      %588 = vadd.xlane.f32.xlu0 %v587
      %v589 = vpop.xlane.xlu0 %588
      %v590 = vsel %vm460, %v552, 0.0
      %591 = vadd.xlane.f32.xlu0 %v590
      %v592 = vpop.xlane.xlu0 %591
      %v593 = vsel %vm460, %v553, 0.0
      %594 = vadd.xlane.f32.xlu0 %v593
      %v595 = vpop.xlane.xlu0 %594
      %v596 = vsel %vm460, %v554, 0.0
      %597 = vadd.xlane.f32.xlu0 %v596
      %v598 = vpop.xlane.xlu0 %597
      %v599 = vsel %vm460, %v555, 0.0
      %600 = vadd.xlane.f32.xlu0 %v599
      %v601 = vpop.xlane.xlu0 %600
      %v602 = vsel %vm460, %v556, 0.0
      %603 = vadd.xlane.f32.xlu0 %v602
      %v604 = vpop.xlane.xlu0 %603
      %v605 = vsel %vm509, %v559, 0.0
      %v606 = vsel %vm509, %v562, 0.0
      %v607 = vadd.f32 %v605, %v606
      %v608 = vsel %vm509, %v565, 0.0
      %v609 = vadd.f32 %v607, %v608
      %v610 = vsel %vm509, %v568, 0.0
      %v611 = vadd.f32 %v609, %v610
      %v612 = vsel %vm509, %v571, 0.0
      %v613 = vadd.f32 %v611, %v612
      %v614 = vsel %vm509, %v574, 0.0
      %v615 = vadd.f32 %v613, %v614
      %v616 = vsel %vm509, %v577, 0.0
      %v617 = vadd.f32 %v615, %v616
      %v618 = vsel %vm509, %v580, 0.0
      %v619 = vadd.f32 %v617, %v618
      %v620 = vsel %vm509, %v583, 0.0
      %v621 = vadd.f32 %v619, %v620
      %v622 = vsel %vm509, %v586, 0.0
      %v623 = vadd.f32 %v621, %v622
      %v624 = vsel %vm509, %v589, 0.0
      %v625 = vadd.f32 %v623, %v624
      %v626 = vsel %vm509, %v592, 0.0
      %v627 = vadd.f32 %v625, %v626
      %v628 = vsel %vm509, %v595, 0.0
      %v629 = vadd.f32 %v627, %v628
      %v630 = vsel %vm509, %v598, 0.0
      %v631 = vadd.f32 %v629, %v630
      %v632 = vsel %vm509, %v601, 0.0
      %v633 = vadd.f32 %v631, %v632
      %v634 = vsel %vm509, %v604, 0.0
      %v635 = vadd.f32 %v633, %v634
      %v636 = vmul.f32 %v540, 0.00390625
      %v637 = vmul.f32 %v635, 0.00390625
      %v638 = vmul.f32 %v636, %v636
      %v639 = vsub.f32 %v637, %v638
      %v640 = vmax.f32 %v639, 0.0
      %v641 = vsub.f32 %v442, %v636
      %v642 = vsub.f32 %v443, %v636
      %v643 = vsub.f32 %v444, %v636
      %v644 = vsub.f32 %v445, %v636
      %v645 = vsub.f32 %v446, %v636
      %v646 = vsub.f32 %v447, %v636
      %v647 = vsub.f32 %v448, %v636
      %v648 = vsub.f32 %v449, %v636
      %v649 = vsub.f32 %v450, %v636
      %v650 = vsub.f32 %v451, %v636
      %v651 = vsub.f32 %v452, %v636
      %v652 = vsub.f32 %v453, %v636
      %v653 = vsub.f32 %v454, %v636
      %v654 = vsub.f32 %v455, %v636
      %v655 = vsub.f32 %v456, %v636
      %v656 = vsub.f32 %v457, %v636
      %v657 = vadd.f32 %v640, 1e-05
      %v658 = vrsqrt.pop %v657
      %v659 = vmul.f32 %v658, %v657
      %v660 = vmul.f32 %v659, %v658
      %v661 = vmul.f32 0.5, %v660
      %v662 = vsub.f32 1.5, %v661
      %v663 = vmul.f32 %v658, %v662
      %vm664 = vweird.f32 %v657
      %vm665 = vweird.f32 %v658
      %vm666 = vmor %vm664, %vm665
      %v667 = vsel %vm666, %v658, %v663
      %v668 = vmul.f32 %v641, %v667
      %v669 = vmul.f32 %v642, %v667
      %v670 = vmul.f32 %v643, %v667
      %v671 = vmul.f32 %v644, %v667
      %v672 = vmul.f32 %v645, %v667
      %v673 = vmul.f32 %v646, %v667
      %v674 = vmul.f32 %v647, %v667
      %v675 = vmul.f32 %v648, %v667
      %v676 = vmul.f32 %v649, %v667
      %v677 = vmul.f32 %v650, %v667
      %v678 = vmul.f32 %v651, %v667
      %v679 = vmul.f32 %v652, %v667
      %v680 = vmul.f32 %v653, %v667
      %v681 = vmul.f32 %v654, %v667
      %v682 = vmul.f32 %v655, %v667
      %v683 = vmul.f32 %v656, %v667
      %685 = vset.pattern.permute.xlu0 0
      %686 = vperm.xlu0 %685, %v458
      %v687 = vpop.permute.xlu0 %686
      %v689 = vmul.f32 %v668, %v687
      %v690 = vmul.f32 %v669, %v687
      %v691 = vmul.f32 %v670, %v687
      %v692 = vmul.f32 %v671, %v687
      %v693 = vmul.f32 %v672, %v687
      %v694 = vmul.f32 %v673, %v687
      %v695 = vmul.f32 %v674, %v687
      %v696 = vmul.f32 %v675, %v687
      %v697 = vmul.f32 %v676, %v687
      %v698 = vmul.f32 %v677, %v687
      %v699 = vmul.f32 %v678, %v687
      %v700 = vmul.f32 %v679, %v687
      %v701 = vmul.f32 %v680, %v687
      %v702 = vmul.f32 %v681, %v687
      %v703 = vmul.f32 %v682, %v687
      %v704 = vmul.f32 %v683, %v687
      %706 = vset.pattern.permute.xlu0 0
      %707 = vperm.xlu0 %706, %v459
      %v708 = vpop.permute.xlu0 %707
      %v710 = vadd.f32 %v689, %v708
      %v711 = vadd.f32 %v690, %v708
      %v712 = vadd.f32 %v691, %v708
      %v713 = vadd.f32 %v692, %v708
      %v714 = vadd.f32 %v693, %v708
      %v715 = vadd.f32 %v694, %v708
      %v716 = vadd.f32 %v695, %v708
      %v717 = vadd.f32 %v696, %v708
      %v718 = vadd.f32 %v697, %v708
      %v719 = vadd.f32 %v698, %v708
      %v720 = vadd.f32 %v699, %v708
      %v721 = vadd.f32 %v700, %v708
      %v722 = vadd.f32 %v701, %v708
      %v723 = vadd.f32 %v702, %v708
      %v724 = vadd.f32 %v703, %v708
      %v725 = vadd.f32 %v704, %v708
      %v726 = vmul.f32 %v710, %v710
      %v727 = vmul.f32 %v711, %v711
      %v728 = vmul.f32 %v712, %v712
      %v729 = vmul.f32 %v713, %v713
      %v730 = vmul.f32 %v714, %v714
      %v731 = vmul.f32 %v715, %v715
      %v732 = vmul.f32 %v716, %v716
      %v733 = vmul.f32 %v717, %v717
      %v734 = vmul.f32 %v718, %v718
      %v735 = vmul.f32 %v719, %v719
      %v736 = vmul.f32 %v720, %v720
      %v737 = vmul.f32 %v721, %v721
      %v738 = vmul.f32 %v722, %v722
      %v739 = vmul.f32 %v723, %v723
      %v740 = vmul.f32 %v724, %v724
      %v741 = vmul.f32 %v725, %v725
      %v742 = vmul.f32 %v710, %v726
      %v743 = vmul.f32 %v711, %v727
      %v744 = vmul.f32 %v712, %v728
      %v745 = vmul.f32 %v713, %v729
      %v746 = vmul.f32 %v714, %v730
      %v747 = vmul.f32 %v715, %v731
      %v748 = vmul.f32 %v716, %v732
      %v749 = vmul.f32 %v717, %v733
      %v750 = vmul.f32 %v718, %v734
      %v751 = vmul.f32 %v719, %v735
      %v752 = vmul.f32 %v720, %v736
      %v753 = vmul.f32 %v721, %v737
      %v754 = vmul.f32 %v722, %v738
      %v755 = vmul.f32 %v723, %v739
      %v756 = vmul.f32 %v724, %v740
      %v757 = vmul.f32 %v725, %v741
      %v758 = vmul.f32 %v742, 0.044715
      %v759 = vmul.f32 %v743, 0.044715
      %v760 = vmul.f32 %v744, 0.044715
      %v761 = vmul.f32 %v745, 0.044715
      %v762 = vmul.f32 %v746, 0.044715
      %v763 = vmul.f32 %v747, 0.044715
      %v764 = vmul.f32 %v748, 0.044715
      %v765 = vmul.f32 %v749, 0.044715
      %v766 = vmul.f32 %v750, 0.044715
      %v767 = vmul.f32 %v751, 0.044715
      %v768 = vmul.f32 %v752, 0.044715
      %v769 = vmul.f32 %v753, 0.044715
      %v770 = vmul.f32 %v754, 0.044715
      %v771 = vmul.f32 %v755, 0.044715
      %v772 = vmul.f32 %v756, 0.044715
      %v773 = vmul.f32 %v757, 0.044715
      %v774 = vadd.f32 %v710, %v758
      %v775 = vadd.f32 %v711, %v759
      %v776 = vadd.f32 %v712, %v760
      %v777 = vadd.f32 %v713, %v761
      %v778 = vadd.f32 %v714, %v762
      %v779 = vadd.f32 %v715, %v763
      %v780 = vadd.f32 %v716, %v764
      %v781 = vadd.f32 %v717, %v765
      %v782 = vadd.f32 %v718, %v766
      %v783 = vadd.f32 %v719, %v767
      %v784 = vadd.f32 %v720, %v768
      %v785 = vadd.f32 %v721, %v769
      %v786 = vadd.f32 %v722, %v770
      %v787 = vadd.f32 %v723, %v771
      %v788 = vadd.f32 %v724, %v772
      %v789 = vadd.f32 %v725, %v773
      %v790 = vmul.f32 %v774, 0.7978846
      %v791 = vmul.f32 %v775, 0.7978846
      %v792 = vmul.f32 %v776, 0.7978846
      %v793 = vmul.f32 %v777, 0.7978846
      %v794 = vmul.f32 %v778, 0.7978846
      %v795 = vmul.f32 %v779, 0.7978846
      %v796 = vmul.f32 %v780, 0.7978846
      %v797 = vmul.f32 %v781, 0.7978846
      %v798 = vmul.f32 %v782, 0.7978846
      %v799 = vmul.f32 %v783, 0.7978846
      %v800 = vmul.f32 %v784, 0.7978846
      %v801 = vmul.f32 %v785, 0.7978846
      %v802 = vmul.f32 %v786, 0.7978846
      %v803 = vmul.f32 %v787, 0.7978846
      %v804 = vmul.f32 %v788, 0.7978846
      %v805 = vmul.f32 %v789, 0.7978846
      %v806 = vtanh.pop %v790
      %v807 = vtanh.pop %v791
      %v808 = vtanh.pop %v792
      %v809 = vtanh.pop %v793
      %v810 = vtanh.pop %v794
      %v811 = vtanh.pop %v795
      %v812 = vtanh.pop %v796
      %v813 = vtanh.pop %v797
      %v814 = vtanh.pop %v798
      %v815 = vtanh.pop %v799
      %v816 = vtanh.pop %v800
      %v817 = vtanh.pop %v801
      %v818 = vtanh.pop %v802
      %v819 = vtanh.pop %v803
      %v820 = vtanh.pop %v804
      %v821 = vtanh.pop %v805
      %v822 = vadd.f32 %v806, 1.0
      %v823 = vadd.f32 %v807, 1.0
      %v824 = vadd.f32 %v808, 1.0
      %v825 = vadd.f32 %v809, 1.0
      %v826 = vadd.f32 %v810, 1.0
      %v827 = vadd.f32 %v811, 1.0
      %v828 = vadd.f32 %v812, 1.0
      %v829 = vadd.f32 %v813, 1.0
      %v830 = vadd.f32 %v814, 1.0
      %v831 = vadd.f32 %v815, 1.0
      %v832 = vadd.f32 %v816, 1.0
      %v833 = vadd.f32 %v817, 1.0
      %v834 = vadd.f32 %v818, 1.0
      %v835 = vadd.f32 %v819, 1.0
      %v836 = vadd.f32 %v820, 1.0
      %v837 = vadd.f32 %v821, 1.0
      %v838 = vmul.f32 %v822, 0.5
      %v839 = vmul.f32 %v823, 0.5
      %v840 = vmul.f32 %v824, 0.5
      %v841 = vmul.f32 %v825, 0.5
      %v842 = vmul.f32 %v826, 0.5
      %v843 = vmul.f32 %v827, 0.5
      %v844 = vmul.f32 %v828, 0.5
      %v845 = vmul.f32 %v829, 0.5
      %v846 = vmul.f32 %v830, 0.5
      %v847 = vmul.f32 %v831, 0.5
      %v848 = vmul.f32 %v832, 0.5
      %v849 = vmul.f32 %v833, 0.5
      %v850 = vmul.f32 %v834, 0.5
      %v851 = vmul.f32 %v835, 0.5
      %v852 = vmul.f32 %v836, 0.5
      %v853 = vmul.f32 %v837, 0.5
      %v854 = vmul.f32 %v710, %v838
      %v855 = vmul.f32 %v711, %v839
      %v856 = vmul.f32 %v712, %v840
      %v857 = vmul.f32 %v713, %v841
      %v858 = vmul.f32 %v714, %v842
      %v859 = vmul.f32 %v715, %v843
      %v860 = vmul.f32 %v716, %v844
      %v861 = vmul.f32 %v717, %v845
      %v862 = vmul.f32 %v718, %v846
      %v863 = vmul.f32 %v719, %v847
      %v864 = vmul.f32 %v720, %v848
      %v865 = vmul.f32 %v721, %v849
      %v866 = vmul.f32 %v722, %v850
      %v867 = vmul.f32 %v723, %v851
      %v868 = vmul.f32 %v724, %v852
      %v869 = vmul.f32 %v725, %v853
      %v870 = vpack.c.bf16 %v854, %v854
      %v871 = vpack.c.bf16 %v855, %v855
      %v872 = vpack.c.bf16 %v856, %v856
      %v873 = vpack.c.bf16 %v857, %v857
      %v874 = vpack.c.bf16 %v858, %v858
      %v875 = vpack.c.bf16 %v859, %v859
      %v876 = vpack.c.bf16 %v860, %v860
      %v877 = vpack.c.bf16 %v861, %v861
      %v878 = vpack.c.bf16 %v862, %v862
      %v879 = vpack.c.bf16 %v863, %v863
      %v880 = vpack.c.bf16 %v864, %v864
      %v881 = vpack.c.bf16 %v865, %v865
      %v882 = vpack.c.bf16 %v866, %v866
      %v883 = vpack.c.bf16 %v867, %v867
      %v884 = vpack.c.bf16 %v868, %v868
      %v885 = vpack.c.bf16 %v869, %v869
      %901 = vrot.lane.b32.xlu0 %v870, 1
      %v902 = vpop.permute.xlu0 %901
      %903 = vrot.lane.b32.xlu0 %v871, 1
      %v904 = vpop.permute.xlu0 %903
      %905 = vrot.lane.b32.xlu0 %v872, 1
      %v906 = vpop.permute.xlu0 %905
      %907 = vrot.lane.b32.xlu0 %v873, 1
      %v908 = vpop.permute.xlu0 %907
      %909 = vrot.lane.b32.xlu0 %v874, 1
      %v910 = vpop.permute.xlu0 %909
      %911 = vrot.lane.b32.xlu0 %v875, 1
      %v912 = vpop.permute.xlu0 %911
      %913 = vrot.lane.b32.xlu0 %v876, 1
      %v914 = vpop.permute.xlu0 %913
      %915 = vrot.lane.b32.xlu0 %v877, 1
      %v916 = vpop.permute.xlu0 %915
      %917 = vrot.lane.b32.xlu0 %v878, 1
      %v918 = vpop.permute.xlu0 %917
      %919 = vrot.lane.b32.xlu0 %v879, 1
      %v920 = vpop.permute.xlu0 %919
      %921 = vrot.lane.b32.xlu0 %v880, 1
      %v922 = vpop.permute.xlu0 %921
      %923 = vrot.lane.b32.xlu0 %v881, 1
      %v924 = vpop.permute.xlu0 %923
      %925 = vrot.lane.b32.xlu0 %v882, 1
      %v926 = vpop.permute.xlu0 %925
      %927 = vrot.lane.b32.xlu0 %v883, 1
      %v928 = vpop.permute.xlu0 %927
      %929 = vrot.lane.b32.xlu0 %v884, 1
      %v930 = vpop.permute.xlu0 %929
      %s946 = scalar_lea.vmem [#allocation2], 40
      %vm947 = vcmask 123912
      %948 = vst.msk [vmem:[%s946] sm:$0x3] %vm947, %v902
      %949 = vst.msk [vmem:[%s946 + $0x28] sm:$0x3] %vm947, %v904
      %950 = vst.msk [vmem:[%s946 + $0x50] sm:$0x3] %vm947, %v906
      %951 = vst.msk [vmem:[%s946 + $0x78] sm:$0x3] %vm947, %v908
      %952 = vst.msk [vmem:[%s946 + $0xa0] sm:$0x3] %vm947, %v910
      %953 = vst.msk [vmem:[%s946 + $0xc8] sm:$0x3] %vm947, %v912
      %954 = vst.msk [vmem:[%s946 + $0xf0] sm:$0x3] %vm947, %v914
      %955 = vst.msk [vmem:[%s946 + $0x118] sm:$0x3] %vm947, %v916
      %956 = vst.msk [vmem:[%s946 + $0x140] sm:$0x3] %vm947, %v918
      %957 = vst.msk [vmem:[%s946 + $0x168] sm:$0x3] %vm947, %v920
      %958 = vst.msk [vmem:[%s946 + $0x190] sm:$0x3] %vm947, %v922
      %959 = vst.msk [vmem:[%s946 + $0x1b8] sm:$0x3] %vm947, %v924
      %960 = vst.msk [vmem:[%s946 + $0x1e0] sm:$0x3] %vm947, %v926
      %961 = vst.msk [vmem:[%s946 + $0x208] sm:$0x3] %vm947, %v928
      %962 = vst.msk [vmem:[%s946 + $0x230] sm:$0x3] %vm947, %v930
      %vm963 = vcmask 123904
      %964 = vst.msk [vmem:[#allocation2] sm:$0x3] %vm963, 0
      %vm965 = vcmask 1024
      %966 = vst.msk [vmem:[#allocation2] sm:$0x3] %vm965, 0
      %967 = vst.msk [vmem:[#allocation2 + $0x28] sm:$0x3] %vm965, 0
      %968 = vst.msk [vmem:[#allocation2 + $0x50] sm:$0x3] %vm965, 0
      %969 = vst.msk [vmem:[#allocation2 + $0x78] sm:$0x3] %vm965, 0
      %970 = vst.msk [vmem:[#allocation2 + $0xa0] sm:$0x3] %vm965, 0
      %971 = vst.msk [vmem:[#allocation2 + $0xc8] sm:$0x3] %vm965, 0
      %972 = vst.msk [vmem:[#allocation2 + $0xf0] sm:$0x3] %vm965, 0
      %973 = vst.msk [vmem:[#allocation2 + $0x118] sm:$0x3] %vm965, 0
      %974 = vst.msk [vmem:[#allocation2 + $0x140] sm:$0x3] %vm965, 0
      %975 = vst.msk [vmem:[#allocation2 + $0x168] sm:$0x3] %vm965, 0
      %976 = vst.msk [vmem:[#allocation2 + $0x190] sm:$0x3] %vm965, 0
      %977 = vst.msk [vmem:[#allocation2 + $0x1b8] sm:$0x3] %vm965, 0
      %978 = vst.msk [vmem:[#allocation2 + $0x1e0] sm:$0x3] %vm965, 0
      %979 = vst.msk [vmem:[#allocation2 + $0x208] sm:$0x3] %vm965, 0
      %980 = vst.msk [vmem:[#allocation2 + $0x230] sm:$0x3] %vm965, 0
      %981 = vst.msk [vmem:[#allocation2 + $0x258] sm:$0x3] %vm965, 0
      %v982 = vrot.slane %v870, 6
      %v983 = vrot.slane %v871, 6
      %v984 = vrot.slane %v872, 6
      %v985 = vrot.slane %v873, 6
      %v986 = vrot.slane %v874, 6
      %v987 = vrot.slane %v875, 6
      %v988 = vrot.slane %v876, 6
      %v989 = vrot.slane %v877, 6
      %v990 = vrot.slane %v878, 6
      %v991 = vrot.slane %v879, 6
      %v992 = vrot.slane %v880, 6
      %v993 = vrot.slane %v881, 6
      %v994 = vrot.slane %v882, 6
      %v995 = vrot.slane %v883, 6
      %v996 = vrot.slane %v884, 6
      %vm1012 = vcmask 125954
      %1013 = vst.msk [vmem:[%s946] sm:$0xc] %vm1012, %v982
      %1014 = vst.msk [vmem:[%s946 + $0x28] sm:$0xc] %vm1012, %v983
      %1015 = vst.msk [vmem:[%s946 + $0x50] sm:$0xc] %vm1012, %v984
      %1016 = vst.msk [vmem:[%s946 + $0x78] sm:$0xc] %vm1012, %v985
      %1017 = vst.msk [vmem:[%s946 + $0xa0] sm:$0xc] %vm1012, %v986
      %1018 = vst.msk [vmem:[%s946 + $0xc8] sm:$0xc] %vm1012, %v987
      %1019 = vst.msk [vmem:[%s946 + $0xf0] sm:$0xc] %vm1012, %v988
      %1020 = vst.msk [vmem:[%s946 + $0x118] sm:$0xc] %vm1012, %v989
      %1021 = vst.msk [vmem:[%s946 + $0x140] sm:$0xc] %vm1012, %v990
      %1022 = vst.msk [vmem:[%s946 + $0x168] sm:$0xc] %vm1012, %v991
      %1023 = vst.msk [vmem:[%s946 + $0x190] sm:$0xc] %vm1012, %v992
      %1024 = vst.msk [vmem:[%s946 + $0x1b8] sm:$0xc] %vm1012, %v993
      %1025 = vst.msk [vmem:[%s946 + $0x1e0] sm:$0xc] %vm1012, %v994
      %1026 = vst.msk [vmem:[%s946 + $0x208] sm:$0xc] %vm1012, %v995
      %1027 = vst.msk [vmem:[%s946 + $0x230] sm:$0xc] %vm1012, %v996
      %1028 = vst.msk [vmem:[#allocation2] sm:$0xc] %vm1012, 0
      %1029 = vrot.lane.b32.xlu0 %v870, 127
      %v1030 = vpop.permute.xlu0 %1029
      %1031 = vrot.lane.b32.xlu0 %v871, 127
      %v1032 = vpop.permute.xlu0 %1031
      %1033 = vrot.lane.b32.xlu0 %v872, 127
      %v1034 = vpop.permute.xlu0 %1033
      %1035 = vrot.lane.b32.xlu0 %v873, 127
      %v1036 = vpop.permute.xlu0 %1035
      %1037 = vrot.lane.b32.xlu0 %v874, 127
      %v1038 = vpop.permute.xlu0 %1037
      %1039 = vrot.lane.b32.xlu0 %v875, 127
      %v1040 = vpop.permute.xlu0 %1039
      %1041 = vrot.lane.b32.xlu0 %v876, 127
      %v1042 = vpop.permute.xlu0 %1041
      %1043 = vrot.lane.b32.xlu0 %v877, 127
      %v1044 = vpop.permute.xlu0 %1043
      %1045 = vrot.lane.b32.xlu0 %v878, 127
      %v1046 = vpop.permute.xlu0 %1045
      %1047 = vrot.lane.b32.xlu0 %v879, 127
      %v1048 = vpop.permute.xlu0 %1047
      %1049 = vrot.lane.b32.xlu0 %v880, 127
      %v1050 = vpop.permute.xlu0 %1049
      %1051 = vrot.lane.b32.xlu0 %v881, 127
      %v1052 = vpop.permute.xlu0 %1051
      %1053 = vrot.lane.b32.xlu0 %v882, 127
      %v1054 = vpop.permute.xlu0 %1053
      %1055 = vrot.lane.b32.xlu0 %v883, 127
      %v1056 = vpop.permute.xlu0 %1055
      %1057 = vrot.lane.b32.xlu0 %v884, 127
      %v1058 = vpop.permute.xlu0 %1057
      %vm1074 = vcmask 115712
      %1075 = vst.msk [vmem:[%s946 + $0x4] sm:$0x3] %vm1074, %v1030
      %1076 = vst.msk [vmem:[%s946 + $0x2c] sm:$0x3] %vm1074, %v1032
      %1077 = vst.msk [vmem:[%s946 + $0x54] sm:$0x3] %vm1074, %v1034
      %1078 = vst.msk [vmem:[%s946 + $0x7c] sm:$0x3] %vm1074, %v1036
      %1079 = vst.msk [vmem:[%s946 + $0xa4] sm:$0x3] %vm1074, %v1038
      %1080 = vst.msk [vmem:[%s946 + $0xcc] sm:$0x3] %vm1074, %v1040
      %1081 = vst.msk [vmem:[%s946 + $0xf4] sm:$0x3] %vm1074, %v1042
      %1082 = vst.msk [vmem:[%s946 + $0x11c] sm:$0x3] %vm1074, %v1044
      %1083 = vst.msk [vmem:[%s946 + $0x144] sm:$0x3] %vm1074, %v1046
      %1084 = vst.msk [vmem:[%s946 + $0x16c] sm:$0x3] %vm1074, %v1048
      %1085 = vst.msk [vmem:[%s946 + $0x194] sm:$0x3] %vm1074, %v1050
      %1086 = vst.msk [vmem:[%s946 + $0x1bc] sm:$0x3] %vm1074, %v1052
      %1087 = vst.msk [vmem:[%s946 + $0x1e4] sm:$0x3] %vm1074, %v1054
      %1088 = vst.msk [vmem:[%s946 + $0x20c] sm:$0x3] %vm1074, %v1056
      %1089 = vst.msk [vmem:[%s946 + $0x234] sm:$0x3] %vm1074, %v1058
      %1090 = vst.msk [vmem:[#allocation2 + $0x4] sm:$0x3] %vm963, 0
      %vm1091 = vcmask 124024
      %1092 = vst.msk [vmem:[#allocation2 + $0x4] sm:$0x3] %vm1091, 0
      %1093 = vst.msk [vmem:[#allocation2 + $0x2c] sm:$0x3] %vm1091, 0
      %1094 = vst.msk [vmem:[#allocation2 + $0x54] sm:$0x3] %vm1091, 0
      %1095 = vst.msk [vmem:[#allocation2 + $0x7c] sm:$0x3] %vm1091, 0
      %1096 = vst.msk [vmem:[#allocation2 + $0xa4] sm:$0x3] %vm1091, 0
      %1097 = vst.msk [vmem:[#allocation2 + $0xcc] sm:$0x3] %vm1091, 0
      %1098 = vst.msk [vmem:[#allocation2 + $0xf4] sm:$0x3] %vm1091, 0
      %1099 = vst.msk [vmem:[#allocation2 + $0x11c] sm:$0x3] %vm1091, 0
      %1100 = vst.msk [vmem:[#allocation2 + $0x144] sm:$0x3] %vm1091, 0
      %1101 = vst.msk [vmem:[#allocation2 + $0x16c] sm:$0x3] %vm1091, 0
      %1102 = vst.msk [vmem:[#allocation2 + $0x194] sm:$0x3] %vm1091, 0
      %1103 = vst.msk [vmem:[#allocation2 + $0x1bc] sm:$0x3] %vm1091, 0
      %1104 = vst.msk [vmem:[#allocation2 + $0x1e4] sm:$0x3] %vm1091, 0
      %1105 = vst.msk [vmem:[#allocation2 + $0x20c] sm:$0x3] %vm1091, 0
      %1106 = vst.msk [vmem:[#allocation2 + $0x234] sm:$0x3] %vm1091, 0
      %1107 = vst.msk [vmem:[#allocation2 + $0x25c] sm:$0x3] %vm1091, 0
      %v1109 = vrot.slane %v885, 6
      %1110 = vrot.lane.b32.xlu0 %v982, 1
      %v1111 = vpop.permute.xlu0 %1110
      %1112 = vrot.lane.b32.xlu0 %v983, 1
      %v1113 = vpop.permute.xlu0 %1112
      %1114 = vrot.lane.b32.xlu0 %v984, 1
      %v1115 = vpop.permute.xlu0 %1114
      %1116 = vrot.lane.b32.xlu0 %v985, 1
      %v1117 = vpop.permute.xlu0 %1116
      %1118 = vrot.lane.b32.xlu0 %v986, 1
      %v1119 = vpop.permute.xlu0 %1118
      %1120 = vrot.lane.b32.xlu0 %v987, 1
      %v1121 = vpop.permute.xlu0 %1120
      %1122 = vrot.lane.b32.xlu0 %v988, 1
      %v1123 = vpop.permute.xlu0 %1122
      %1124 = vrot.lane.b32.xlu0 %v989, 1
      %v1125 = vpop.permute.xlu0 %1124
      %1126 = vrot.lane.b32.xlu0 %v990, 1
      %v1127 = vpop.permute.xlu0 %1126
      %1128 = vrot.lane.b32.xlu0 %v991, 1
      %v1129 = vpop.permute.xlu0 %1128
      %1130 = vrot.lane.b32.xlu0 %v992, 1
      %v1131 = vpop.permute.xlu0 %1130
      %1132 = vrot.lane.b32.xlu0 %v993, 1
      %v1133 = vpop.permute.xlu0 %1132
      %1134 = vrot.lane.b32.xlu0 %v994, 1
      %v1135 = vpop.permute.xlu0 %1134
      %1136 = vrot.lane.b32.xlu0 %v995, 1
      %v1137 = vpop.permute.xlu0 %1136
      %1138 = vrot.lane.b32.xlu0 %v996, 1
      %v1139 = vpop.permute.xlu0 %1138
      %1140 = vrot.lane.b32.xlu0 %v1109, 1
      %v1141 = vpop.permute.xlu0 %1140
      %vm1158 = vcmask 125962
      %1159 = vst.msk [vmem:[#allocation2 + $0x4] sm:$0xc] %vm1158, %v1111
      %1160 = vst.msk [vmem:[#allocation2 + $0x2c] sm:$0xc] %vm1158, %v1113
      %1161 = vst.msk [vmem:[#allocation2 + $0x54] sm:$0xc] %vm1158, %v1115
      %1162 = vst.msk [vmem:[#allocation2 + $0x7c] sm:$0xc] %vm1158, %v1117
      %1163 = vst.msk [vmem:[#allocation2 + $0xa4] sm:$0xc] %vm1158, %v1119
      %1164 = vst.msk [vmem:[#allocation2 + $0xcc] sm:$0xc] %vm1158, %v1121
      %1165 = vst.msk [vmem:[#allocation2 + $0xf4] sm:$0xc] %vm1158, %v1123
      %1166 = vst.msk [vmem:[#allocation2 + $0x11c] sm:$0xc] %vm1158, %v1125
      %1167 = vst.msk [vmem:[#allocation2 + $0x144] sm:$0xc] %vm1158, %v1127
      %1168 = vst.msk [vmem:[#allocation2 + $0x16c] sm:$0xc] %vm1158, %v1129
      %1169 = vst.msk [vmem:[#allocation2 + $0x194] sm:$0xc] %vm1158, %v1131
      %1170 = vst.msk [vmem:[#allocation2 + $0x1bc] sm:$0xc] %vm1158, %v1133
      %1171 = vst.msk [vmem:[#allocation2 + $0x1e4] sm:$0xc] %vm1158, %v1135
      %1172 = vst.msk [vmem:[#allocation2 + $0x20c] sm:$0xc] %vm1158, %v1137
      %1173 = vst.msk [vmem:[#allocation2 + $0x234] sm:$0xc] %vm1158, %v1139
      %1174 = vst.msk [vmem:[#allocation2 + $0x25c] sm:$0xc] %vm1158, %v1141
      %vm1175 = vcmask 3074
      %1176 = vst.msk [vmem:[#allocation2 + $0x4] sm:$0xc] %vm1175, 0
      %1177 = vst.msk [vmem:[#allocation2 + $0x2c] sm:$0xc] %vm1175, 0
      %1178 = vst.msk [vmem:[#allocation2 + $0x54] sm:$0xc] %vm1175, 0
      %1179 = vst.msk [vmem:[#allocation2 + $0x7c] sm:$0xc] %vm1175, 0
      %1180 = vst.msk [vmem:[#allocation2 + $0xa4] sm:$0xc] %vm1175, 0
      %1181 = vst.msk [vmem:[#allocation2 + $0xcc] sm:$0xc] %vm1175, 0
      %1182 = vst.msk [vmem:[#allocation2 + $0xf4] sm:$0xc] %vm1175, 0
      %1183 = vst.msk [vmem:[#allocation2 + $0x11c] sm:$0xc] %vm1175, 0
      %1184 = vst.msk [vmem:[#allocation2 + $0x144] sm:$0xc] %vm1175, 0
      %1185 = vst.msk [vmem:[#allocation2 + $0x16c] sm:$0xc] %vm1175, 0
      %1186 = vst.msk [vmem:[#allocation2 + $0x194] sm:$0xc] %vm1175, 0
      %1187 = vst.msk [vmem:[#allocation2 + $0x1bc] sm:$0xc] %vm1175, 0
      %1188 = vst.msk [vmem:[#allocation2 + $0x1e4] sm:$0xc] %vm1175, 0
      %1189 = vst.msk [vmem:[#allocation2 + $0x20c] sm:$0xc] %vm1175, 0
      %1190 = vst.msk [vmem:[#allocation2 + $0x234] sm:$0xc] %vm1175, 0
      %1191 = vst.msk [vmem:[#allocation2 + $0x25c] sm:$0xc] %vm1175, 0
      %1192 = vst.msk [vmem:[#allocation2 + $0x8] sm:$0x3] %vm963, %v870
      %1193 = vst.msk [vmem:[#allocation2 + $0x30] sm:$0x3] %vm963, %v871
      %1194 = vst.msk [vmem:[#allocation2 + $0x58] sm:$0x3] %vm963, %v872
      %1195 = vst.msk [vmem:[#allocation2 + $0x80] sm:$0x3] %vm963, %v873
      %1196 = vst.msk [vmem:[#allocation2 + $0xa8] sm:$0x3] %vm963, %v874
      %1197 = vst.msk [vmem:[#allocation2 + $0xd0] sm:$0x3] %vm963, %v875
      %1198 = vst.msk [vmem:[#allocation2 + $0xf8] sm:$0x3] %vm963, %v876
      %1199 = vst.msk [vmem:[#allocation2 + $0x120] sm:$0x3] %vm963, %v877
      %1200 = vst.msk [vmem:[#allocation2 + $0x148] sm:$0x3] %vm963, %v878
      %1201 = vst.msk [vmem:[#allocation2 + $0x170] sm:$0x3] %vm963, %v879
      %1202 = vst.msk [vmem:[#allocation2 + $0x198] sm:$0x3] %vm963, %v880
      %1203 = vst.msk [vmem:[#allocation2 + $0x1c0] sm:$0x3] %vm963, %v881
      %1204 = vst.msk [vmem:[#allocation2 + $0x1e8] sm:$0x3] %vm963, %v882
      %1205 = vst.msk [vmem:[#allocation2 + $0x210] sm:$0x3] %vm963, %v883
      %1206 = vst.msk [vmem:[#allocation2 + $0x238] sm:$0x3] %vm963, %v884
      %1207 = vst.msk [vmem:[#allocation2 + $0x260] sm:$0x3] %vm963, %v885
      %1208 = vrot.lane.b32.xlu0 %v982, 127
      %v1209 = vpop.permute.xlu0 %1208
      %1210 = vrot.lane.b32.xlu0 %v983, 127
      %v1211 = vpop.permute.xlu0 %1210
      %1212 = vrot.lane.b32.xlu0 %v984, 127
      %v1213 = vpop.permute.xlu0 %1212
      %1214 = vrot.lane.b32.xlu0 %v985, 127
      %v1215 = vpop.permute.xlu0 %1214
      %1216 = vrot.lane.b32.xlu0 %v986, 127
      %v1217 = vpop.permute.xlu0 %1216
      %1218 = vrot.lane.b32.xlu0 %v987, 127
      %v1219 = vpop.permute.xlu0 %1218
      %1220 = vrot.lane.b32.xlu0 %v988, 127
      %v1221 = vpop.permute.xlu0 %1220
      %1222 = vrot.lane.b32.xlu0 %v989, 127
      %v1223 = vpop.permute.xlu0 %1222
      %1224 = vrot.lane.b32.xlu0 %v990, 127
      %v1225 = vpop.permute.xlu0 %1224
      %1226 = vrot.lane.b32.xlu0 %v991, 127
      %v1227 = vpop.permute.xlu0 %1226
      %1228 = vrot.lane.b32.xlu0 %v992, 127
      %v1229 = vpop.permute.xlu0 %1228
      %1230 = vrot.lane.b32.xlu0 %v993, 127
      %v1231 = vpop.permute.xlu0 %1230
      %1232 = vrot.lane.b32.xlu0 %v994, 127
      %v1233 = vpop.permute.xlu0 %1232
      %1234 = vrot.lane.b32.xlu0 %v995, 127
      %v1235 = vpop.permute.xlu0 %1234
      %1236 = vrot.lane.b32.xlu0 %v996, 127
      %v1237 = vpop.permute.xlu0 %1236
      %1238 = vrot.lane.b32.xlu0 %v1109, 127
      %v1239 = vpop.permute.xlu0 %1238
      %vm1256 = vcmask 117762
      %1257 = vst.msk [vmem:[#allocation2 + $0x8] sm:$0xc] %vm1256, %v1209
      %1258 = vst.msk [vmem:[#allocation2 + $0x30] sm:$0xc] %vm1256, %v1211
      %1259 = vst.msk [vmem:[#allocation2 + $0x58] sm:$0xc] %vm1256, %v1213
      %1260 = vst.msk [vmem:[#allocation2 + $0x80] sm:$0xc] %vm1256, %v1215
      %1261 = vst.msk [vmem:[#allocation2 + $0xa8] sm:$0xc] %vm1256, %v1217
      %1262 = vst.msk [vmem:[#allocation2 + $0xd0] sm:$0xc] %vm1256, %v1219
      %1263 = vst.msk [vmem:[#allocation2 + $0xf8] sm:$0xc] %vm1256, %v1221
      %1264 = vst.msk [vmem:[#allocation2 + $0x120] sm:$0xc] %vm1256, %v1223
      %1265 = vst.msk [vmem:[#allocation2 + $0x148] sm:$0xc] %vm1256, %v1225
      %1266 = vst.msk [vmem:[#allocation2 + $0x170] sm:$0xc] %vm1256, %v1227
      %1267 = vst.msk [vmem:[#allocation2 + $0x198] sm:$0xc] %vm1256, %v1229
      %1268 = vst.msk [vmem:[#allocation2 + $0x1c0] sm:$0xc] %vm1256, %v1231
      %1269 = vst.msk [vmem:[#allocation2 + $0x1e8] sm:$0xc] %vm1256, %v1233
      %1270 = vst.msk [vmem:[#allocation2 + $0x210] sm:$0xc] %vm1256, %v1235
      %1271 = vst.msk [vmem:[#allocation2 + $0x238] sm:$0xc] %vm1256, %v1237
      %1272 = vst.msk [vmem:[#allocation2 + $0x260] sm:$0xc] %vm1256, %v1239
      %vm1273 = vcmask 126074
      %1274 = vst.msk [vmem:[#allocation2 + $0x8] sm:$0xc] %vm1273, 0
      %1275 = vst.msk [vmem:[#allocation2 + $0x30] sm:$0xc] %vm1273, 0
      %1276 = vst.msk [vmem:[#allocation2 + $0x58] sm:$0xc] %vm1273, 0
      %1277 = vst.msk [vmem:[#allocation2 + $0x80] sm:$0xc] %vm1273, 0
      %1278 = vst.msk [vmem:[#allocation2 + $0xa8] sm:$0xc] %vm1273, 0
      %1279 = vst.msk [vmem:[#allocation2 + $0xd0] sm:$0xc] %vm1273, 0
      %1280 = vst.msk [vmem:[#allocation2 + $0xf8] sm:$0xc] %vm1273, 0
      %1281 = vst.msk [vmem:[#allocation2 + $0x120] sm:$0xc] %vm1273, 0
      %1282 = vst.msk [vmem:[#allocation2 + $0x148] sm:$0xc] %vm1273, 0
      %1283 = vst.msk [vmem:[#allocation2 + $0x170] sm:$0xc] %vm1273, 0
      %1284 = vst.msk [vmem:[#allocation2 + $0x198] sm:$0xc] %vm1273, 0
      %1285 = vst.msk [vmem:[#allocation2 + $0x1c0] sm:$0xc] %vm1273, 0
      %1286 = vst.msk [vmem:[#allocation2 + $0x1e8] sm:$0xc] %vm1273, 0
      %1287 = vst.msk [vmem:[#allocation2 + $0x210] sm:$0xc] %vm1273, 0
      %1288 = vst.msk [vmem:[#allocation2 + $0x238] sm:$0xc] %vm1273, 0
      %1289 = vst.msk [vmem:[#allocation2 + $0x260] sm:$0xc] %vm1273, 0
      %1290 = vrot.lane.b32.xlu0 %v885, 1
      %v1291 = vpop.permute.xlu0 %1290
      %1293 = vst.msk [vmem:[#allocation2 + $0xc] sm:$0x3] %vm947, %v904
      %1294 = vst.msk [vmem:[#allocation2 + $0x34] sm:$0x3] %vm947, %v906
      %1295 = vst.msk [vmem:[#allocation2 + $0x5c] sm:$0x3] %vm947, %v908
      %1296 = vst.msk [vmem:[#allocation2 + $0x84] sm:$0x3] %vm947, %v910
      %1297 = vst.msk [vmem:[#allocation2 + $0xac] sm:$0x3] %vm947, %v912
      %1298 = vst.msk [vmem:[#allocation2 + $0xd4] sm:$0x3] %vm947, %v914
      %1299 = vst.msk [vmem:[#allocation2 + $0xfc] sm:$0x3] %vm947, %v916
      %1300 = vst.msk [vmem:[#allocation2 + $0x124] sm:$0x3] %vm947, %v918
      %1301 = vst.msk [vmem:[#allocation2 + $0x14c] sm:$0x3] %vm947, %v920
      %1302 = vst.msk [vmem:[#allocation2 + $0x174] sm:$0x3] %vm947, %v922
      %1303 = vst.msk [vmem:[#allocation2 + $0x19c] sm:$0x3] %vm947, %v924
      %1304 = vst.msk [vmem:[#allocation2 + $0x1c4] sm:$0x3] %vm947, %v926
      %1305 = vst.msk [vmem:[#allocation2 + $0x1ec] sm:$0x3] %vm947, %v928
      %1306 = vst.msk [vmem:[#allocation2 + $0x214] sm:$0x3] %vm947, %v930
      %1307 = vst.msk [vmem:[#allocation2 + $0x23c] sm:$0x3] %vm947, %v1291
      %s1308 = scalar_lea.vmem [#allocation2], 600
      %1309 = vst.msk [vmem:[%s1308 + $0xc] sm:$0x3] %vm963, 0
      %1310 = vst.msk [vmem:[#allocation2 + $0xc] sm:$0x3] %vm965, 0
      %1311 = vst.msk [vmem:[#allocation2 + $0x34] sm:$0x3] %vm965, 0
      %1312 = vst.msk [vmem:[#allocation2 + $0x5c] sm:$0x3] %vm965, 0
      %1313 = vst.msk [vmem:[#allocation2 + $0x84] sm:$0x3] %vm965, 0
      %1314 = vst.msk [vmem:[#allocation2 + $0xac] sm:$0x3] %vm965, 0
      %1315 = vst.msk [vmem:[#allocation2 + $0xd4] sm:$0x3] %vm965, 0
      %1316 = vst.msk [vmem:[#allocation2 + $0xfc] sm:$0x3] %vm965, 0
      %1317 = vst.msk [vmem:[#allocation2 + $0x124] sm:$0x3] %vm965, 0
      %1318 = vst.msk [vmem:[#allocation2 + $0x14c] sm:$0x3] %vm965, 0
      %1319 = vst.msk [vmem:[#allocation2 + $0x174] sm:$0x3] %vm965, 0
      %1320 = vst.msk [vmem:[#allocation2 + $0x19c] sm:$0x3] %vm965, 0
      %1321 = vst.msk [vmem:[#allocation2 + $0x1c4] sm:$0x3] %vm965, 0
      %1322 = vst.msk [vmem:[#allocation2 + $0x1ec] sm:$0x3] %vm965, 0
      %1323 = vst.msk [vmem:[#allocation2 + $0x214] sm:$0x3] %vm965, 0
      %1324 = vst.msk [vmem:[#allocation2 + $0x23c] sm:$0x3] %vm965, 0
      %1325 = vst.msk [vmem:[#allocation2 + $0x264] sm:$0x3] %vm965, 0
      %1327 = vst.msk [vmem:[#allocation2 + $0xc] sm:$0xc] %vm1012, %v983
      %1328 = vst.msk [vmem:[#allocation2 + $0x34] sm:$0xc] %vm1012, %v984
      %1329 = vst.msk [vmem:[#allocation2 + $0x5c] sm:$0xc] %vm1012, %v985
      %1330 = vst.msk [vmem:[#allocation2 + $0x84] sm:$0xc] %vm1012, %v986
      %1331 = vst.msk [vmem:[#allocation2 + $0xac] sm:$0xc] %vm1012, %v987
      %1332 = vst.msk [vmem:[#allocation2 + $0xd4] sm:$0xc] %vm1012, %v988
      %1333 = vst.msk [vmem:[#allocation2 + $0xfc] sm:$0xc] %vm1012, %v989
      %1334 = vst.msk [vmem:[#allocation2 + $0x124] sm:$0xc] %vm1012, %v990
      %1335 = vst.msk [vmem:[#allocation2 + $0x14c] sm:$0xc] %vm1012, %v991
      %1336 = vst.msk [vmem:[#allocation2 + $0x174] sm:$0xc] %vm1012, %v992
      %1337 = vst.msk [vmem:[#allocation2 + $0x19c] sm:$0xc] %vm1012, %v993
      %1338 = vst.msk [vmem:[#allocation2 + $0x1c4] sm:$0xc] %vm1012, %v994
      %1339 = vst.msk [vmem:[#allocation2 + $0x1ec] sm:$0xc] %vm1012, %v995
      %1340 = vst.msk [vmem:[#allocation2 + $0x214] sm:$0xc] %vm1012, %v996
      %1341 = vst.msk [vmem:[#allocation2 + $0x23c] sm:$0xc] %vm1012, %v1109
      %1342 = vst.msk [vmem:[%s1308 + $0xc] sm:$0xc] %vm1012, 0
      %1343 = vrot.lane.b32.xlu0 %v885, 127
      %v1344 = vpop.permute.xlu0 %1343
      %1346 = vst.msk [vmem:[#allocation2 + $0x10] sm:$0x3] %vm1074, %v1032
      %1347 = vst.msk [vmem:[#allocation2 + $0x38] sm:$0x3] %vm1074, %v1034
      %1348 = vst.msk [vmem:[#allocation2 + $0x60] sm:$0x3] %vm1074, %v1036
      %1349 = vst.msk [vmem:[#allocation2 + $0x88] sm:$0x3] %vm1074, %v1038
      %1350 = vst.msk [vmem:[#allocation2 + $0xb0] sm:$0x3] %vm1074, %v1040
      %1351 = vst.msk [vmem:[#allocation2 + $0xd8] sm:$0x3] %vm1074, %v1042
      %1352 = vst.msk [vmem:[#allocation2 + $0x100] sm:$0x3] %vm1074, %v1044
      %1353 = vst.msk [vmem:[#allocation2 + $0x128] sm:$0x3] %vm1074, %v1046
      %1354 = vst.msk [vmem:[#allocation2 + $0x150] sm:$0x3] %vm1074, %v1048
      %1355 = vst.msk [vmem:[#allocation2 + $0x178] sm:$0x3] %vm1074, %v1050
      %1356 = vst.msk [vmem:[#allocation2 + $0x1a0] sm:$0x3] %vm1074, %v1052
      %1357 = vst.msk [vmem:[#allocation2 + $0x1c8] sm:$0x3] %vm1074, %v1054
      %1358 = vst.msk [vmem:[#allocation2 + $0x1f0] sm:$0x3] %vm1074, %v1056
      %1359 = vst.msk [vmem:[#allocation2 + $0x218] sm:$0x3] %vm1074, %v1058
      %1360 = vst.msk [vmem:[#allocation2 + $0x240] sm:$0x3] %vm1074, %v1344
      %1361 = vst.msk [vmem:[%s1308 + $0x10] sm:$0x3] %vm963, 0
      %1362 = vst.msk [vmem:[#allocation2 + $0x10] sm:$0x3] %vm1091, 0
      %1363 = vst.msk [vmem:[#allocation2 + $0x38] sm:$0x3] %vm1091, 0
      %1364 = vst.msk [vmem:[#allocation2 + $0x60] sm:$0x3] %vm1091, 0
      %1365 = vst.msk [vmem:[#allocation2 + $0x88] sm:$0x3] %vm1091, 0
      %1366 = vst.msk [vmem:[#allocation2 + $0xb0] sm:$0x3] %vm1091, 0
      %1367 = vst.msk [vmem:[#allocation2 + $0xd8] sm:$0x3] %vm1091, 0
      %1368 = vst.msk [vmem:[#allocation2 + $0x100] sm:$0x3] %vm1091, 0
      %1369 = vst.msk [vmem:[#allocation2 + $0x128] sm:$0x3] %vm1091, 0
      %1370 = vst.msk [vmem:[#allocation2 + $0x150] sm:$0x3] %vm1091, 0
      %1371 = vst.msk [vmem:[#allocation2 + $0x178] sm:$0x3] %vm1091, 0
      %1372 = vst.msk [vmem:[#allocation2 + $0x1a0] sm:$0x3] %vm1091, 0
      %1373 = vst.msk [vmem:[#allocation2 + $0x1c8] sm:$0x3] %vm1091, 0
      %1374 = vst.msk [vmem:[#allocation2 + $0x1f0] sm:$0x3] %vm1091, 0
      %1375 = vst.msk [vmem:[#allocation2 + $0x218] sm:$0x3] %vm1091, 0
      %1376 = vst.msk [vmem:[#allocation2 + $0x240] sm:$0x3] %vm1091, 0
      %1377 = vst.msk [vmem:[#allocation2 + $0x268] sm:$0x3] %vm1091, 0
      %v1378 = vld [vmem:[%s3] sm:$0xf]
      loop: start=0, step=1, limit=16
      $region73: #{tfc_tdf_forward.2} parent=71 // loop_pre_header
        _
      $region74: #{tfc_tdf_forward.2} parent=71 // loop_header
        %s1380 = sphi 0, %s1384
        %p1381 = scmp.ge.s32.totalorder %s1380, 16
      $region75: #{tfc_tdf_forward.2} parent=71 // loop_header_branch
        %1383 = sbr.rel (%p1381) target = $region79
      $region76: #{tfc_tdf_forward.2} parent=71 // loop_body
        %s1385 = smul.u32 %s1380, 10
        %s1386 = smul.addr %s1385, 4
        %s1387 = scalar_lea.vmem [#allocation2], %s1386
        %v1388 = vld [vmem:[%s1387] sm:$0xf]
        %v1389 = vld [vmem:[%s1387 + $0x4] sm:$0xf]
        %v1390 = vld [vmem:[%s1387 + $0x8] sm:$0xf]
        %v1391 = vld [vmem:[%s1387 + $0xc] sm:$0xf]
        %v1392 = vld [vmem:[%s1387 + $0x10] sm:$0x3]
        %v1398 = vunpack.c.l.b16 %v1388
        %v1399 = vunpack.c.l.b16 %v1389
        %v1400 = vunpack.c.l.b16 %v1390
        %v1401 = vunpack.c.l.b16 %v1391
        %v1402 = vunpack.c.l.b16 %v1392
        %v1403 = vpack.c.b16 %v1399, %v1398
        %v1404 = vpack.c.b16 %v1401, %v1400
        %v1405 = vpack.c.b16 %v1402, %v1402
        %vm1408 = vcmask 293888
        %v1410 = vsel %vm1408, %v1378, 0
        %vm1412 = vcmask 1041408
        %v1414 = vsel %vm1412, %v1405, 0
        %1416 = vmatpush.bf16.msra.mxu0 0
        %1417 = vmatpush.bf16.msra.mxu0 0
        %1418 = vmatpush.bf16.msra.mxu0 0
        %1419 = vmatpush.bf16.msra.mxu0 0
        %1420 = vmatpush.bf16.msra.mxu0 0
        %1421 = vmatpush.bf16.msra.mxu0 %v1414
        %1422 = vmatpush.bf16.msra.mxu0 %v1404
        %1423 = vmatpush.bf16.msra.mxu0 %v1403
        %1424 = vmatmul.bf16.gmra.mxu0 %v1410
        %v1425 = vpop.f32.mrf.mxu0
        %v1426 = vadd.f32 0.0, %v1425
        %v1427 = vpop.f32.mrf.mxu0
        %1428 = vdwg.mxu0
        %s1429 = smul.u32 %s1380, 8
        %s1430 = scalar_lea.vmem [#allocation3], %s1429
        %vm1431 = vcmask 130048
        %1432 = vst.msk [vmem:[%s1430] sm:$0xff] %vm1431, %v1426
      $region77: #{tfc_tdf_forward.2} parent=71 // loop_footer
        %s1384 = sadd.s32 1, %s1380
      $region78: #{tfc_tdf_forward.2} parent=71 // loop_footer_branch
        %1379 = sbr.rel target = $region74
      $region79: #{tfc_tdf_forward.2} parent=71 // loop_exit
        _
      %v1433 = vld [vmem:[#allocation3] sm:$0xff]
      %v1434 = vld [vmem:[#allocation3 + $0x8] sm:$0xff]
      %v1435 = vld [vmem:[#allocation3 + $0x10] sm:$0xff]
      %v1436 = vld [vmem:[#allocation3 + $0x18] sm:$0xff]
      %v1437 = vld [vmem:[#allocation3 + $0x20] sm:$0xff]
      %v1438 = vld [vmem:[#allocation3 + $0x28] sm:$0xff]
      %v1439 = vld [vmem:[#allocation3 + $0x30] sm:$0xff]
      %v1440 = vld [vmem:[#allocation3 + $0x38] sm:$0xff]
      %v1441 = vld [vmem:[#allocation3 + $0x40] sm:$0xff]
      %v1442 = vld [vmem:[#allocation3 + $0x48] sm:$0xff]
      %v1443 = vld [vmem:[#allocation3 + $0x50] sm:$0xff]
      %v1444 = vld [vmem:[#allocation3 + $0x58] sm:$0xff]
      %v1445 = vld [vmem:[#allocation3 + $0x60] sm:$0xff]
      %v1446 = vld [vmem:[#allocation3 + $0x68] sm:$0xff]
      %v1447 = vld [vmem:[#allocation3 + $0x70] sm:$0xff]
      %v1448 = vld [vmem:[#allocation3 + $0x78] sm:$0xff]
      %v1449 = vld [vmem:[%s4] sm:$0xff]
      %v1450 = vld [vmem:[%s5] sm:$0xff]
      %vm1451 = vcmask 130048
      %v1452 = vsel %vm1451, %v1433, 0.0
      %1453 = vadd.xlane.f32.xlu0 %v1452
      %v1454 = vpop.xlane.xlu0 %1453
      %v1455 = vsel %vm1451, %v1434, 0.0
      %1456 = vadd.xlane.f32.xlu0 %v1455
      %v1457 = vpop.xlane.xlu0 %1456
      %v1458 = vsel %vm1451, %v1435, 0.0
      %1459 = vadd.xlane.f32.xlu0 %v1458
      %v1460 = vpop.xlane.xlu0 %1459
      %v1461 = vsel %vm1451, %v1436, 0.0
      %1462 = vadd.xlane.f32.xlu0 %v1461
      %v1463 = vpop.xlane.xlu0 %1462
      %v1464 = vsel %vm1451, %v1437, 0.0
      %1465 = vadd.xlane.f32.xlu0 %v1464
      %v1466 = vpop.xlane.xlu0 %1465
      %v1467 = vsel %vm1451, %v1438, 0.0
      %1468 = vadd.xlane.f32.xlu0 %v1467
      %v1469 = vpop.xlane.xlu0 %1468
      %v1470 = vsel %vm1451, %v1439, 0.0
      %1471 = vadd.xlane.f32.xlu0 %v1470
      %v1472 = vpop.xlane.xlu0 %1471
      %v1473 = vsel %vm1451, %v1440, 0.0
      %1474 = vadd.xlane.f32.xlu0 %v1473
      %v1475 = vpop.xlane.xlu0 %1474
      %v1476 = vsel %vm1451, %v1441, 0.0
      %1477 = vadd.xlane.f32.xlu0 %v1476
      %v1478 = vpop.xlane.xlu0 %1477
      %v1479 = vsel %vm1451, %v1442, 0.0
      %1480 = vadd.xlane.f32.xlu0 %v1479
      %v1481 = vpop.xlane.xlu0 %1480
      %v1482 = vsel %vm1451, %v1443, 0.0
      %1483 = vadd.xlane.f32.xlu0 %v1482
      %v1484 = vpop.xlane.xlu0 %1483
      %v1485 = vsel %vm1451, %v1444, 0.0
      %1486 = vadd.xlane.f32.xlu0 %v1485
      %v1487 = vpop.xlane.xlu0 %1486
      %v1488 = vsel %vm1451, %v1445, 0.0
      %1489 = vadd.xlane.f32.xlu0 %v1488
      %v1490 = vpop.xlane.xlu0 %1489
      %v1491 = vsel %vm1451, %v1446, 0.0
      %1492 = vadd.xlane.f32.xlu0 %v1491
      %v1493 = vpop.xlane.xlu0 %1492
      %v1494 = vsel %vm1451, %v1447, 0.0
      %1495 = vadd.xlane.f32.xlu0 %v1494
      %v1496 = vpop.xlane.xlu0 %1495
      %v1497 = vsel %vm1451, %v1448, 0.0
      %1498 = vadd.xlane.f32.xlu0 %v1497
      %v1499 = vpop.xlane.xlu0 %1498
      %v1500 = vadd.f32 %v1454, %v1457
      %v1501 = vadd.f32 %v1500, %v1460
      %v1502 = vadd.f32 %v1501, %v1463
      %v1503 = vadd.f32 %v1502, %v1466
      %v1504 = vadd.f32 %v1503, %v1469
      %v1505 = vadd.f32 %v1504, %v1472
      %v1506 = vadd.f32 %v1505, %v1475
      %v1507 = vadd.f32 %v1506, %v1478
      %v1508 = vadd.f32 %v1507, %v1481
      %v1509 = vadd.f32 %v1508, %v1484
      %v1510 = vadd.f32 %v1509, %v1487
      %v1511 = vadd.f32 %v1510, %v1490
      %v1512 = vadd.f32 %v1511, %v1493
      %v1513 = vadd.f32 %v1512, %v1496
      %v1514 = vadd.f32 %v1513, %v1499
      %v1515 = vmul.f32 %v1433, %v1433
      %v1516 = vmul.f32 %v1434, %v1434
      %v1517 = vmul.f32 %v1435, %v1435
      %v1518 = vmul.f32 %v1436, %v1436
      %v1519 = vmul.f32 %v1437, %v1437
      %v1520 = vmul.f32 %v1438, %v1438
      %v1521 = vmul.f32 %v1439, %v1439
      %v1522 = vmul.f32 %v1440, %v1440
      %v1523 = vmul.f32 %v1441, %v1441
      %v1524 = vmul.f32 %v1442, %v1442
      %v1525 = vmul.f32 %v1443, %v1443
      %v1526 = vmul.f32 %v1444, %v1444
      %v1527 = vmul.f32 %v1445, %v1445
      %v1528 = vmul.f32 %v1446, %v1446
      %v1529 = vmul.f32 %v1447, %v1447
      %v1530 = vmul.f32 %v1448, %v1448
      %v1531 = vsel %vm1451, %v1515, 0.0
      %1532 = vadd.xlane.f32.xlu0 %v1531
      %v1533 = vpop.xlane.xlu0 %1532
      %v1534 = vsel %vm1451, %v1516, 0.0
      %1535 = vadd.xlane.f32.xlu0 %v1534
      %v1536 = vpop.xlane.xlu0 %1535
      %v1537 = vsel %vm1451, %v1517, 0.0
      %1538 = vadd.xlane.f32.xlu0 %v1537
      %v1539 = vpop.xlane.xlu0 %1538
      %v1540 = vsel %vm1451, %v1518, 0.0
      %1541 = vadd.xlane.f32.xlu0 %v1540
      %v1542 = vpop.xlane.xlu0 %1541
      %v1543 = vsel %vm1451, %v1519, 0.0
      %1544 = vadd.xlane.f32.xlu0 %v1543
      %v1545 = vpop.xlane.xlu0 %1544
      %v1546 = vsel %vm1451, %v1520, 0.0
      %1547 = vadd.xlane.f32.xlu0 %v1546
      %v1548 = vpop.xlane.xlu0 %1547
      %v1549 = vsel %vm1451, %v1521, 0.0
      %1550 = vadd.xlane.f32.xlu0 %v1549
      %v1551 = vpop.xlane.xlu0 %1550
      %v1552 = vsel %vm1451, %v1522, 0.0
      %1553 = vadd.xlane.f32.xlu0 %v1552
      %v1554 = vpop.xlane.xlu0 %1553
      %v1555 = vsel %vm1451, %v1523, 0.0
      %1556 = vadd.xlane.f32.xlu0 %v1555
      %v1557 = vpop.xlane.xlu0 %1556
      %v1558 = vsel %vm1451, %v1524, 0.0
      %1559 = vadd.xlane.f32.xlu0 %v1558
      %v1560 = vpop.xlane.xlu0 %1559
      %v1561 = vsel %vm1451, %v1525, 0.0
      %1562 = vadd.xlane.f32.xlu0 %v1561
      %v1563 = vpop.xlane.xlu0 %1562
      %v1564 = vsel %vm1451, %v1526, 0.0
      %1565 = vadd.xlane.f32.xlu0 %v1564
      %v1566 = vpop.xlane.xlu0 %1565
      %v1567 = vsel %vm1451, %v1527, 0.0
      %1568 = vadd.xlane.f32.xlu0 %v1567
      %v1569 = vpop.xlane.xlu0 %1568
      %v1570 = vsel %vm1451, %v1528, 0.0
      %1571 = vadd.xlane.f32.xlu0 %v1570
      %v1572 = vpop.xlane.xlu0 %1571
      %v1573 = vsel %vm1451, %v1529, 0.0
      %1574 = vadd.xlane.f32.xlu0 %v1573
      %v1575 = vpop.xlane.xlu0 %1574
      %v1576 = vsel %vm1451, %v1530, 0.0
      %1577 = vadd.xlane.f32.xlu0 %v1576
      %v1578 = vpop.xlane.xlu0 %1577
      %v1579 = vadd.f32 %v1533, %v1536
      %v1580 = vadd.f32 %v1579, %v1539
      %v1581 = vadd.f32 %v1580, %v1542
      %v1582 = vadd.f32 %v1581, %v1545
      %v1583 = vadd.f32 %v1582, %v1548
      %v1584 = vadd.f32 %v1583, %v1551
      %v1585 = vadd.f32 %v1584, %v1554
      %v1586 = vadd.f32 %v1585, %v1557
      %v1587 = vadd.f32 %v1586, %v1560
      %v1588 = vadd.f32 %v1587, %v1563
      %v1589 = vadd.f32 %v1588, %v1566
      %v1590 = vadd.f32 %v1589, %v1569
      %v1591 = vadd.f32 %v1590, %v1572
      %v1592 = vadd.f32 %v1591, %v1575
      %v1593 = vadd.f32 %v1592, %v1578
      %v1594 = vmul.f32 %v1514, 0.00390625
      %v1595 = vmul.f32 %v1593, 0.00390625
      %v1596 = vmul.f32 %v1594, %v1594
      %v1597 = vsub.f32 %v1595, %v1596
      %v1598 = vmax.f32 %v1597, 0.0
      %v1599 = vsub.f32 %v1433, %v1594
      %v1600 = vsub.f32 %v1434, %v1594
      %v1601 = vsub.f32 %v1435, %v1594
      %v1602 = vsub.f32 %v1436, %v1594
      %v1603 = vsub.f32 %v1437, %v1594
      %v1604 = vsub.f32 %v1438, %v1594
      %v1605 = vsub.f32 %v1439, %v1594
      %v1606 = vsub.f32 %v1440, %v1594
      %v1607 = vsub.f32 %v1441, %v1594
      %v1608 = vsub.f32 %v1442, %v1594
      %v1609 = vsub.f32 %v1443, %v1594
      %v1610 = vsub.f32 %v1444, %v1594
      %v1611 = vsub.f32 %v1445, %v1594
      %v1612 = vsub.f32 %v1446, %v1594
      %v1613 = vsub.f32 %v1447, %v1594
      %v1614 = vsub.f32 %v1448, %v1594
      %v1615 = vadd.f32 %v1598, 1e-05
      %v1616 = vrsqrt.pop %v1615
      %v1617 = vmul.f32 %v1616, %v1615
      %v1618 = vmul.f32 %v1617, %v1616
      %v1619 = vmul.f32 0.5, %v1618
      %v1620 = vsub.f32 1.5, %v1619
      %v1621 = vmul.f32 %v1616, %v1620
      %vm1622 = vweird.f32 %v1615
      %vm1623 = vweird.f32 %v1616
      %vm1624 = vmor %vm1622, %vm1623
      %v1625 = vsel %vm1624, %v1616, %v1621
      %v1626 = vmul.f32 %v1599, %v1625
      %v1627 = vmul.f32 %v1600, %v1625
      %v1628 = vmul.f32 %v1601, %v1625
      %v1629 = vmul.f32 %v1602, %v1625
      %v1630 = vmul.f32 %v1603, %v1625
      %v1631 = vmul.f32 %v1604, %v1625
      %v1632 = vmul.f32 %v1605, %v1625
      %v1633 = vmul.f32 %v1606, %v1625
      %v1634 = vmul.f32 %v1607, %v1625
      %v1635 = vmul.f32 %v1608, %v1625
      %v1636 = vmul.f32 %v1609, %v1625
      %v1637 = vmul.f32 %v1610, %v1625
      %v1638 = vmul.f32 %v1611, %v1625
      %v1639 = vmul.f32 %v1612, %v1625
      %v1640 = vmul.f32 %v1613, %v1625
      %v1641 = vmul.f32 %v1614, %v1625
      %1643 = vset.pattern.permute.xlu0 0
      %1644 = vperm.xlu0 %1643, %v1449
      %v1645 = vpop.permute.xlu0 %1644
      %v1647 = vmul.f32 %v1626, %v1645
      %v1648 = vmul.f32 %v1627, %v1645
      %v1649 = vmul.f32 %v1628, %v1645
      %v1650 = vmul.f32 %v1629, %v1645
      %v1651 = vmul.f32 %v1630, %v1645
      %v1652 = vmul.f32 %v1631, %v1645
      %v1653 = vmul.f32 %v1632, %v1645
      %v1654 = vmul.f32 %v1633, %v1645
      %v1655 = vmul.f32 %v1634, %v1645
      %v1656 = vmul.f32 %v1635, %v1645
      %v1657 = vmul.f32 %v1636, %v1645
      %v1658 = vmul.f32 %v1637, %v1645
      %v1659 = vmul.f32 %v1638, %v1645
      %v1660 = vmul.f32 %v1639, %v1645
      %v1661 = vmul.f32 %v1640, %v1645
      %v1662 = vmul.f32 %v1641, %v1645
      %1664 = vset.pattern.permute.xlu0 0
      %1665 = vperm.xlu0 %1664, %v1450
      %v1666 = vpop.permute.xlu0 %1665
      %v1668 = vadd.f32 %v1647, %v1666
      %v1669 = vadd.f32 %v1648, %v1666
      %v1670 = vadd.f32 %v1649, %v1666
      %v1671 = vadd.f32 %v1650, %v1666
      %v1672 = vadd.f32 %v1651, %v1666
      %v1673 = vadd.f32 %v1652, %v1666
      %v1674 = vadd.f32 %v1653, %v1666
      %v1675 = vadd.f32 %v1654, %v1666
      %v1676 = vadd.f32 %v1655, %v1666
      %v1677 = vadd.f32 %v1656, %v1666
      %v1678 = vadd.f32 %v1657, %v1666
      %v1679 = vadd.f32 %v1658, %v1666
      %v1680 = vadd.f32 %v1659, %v1666
      %v1681 = vadd.f32 %v1660, %v1666
      %v1682 = vadd.f32 %v1661, %v1666
      %v1683 = vadd.f32 %v1662, %v1666
      %v1684 = vmul.f32 %v1668, %v1668
      %v1685 = vmul.f32 %v1669, %v1669
      %v1686 = vmul.f32 %v1670, %v1670
      %v1687 = vmul.f32 %v1671, %v1671
      %v1688 = vmul.f32 %v1672, %v1672
      %v1689 = vmul.f32 %v1673, %v1673
      %v1690 = vmul.f32 %v1674, %v1674
      %v1691 = vmul.f32 %v1675, %v1675
      %v1692 = vmul.f32 %v1676, %v1676
      %v1693 = vmul.f32 %v1677, %v1677
      %v1694 = vmul.f32 %v1678, %v1678
      %v1695 = vmul.f32 %v1679, %v1679
      %v1696 = vmul.f32 %v1680, %v1680
      %v1697 = vmul.f32 %v1681, %v1681
      %v1698 = vmul.f32 %v1682, %v1682
      %v1699 = vmul.f32 %v1683, %v1683
      %v1700 = vmul.f32 %v1668, %v1684
      %v1701 = vmul.f32 %v1669, %v1685
      %v1702 = vmul.f32 %v1670, %v1686
      %v1703 = vmul.f32 %v1671, %v1687
      %v1704 = vmul.f32 %v1672, %v1688
      %v1705 = vmul.f32 %v1673, %v1689
      %v1706 = vmul.f32 %v1674, %v1690
      %v1707 = vmul.f32 %v1675, %v1691
      %v1708 = vmul.f32 %v1676, %v1692
      %v1709 = vmul.f32 %v1677, %v1693
      %v1710 = vmul.f32 %v1678, %v1694
      %v1711 = vmul.f32 %v1679, %v1695
      %v1712 = vmul.f32 %v1680, %v1696
      %v1713 = vmul.f32 %v1681, %v1697
      %v1714 = vmul.f32 %v1682, %v1698
      %v1715 = vmul.f32 %v1683, %v1699
      %v1716 = vmul.f32 %v1700, 0.044715
      %v1717 = vmul.f32 %v1701, 0.044715
      %v1718 = vmul.f32 %v1702, 0.044715
      %v1719 = vmul.f32 %v1703, 0.044715
      %v1720 = vmul.f32 %v1704, 0.044715
      %v1721 = vmul.f32 %v1705, 0.044715
      %v1722 = vmul.f32 %v1706, 0.044715
      %v1723 = vmul.f32 %v1707, 0.044715
      %v1724 = vmul.f32 %v1708, 0.044715
      %v1725 = vmul.f32 %v1709, 0.044715
      %v1726 = vmul.f32 %v1710, 0.044715
      %v1727 = vmul.f32 %v1711, 0.044715
      %v1728 = vmul.f32 %v1712, 0.044715
      %v1729 = vmul.f32 %v1713, 0.044715
      %v1730 = vmul.f32 %v1714, 0.044715
      %v1731 = vmul.f32 %v1715, 0.044715
      %v1732 = vadd.f32 %v1668, %v1716
      %v1733 = vadd.f32 %v1669, %v1717
      %v1734 = vadd.f32 %v1670, %v1718
      %v1735 = vadd.f32 %v1671, %v1719
      %v1736 = vadd.f32 %v1672, %v1720
      %v1737 = vadd.f32 %v1673, %v1721
      %v1738 = vadd.f32 %v1674, %v1722
      %v1739 = vadd.f32 %v1675, %v1723
      %v1740 = vadd.f32 %v1676, %v1724
      %v1741 = vadd.f32 %v1677, %v1725
      %v1742 = vadd.f32 %v1678, %v1726
      %v1743 = vadd.f32 %v1679, %v1727
      %v1744 = vadd.f32 %v1680, %v1728
      %v1745 = vadd.f32 %v1681, %v1729
      %v1746 = vadd.f32 %v1682, %v1730
      %v1747 = vadd.f32 %v1683, %v1731
      %v1748 = vmul.f32 %v1732, 0.7978846
      %v1749 = vmul.f32 %v1733, 0.7978846
      %v1750 = vmul.f32 %v1734, 0.7978846
      %v1751 = vmul.f32 %v1735, 0.7978846
      %v1752 = vmul.f32 %v1736, 0.7978846
      %v1753 = vmul.f32 %v1737, 0.7978846
      %v1754 = vmul.f32 %v1738, 0.7978846
      %v1755 = vmul.f32 %v1739, 0.7978846
      %v1756 = vmul.f32 %v1740, 0.7978846
      %v1757 = vmul.f32 %v1741, 0.7978846
      %v1758 = vmul.f32 %v1742, 0.7978846
      %v1759 = vmul.f32 %v1743, 0.7978846
      %v1760 = vmul.f32 %v1744, 0.7978846
      %v1761 = vmul.f32 %v1745, 0.7978846
      %v1762 = vmul.f32 %v1746, 0.7978846
      %v1763 = vmul.f32 %v1747, 0.7978846
      %v1764 = vtanh.pop %v1748
      %v1765 = vtanh.pop %v1749
      %v1766 = vtanh.pop %v1750
      %v1767 = vtanh.pop %v1751
      %v1768 = vtanh.pop %v1752
      %v1769 = vtanh.pop %v1753
      %v1770 = vtanh.pop %v1754
      %v1771 = vtanh.pop %v1755
      %v1772 = vtanh.pop %v1756
      %v1773 = vtanh.pop %v1757
      %v1774 = vtanh.pop %v1758
      %v1775 = vtanh.pop %v1759
      %v1776 = vtanh.pop %v1760
      %v1777 = vtanh.pop %v1761
      %v1778 = vtanh.pop %v1762
      %v1779 = vtanh.pop %v1763
      %v1780 = vadd.f32 %v1764, 1.0
      %v1781 = vadd.f32 %v1765, 1.0
      %v1782 = vadd.f32 %v1766, 1.0
      %v1783 = vadd.f32 %v1767, 1.0
      %v1784 = vadd.f32 %v1768, 1.0
      %v1785 = vadd.f32 %v1769, 1.0
      %v1786 = vadd.f32 %v1770, 1.0
      %v1787 = vadd.f32 %v1771, 1.0
      %v1788 = vadd.f32 %v1772, 1.0
      %v1789 = vadd.f32 %v1773, 1.0
      %v1790 = vadd.f32 %v1774, 1.0
      %v1791 = vadd.f32 %v1775, 1.0
      %v1792 = vadd.f32 %v1776, 1.0
      %v1793 = vadd.f32 %v1777, 1.0
      %v1794 = vadd.f32 %v1778, 1.0
      %v1795 = vadd.f32 %v1779, 1.0
      %v1796 = vmul.f32 %v1780, 0.5
      %v1797 = vmul.f32 %v1781, 0.5
      %v1798 = vmul.f32 %v1782, 0.5
      %v1799 = vmul.f32 %v1783, 0.5
      %v1800 = vmul.f32 %v1784, 0.5
      %v1801 = vmul.f32 %v1785, 0.5
      %v1802 = vmul.f32 %v1786, 0.5
      %v1803 = vmul.f32 %v1787, 0.5
      %v1804 = vmul.f32 %v1788, 0.5
      %v1805 = vmul.f32 %v1789, 0.5
      %v1806 = vmul.f32 %v1790, 0.5
      %v1807 = vmul.f32 %v1791, 0.5
      %v1808 = vmul.f32 %v1792, 0.5
      %v1809 = vmul.f32 %v1793, 0.5
      %v1810 = vmul.f32 %v1794, 0.5
      %v1811 = vmul.f32 %v1795, 0.5
      %v1812 = vmul.f32 %v1668, %v1796
      %v1813 = vmul.f32 %v1669, %v1797
      %v1814 = vmul.f32 %v1670, %v1798
      %v1815 = vmul.f32 %v1671, %v1799
      %v1816 = vmul.f32 %v1672, %v1800
      %v1817 = vmul.f32 %v1673, %v1801
      %v1818 = vmul.f32 %v1674, %v1802
      %v1819 = vmul.f32 %v1675, %v1803
      %v1820 = vmul.f32 %v1676, %v1804
      %v1821 = vmul.f32 %v1677, %v1805
      %v1822 = vmul.f32 %v1678, %v1806
      %v1823 = vmul.f32 %v1679, %v1807
      %v1824 = vmul.f32 %v1680, %v1808
      %v1825 = vmul.f32 %v1681, %v1809
      %v1826 = vmul.f32 %v1682, %v1810
      %v1827 = vmul.f32 %v1683, %v1811
      %v1828 = vpack.c.bf16 %v1813, %v1812
      %v1829 = vpack.c.bf16 %v1815, %v1814
      %v1830 = vpack.c.bf16 %v1817, %v1816
      %v1831 = vpack.c.bf16 %v1819, %v1818
      %v1832 = vpack.c.bf16 %v1821, %v1820
      %v1833 = vpack.c.bf16 %v1823, %v1822
      %v1834 = vpack.c.bf16 %v1825, %v1824
      %v1835 = vpack.c.bf16 %v1827, %v1826
      %v1836 = vld [vmem:[%s6] sm:$0xf]
      %v1837 = vld [vmem:[%s6 + $0x4] sm:$0xf]
      %v1840 = vunpack.c.l.b16 %v1836
      %v1841 = vunpack.c.l.b16 %v1837
      %v1842 = vpack.c.b16 %v1841, %v1840
      %v1845 = vsel %vm1451, %v1828, 0
      %v1848 = vsel %vm1451, %v1829, 0
      %v1851 = vsel %vm1451, %v1830, 0
      %v1854 = vsel %vm1451, %v1831, 0
      %v1857 = vsel %vm1451, %v1832, 0
      %v1860 = vsel %vm1451, %v1833, 0
      %v1863 = vsel %vm1451, %v1834, 0
      %v1866 = vsel %vm1451, %v1835, 0
      %1868 = vmatpush.bf16.msra.mxu0 0
      %1869 = vmatpush.bf16.msra.mxu0 0
      %1870 = vmatpush.bf16.msra.mxu0 0
      %1871 = vmatpush.bf16.msra.mxu0 0
      %1872 = vmatpush.bf16.msra.mxu0 0
      %1873 = vmatpush.bf16.msra.mxu0 0
      %1874 = vmatpush.bf16.msra.mxu0 0
      %1875 = vmatpush.bf16.msra.mxu0 %v1842
      %1876 = vmatmul.bf16.gmra.mxu0 %v1845
      %v1877 = vpop.f32.mrf.mxu0
      %v1878 = vadd.f32 0.0, %v1877
      %v1879 = vpop.f32.mrf.mxu0
      %v1880 = vadd.f32 0.0, %v1879
      %1881 = vmatmul.bf16.gmra.mxu0 %v1848
      %v1882 = vpop.f32.mrf.mxu0
      %v1883 = vadd.f32 0.0, %v1882
      %v1884 = vpop.f32.mrf.mxu0
      %v1885 = vadd.f32 0.0, %v1884
      %1886 = vmatmul.bf16.gmra.mxu0 %v1851
      %v1887 = vpop.f32.mrf.mxu0
      %v1888 = vadd.f32 0.0, %v1887
      %v1889 = vpop.f32.mrf.mxu0
      %v1890 = vadd.f32 0.0, %v1889
      %1891 = vmatmul.bf16.gmra.mxu0 %v1854
      %v1892 = vpop.f32.mrf.mxu0
      %v1893 = vadd.f32 0.0, %v1892
      %v1894 = vpop.f32.mrf.mxu0
      %v1895 = vadd.f32 0.0, %v1894
      %1896 = vmatmul.bf16.gmra.mxu0 %v1857
      %v1897 = vpop.f32.mrf.mxu0
      %v1898 = vadd.f32 0.0, %v1897
      %v1899 = vpop.f32.mrf.mxu0
      %v1900 = vadd.f32 0.0, %v1899
      %1901 = vmatmul.bf16.gmra.mxu0 %v1860
      %v1902 = vpop.f32.mrf.mxu0
      %v1903 = vadd.f32 0.0, %v1902
      %v1904 = vpop.f32.mrf.mxu0
      %v1905 = vadd.f32 0.0, %v1904
      %1906 = vmatmul.bf16.gmra.mxu0 %v1863
      %v1907 = vpop.f32.mrf.mxu0
      %v1908 = vadd.f32 0.0, %v1907
      %v1909 = vpop.f32.mrf.mxu0
      %v1910 = vadd.f32 0.0, %v1909
      %1911 = vmatmul.bf16.gmra.mxu0 %v1866
      %v1912 = vpop.f32.mrf.mxu0
      %v1913 = vadd.f32 0.0, %v1912
      %v1914 = vpop.f32.mrf.mxu0
      %v1915 = vadd.f32 0.0, %v1914
      %1916 = vdwg.mxu0
      %v1917 = vld [vmem:[%s7] sm:$0xff]
      %v1918 = vld [vmem:[%s8] sm:$0xff]
      %vm1919 = vcmask 31744
      %v1920 = vsel %vm1919, %v1878, 0.0
      %1921 = vadd.xlane.f32.xlu0 %v1920
      %v1922 = vpop.xlane.xlu0 %1921
      %v1923 = vsel %vm1919, %v1880, 0.0
      %1924 = vadd.xlane.f32.xlu0 %v1923
      %v1925 = vpop.xlane.xlu0 %1924
      %v1926 = vsel %vm1919, %v1883, 0.0
      %1927 = vadd.xlane.f32.xlu0 %v1926
      %v1928 = vpop.xlane.xlu0 %1927
      %v1929 = vsel %vm1919, %v1885, 0.0
      %1930 = vadd.xlane.f32.xlu0 %v1929
      %v1931 = vpop.xlane.xlu0 %1930
      %v1932 = vsel %vm1919, %v1888, 0.0
      %1933 = vadd.xlane.f32.xlu0 %v1932
      %v1934 = vpop.xlane.xlu0 %1933
      %v1935 = vsel %vm1919, %v1890, 0.0
      %1936 = vadd.xlane.f32.xlu0 %v1935
      %v1937 = vpop.xlane.xlu0 %1936
      %v1938 = vsel %vm1919, %v1893, 0.0
      %1939 = vadd.xlane.f32.xlu0 %v1938
      %v1940 = vpop.xlane.xlu0 %1939
      %v1941 = vsel %vm1919, %v1895, 0.0
      %1942 = vadd.xlane.f32.xlu0 %v1941
      %v1943 = vpop.xlane.xlu0 %1942
      %v1944 = vsel %vm1919, %v1898, 0.0
      %1945 = vadd.xlane.f32.xlu0 %v1944
      %v1946 = vpop.xlane.xlu0 %1945
      %v1947 = vsel %vm1919, %v1900, 0.0
      %1948 = vadd.xlane.f32.xlu0 %v1947
      %v1949 = vpop.xlane.xlu0 %1948
      %v1950 = vsel %vm1919, %v1903, 0.0
      %1951 = vadd.xlane.f32.xlu0 %v1950
      %v1952 = vpop.xlane.xlu0 %1951
      %v1953 = vsel %vm1919, %v1905, 0.0
      %1954 = vadd.xlane.f32.xlu0 %v1953
      %v1955 = vpop.xlane.xlu0 %1954
      %v1956 = vsel %vm1919, %v1908, 0.0
      %1957 = vadd.xlane.f32.xlu0 %v1956
      %v1958 = vpop.xlane.xlu0 %1957
      %v1959 = vsel %vm1919, %v1910, 0.0
      %1960 = vadd.xlane.f32.xlu0 %v1959
      %v1961 = vpop.xlane.xlu0 %1960
      %v1962 = vsel %vm1919, %v1913, 0.0
      %1963 = vadd.xlane.f32.xlu0 %v1962
      %v1964 = vpop.xlane.xlu0 %1963
      %v1965 = vsel %vm1919, %v1915, 0.0
      %1966 = vadd.xlane.f32.xlu0 %v1965
      %v1967 = vpop.xlane.xlu0 %1966
      %v1968 = vadd.f32 %v1922, %v1925
      %v1969 = vadd.f32 %v1968, %v1928
      %v1970 = vadd.f32 %v1969, %v1931
      %v1971 = vadd.f32 %v1970, %v1934
      %v1972 = vadd.f32 %v1971, %v1937
      %v1973 = vadd.f32 %v1972, %v1940
      %v1974 = vadd.f32 %v1973, %v1943
      %v1975 = vadd.f32 %v1974, %v1946
      %v1976 = vadd.f32 %v1975, %v1949
      %v1977 = vadd.f32 %v1976, %v1952
      %v1978 = vadd.f32 %v1977, %v1955
      %v1979 = vadd.f32 %v1978, %v1958
      %v1980 = vadd.f32 %v1979, %v1961
      %v1981 = vadd.f32 %v1980, %v1964
      %v1982 = vadd.f32 %v1981, %v1967
      %v1983 = vmul.f32 %v1878, %v1878
      %v1984 = vmul.f32 %v1880, %v1880
      %v1985 = vmul.f32 %v1883, %v1883
      %v1986 = vmul.f32 %v1885, %v1885
      %v1987 = vmul.f32 %v1888, %v1888
      %v1988 = vmul.f32 %v1890, %v1890
      %v1989 = vmul.f32 %v1893, %v1893
      %v1990 = vmul.f32 %v1895, %v1895
      %v1991 = vmul.f32 %v1898, %v1898
      %v1992 = vmul.f32 %v1900, %v1900
      %v1993 = vmul.f32 %v1903, %v1903
      %v1994 = vmul.f32 %v1905, %v1905
      %v1995 = vmul.f32 %v1908, %v1908
      %v1996 = vmul.f32 %v1910, %v1910
      %v1997 = vmul.f32 %v1913, %v1913
      %v1998 = vmul.f32 %v1915, %v1915
      %v1999 = vsel %vm1919, %v1983, 0.0
      %2000 = vadd.xlane.f32.xlu0 %v1999
      %v2001 = vpop.xlane.xlu0 %2000
      %v2002 = vsel %vm1919, %v1984, 0.0
      %2003 = vadd.xlane.f32.xlu0 %v2002
      %v2004 = vpop.xlane.xlu0 %2003
      %v2005 = vsel %vm1919, %v1985, 0.0
      %2006 = vadd.xlane.f32.xlu0 %v2005
      %v2007 = vpop.xlane.xlu0 %2006
      %v2008 = vsel %vm1919, %v1986, 0.0
      %2009 = vadd.xlane.f32.xlu0 %v2008
      %v2010 = vpop.xlane.xlu0 %2009
      %v2011 = vsel %vm1919, %v1987, 0.0
      %2012 = vadd.xlane.f32.xlu0 %v2011
      %v2013 = vpop.xlane.xlu0 %2012
      %v2014 = vsel %vm1919, %v1988, 0.0
      %2015 = vadd.xlane.f32.xlu0 %v2014
      %v2016 = vpop.xlane.xlu0 %2015
      %v2017 = vsel %vm1919, %v1989, 0.0
      %2018 = vadd.xlane.f32.xlu0 %v2017
      %v2019 = vpop.xlane.xlu0 %2018
      %v2020 = vsel %vm1919, %v1990, 0.0
      %2021 = vadd.xlane.f32.xlu0 %v2020
      %v2022 = vpop.xlane.xlu0 %2021
      %v2023 = vsel %vm1919, %v1991, 0.0
      %2024 = vadd.xlane.f32.xlu0 %v2023
      %v2025 = vpop.xlane.xlu0 %2024
      %v2026 = vsel %vm1919, %v1992, 0.0
      %2027 = vadd.xlane.f32.xlu0 %v2026
      %v2028 = vpop.xlane.xlu0 %2027
      %v2029 = vsel %vm1919, %v1993, 0.0
      %2030 = vadd.xlane.f32.xlu0 %v2029
      %v2031 = vpop.xlane.xlu0 %2030
      %v2032 = vsel %vm1919, %v1994, 0.0
      %2033 = vadd.xlane.f32.xlu0 %v2032
      %v2034 = vpop.xlane.xlu0 %2033
      %v2035 = vsel %vm1919, %v1995, 0.0
      %2036 = vadd.xlane.f32.xlu0 %v2035
      %v2037 = vpop.xlane.xlu0 %2036
      %v2038 = vsel %vm1919, %v1996, 0.0
      %2039 = vadd.xlane.f32.xlu0 %v2038
      %v2040 = vpop.xlane.xlu0 %2039
      %v2041 = vsel %vm1919, %v1997, 0.0
      %2042 = vadd.xlane.f32.xlu0 %v2041
      %v2043 = vpop.xlane.xlu0 %2042
      %v2044 = vsel %vm1919, %v1998, 0.0
      %2045 = vadd.xlane.f32.xlu0 %v2044
      %v2046 = vpop.xlane.xlu0 %2045
      %v2047 = vadd.f32 %v2001, %v2004
      %v2048 = vadd.f32 %v2047, %v2007
      %v2049 = vadd.f32 %v2048, %v2010
      %v2050 = vadd.f32 %v2049, %v2013
      %v2051 = vadd.f32 %v2050, %v2016
      %v2052 = vadd.f32 %v2051, %v2019
      %v2053 = vadd.f32 %v2052, %v2022
      %v2054 = vadd.f32 %v2053, %v2025
      %v2055 = vadd.f32 %v2054, %v2028
      %v2056 = vadd.f32 %v2055, %v2031
      %v2057 = vadd.f32 %v2056, %v2034
      %v2058 = vadd.f32 %v2057, %v2037
      %v2059 = vadd.f32 %v2058, %v2040
      %v2060 = vadd.f32 %v2059, %v2043
      %v2061 = vadd.f32 %v2060, %v2046
      %v2062 = vmul.f32 %v1982, 0.015625
      %v2063 = vmul.f32 %v2061, 0.015625
      %v2064 = vmul.f32 %v2062, %v2062
      %v2065 = vsub.f32 %v2063, %v2064
      %v2066 = vmax.f32 %v2065, 0.0
      %v2067 = vsub.f32 %v1878, %v2062
      %v2068 = vsub.f32 %v1880, %v2062
      %v2069 = vsub.f32 %v1883, %v2062
      %v2070 = vsub.f32 %v1885, %v2062
      %v2071 = vsub.f32 %v1888, %v2062
      %v2072 = vsub.f32 %v1890, %v2062
      %v2073 = vsub.f32 %v1893, %v2062
      %v2074 = vsub.f32 %v1895, %v2062
      %v2075 = vsub.f32 %v1898, %v2062
      %v2076 = vsub.f32 %v1900, %v2062
      %v2077 = vsub.f32 %v1903, %v2062
      %v2078 = vsub.f32 %v1905, %v2062
      %v2079 = vsub.f32 %v1908, %v2062
      %v2080 = vsub.f32 %v1910, %v2062
      %v2081 = vsub.f32 %v1913, %v2062
      %v2082 = vsub.f32 %v1915, %v2062
      %v2083 = vadd.f32 %v2066, 1e-05
      %v2084 = vrsqrt.pop %v2083
      %v2085 = vmul.f32 %v2084, %v2083
      %v2086 = vmul.f32 %v2085, %v2084
      %v2087 = vmul.f32 0.5, %v2086
      %v2088 = vsub.f32 1.5, %v2087
      %v2089 = vmul.f32 %v2084, %v2088
      %vm2090 = vweird.f32 %v2083
      %vm2091 = vweird.f32 %v2084
      %vm2092 = vmor %vm2090, %vm2091
      %v2093 = vsel %vm2092, %v2084, %v2089
      %v2094 = vmul.f32 %v2067, %v2093
      %v2095 = vmul.f32 %v2068, %v2093
      %v2096 = vmul.f32 %v2069, %v2093
      %v2097 = vmul.f32 %v2070, %v2093
      %v2098 = vmul.f32 %v2071, %v2093
      %v2099 = vmul.f32 %v2072, %v2093
      %v2100 = vmul.f32 %v2073, %v2093
      %v2101 = vmul.f32 %v2074, %v2093
      %v2102 = vmul.f32 %v2075, %v2093
      %v2103 = vmul.f32 %v2076, %v2093
      %v2104 = vmul.f32 %v2077, %v2093
      %v2105 = vmul.f32 %v2078, %v2093
      %v2106 = vmul.f32 %v2079, %v2093
      %v2107 = vmul.f32 %v2080, %v2093
      %v2108 = vmul.f32 %v2081, %v2093
      %v2109 = vmul.f32 %v2082, %v2093
      %2111 = vset.pattern.permute.xlu0 0
      %2112 = vperm.xlu0 %2111, %v1917
      %v2113 = vpop.permute.xlu0 %2112
      %v2115 = vmul.f32 %v2094, %v2113
      %v2116 = vmul.f32 %v2095, %v2113
      %v2117 = vmul.f32 %v2096, %v2113
      %v2118 = vmul.f32 %v2097, %v2113
      %v2119 = vmul.f32 %v2098, %v2113
      %v2120 = vmul.f32 %v2099, %v2113
      %v2121 = vmul.f32 %v2100, %v2113
      %v2122 = vmul.f32 %v2101, %v2113
      %v2123 = vmul.f32 %v2102, %v2113
      %v2124 = vmul.f32 %v2103, %v2113
      %v2125 = vmul.f32 %v2104, %v2113
      %v2126 = vmul.f32 %v2105, %v2113
      %v2127 = vmul.f32 %v2106, %v2113
      %v2128 = vmul.f32 %v2107, %v2113
      %v2129 = vmul.f32 %v2108, %v2113
      %v2130 = vmul.f32 %v2109, %v2113
      %2132 = vset.pattern.permute.xlu0 0
      %2133 = vperm.xlu0 %2132, %v1918
      %v2134 = vpop.permute.xlu0 %2133
      %v2136 = vadd.f32 %v2115, %v2134
      %v2137 = vadd.f32 %v2116, %v2134
      %v2138 = vadd.f32 %v2117, %v2134
      %v2139 = vadd.f32 %v2118, %v2134
      %v2140 = vadd.f32 %v2119, %v2134
      %v2141 = vadd.f32 %v2120, %v2134
      %v2142 = vadd.f32 %v2121, %v2134
      %v2143 = vadd.f32 %v2122, %v2134
      %v2144 = vadd.f32 %v2123, %v2134
      %v2145 = vadd.f32 %v2124, %v2134
      %v2146 = vadd.f32 %v2125, %v2134
      %v2147 = vadd.f32 %v2126, %v2134
      %v2148 = vadd.f32 %v2127, %v2134
      %v2149 = vadd.f32 %v2128, %v2134
      %v2150 = vadd.f32 %v2129, %v2134
      %v2151 = vadd.f32 %v2130, %v2134
      %v2152 = vmul.f32 %v2136, %v2136
      %v2153 = vmul.f32 %v2137, %v2137
      %v2154 = vmul.f32 %v2138, %v2138
      %v2155 = vmul.f32 %v2139, %v2139
      %v2156 = vmul.f32 %v2140, %v2140
      %v2157 = vmul.f32 %v2141, %v2141
      %v2158 = vmul.f32 %v2142, %v2142
      %v2159 = vmul.f32 %v2143, %v2143
      %v2160 = vmul.f32 %v2144, %v2144
      %v2161 = vmul.f32 %v2145, %v2145
      %v2162 = vmul.f32 %v2146, %v2146
      %v2163 = vmul.f32 %v2147, %v2147
      %v2164 = vmul.f32 %v2148, %v2148
      %v2165 = vmul.f32 %v2149, %v2149
      %v2166 = vmul.f32 %v2150, %v2150
      %v2167 = vmul.f32 %v2151, %v2151
      %v2168 = vmul.f32 %v2136, %v2152
      %v2169 = vmul.f32 %v2137, %v2153
      %v2170 = vmul.f32 %v2138, %v2154
      %v2171 = vmul.f32 %v2139, %v2155
      %v2172 = vmul.f32 %v2140, %v2156
      %v2173 = vmul.f32 %v2141, %v2157
      %v2174 = vmul.f32 %v2142, %v2158
      %v2175 = vmul.f32 %v2143, %v2159
      %v2176 = vmul.f32 %v2144, %v2160
      %v2177 = vmul.f32 %v2145, %v2161
      %v2178 = vmul.f32 %v2146, %v2162
      %v2179 = vmul.f32 %v2147, %v2163
      %v2180 = vmul.f32 %v2148, %v2164
      %v2181 = vmul.f32 %v2149, %v2165
      %v2182 = vmul.f32 %v2150, %v2166
      %v2183 = vmul.f32 %v2151, %v2167
      %v2184 = vmul.f32 %v2168, 0.044715
      %v2185 = vmul.f32 %v2169, 0.044715
      %v2186 = vmul.f32 %v2170, 0.044715
      %v2187 = vmul.f32 %v2171, 0.044715
      %v2188 = vmul.f32 %v2172, 0.044715
      %v2189 = vmul.f32 %v2173, 0.044715
      %v2190 = vmul.f32 %v2174, 0.044715
      %v2191 = vmul.f32 %v2175, 0.044715
      %v2192 = vmul.f32 %v2176, 0.044715
      %v2193 = vmul.f32 %v2177, 0.044715
      %v2194 = vmul.f32 %v2178, 0.044715
      %v2195 = vmul.f32 %v2179, 0.044715
      %v2196 = vmul.f32 %v2180, 0.044715
      %v2197 = vmul.f32 %v2181, 0.044715
      %v2198 = vmul.f32 %v2182, 0.044715
      %v2199 = vmul.f32 %v2183, 0.044715
      %v2200 = vadd.f32 %v2136, %v2184
      %v2201 = vadd.f32 %v2137, %v2185
      %v2202 = vadd.f32 %v2138, %v2186
      %v2203 = vadd.f32 %v2139, %v2187
      %v2204 = vadd.f32 %v2140, %v2188
      %v2205 = vadd.f32 %v2141, %v2189
      %v2206 = vadd.f32 %v2142, %v2190
      %v2207 = vadd.f32 %v2143, %v2191
      %v2208 = vadd.f32 %v2144, %v2192
      %v2209 = vadd.f32 %v2145, %v2193
      %v2210 = vadd.f32 %v2146, %v2194
      %v2211 = vadd.f32 %v2147, %v2195
      %v2212 = vadd.f32 %v2148, %v2196
      %v2213 = vadd.f32 %v2149, %v2197
      %v2214 = vadd.f32 %v2150, %v2198
      %v2215 = vadd.f32 %v2151, %v2199
      %v2216 = vmul.f32 %v2200, 0.7978846
      %v2217 = vmul.f32 %v2201, 0.7978846
      %v2218 = vmul.f32 %v2202, 0.7978846
      %v2219 = vmul.f32 %v2203, 0.7978846
      %v2220 = vmul.f32 %v2204, 0.7978846
      %v2221 = vmul.f32 %v2205, 0.7978846
      %v2222 = vmul.f32 %v2206, 0.7978846
      %v2223 = vmul.f32 %v2207, 0.7978846
      %v2224 = vmul.f32 %v2208, 0.7978846
      %v2225 = vmul.f32 %v2209, 0.7978846
      %v2226 = vmul.f32 %v2210, 0.7978846
      %v2227 = vmul.f32 %v2211, 0.7978846
      %v2228 = vmul.f32 %v2212, 0.7978846
      %v2229 = vmul.f32 %v2213, 0.7978846
      %v2230 = vmul.f32 %v2214, 0.7978846
      %v2231 = vmul.f32 %v2215, 0.7978846
      %v2232 = vtanh.pop %v2216
      %v2233 = vtanh.pop %v2217
      %v2234 = vtanh.pop %v2218
      %v2235 = vtanh.pop %v2219
      %v2236 = vtanh.pop %v2220
      %v2237 = vtanh.pop %v2221
      %v2238 = vtanh.pop %v2222
      %v2239 = vtanh.pop %v2223
      %v2240 = vtanh.pop %v2224
      %v2241 = vtanh.pop %v2225
      %v2242 = vtanh.pop %v2226
      %v2243 = vtanh.pop %v2227
      %v2244 = vtanh.pop %v2228
      %v2245 = vtanh.pop %v2229
      %v2246 = vtanh.pop %v2230
      %v2247 = vtanh.pop %v2231
      %v2248 = vadd.f32 %v2232, 1.0
      %v2249 = vadd.f32 %v2233, 1.0
      %v2250 = vadd.f32 %v2234, 1.0
      %v2251 = vadd.f32 %v2235, 1.0
      %v2252 = vadd.f32 %v2236, 1.0
      %v2253 = vadd.f32 %v2237, 1.0
      %v2254 = vadd.f32 %v2238, 1.0
      %v2255 = vadd.f32 %v2239, 1.0
      %v2256 = vadd.f32 %v2240, 1.0
      %v2257 = vadd.f32 %v2241, 1.0
      %v2258 = vadd.f32 %v2242, 1.0
      %v2259 = vadd.f32 %v2243, 1.0
      %v2260 = vadd.f32 %v2244, 1.0
      %v2261 = vadd.f32 %v2245, 1.0
      %v2262 = vadd.f32 %v2246, 1.0
      %v2263 = vadd.f32 %v2247, 1.0
      %v2264 = vmul.f32 %v2248, 0.5
      %v2265 = vmul.f32 %v2249, 0.5
      %v2266 = vmul.f32 %v2250, 0.5
      %v2267 = vmul.f32 %v2251, 0.5
      %v2268 = vmul.f32 %v2252, 0.5
      %v2269 = vmul.f32 %v2253, 0.5
      %v2270 = vmul.f32 %v2254, 0.5
      %v2271 = vmul.f32 %v2255, 0.5
      %v2272 = vmul.f32 %v2256, 0.5
      %v2273 = vmul.f32 %v2257, 0.5
      %v2274 = vmul.f32 %v2258, 0.5
      %v2275 = vmul.f32 %v2259, 0.5
      %v2276 = vmul.f32 %v2260, 0.5
      %v2277 = vmul.f32 %v2261, 0.5
      %v2278 = vmul.f32 %v2262, 0.5
      %v2279 = vmul.f32 %v2263, 0.5
      %v2280 = vmul.f32 %v2136, %v2264
      %v2281 = vmul.f32 %v2137, %v2265
      %v2282 = vmul.f32 %v2138, %v2266
      %v2283 = vmul.f32 %v2139, %v2267
      %v2284 = vmul.f32 %v2140, %v2268
      %v2285 = vmul.f32 %v2141, %v2269
      %v2286 = vmul.f32 %v2142, %v2270
      %v2287 = vmul.f32 %v2143, %v2271
      %v2288 = vmul.f32 %v2144, %v2272
      %v2289 = vmul.f32 %v2145, %v2273
      %v2290 = vmul.f32 %v2146, %v2274
      %v2291 = vmul.f32 %v2147, %v2275
      %v2292 = vmul.f32 %v2148, %v2276
      %v2293 = vmul.f32 %v2149, %v2277
      %v2294 = vmul.f32 %v2150, %v2278
      %v2295 = vmul.f32 %v2151, %v2279
      %v2296 = vpack.c.bf16 %v2281, %v2280
      %v2297 = vpack.c.bf16 %v2283, %v2282
      %v2298 = vpack.c.bf16 %v2285, %v2284
      %v2299 = vpack.c.bf16 %v2287, %v2286
      %v2300 = vpack.c.bf16 %v2289, %v2288
      %v2301 = vpack.c.bf16 %v2291, %v2290
      %v2302 = vpack.c.bf16 %v2293, %v2292
      %v2303 = vpack.c.bf16 %v2295, %v2294
      %v2304 = vld [vmem:[%s9] sm:$0x3]
      %v2306 = vsel %vm1919, %v2296, 0
      %v2309 = vsel %vm1919, %v2297, 0
      %v2312 = vsel %vm1919, %v2298, 0
      %v2315 = vsel %vm1919, %v2299, 0
      %v2318 = vsel %vm1919, %v2300, 0
      %v2321 = vsel %vm1919, %v2301, 0
      %v2324 = vsel %vm1919, %v2302, 0
      %v2327 = vsel %vm1919, %v2303, 0
      %vm2329 = vcmask 1041408
      %v2331 = vsel %vm2329, %v2304, 0
      %2333 = vmatpush.bf16.msra.mxu0 0
      %2334 = vmatpush.bf16.msra.mxu0 0
      %2335 = vmatpush.bf16.msra.mxu0 0
      %2336 = vmatpush.bf16.msra.mxu0 0
      %2337 = vmatpush.bf16.msra.mxu0 0
      %2338 = vmatpush.bf16.msra.mxu0 0
      %2339 = vmatpush.bf16.msra.mxu0 0
      %2340 = vmatpush.bf16.msra.mxu0 %v2331
      %2341 = vmatmul.bf16.gmra.mxu0 %v2306
      %v2342 = vpop.f32.mrf.mxu0
      %v2343 = vadd.f32 0.0, %v2342
      %v2344 = vpop.f32.mrf.mxu0
      %v2345 = vadd.f32 0.0, %v2344
      %2346 = vmatmul.bf16.gmra.mxu0 %v2309
      %v2347 = vpop.f32.mrf.mxu0
      %v2348 = vadd.f32 0.0, %v2347
      %v2349 = vpop.f32.mrf.mxu0
      %v2350 = vadd.f32 0.0, %v2349
      %2351 = vmatmul.bf16.gmra.mxu0 %v2312
      %v2352 = vpop.f32.mrf.mxu0
      %v2353 = vadd.f32 0.0, %v2352
      %v2354 = vpop.f32.mrf.mxu0
      %v2355 = vadd.f32 0.0, %v2354
      %2356 = vmatmul.bf16.gmra.mxu0 %v2315
      %v2357 = vpop.f32.mrf.mxu0
      %v2358 = vadd.f32 0.0, %v2357
      %v2359 = vpop.f32.mrf.mxu0
      %v2360 = vadd.f32 0.0, %v2359
      %2361 = vmatmul.bf16.gmra.mxu0 %v2318
      %v2362 = vpop.f32.mrf.mxu0
      %v2363 = vadd.f32 0.0, %v2362
      %v2364 = vpop.f32.mrf.mxu0
      %v2365 = vadd.f32 0.0, %v2364
      %2366 = vmatmul.bf16.gmra.mxu0 %v2321
      %v2367 = vpop.f32.mrf.mxu0
      %v2368 = vadd.f32 0.0, %v2367
      %v2369 = vpop.f32.mrf.mxu0
      %v2370 = vadd.f32 0.0, %v2369
      %2371 = vmatmul.bf16.gmra.mxu0 %v2324
      %v2372 = vpop.f32.mrf.mxu0
      %v2373 = vadd.f32 0.0, %v2372
      %v2374 = vpop.f32.mrf.mxu0
      %v2375 = vadd.f32 0.0, %v2374
      %2376 = vmatmul.bf16.gmra.mxu0 %v2327
      %v2377 = vpop.f32.mrf.mxu0
      %v2378 = vadd.f32 0.0, %v2377
      %v2379 = vpop.f32.mrf.mxu0
      %v2380 = vadd.f32 0.0, %v2379
      %2381 = vdwg.mxu0
      %v2382 = vadd.f32 %v1433, %v2343
      %v2383 = vadd.f32 %v1434, %v2345
      %v2384 = vadd.f32 %v1435, %v2348
      %v2385 = vadd.f32 %v1436, %v2350
      %v2386 = vadd.f32 %v1437, %v2353
      %v2387 = vadd.f32 %v1438, %v2355
      %v2388 = vadd.f32 %v1439, %v2358
      %v2389 = vadd.f32 %v1440, %v2360
      %v2390 = vadd.f32 %v1441, %v2363
      %v2391 = vadd.f32 %v1442, %v2365
      %v2392 = vadd.f32 %v1443, %v2368
      %v2393 = vadd.f32 %v1444, %v2370
      %v2394 = vadd.f32 %v1445, %v2373
      %v2395 = vadd.f32 %v1446, %v2375
      %v2396 = vadd.f32 %v1447, %v2378
      %v2397 = vadd.f32 %v1448, %v2380
      %v2398 = vld [vmem:[%s10] sm:$0xff]
      %v2399 = vld [vmem:[%s11] sm:$0xff]
      %v2400 = vsel %vm1451, %v2382, 0.0
      %2401 = vadd.xlane.f32.xlu0 %v2400
      %v2402 = vpop.xlane.xlu0 %2401
      %v2403 = vsel %vm1451, %v2383, 0.0
      %2404 = vadd.xlane.f32.xlu0 %v2403
      %v2405 = vpop.xlane.xlu0 %2404
      %v2406 = vsel %vm1451, %v2384, 0.0
      %2407 = vadd.xlane.f32.xlu0 %v2406
      %v2408 = vpop.xlane.xlu0 %2407
      %v2409 = vsel %vm1451, %v2385, 0.0
      %2410 = vadd.xlane.f32.xlu0 %v2409
      %v2411 = vpop.xlane.xlu0 %2410
      %v2412 = vsel %vm1451, %v2386, 0.0
      %2413 = vadd.xlane.f32.xlu0 %v2412
      %v2414 = vpop.xlane.xlu0 %2413
      %v2415 = vsel %vm1451, %v2387, 0.0
      %2416 = vadd.xlane.f32.xlu0 %v2415
      %v2417 = vpop.xlane.xlu0 %2416
      %v2418 = vsel %vm1451, %v2388, 0.0
      %2419 = vadd.xlane.f32.xlu0 %v2418
      %v2420 = vpop.xlane.xlu0 %2419
      %v2421 = vsel %vm1451, %v2389, 0.0
      %2422 = vadd.xlane.f32.xlu0 %v2421
      %v2423 = vpop.xlane.xlu0 %2422
      %v2424 = vsel %vm1451, %v2390, 0.0
      %2425 = vadd.xlane.f32.xlu0 %v2424
      %v2426 = vpop.xlane.xlu0 %2425
      %v2427 = vsel %vm1451, %v2391, 0.0
      %2428 = vadd.xlane.f32.xlu0 %v2427
      %v2429 = vpop.xlane.xlu0 %2428
      %v2430 = vsel %vm1451, %v2392, 0.0
      %2431 = vadd.xlane.f32.xlu0 %v2430
      %v2432 = vpop.xlane.xlu0 %2431
      %v2433 = vsel %vm1451, %v2393, 0.0
      %2434 = vadd.xlane.f32.xlu0 %v2433
      %v2435 = vpop.xlane.xlu0 %2434
      %v2436 = vsel %vm1451, %v2394, 0.0
      %2437 = vadd.xlane.f32.xlu0 %v2436
      %v2438 = vpop.xlane.xlu0 %2437
      %v2439 = vsel %vm1451, %v2395, 0.0
      %2440 = vadd.xlane.f32.xlu0 %v2439
      %v2441 = vpop.xlane.xlu0 %2440
      %v2442 = vsel %vm1451, %v2396, 0.0
      %2443 = vadd.xlane.f32.xlu0 %v2442
      %v2444 = vpop.xlane.xlu0 %2443
      %v2445 = vsel %vm1451, %v2397, 0.0
      %2446 = vadd.xlane.f32.xlu0 %v2445
      %v2447 = vpop.xlane.xlu0 %2446
      %v2448 = vadd.f32 %v2402, %v2405
      %v2449 = vadd.f32 %v2448, %v2408
      %v2450 = vadd.f32 %v2449, %v2411
      %v2451 = vadd.f32 %v2450, %v2414
      %v2452 = vadd.f32 %v2451, %v2417
      %v2453 = vadd.f32 %v2452, %v2420
      %v2454 = vadd.f32 %v2453, %v2423
      %v2455 = vadd.f32 %v2454, %v2426
      %v2456 = vadd.f32 %v2455, %v2429
      %v2457 = vadd.f32 %v2456, %v2432
      %v2458 = vadd.f32 %v2457, %v2435
      %v2459 = vadd.f32 %v2458, %v2438
      %v2460 = vadd.f32 %v2459, %v2441
      %v2461 = vadd.f32 %v2460, %v2444
      %v2462 = vadd.f32 %v2461, %v2447
      %v2463 = vmul.f32 %v2382, %v2382
      %v2464 = vmul.f32 %v2383, %v2383
      %v2465 = vmul.f32 %v2384, %v2384
      %v2466 = vmul.f32 %v2385, %v2385
      %v2467 = vmul.f32 %v2386, %v2386
      %v2468 = vmul.f32 %v2387, %v2387
      %v2469 = vmul.f32 %v2388, %v2388
      %v2470 = vmul.f32 %v2389, %v2389
      %v2471 = vmul.f32 %v2390, %v2390
      %v2472 = vmul.f32 %v2391, %v2391
      %v2473 = vmul.f32 %v2392, %v2392
      %v2474 = vmul.f32 %v2393, %v2393
      %v2475 = vmul.f32 %v2394, %v2394
      %v2476 = vmul.f32 %v2395, %v2395
      %v2477 = vmul.f32 %v2396, %v2396
      %v2478 = vmul.f32 %v2397, %v2397
      %v2479 = vsel %vm1451, %v2463, 0.0
      %2480 = vadd.xlane.f32.xlu0 %v2479
      %v2481 = vpop.xlane.xlu0 %2480
      %v2482 = vsel %vm1451, %v2464, 0.0
      %2483 = vadd.xlane.f32.xlu0 %v2482
      %v2484 = vpop.xlane.xlu0 %2483
      %v2485 = vsel %vm1451, %v2465, 0.0
      %2486 = vadd.xlane.f32.xlu0 %v2485
      %v2487 = vpop.xlane.xlu0 %2486
      %v2488 = vsel %vm1451, %v2466, 0.0
      %2489 = vadd.xlane.f32.xlu0 %v2488
      %v2490 = vpop.xlane.xlu0 %2489
      %v2491 = vsel %vm1451, %v2467, 0.0
      %2492 = vadd.xlane.f32.xlu0 %v2491
      %v2493 = vpop.xlane.xlu0 %2492
      %v2494 = vsel %vm1451, %v2468, 0.0
      %2495 = vadd.xlane.f32.xlu0 %v2494
      %v2496 = vpop.xlane.xlu0 %2495
      %v2497 = vsel %vm1451, %v2469, 0.0
      %2498 = vadd.xlane.f32.xlu0 %v2497
      %v2499 = vpop.xlane.xlu0 %2498
      %v2500 = vsel %vm1451, %v2470, 0.0
      %2501 = vadd.xlane.f32.xlu0 %v2500
      %v2502 = vpop.xlane.xlu0 %2501
      %v2503 = vsel %vm1451, %v2471, 0.0
      %2504 = vadd.xlane.f32.xlu0 %v2503
      %v2505 = vpop.xlane.xlu0 %2504
      %v2506 = vsel %vm1451, %v2472, 0.0
      %2507 = vadd.xlane.f32.xlu0 %v2506
      %v2508 = vpop.xlane.xlu0 %2507
      %v2509 = vsel %vm1451, %v2473, 0.0
      %2510 = vadd.xlane.f32.xlu0 %v2509
      %v2511 = vpop.xlane.xlu0 %2510
      %v2512 = vsel %vm1451, %v2474, 0.0
      %2513 = vadd.xlane.f32.xlu0 %v2512
      %v2514 = vpop.xlane.xlu0 %2513
      %v2515 = vsel %vm1451, %v2475, 0.0
      %2516 = vadd.xlane.f32.xlu0 %v2515
      %v2517 = vpop.xlane.xlu0 %2516
      %v2518 = vsel %vm1451, %v2476, 0.0
      %2519 = vadd.xlane.f32.xlu0 %v2518
      %v2520 = vpop.xlane.xlu0 %2519
      %v2521 = vsel %vm1451, %v2477, 0.0
      %2522 = vadd.xlane.f32.xlu0 %v2521
      %v2523 = vpop.xlane.xlu0 %2522
      %v2524 = vsel %vm1451, %v2478, 0.0
      %2525 = vadd.xlane.f32.xlu0 %v2524
      %v2526 = vpop.xlane.xlu0 %2525
      %v2527 = vadd.f32 %v2481, %v2484
      %v2528 = vadd.f32 %v2527, %v2487
      %v2529 = vadd.f32 %v2528, %v2490
      %v2530 = vadd.f32 %v2529, %v2493
      %v2531 = vadd.f32 %v2530, %v2496
      %v2532 = vadd.f32 %v2531, %v2499
      %v2533 = vadd.f32 %v2532, %v2502
      %v2534 = vadd.f32 %v2533, %v2505
      %v2535 = vadd.f32 %v2534, %v2508
      %v2536 = vadd.f32 %v2535, %v2511
      %v2537 = vadd.f32 %v2536, %v2514
      %v2538 = vadd.f32 %v2537, %v2517
      %v2539 = vadd.f32 %v2538, %v2520
      %v2540 = vadd.f32 %v2539, %v2523
      %v2541 = vadd.f32 %v2540, %v2526
      %v2542 = vmul.f32 %v2462, 0.00390625
      %v2543 = vmul.f32 %v2541, 0.00390625
      %v2544 = vmul.f32 %v2542, %v2542
      %v2545 = vsub.f32 %v2543, %v2544
      %v2546 = vmax.f32 %v2545, 0.0
      %v2547 = vsub.f32 %v2382, %v2542
      %v2548 = vsub.f32 %v2383, %v2542
      %v2549 = vsub.f32 %v2384, %v2542
      %v2550 = vsub.f32 %v2385, %v2542
      %v2551 = vsub.f32 %v2386, %v2542
      %v2552 = vsub.f32 %v2387, %v2542
      %v2553 = vsub.f32 %v2388, %v2542
      %v2554 = vsub.f32 %v2389, %v2542
      %v2555 = vsub.f32 %v2390, %v2542
      %v2556 = vsub.f32 %v2391, %v2542
      %v2557 = vsub.f32 %v2392, %v2542
      %v2558 = vsub.f32 %v2393, %v2542
      %v2559 = vsub.f32 %v2394, %v2542
      %v2560 = vsub.f32 %v2395, %v2542
      %v2561 = vsub.f32 %v2396, %v2542
      %v2562 = vsub.f32 %v2397, %v2542
      %v2563 = vadd.f32 %v2546, 1e-05
      %v2564 = vrsqrt.pop %v2563
      %v2565 = vmul.f32 %v2564, %v2563
      %v2566 = vmul.f32 %v2565, %v2564
      %v2567 = vmul.f32 0.5, %v2566
      %v2568 = vsub.f32 1.5, %v2567
      %v2569 = vmul.f32 %v2564, %v2568
      %vm2570 = vweird.f32 %v2563
      %vm2571 = vweird.f32 %v2564
      %vm2572 = vmor %vm2570, %vm2571
      %v2573 = vsel %vm2572, %v2564, %v2569
      %v2574 = vmul.f32 %v2547, %v2573
      %v2575 = vmul.f32 %v2548, %v2573
      %v2576 = vmul.f32 %v2549, %v2573
      %v2577 = vmul.f32 %v2550, %v2573
      %v2578 = vmul.f32 %v2551, %v2573
      %v2579 = vmul.f32 %v2552, %v2573
      %v2580 = vmul.f32 %v2553, %v2573
      %v2581 = vmul.f32 %v2554, %v2573
      %v2582 = vmul.f32 %v2555, %v2573
      %v2583 = vmul.f32 %v2556, %v2573
      %v2584 = vmul.f32 %v2557, %v2573
      %v2585 = vmul.f32 %v2558, %v2573
      %v2586 = vmul.f32 %v2559, %v2573
      %v2587 = vmul.f32 %v2560, %v2573
      %v2588 = vmul.f32 %v2561, %v2573
      %v2589 = vmul.f32 %v2562, %v2573
      %2591 = vset.pattern.permute.xlu0 0
      %2592 = vperm.xlu0 %2591, %v2398
      %v2593 = vpop.permute.xlu0 %2592
      %v2595 = vmul.f32 %v2574, %v2593
      %v2596 = vmul.f32 %v2575, %v2593
      %v2597 = vmul.f32 %v2576, %v2593
      %v2598 = vmul.f32 %v2577, %v2593
      %v2599 = vmul.f32 %v2578, %v2593
      %v2600 = vmul.f32 %v2579, %v2593
      %v2601 = vmul.f32 %v2580, %v2593
      %v2602 = vmul.f32 %v2581, %v2593
      %v2603 = vmul.f32 %v2582, %v2593
      %v2604 = vmul.f32 %v2583, %v2593
      %v2605 = vmul.f32 %v2584, %v2593
      %v2606 = vmul.f32 %v2585, %v2593
      %v2607 = vmul.f32 %v2586, %v2593
      %v2608 = vmul.f32 %v2587, %v2593
      %v2609 = vmul.f32 %v2588, %v2593
      %v2610 = vmul.f32 %v2589, %v2593
      %2612 = vset.pattern.permute.xlu0 0
      %2613 = vperm.xlu0 %2612, %v2399
      %v2614 = vpop.permute.xlu0 %2613
      %v2616 = vadd.f32 %v2595, %v2614
      %v2617 = vadd.f32 %v2596, %v2614
      %v2618 = vadd.f32 %v2597, %v2614
      %v2619 = vadd.f32 %v2598, %v2614
      %v2620 = vadd.f32 %v2599, %v2614
      %v2621 = vadd.f32 %v2600, %v2614
      %v2622 = vadd.f32 %v2601, %v2614
      %v2623 = vadd.f32 %v2602, %v2614
      %v2624 = vadd.f32 %v2603, %v2614
      %v2625 = vadd.f32 %v2604, %v2614
      %v2626 = vadd.f32 %v2605, %v2614
      %v2627 = vadd.f32 %v2606, %v2614
      %v2628 = vadd.f32 %v2607, %v2614
      %v2629 = vadd.f32 %v2608, %v2614
      %v2630 = vadd.f32 %v2609, %v2614
      %v2631 = vadd.f32 %v2610, %v2614
      %v2632 = vmul.f32 %v2616, %v2616
      %v2633 = vmul.f32 %v2617, %v2617
      %v2634 = vmul.f32 %v2618, %v2618
      %v2635 = vmul.f32 %v2619, %v2619
      %v2636 = vmul.f32 %v2620, %v2620
      %v2637 = vmul.f32 %v2621, %v2621
      %v2638 = vmul.f32 %v2622, %v2622
      %v2639 = vmul.f32 %v2623, %v2623
      %v2640 = vmul.f32 %v2624, %v2624
      %v2641 = vmul.f32 %v2625, %v2625
      %v2642 = vmul.f32 %v2626, %v2626
      %v2643 = vmul.f32 %v2627, %v2627
      %v2644 = vmul.f32 %v2628, %v2628
      %v2645 = vmul.f32 %v2629, %v2629
      %v2646 = vmul.f32 %v2630, %v2630
      %v2647 = vmul.f32 %v2631, %v2631
      %v2648 = vmul.f32 %v2616, %v2632
      %v2649 = vmul.f32 %v2617, %v2633
      %v2650 = vmul.f32 %v2618, %v2634
      %v2651 = vmul.f32 %v2619, %v2635
      %v2652 = vmul.f32 %v2620, %v2636
      %v2653 = vmul.f32 %v2621, %v2637
      %v2654 = vmul.f32 %v2622, %v2638
      %v2655 = vmul.f32 %v2623, %v2639
      %v2656 = vmul.f32 %v2624, %v2640
      %v2657 = vmul.f32 %v2625, %v2641
      %v2658 = vmul.f32 %v2626, %v2642
      %v2659 = vmul.f32 %v2627, %v2643
      %v2660 = vmul.f32 %v2628, %v2644
      %v2661 = vmul.f32 %v2629, %v2645
      %v2662 = vmul.f32 %v2630, %v2646
      %v2663 = vmul.f32 %v2631, %v2647
      %v2664 = vmul.f32 %v2648, 0.044715
      %v2665 = vmul.f32 %v2649, 0.044715
      %v2666 = vmul.f32 %v2650, 0.044715
      %v2667 = vmul.f32 %v2651, 0.044715
      %v2668 = vmul.f32 %v2652, 0.044715
      %v2669 = vmul.f32 %v2653, 0.044715
      %v2670 = vmul.f32 %v2654, 0.044715
      %v2671 = vmul.f32 %v2655, 0.044715
      %v2672 = vmul.f32 %v2656, 0.044715
      %v2673 = vmul.f32 %v2657, 0.044715
      %v2674 = vmul.f32 %v2658, 0.044715
      %v2675 = vmul.f32 %v2659, 0.044715
      %v2676 = vmul.f32 %v2660, 0.044715
      %v2677 = vmul.f32 %v2661, 0.044715
      %v2678 = vmul.f32 %v2662, 0.044715
      %v2679 = vmul.f32 %v2663, 0.044715
      %v2680 = vadd.f32 %v2616, %v2664
      %v2681 = vadd.f32 %v2617, %v2665
      %v2682 = vadd.f32 %v2618, %v2666
      %v2683 = vadd.f32 %v2619, %v2667
      %v2684 = vadd.f32 %v2620, %v2668
      %v2685 = vadd.f32 %v2621, %v2669
      %v2686 = vadd.f32 %v2622, %v2670
      %v2687 = vadd.f32 %v2623, %v2671
      %v2688 = vadd.f32 %v2624, %v2672
      %v2689 = vadd.f32 %v2625, %v2673
      %v2690 = vadd.f32 %v2626, %v2674
      %v2691 = vadd.f32 %v2627, %v2675
      %v2692 = vadd.f32 %v2628, %v2676
      %v2693 = vadd.f32 %v2629, %v2677
      %v2694 = vadd.f32 %v2630, %v2678
      %v2695 = vadd.f32 %v2631, %v2679
      %v2696 = vmul.f32 %v2680, 0.7978846
      %v2697 = vmul.f32 %v2681, 0.7978846
      %v2698 = vmul.f32 %v2682, 0.7978846
      %v2699 = vmul.f32 %v2683, 0.7978846
      %v2700 = vmul.f32 %v2684, 0.7978846
      %v2701 = vmul.f32 %v2685, 0.7978846
      %v2702 = vmul.f32 %v2686, 0.7978846
      %v2703 = vmul.f32 %v2687, 0.7978846
      %v2704 = vmul.f32 %v2688, 0.7978846
      %v2705 = vmul.f32 %v2689, 0.7978846
      %v2706 = vmul.f32 %v2690, 0.7978846
      %v2707 = vmul.f32 %v2691, 0.7978846
      %v2708 = vmul.f32 %v2692, 0.7978846
      %v2709 = vmul.f32 %v2693, 0.7978846
      %v2710 = vmul.f32 %v2694, 0.7978846
      %v2711 = vmul.f32 %v2695, 0.7978846
      %v2712 = vtanh.pop %v2696
      %v2713 = vtanh.pop %v2697
      %v2714 = vtanh.pop %v2698
      %v2715 = vtanh.pop %v2699
      %v2716 = vtanh.pop %v2700
      %v2717 = vtanh.pop %v2701
      %v2718 = vtanh.pop %v2702
      %v2719 = vtanh.pop %v2703
      %v2720 = vtanh.pop %v2704
      %v2721 = vtanh.pop %v2705
      %v2722 = vtanh.pop %v2706
      %v2723 = vtanh.pop %v2707
      %v2724 = vtanh.pop %v2708
      %v2725 = vtanh.pop %v2709
      %v2726 = vtanh.pop %v2710
      %v2727 = vtanh.pop %v2711
      %v2728 = vadd.f32 %v2712, 1.0
      %v2729 = vadd.f32 %v2713, 1.0
      %v2730 = vadd.f32 %v2714, 1.0
      %v2731 = vadd.f32 %v2715, 1.0
      %v2732 = vadd.f32 %v2716, 1.0
      %v2733 = vadd.f32 %v2717, 1.0
      %v2734 = vadd.f32 %v2718, 1.0
      %v2735 = vadd.f32 %v2719, 1.0
      %v2736 = vadd.f32 %v2720, 1.0
      %v2737 = vadd.f32 %v2721, 1.0
      %v2738 = vadd.f32 %v2722, 1.0
      %v2739 = vadd.f32 %v2723, 1.0
      %v2740 = vadd.f32 %v2724, 1.0
      %v2741 = vadd.f32 %v2725, 1.0
      %v2742 = vadd.f32 %v2726, 1.0
      %v2743 = vadd.f32 %v2727, 1.0
      %v2744 = vmul.f32 %v2728, 0.5
      %v2745 = vmul.f32 %v2729, 0.5
      %v2746 = vmul.f32 %v2730, 0.5
      %v2747 = vmul.f32 %v2731, 0.5
      %v2748 = vmul.f32 %v2732, 0.5
      %v2749 = vmul.f32 %v2733, 0.5
      %v2750 = vmul.f32 %v2734, 0.5
      %v2751 = vmul.f32 %v2735, 0.5
      %v2752 = vmul.f32 %v2736, 0.5
      %v2753 = vmul.f32 %v2737, 0.5
      %v2754 = vmul.f32 %v2738, 0.5
      %v2755 = vmul.f32 %v2739, 0.5
      %v2756 = vmul.f32 %v2740, 0.5
      %v2757 = vmul.f32 %v2741, 0.5
      %v2758 = vmul.f32 %v2742, 0.5
      %v2759 = vmul.f32 %v2743, 0.5
      %v2760 = vmul.f32 %v2616, %v2744
      %v2761 = vmul.f32 %v2617, %v2745
      %v2762 = vmul.f32 %v2618, %v2746
      %v2763 = vmul.f32 %v2619, %v2747
      %v2764 = vmul.f32 %v2620, %v2748
      %v2765 = vmul.f32 %v2621, %v2749
      %v2766 = vmul.f32 %v2622, %v2750
      %v2767 = vmul.f32 %v2623, %v2751
      %v2768 = vmul.f32 %v2624, %v2752
      %v2769 = vmul.f32 %v2625, %v2753
      %v2770 = vmul.f32 %v2626, %v2754
      %v2771 = vmul.f32 %v2627, %v2755
      %v2772 = vmul.f32 %v2628, %v2756
      %v2773 = vmul.f32 %v2629, %v2757
      %v2774 = vmul.f32 %v2630, %v2758
      %v2775 = vmul.f32 %v2631, %v2759
      %v2776 = vpack.c.bf16 %v2760, %v2760
      %v2777 = vpack.c.bf16 %v2761, %v2761
      %v2778 = vpack.c.bf16 %v2762, %v2762
      %v2779 = vpack.c.bf16 %v2763, %v2763
      %v2780 = vpack.c.bf16 %v2764, %v2764
      %v2781 = vpack.c.bf16 %v2765, %v2765
      %v2782 = vpack.c.bf16 %v2766, %v2766
      %v2783 = vpack.c.bf16 %v2767, %v2767
      %v2784 = vpack.c.bf16 %v2768, %v2768
      %v2785 = vpack.c.bf16 %v2769, %v2769
      %v2786 = vpack.c.bf16 %v2770, %v2770
      %v2787 = vpack.c.bf16 %v2771, %v2771
      %v2788 = vpack.c.bf16 %v2772, %v2772
      %v2789 = vpack.c.bf16 %v2773, %v2773
      %v2790 = vpack.c.bf16 %v2774, %v2774
      %v2791 = vpack.c.bf16 %v2775, %v2775
      %2807 = vrot.lane.b32.xlu0 %v2776, 1
      %v2808 = vpop.permute.xlu0 %2807
      %2809 = vrot.lane.b32.xlu0 %v2777, 1
      %v2810 = vpop.permute.xlu0 %2809
      %2811 = vrot.lane.b32.xlu0 %v2778, 1
      %v2812 = vpop.permute.xlu0 %2811
      %2813 = vrot.lane.b32.xlu0 %v2779, 1
      %v2814 = vpop.permute.xlu0 %2813
      %2815 = vrot.lane.b32.xlu0 %v2780, 1
      %v2816 = vpop.permute.xlu0 %2815
      %2817 = vrot.lane.b32.xlu0 %v2781, 1
      %v2818 = vpop.permute.xlu0 %2817
      %2819 = vrot.lane.b32.xlu0 %v2782, 1
      %v2820 = vpop.permute.xlu0 %2819
      %2821 = vrot.lane.b32.xlu0 %v2783, 1
      %v2822 = vpop.permute.xlu0 %2821
      %2823 = vrot.lane.b32.xlu0 %v2784, 1
      %v2824 = vpop.permute.xlu0 %2823
      %2825 = vrot.lane.b32.xlu0 %v2785, 1
      %v2826 = vpop.permute.xlu0 %2825
      %2827 = vrot.lane.b32.xlu0 %v2786, 1
      %v2828 = vpop.permute.xlu0 %2827
      %2829 = vrot.lane.b32.xlu0 %v2787, 1
      %v2830 = vpop.permute.xlu0 %2829
      %2831 = vrot.lane.b32.xlu0 %v2788, 1
      %v2832 = vpop.permute.xlu0 %2831
      %2833 = vrot.lane.b32.xlu0 %v2789, 1
      %v2834 = vpop.permute.xlu0 %2833
      %2835 = vrot.lane.b32.xlu0 %v2790, 1
      %v2836 = vpop.permute.xlu0 %2835
      %vm2852 = vcmask 125960
      %2853 = vst.msk [vmem:[%s946] sm:$0xf] %vm2852, %v2808
      %2854 = vst.msk [vmem:[%s946 + $0x28] sm:$0xf] %vm2852, %v2810
      %2855 = vst.msk [vmem:[%s946 + $0x50] sm:$0xf] %vm2852, %v2812
      %2856 = vst.msk [vmem:[%s946 + $0x78] sm:$0xf] %vm2852, %v2814
      %2857 = vst.msk [vmem:[%s946 + $0xa0] sm:$0xf] %vm2852, %v2816
      %2858 = vst.msk [vmem:[%s946 + $0xc8] sm:$0xf] %vm2852, %v2818
      %2859 = vst.msk [vmem:[%s946 + $0xf0] sm:$0xf] %vm2852, %v2820
      %2860 = vst.msk [vmem:[%s946 + $0x118] sm:$0xf] %vm2852, %v2822
      %2861 = vst.msk [vmem:[%s946 + $0x140] sm:$0xf] %vm2852, %v2824
      %2862 = vst.msk [vmem:[%s946 + $0x168] sm:$0xf] %vm2852, %v2826
      %2863 = vst.msk [vmem:[%s946 + $0x190] sm:$0xf] %vm2852, %v2828
      %2864 = vst.msk [vmem:[%s946 + $0x1b8] sm:$0xf] %vm2852, %v2830
      %2865 = vst.msk [vmem:[%s946 + $0x1e0] sm:$0xf] %vm2852, %v2832
      %2866 = vst.msk [vmem:[%s946 + $0x208] sm:$0xf] %vm2852, %v2834
      %2867 = vst.msk [vmem:[%s946 + $0x230] sm:$0xf] %vm2852, %v2836
      %2868 = vst.msk [vmem:[#allocation2] sm:$0xf] %vm460, 0
      %vm2869 = vcmask 3072
      %2870 = vst.msk [vmem:[#allocation2] sm:$0xf] %vm2869, 0
      %2871 = vst.msk [vmem:[#allocation2 + $0x28] sm:$0xf] %vm2869, 0
      %2872 = vst.msk [vmem:[#allocation2 + $0x50] sm:$0xf] %vm2869, 0
      %2873 = vst.msk [vmem:[#allocation2 + $0x78] sm:$0xf] %vm2869, 0
      %2874 = vst.msk [vmem:[#allocation2 + $0xa0] sm:$0xf] %vm2869, 0
      %2875 = vst.msk [vmem:[#allocation2 + $0xc8] sm:$0xf] %vm2869, 0
      %2876 = vst.msk [vmem:[#allocation2 + $0xf0] sm:$0xf] %vm2869, 0
      %2877 = vst.msk [vmem:[#allocation2 + $0x118] sm:$0xf] %vm2869, 0
      %2878 = vst.msk [vmem:[#allocation2 + $0x140] sm:$0xf] %vm2869, 0
      %2879 = vst.msk [vmem:[#allocation2 + $0x168] sm:$0xf] %vm2869, 0
      %2880 = vst.msk [vmem:[#allocation2 + $0x190] sm:$0xf] %vm2869, 0
      %2881 = vst.msk [vmem:[#allocation2 + $0x1b8] sm:$0xf] %vm2869, 0
      %2882 = vst.msk [vmem:[#allocation2 + $0x1e0] sm:$0xf] %vm2869, 0
      %2883 = vst.msk [vmem:[#allocation2 + $0x208] sm:$0xf] %vm2869, 0
      %2884 = vst.msk [vmem:[#allocation2 + $0x230] sm:$0xf] %vm2869, 0
      %2885 = vst.msk [vmem:[#allocation2 + $0x258] sm:$0xf] %vm2869, 0
      %2886 = vst.msk [vmem:[%s946 + $0x4] sm:$0xf] %vm460, %v2776
      %2887 = vst.msk [vmem:[%s946 + $0x2c] sm:$0xf] %vm460, %v2777
      %2888 = vst.msk [vmem:[%s946 + $0x54] sm:$0xf] %vm460, %v2778
      %2889 = vst.msk [vmem:[%s946 + $0x7c] sm:$0xf] %vm460, %v2779
      %2890 = vst.msk [vmem:[%s946 + $0xa4] sm:$0xf] %vm460, %v2780
      %2891 = vst.msk [vmem:[%s946 + $0xcc] sm:$0xf] %vm460, %v2781
      %2892 = vst.msk [vmem:[%s946 + $0xf4] sm:$0xf] %vm460, %v2782
      %2893 = vst.msk [vmem:[%s946 + $0x11c] sm:$0xf] %vm460, %v2783
      %2894 = vst.msk [vmem:[%s946 + $0x144] sm:$0xf] %vm460, %v2784
      %2895 = vst.msk [vmem:[%s946 + $0x16c] sm:$0xf] %vm460, %v2785
      %2896 = vst.msk [vmem:[%s946 + $0x194] sm:$0xf] %vm460, %v2786
      %2897 = vst.msk [vmem:[%s946 + $0x1bc] sm:$0xf] %vm460, %v2787
      %2898 = vst.msk [vmem:[%s946 + $0x1e4] sm:$0xf] %vm460, %v2788
      %2899 = vst.msk [vmem:[%s946 + $0x20c] sm:$0xf] %vm460, %v2789
      %2900 = vst.msk [vmem:[%s946 + $0x234] sm:$0xf] %vm460, %v2790
      %2901 = vst.msk [vmem:[#allocation2 + $0x4] sm:$0xf] %vm460, 0
      %2902 = vrot.lane.b32.xlu0 %v2776, 127
      %v2903 = vpop.permute.xlu0 %2902
      %2904 = vrot.lane.b32.xlu0 %v2777, 127
      %v2905 = vpop.permute.xlu0 %2904
      %2906 = vrot.lane.b32.xlu0 %v2778, 127
      %v2907 = vpop.permute.xlu0 %2906
      %2908 = vrot.lane.b32.xlu0 %v2779, 127
      %v2909 = vpop.permute.xlu0 %2908
      %2910 = vrot.lane.b32.xlu0 %v2780, 127
      %v2911 = vpop.permute.xlu0 %2910
      %2912 = vrot.lane.b32.xlu0 %v2781, 127
      %v2913 = vpop.permute.xlu0 %2912
      %2914 = vrot.lane.b32.xlu0 %v2782, 127
      %v2915 = vpop.permute.xlu0 %2914
      %2916 = vrot.lane.b32.xlu0 %v2783, 127
      %v2917 = vpop.permute.xlu0 %2916
      %2918 = vrot.lane.b32.xlu0 %v2784, 127
      %v2919 = vpop.permute.xlu0 %2918
      %2920 = vrot.lane.b32.xlu0 %v2785, 127
      %v2921 = vpop.permute.xlu0 %2920
      %2922 = vrot.lane.b32.xlu0 %v2786, 127
      %v2923 = vpop.permute.xlu0 %2922
      %2924 = vrot.lane.b32.xlu0 %v2787, 127
      %v2925 = vpop.permute.xlu0 %2924
      %2926 = vrot.lane.b32.xlu0 %v2788, 127
      %v2927 = vpop.permute.xlu0 %2926
      %2928 = vrot.lane.b32.xlu0 %v2789, 127
      %v2929 = vpop.permute.xlu0 %2928
      %2930 = vrot.lane.b32.xlu0 %v2790, 127
      %v2931 = vpop.permute.xlu0 %2930
      %vm2947 = vcmask 117760
      %2948 = vst.msk [vmem:[%s946 + $0x8] sm:$0xf] %vm2947, %v2903
      %2949 = vst.msk [vmem:[%s946 + $0x30] sm:$0xf] %vm2947, %v2905
      %2950 = vst.msk [vmem:[%s946 + $0x58] sm:$0xf] %vm2947, %v2907
      %2951 = vst.msk [vmem:[%s946 + $0x80] sm:$0xf] %vm2947, %v2909
      %2952 = vst.msk [vmem:[%s946 + $0xa8] sm:$0xf] %vm2947, %v2911
      %2953 = vst.msk [vmem:[%s946 + $0xd0] sm:$0xf] %vm2947, %v2913
      %2954 = vst.msk [vmem:[%s946 + $0xf8] sm:$0xf] %vm2947, %v2915
      %2955 = vst.msk [vmem:[%s946 + $0x120] sm:$0xf] %vm2947, %v2917
      %2956 = vst.msk [vmem:[%s946 + $0x148] sm:$0xf] %vm2947, %v2919
      %2957 = vst.msk [vmem:[%s946 + $0x170] sm:$0xf] %vm2947, %v2921
      %2958 = vst.msk [vmem:[%s946 + $0x198] sm:$0xf] %vm2947, %v2923
      %2959 = vst.msk [vmem:[%s946 + $0x1c0] sm:$0xf] %vm2947, %v2925
      %2960 = vst.msk [vmem:[%s946 + $0x1e8] sm:$0xf] %vm2947, %v2927
      %2961 = vst.msk [vmem:[%s946 + $0x210] sm:$0xf] %vm2947, %v2929
      %2962 = vst.msk [vmem:[%s946 + $0x238] sm:$0xf] %vm2947, %v2931
      %2963 = vst.msk [vmem:[#allocation2 + $0x8] sm:$0xf] %vm460, 0
      %vm2964 = vcmask 126072
      %2965 = vst.msk [vmem:[#allocation2 + $0x8] sm:$0xf] %vm2964, 0
      %2966 = vst.msk [vmem:[#allocation2 + $0x30] sm:$0xf] %vm2964, 0
      %2967 = vst.msk [vmem:[#allocation2 + $0x58] sm:$0xf] %vm2964, 0
      %2968 = vst.msk [vmem:[#allocation2 + $0x80] sm:$0xf] %vm2964, 0
      %2969 = vst.msk [vmem:[#allocation2 + $0xa8] sm:$0xf] %vm2964, 0
      %2970 = vst.msk [vmem:[#allocation2 + $0xd0] sm:$0xf] %vm2964, 0
      %2971 = vst.msk [vmem:[#allocation2 + $0xf8] sm:$0xf] %vm2964, 0
      %2972 = vst.msk [vmem:[#allocation2 + $0x120] sm:$0xf] %vm2964, 0
      %2973 = vst.msk [vmem:[#allocation2 + $0x148] sm:$0xf] %vm2964, 0
      %2974 = vst.msk [vmem:[#allocation2 + $0x170] sm:$0xf] %vm2964, 0
      %2975 = vst.msk [vmem:[#allocation2 + $0x198] sm:$0xf] %vm2964, 0
      %2976 = vst.msk [vmem:[#allocation2 + $0x1c0] sm:$0xf] %vm2964, 0
      %2977 = vst.msk [vmem:[#allocation2 + $0x1e8] sm:$0xf] %vm2964, 0
      %2978 = vst.msk [vmem:[#allocation2 + $0x210] sm:$0xf] %vm2964, 0
      %2979 = vst.msk [vmem:[#allocation2 + $0x238] sm:$0xf] %vm2964, 0
      %2980 = vst.msk [vmem:[#allocation2 + $0x260] sm:$0xf] %vm2964, 0
      %2982 = vrot.lane.b32.xlu0 %v2791, 1
      %v2983 = vpop.permute.xlu0 %2982
      %2985 = vst.msk [vmem:[#allocation2 + $0xc] sm:$0xf] %vm2852, %v2808
      %2986 = vst.msk [vmem:[#allocation2 + $0x34] sm:$0xf] %vm2852, %v2810
      %2987 = vst.msk [vmem:[#allocation2 + $0x5c] sm:$0xf] %vm2852, %v2812
      %2988 = vst.msk [vmem:[#allocation2 + $0x84] sm:$0xf] %vm2852, %v2814
      %2989 = vst.msk [vmem:[#allocation2 + $0xac] sm:$0xf] %vm2852, %v2816
      %2990 = vst.msk [vmem:[#allocation2 + $0xd4] sm:$0xf] %vm2852, %v2818
      %2991 = vst.msk [vmem:[#allocation2 + $0xfc] sm:$0xf] %vm2852, %v2820
      %2992 = vst.msk [vmem:[#allocation2 + $0x124] sm:$0xf] %vm2852, %v2822
      %2993 = vst.msk [vmem:[#allocation2 + $0x14c] sm:$0xf] %vm2852, %v2824
      %2994 = vst.msk [vmem:[#allocation2 + $0x174] sm:$0xf] %vm2852, %v2826
      %2995 = vst.msk [vmem:[#allocation2 + $0x19c] sm:$0xf] %vm2852, %v2828
      %2996 = vst.msk [vmem:[#allocation2 + $0x1c4] sm:$0xf] %vm2852, %v2830
      %2997 = vst.msk [vmem:[#allocation2 + $0x1ec] sm:$0xf] %vm2852, %v2832
      %2998 = vst.msk [vmem:[#allocation2 + $0x214] sm:$0xf] %vm2852, %v2834
      %2999 = vst.msk [vmem:[#allocation2 + $0x23c] sm:$0xf] %vm2852, %v2836
      %3000 = vst.msk [vmem:[#allocation2 + $0x264] sm:$0xf] %vm2852, %v2983
      %3001 = vst.msk [vmem:[#allocation2 + $0xc] sm:$0xf] %vm2869, 0
      %3002 = vst.msk [vmem:[#allocation2 + $0x34] sm:$0xf] %vm2869, 0
      %3003 = vst.msk [vmem:[#allocation2 + $0x5c] sm:$0xf] %vm2869, 0
      %3004 = vst.msk [vmem:[#allocation2 + $0x84] sm:$0xf] %vm2869, 0
      %3005 = vst.msk [vmem:[#allocation2 + $0xac] sm:$0xf] %vm2869, 0
      %3006 = vst.msk [vmem:[#allocation2 + $0xd4] sm:$0xf] %vm2869, 0
      %3007 = vst.msk [vmem:[#allocation2 + $0xfc] sm:$0xf] %vm2869, 0
      %3008 = vst.msk [vmem:[#allocation2 + $0x124] sm:$0xf] %vm2869, 0
      %3009 = vst.msk [vmem:[#allocation2 + $0x14c] sm:$0xf] %vm2869, 0
      %3010 = vst.msk [vmem:[#allocation2 + $0x174] sm:$0xf] %vm2869, 0
      %3011 = vst.msk [vmem:[#allocation2 + $0x19c] sm:$0xf] %vm2869, 0
      %3012 = vst.msk [vmem:[#allocation2 + $0x1c4] sm:$0xf] %vm2869, 0
      %3013 = vst.msk [vmem:[#allocation2 + $0x1ec] sm:$0xf] %vm2869, 0
      %3014 = vst.msk [vmem:[#allocation2 + $0x214] sm:$0xf] %vm2869, 0
      %3015 = vst.msk [vmem:[#allocation2 + $0x23c] sm:$0xf] %vm2869, 0
      %3016 = vst.msk [vmem:[#allocation2 + $0x264] sm:$0xf] %vm2869, 0
      %3017 = vst.msk [vmem:[#allocation2 + $0x10] sm:$0xf] %vm460, %v2776
      %3018 = vst.msk [vmem:[#allocation2 + $0x38] sm:$0xf] %vm460, %v2777
      %3019 = vst.msk [vmem:[#allocation2 + $0x60] sm:$0xf] %vm460, %v2778
      %3020 = vst.msk [vmem:[#allocation2 + $0x88] sm:$0xf] %vm460, %v2779
      %3021 = vst.msk [vmem:[#allocation2 + $0xb0] sm:$0xf] %vm460, %v2780
      %3022 = vst.msk [vmem:[#allocation2 + $0xd8] sm:$0xf] %vm460, %v2781
      %3023 = vst.msk [vmem:[#allocation2 + $0x100] sm:$0xf] %vm460, %v2782
      %3024 = vst.msk [vmem:[#allocation2 + $0x128] sm:$0xf] %vm460, %v2783
      %3025 = vst.msk [vmem:[#allocation2 + $0x150] sm:$0xf] %vm460, %v2784
      %3026 = vst.msk [vmem:[#allocation2 + $0x178] sm:$0xf] %vm460, %v2785
      %3027 = vst.msk [vmem:[#allocation2 + $0x1a0] sm:$0xf] %vm460, %v2786
      %3028 = vst.msk [vmem:[#allocation2 + $0x1c8] sm:$0xf] %vm460, %v2787
      %3029 = vst.msk [vmem:[#allocation2 + $0x1f0] sm:$0xf] %vm460, %v2788
      %3030 = vst.msk [vmem:[#allocation2 + $0x218] sm:$0xf] %vm460, %v2789
      %3031 = vst.msk [vmem:[#allocation2 + $0x240] sm:$0xf] %vm460, %v2790
      %3032 = vst.msk [vmem:[#allocation2 + $0x268] sm:$0xf] %vm460, %v2791
      %3033 = vrot.lane.b32.xlu0 %v2791, 127
      %v3034 = vpop.permute.xlu0 %3033
      %3036 = vst.msk [vmem:[#allocation2 + $0x14] sm:$0xf] %vm2947, %v2903
      %3037 = vst.msk [vmem:[#allocation2 + $0x3c] sm:$0xf] %vm2947, %v2905
      %3038 = vst.msk [vmem:[#allocation2 + $0x64] sm:$0xf] %vm2947, %v2907
      %3039 = vst.msk [vmem:[#allocation2 + $0x8c] sm:$0xf] %vm2947, %v2909
      %3040 = vst.msk [vmem:[#allocation2 + $0xb4] sm:$0xf] %vm2947, %v2911
      %3041 = vst.msk [vmem:[#allocation2 + $0xdc] sm:$0xf] %vm2947, %v2913
      %3042 = vst.msk [vmem:[#allocation2 + $0x104] sm:$0xf] %vm2947, %v2915
      %3043 = vst.msk [vmem:[#allocation2 + $0x12c] sm:$0xf] %vm2947, %v2917
      %3044 = vst.msk [vmem:[#allocation2 + $0x154] sm:$0xf] %vm2947, %v2919
      %3045 = vst.msk [vmem:[#allocation2 + $0x17c] sm:$0xf] %vm2947, %v2921
      %3046 = vst.msk [vmem:[#allocation2 + $0x1a4] sm:$0xf] %vm2947, %v2923
      %3047 = vst.msk [vmem:[#allocation2 + $0x1cc] sm:$0xf] %vm2947, %v2925
      %3048 = vst.msk [vmem:[#allocation2 + $0x1f4] sm:$0xf] %vm2947, %v2927
      %3049 = vst.msk [vmem:[#allocation2 + $0x21c] sm:$0xf] %vm2947, %v2929
      %3050 = vst.msk [vmem:[#allocation2 + $0x244] sm:$0xf] %vm2947, %v2931
      %3051 = vst.msk [vmem:[#allocation2 + $0x26c] sm:$0xf] %vm2947, %v3034
      %3052 = vst.msk [vmem:[#allocation2 + $0x14] sm:$0xf] %vm2964, 0
      %3053 = vst.msk [vmem:[#allocation2 + $0x3c] sm:$0xf] %vm2964, 0
      %3054 = vst.msk [vmem:[#allocation2 + $0x64] sm:$0xf] %vm2964, 0
      %3055 = vst.msk [vmem:[#allocation2 + $0x8c] sm:$0xf] %vm2964, 0
      %3056 = vst.msk [vmem:[#allocation2 + $0xb4] sm:$0xf] %vm2964, 0
      %3057 = vst.msk [vmem:[#allocation2 + $0xdc] sm:$0xf] %vm2964, 0
      %3058 = vst.msk [vmem:[#allocation2 + $0x104] sm:$0xf] %vm2964, 0
      %3059 = vst.msk [vmem:[#allocation2 + $0x12c] sm:$0xf] %vm2964, 0
      %3060 = vst.msk [vmem:[#allocation2 + $0x154] sm:$0xf] %vm2964, 0
      %3061 = vst.msk [vmem:[#allocation2 + $0x17c] sm:$0xf] %vm2964, 0
      %3062 = vst.msk [vmem:[#allocation2 + $0x1a4] sm:$0xf] %vm2964, 0
      %3063 = vst.msk [vmem:[#allocation2 + $0x1cc] sm:$0xf] %vm2964, 0
      %3064 = vst.msk [vmem:[#allocation2 + $0x1f4] sm:$0xf] %vm2964, 0
      %3065 = vst.msk [vmem:[#allocation2 + $0x21c] sm:$0xf] %vm2964, 0
      %3066 = vst.msk [vmem:[#allocation2 + $0x244] sm:$0xf] %vm2964, 0
      %3067 = vst.msk [vmem:[#allocation2 + $0x26c] sm:$0xf] %vm2964, 0
      %3068 = vst.msk [vmem:[#allocation2 + $0x18] sm:$0xf] %vm2852, %v2810
      %3069 = vst.msk [vmem:[#allocation2 + $0x40] sm:$0xf] %vm2852, %v2812
      %3070 = vst.msk [vmem:[#allocation2 + $0x68] sm:$0xf] %vm2852, %v2814
      %3071 = vst.msk [vmem:[#allocation2 + $0x90] sm:$0xf] %vm2852, %v2816
      %3072 = vst.msk [vmem:[#allocation2 + $0xb8] sm:$0xf] %vm2852, %v2818
      %3073 = vst.msk [vmem:[#allocation2 + $0xe0] sm:$0xf] %vm2852, %v2820
      %3074 = vst.msk [vmem:[#allocation2 + $0x108] sm:$0xf] %vm2852, %v2822
      %3075 = vst.msk [vmem:[#allocation2 + $0x130] sm:$0xf] %vm2852, %v2824
      %3076 = vst.msk [vmem:[#allocation2 + $0x158] sm:$0xf] %vm2852, %v2826
      %3077 = vst.msk [vmem:[#allocation2 + $0x180] sm:$0xf] %vm2852, %v2828
      %3078 = vst.msk [vmem:[#allocation2 + $0x1a8] sm:$0xf] %vm2852, %v2830
      %3079 = vst.msk [vmem:[#allocation2 + $0x1d0] sm:$0xf] %vm2852, %v2832
      %3080 = vst.msk [vmem:[#allocation2 + $0x1f8] sm:$0xf] %vm2852, %v2834
      %3081 = vst.msk [vmem:[#allocation2 + $0x220] sm:$0xf] %vm2852, %v2836
      %3082 = vst.msk [vmem:[#allocation2 + $0x248] sm:$0xf] %vm2852, %v2983
      %3083 = vst.msk [vmem:[%s1308 + $0x18] sm:$0xf] %vm460, 0
      %3084 = vst.msk [vmem:[#allocation2 + $0x18] sm:$0xf] %vm2869, 0
      %3085 = vst.msk [vmem:[#allocation2 + $0x40] sm:$0xf] %vm2869, 0
      %3086 = vst.msk [vmem:[#allocation2 + $0x68] sm:$0xf] %vm2869, 0
      %3087 = vst.msk [vmem:[#allocation2 + $0x90] sm:$0xf] %vm2869, 0
      %3088 = vst.msk [vmem:[#allocation2 + $0xb8] sm:$0xf] %vm2869, 0
      %3089 = vst.msk [vmem:[#allocation2 + $0xe0] sm:$0xf] %vm2869, 0
      %3090 = vst.msk [vmem:[#allocation2 + $0x108] sm:$0xf] %vm2869, 0
      %3091 = vst.msk [vmem:[#allocation2 + $0x130] sm:$0xf] %vm2869, 0
      %3092 = vst.msk [vmem:[#allocation2 + $0x158] sm:$0xf] %vm2869, 0
      %3093 = vst.msk [vmem:[#allocation2 + $0x180] sm:$0xf] %vm2869, 0
      %3094 = vst.msk [vmem:[#allocation2 + $0x1a8] sm:$0xf] %vm2869, 0
      %3095 = vst.msk [vmem:[#allocation2 + $0x1d0] sm:$0xf] %vm2869, 0
      %3096 = vst.msk [vmem:[#allocation2 + $0x1f8] sm:$0xf] %vm2869, 0
      %3097 = vst.msk [vmem:[#allocation2 + $0x220] sm:$0xf] %vm2869, 0
      %3098 = vst.msk [vmem:[#allocation2 + $0x248] sm:$0xf] %vm2869, 0
      %3099 = vst.msk [vmem:[#allocation2 + $0x270] sm:$0xf] %vm2869, 0
      %3100 = vst.msk [vmem:[#allocation2 + $0x1c] sm:$0xf] %vm460, %v2777
      %3101 = vst.msk [vmem:[#allocation2 + $0x44] sm:$0xf] %vm460, %v2778
      %3102 = vst.msk [vmem:[#allocation2 + $0x6c] sm:$0xf] %vm460, %v2779
      %3103 = vst.msk [vmem:[#allocation2 + $0x94] sm:$0xf] %vm460, %v2780
      %3104 = vst.msk [vmem:[#allocation2 + $0xbc] sm:$0xf] %vm460, %v2781
      %3105 = vst.msk [vmem:[#allocation2 + $0xe4] sm:$0xf] %vm460, %v2782
      %3106 = vst.msk [vmem:[#allocation2 + $0x10c] sm:$0xf] %vm460, %v2783
      %3107 = vst.msk [vmem:[#allocation2 + $0x134] sm:$0xf] %vm460, %v2784
      %3108 = vst.msk [vmem:[#allocation2 + $0x15c] sm:$0xf] %vm460, %v2785
      %3109 = vst.msk [vmem:[#allocation2 + $0x184] sm:$0xf] %vm460, %v2786
      %3110 = vst.msk [vmem:[#allocation2 + $0x1ac] sm:$0xf] %vm460, %v2787
      %3111 = vst.msk [vmem:[#allocation2 + $0x1d4] sm:$0xf] %vm460, %v2788
      %3112 = vst.msk [vmem:[#allocation2 + $0x1fc] sm:$0xf] %vm460, %v2789
      %3113 = vst.msk [vmem:[#allocation2 + $0x224] sm:$0xf] %vm460, %v2790
      %3114 = vst.msk [vmem:[#allocation2 + $0x24c] sm:$0xf] %vm460, %v2791
      %3115 = vst.msk [vmem:[%s1308 + $0x1c] sm:$0xf] %vm460, 0
      %3116 = vst.msk [vmem:[#allocation2 + $0x20] sm:$0xf] %vm2947, %v2905
      %3117 = vst.msk [vmem:[#allocation2 + $0x48] sm:$0xf] %vm2947, %v2907
      %3118 = vst.msk [vmem:[#allocation2 + $0x70] sm:$0xf] %vm2947, %v2909
      %3119 = vst.msk [vmem:[#allocation2 + $0x98] sm:$0xf] %vm2947, %v2911
      %3120 = vst.msk [vmem:[#allocation2 + $0xc0] sm:$0xf] %vm2947, %v2913
      %3121 = vst.msk [vmem:[#allocation2 + $0xe8] sm:$0xf] %vm2947, %v2915
      %3122 = vst.msk [vmem:[#allocation2 + $0x110] sm:$0xf] %vm2947, %v2917
      %3123 = vst.msk [vmem:[#allocation2 + $0x138] sm:$0xf] %vm2947, %v2919
      %3124 = vst.msk [vmem:[#allocation2 + $0x160] sm:$0xf] %vm2947, %v2921
      %3125 = vst.msk [vmem:[#allocation2 + $0x188] sm:$0xf] %vm2947, %v2923
      %3126 = vst.msk [vmem:[#allocation2 + $0x1b0] sm:$0xf] %vm2947, %v2925
      %3127 = vst.msk [vmem:[#allocation2 + $0x1d8] sm:$0xf] %vm2947, %v2927
      %3128 = vst.msk [vmem:[#allocation2 + $0x200] sm:$0xf] %vm2947, %v2929
      %3129 = vst.msk [vmem:[#allocation2 + $0x228] sm:$0xf] %vm2947, %v2931
      %3130 = vst.msk [vmem:[#allocation2 + $0x250] sm:$0xf] %vm2947, %v3034
      %3131 = vst.msk [vmem:[%s1308 + $0x20] sm:$0xf] %vm460, 0
      %3132 = vst.msk [vmem:[#allocation2 + $0x20] sm:$0xf] %vm2964, 0
      %3133 = vst.msk [vmem:[#allocation2 + $0x48] sm:$0xf] %vm2964, 0
      %3134 = vst.msk [vmem:[#allocation2 + $0x70] sm:$0xf] %vm2964, 0
      %3135 = vst.msk [vmem:[#allocation2 + $0x98] sm:$0xf] %vm2964, 0
      %3136 = vst.msk [vmem:[#allocation2 + $0xc0] sm:$0xf] %vm2964, 0
      %3137 = vst.msk [vmem:[#allocation2 + $0xe8] sm:$0xf] %vm2964, 0
      %3138 = vst.msk [vmem:[#allocation2 + $0x110] sm:$0xf] %vm2964, 0
      %3139 = vst.msk [vmem:[#allocation2 + $0x138] sm:$0xf] %vm2964, 0
      %3140 = vst.msk [vmem:[#allocation2 + $0x160] sm:$0xf] %vm2964, 0
      %3141 = vst.msk [vmem:[#allocation2 + $0x188] sm:$0xf] %vm2964, 0
      %3142 = vst.msk [vmem:[#allocation2 + $0x1b0] sm:$0xf] %vm2964, 0
      %3143 = vst.msk [vmem:[#allocation2 + $0x1d8] sm:$0xf] %vm2964, 0
      %3144 = vst.msk [vmem:[#allocation2 + $0x200] sm:$0xf] %vm2964, 0
      %3145 = vst.msk [vmem:[#allocation2 + $0x228] sm:$0xf] %vm2964, 0
      %3146 = vst.msk [vmem:[#allocation2 + $0x250] sm:$0xf] %vm2964, 0
      %3147 = vst.msk [vmem:[#allocation2 + $0x278] sm:$0xf] %vm2964, 0
      %v3148 = vpack.c.bf16 %v442, %v442
      %v3149 = vpack.c.bf16 %v443, %v443
      %v3150 = vpack.c.bf16 %v444, %v444
      %v3151 = vpack.c.bf16 %v445, %v445
      %v3152 = vpack.c.bf16 %v446, %v446
      %v3153 = vpack.c.bf16 %v447, %v447
      %v3154 = vpack.c.bf16 %v448, %v448
      %v3155 = vpack.c.bf16 %v449, %v449
      %v3156 = vpack.c.bf16 %v450, %v450
      %v3157 = vpack.c.bf16 %v451, %v451
      %v3158 = vpack.c.bf16 %v452, %v452
      %v3159 = vpack.c.bf16 %v453, %v453
      %v3160 = vpack.c.bf16 %v454, %v454
      %v3161 = vpack.c.bf16 %v455, %v455
      %v3162 = vpack.c.bf16 %v456, %v456
      %v3163 = vpack.c.bf16 %v457, %v457
      %3164 = vst.msk [vmem:[#allocation2 + $0x24] sm:$0x3] %vm963, %v3148
      %3165 = vst.msk [vmem:[#allocation2 + $0x4c] sm:$0x3] %vm963, %v3149
      %3166 = vst.msk [vmem:[#allocation2 + $0x74] sm:$0x3] %vm963, %v3150
      %3167 = vst.msk [vmem:[#allocation2 + $0x9c] sm:$0x3] %vm963, %v3151
      %3168 = vst.msk [vmem:[#allocation2 + $0xc4] sm:$0x3] %vm963, %v3152
      %3169 = vst.msk [vmem:[#allocation2 + $0xec] sm:$0x3] %vm963, %v3153
      %3170 = vst.msk [vmem:[#allocation2 + $0x114] sm:$0x3] %vm963, %v3154
      %3171 = vst.msk [vmem:[#allocation2 + $0x13c] sm:$0x3] %vm963, %v3155
      %3172 = vst.msk [vmem:[#allocation2 + $0x164] sm:$0x3] %vm963, %v3156
      %3173 = vst.msk [vmem:[#allocation2 + $0x18c] sm:$0x3] %vm963, %v3157
      %3174 = vst.msk [vmem:[#allocation2 + $0x1b4] sm:$0x3] %vm963, %v3158
      %3175 = vst.msk [vmem:[#allocation2 + $0x1dc] sm:$0x3] %vm963, %v3159
      %3176 = vst.msk [vmem:[#allocation2 + $0x204] sm:$0x3] %vm963, %v3160
      %3177 = vst.msk [vmem:[#allocation2 + $0x22c] sm:$0x3] %vm963, %v3161
      %3178 = vst.msk [vmem:[#allocation2 + $0x254] sm:$0x3] %vm963, %v3162
      %3179 = vst.msk [vmem:[#allocation2 + $0x27c] sm:$0x3] %vm963, %v3163
      %v3180 = vld [vmem:[%s12] sm:$0xf]
      loop: start=0, step=1, limit=16
      $region80: #{tfc_tdf_forward.2} parent=71 // loop_pre_header
        _
      $region81: #{tfc_tdf_forward.2} parent=71 // loop_header
        %s3182 = sphi 0, %s3186
        %p3183 = scmp.ge.s32.totalorder %s3182, 16
      $region82: #{tfc_tdf_forward.2} parent=71 // loop_header_branch
        %3185 = sbr.rel (%p3183) target = $region86
      $region83: #{tfc_tdf_forward.2} parent=71 // loop_body
        %s3187 = smul.u32 %s3182, 10
        %s3188 = smul.addr %s3187, 4
        %s3189 = scalar_lea.vmem [#allocation2], %s3188
        %v3190 = vld [vmem:[%s3189] sm:$0xf]
        %v3191 = vld [vmem:[%s3189 + $0x4] sm:$0xf]
        %v3192 = vld [vmem:[%s3189 + $0x8] sm:$0xf]
        %v3193 = vld [vmem:[%s3189 + $0xc] sm:$0xf]
        %v3194 = vld [vmem:[%s3189 + $0x10] sm:$0xf]
        %v3195 = vld [vmem:[%s3189 + $0x14] sm:$0xf]
        %v3196 = vld [vmem:[%s3189 + $0x18] sm:$0xf]
        %v3197 = vld [vmem:[%s3189 + $0x1c] sm:$0xf]
        %v3198 = vld [vmem:[%s3189 + $0x20] sm:$0xf]
        %v3199 = vld [vmem:[%s3189 + $0x24] sm:$0x3]
        %v3210 = vunpack.c.l.b16 %v3190
        %v3211 = vunpack.c.l.b16 %v3191
        %v3212 = vunpack.c.l.b16 %v3192
        %v3213 = vunpack.c.l.b16 %v3193
        %v3214 = vunpack.c.l.b16 %v3194
        %v3215 = vunpack.c.l.b16 %v3195
        %v3216 = vunpack.c.l.b16 %v3196
        %v3217 = vunpack.c.l.b16 %v3197
        %v3218 = vunpack.c.l.b16 %v3198
        %v3219 = vunpack.c.l.b16 %v3199
        %v3220 = vpack.c.b16 %v3211, %v3210
        %v3221 = vpack.c.b16 %v3213, %v3212
        %v3222 = vpack.c.b16 %v3215, %v3214
        %v3223 = vpack.c.b16 %v3217, %v3216
        %v3224 = vpack.c.b16 %v3219, %v3218
        %vm3229 = vcmask 621568
        %v3231 = vsel %vm3229, %v3180, 0
        %vm3233 = vcmask 1045504
        %v3235 = vsel %vm3233, %v3224, 0
        %3237 = vmatpush.bf16.msra.mxu0 0
        %3238 = vmatpush.bf16.msra.mxu0 0
        %3239 = vmatpush.bf16.msra.mxu0 0
        %3240 = vmatpush.bf16.msra.mxu0 %v3235
        %3241 = vmatpush.bf16.msra.mxu0 %v3223
        %3242 = vmatpush.bf16.msra.mxu0 %v3222
        %3243 = vmatpush.bf16.msra.mxu0 %v3221
        %3244 = vmatpush.bf16.msra.mxu0 %v3220
        %3245 = vmatmul.bf16.gmra.mxu0 %v3231
        %v3246 = vpop.f32.mrf.mxu0
        %v3247 = vadd.f32 0.0, %v3246
        %v3248 = vpop.f32.mrf.mxu0
        %3249 = vdwg.mxu0
        %s3250 = smul.u32 %s3182, 8
        %s3251 = scalar_lea.vmem %s440, %s3250
        %3252 = vst.msk [vmem:[%s3251] sm:$0xff] %vm1451, %v3247
      $region84: #{tfc_tdf_forward.2} parent=71 // loop_footer
        %s3186 = sadd.s32 1, %s3182
      $region85: #{tfc_tdf_forward.2} parent=71 // loop_footer_branch
        %3181 = sbr.rel target = $region81
      $region86: #{tfc_tdf_forward.2} parent=71 // loop_exit
        _
      %p3253 = scmp.lt.s32.totalorder %s24, 1
      %s3254 = scalar_select %p3253, %s24, 1
      %s3255 = smul.addr %s3254, 16
      %s3256 = smul.addr %s3255, 8
      %s3257 = scalar_lea.vmem %s13, %s3256
      // Predicated region
      $region87: #{tfc_tdf_forward.2} parent=71 // pred_check
        %p3258 = pneg %p320
      $region88: #{tfc_tdf_forward.2} parent=71 // pred_check_branch
        %3260 = sbr.rel (%p3258) target = $region90
      $region89: #{tfc_tdf_forward.2} parent=71 // pred_region
        _
      $region90: #{tfc_tdf_forward.2} parent=71 // pred_fallthru
        _
    $region72: #{tfc_tdf_forward.2} parent=5 // pred_fallthru
      _
    %p3261 = scmp.le.s32.totalorder 2, %s19
    // Predicated region
    $region91: #{tfc_tdf_forward.2} parent=5 // pred_check
      %p3262 = pneg %p3261
    $region92: #{tfc_tdf_forward.2} parent=5 // pred_check_branch
      %3264 = sbr.rel (%p3262) target = $region94
    $region93: #{tfc_tdf_forward.2} parent=5 // pred_region
      %s3265 = ssub.s32 %s19, 2
      // Predicated region
      $region95: #{tfc_tdf_forward.2} parent=93 // pred_check
        %p3266 = pneg %p326
      $region96: #{tfc_tdf_forward.2} parent=93 // pred_check_branch
        %3268 = sbr.rel (%p3266) target = $region98
      $region97: #{tfc_tdf_forward.2} parent=93 // pred_region
        %p3269 = scmp.lt.s32.totalorder %s25, 1
        %s3270 = scalar_select %p3269, %s25, 1
        %s3271 = smul.addr %s3270, 16
        %s3272 = smul.addr %s3271, 8
        %s3273 = scalar_lea.vmem %s13, %s3272
      $region98: #{tfc_tdf_forward.2} parent=93 // pred_fallthru
        _
    $region94: #{tfc_tdf_forward.2} parent=5 // pred_fallthru
      _
  $region6: #{tfc_tdf_forward.2} parent=0 // loop_footer
    %s23 = sadd.s32 1, %s19
  $region7: #{tfc_tdf_forward.2} parent=0 // loop_footer_branch
    %18 = sbr.rel target = $region3
  $region8: #{tfc_tdf_forward.2} parent=0 // loop_exit
    _

</llo_original>
